<compile_context>
chip_gen: v7x
topology: tpu7x:2x2x1
jax: 0.10.0
libtpu: 0.0.40
codegen_flags: <defaults>
</compile_context>

<pallas_src>
import math

import numpy as np
import jax
import jax.numpy as jnp
from jax import lax
from jax.experimental import pallas as pl
from jax.experimental.pallas import tpu as pltpu

SLOPE = 0.2                       # LeakyReLU negative slope


# ----------------------------------------------------------------------------
# Small helpers
# ----------------------------------------------------------------------------
def _round_up(x, m):
    return ((x + m - 1) // m) * m


def _nbytes(shape, dtype):
    return math.prod(shape) * np.dtype(dtype).itemsize


def _vmem_limit(*block_bytes):
    """Per-kernel scoped-VMEM budget: double-buffered blocks + headroom,
    capped low enough to also fit v7x's 64 MiB/TC."""
    total = 2 * sum(int(b) for b in block_bytes) + (4 << 20)
    return int(min(max(total, 16 << 20), 48 << 20))


def _row_tile(R):
    """Row tile for flattened-row kernels: large enough to amortize the
    ~0.35us per-grid-step overhead, small enough that the grid has >= 2 steps
    (v7x has 2 TensorCores; a grid of 1 also disables pipelining)."""
    for t in (1024, 512, 256, 128, 64):
        if R >= 2 * t:
            return t
    return max(8, _round_up(R, 8))


# ----------------------------------------------------------------------------
# Pallas kernels
# ----------------------------------------------------------------------------
def edge_proj(x2d, w_diff, w_self, b):
    """Row-tiled projection for the restructured edge conv.

    Emits two lane-dense bf16 outputs (no XLA lane slicing afterwards):
      z = x @ W_diff            (per-point neighbour projection)
      c = x @ W_self + b        (per-point centre term)
    so that the edge conv is  y = LeakyReLU(max_k z[idx_k] + c)."""
    R, Cin = x2d.shape
    Cout = w_diff.shape[1]
    tile = _row_tile(R)
    pad = (-R) % tile
    xp = jnp.pad(x2d, ((0, pad), (0, 0))) if pad else x2d
    Rp = R + pad

    def kernel(x_ref, wd_ref, ws_ref, b_ref, z_ref, c_ref):
        xb = x_ref[...].astype(jnp.bfloat16)
        z = jnp.dot(xb, wd_ref[...], preferred_element_type=jnp.float32)
        c = jnp.dot(xb, ws_ref[...], preferred_element_type=jnp.float32) + b_ref[...]
        z_ref[...] = z.astype(jnp.bfloat16)
        c_ref[...] = c.astype(jnp.bfloat16)

    vmem = _vmem_limit(_nbytes((tile, Cin), xp.dtype),
                       2 * _nbytes((Cin, Cout), jnp.bfloat16),
                       _nbytes((1, Cout), jnp.float32),
                       2 * _nbytes((tile, Cout), jnp.bfloat16))
    z, c = pl.pallas_call(
        kernel,
        out_shape=(jax.ShapeDtypeStruct((Rp, Cout), jnp.bfloat16),
                   jax.ShapeDtypeStruct((Rp, Cout), jnp.bfloat16)),
        grid=(Rp // tile,),
        in_specs=[
            pl.BlockSpec((tile, Cin), lambda i: (i, 0)),
            # resident bf16 weights / f32 bias (constant index map)
            pl.BlockSpec((Cin, Cout), lambda i: (0, 0)),
            pl.BlockSpec((Cin, Cout), lambda i: (0, 0)),
            pl.BlockSpec((1, Cout), lambda i: (0, 0)),
        ],
        out_specs=[pl.BlockSpec((tile, Cout), lambda i: (i, 0)),
                   pl.BlockSpec((tile, Cout), lambda i: (i, 0))],
        compiler_params=pltpu.CompilerParams(
            dimension_semantics=("parallel",),
            vmem_limit_bytes=vmem),
    )(xp, w_diff, w_self, b)
    if pad:
        z, c = z[:R], c[:R]
    return z, c


def edge_conv(x, idx, w_diff, w_self, b):
    """Restructured DGCNN edge conv (bf16 activations):
       y_i = LeakyReLU( max_k (x_{j(i,k)} @ W_diff) + x_i @ W_self + b )."""
    B, P, C = x.shape
    Cout = w_diff.shape[1]
    z, c = edge_proj(x.reshape(B * P, C), w_diff, w_self, b)
    z = z.reshape(B, P, Cout)
    c = c.reshape(B, P, Cout)
    # TODO(synk): the per-point dynamic neighbour row gather has no portable
    # in-kernel Pallas-TPU form; XLA fuses the gather into the reduce-max and
    # the LeakyReLU epilogue below, so no K-expanded tensor is materialized
    # and no extra kernel launch remains.
    zmax = jax.vmap(lambda zb, ib: jnp.max(zb[ib], axis=1))(z, idx)
    y = zmax.astype(jnp.float32) + c.astype(jnp.float32)
    y = jnp.where(y > 0, y, SLOPE * y)
    return y.astype(jnp.bfloat16)


def knn_idx(x, k):
    """kNN indices (self included) from a Pallas pairwise-score kernel.

    Scores = 2*x_i.x_j - ||x_j||^2  (== -||x_i - x_j||^2 + row-constant),
    which preserves per-row top-k ordering.  ||x_j||^2 is computed once per
    batch in the wrapper (not per query tile); scores are emitted bf16
    (ordering only) to halve the O(P^2) writeback.  Selection stays in XLA."""
    B, P, C = x.shape
    sq = jnp.sum(jnp.square(x.astype(jnp.float32)), axis=-1)[:, None, :]   # (B,1,P)
    TP = 256 if P >= 512 else _round_up(P, 8)
    padq = (-P) % TP
    xq = jnp.pad(x, ((0, 0), (0, padq), (0, 0))) if padq else x
    Pq = P + padq

    def kernel(xq_ref, xa_ref, sq_ref, o_ref):
        inner = lax.dot_general(xq_ref[...], xa_ref[...],
                                (((1,), (1,)), ((), ())),
                                preferred_element_type=jnp.float32)        # (TP,P)
        o_ref[...] = (2.0 * inner - sq_ref[...]).astype(jnp.bfloat16)

    vmem = _vmem_limit(_nbytes((TP, C), xq.dtype),
                       _nbytes((P, C), x.dtype),
                       _nbytes((1, P), jnp.float32),
                       _nbytes((TP, P), jnp.bfloat16))
    d = pl.pallas_call(
        kernel,
        out_shape=jax.ShapeDtypeStruct((B, Pq, P), jnp.bfloat16),
        grid=(B, Pq // TP),
        in_specs=[
            pl.BlockSpec((None, TP, C), lambda bi, pi: (bi, pi, 0)),
            pl.BlockSpec((None, P, C), lambda bi, pi: (bi, 0, 0)),
            pl.BlockSpec((None, 1, P), lambda bi, pi: (bi, 0, 0)),
        ],
        out_specs=pl.BlockSpec((None, TP, P), lambda bi, pi: (bi, pi, 0)),
        compiler_params=pltpu.CompilerParams(
            dimension_semantics=("parallel", "parallel"),
            vmem_limit_bytes=vmem),
    )(xq, x, sq)
    if padq:
        d = d[:, :P, :]
    # TODO(synk): top_k selection (or an in-kernel streaming top-k) stays in XLA.
    return lax.top_k(d, k)[1].astype(jnp.int32)


def bmm_norm(w, vg):
    """J = (W @ Vg) / (W.sum(-1, keepdims=True) + 1e-5), tiled over the N
    reduction axis ("arbitrary") with f32 accumulator scratch so the per-step
    VMEM footprint is bounded (fits v7x's 64 MiB) and the Vg stream overlaps
    the MXU.  Epilogue uses the EUP approx reciprocal."""
    B, M, N = w.shape
    C = vg.shape[-1]
    TN = 512 if N > 512 else _round_up(N, 8)
    padn = (-N) % TN
    if padn:  # zero padding is exact for both the matmul and the row sum
        w = jnp.pad(w, ((0, 0), (0, 0), (0, padn)))
        vg = jnp.pad(vg, ((0, 0), (0, padn), (0, 0)))
    Np = N + padn

    def kernel(w_ref, v_ref, o_ref, acc_ref, s_ref):
        @pl.when(pl.program_id(1) == 0)
        def _():
            acc_ref[...] = jnp.zeros_like(acc_ref)
            s_ref[...] = jnp.zeros_like(s_ref)

        wt = w_ref[...]                                           # (M, TN) bf16
        acc_ref[...] += jnp.dot(wt, v_ref[...],
                                preferred_element_type=jnp.float32)
        s_ref[...] += jnp.sum(wt.astype(jnp.float32), axis=-1, keepdims=True)

        @pl.when(pl.program_id(1) == pl.num_programs(1) - 1)
        def _():
            inv = pl.reciprocal(s_ref[...] + 1e-5, approx=True)
            o_ref[...] = (acc_ref[...] * inv).astype(o_ref.dtype)

    vmem = _vmem_limit(_nbytes((M, TN), w.dtype),
                       _nbytes((TN, C), vg.dtype),
                       _nbytes((M, C), jnp.bfloat16),
                       _nbytes((M, C + 1), jnp.float32))
    return pl.pallas_call(
        kernel,
        out_shape=jax.ShapeDtypeStruct((B, M, C), jnp.bfloat16),
        grid=(B, Np // TN),
        in_specs=[
            pl.BlockSpec((None, M, TN), lambda bi, ni: (bi, 0, ni)),
            pl.BlockSpec((None, TN, C), lambda bi, ni: (bi, ni, 0)),
        ],
        out_specs=pl.BlockSpec((None, M, C), lambda bi, ni: (bi, 0, 0)),
        scratch_shapes=[pltpu.VMEM((M, C), jnp.float32),
                        pltpu.VMEM((M, 1), jnp.float32)],
        compiler_params=pltpu.CompilerParams(
            dimension_semantics=("parallel", "arbitrary"),
            vmem_limit_bytes=vmem),
    )(w, vg)


def skeleton_head(J, idx, skel_params, mlp_params):
    """Fused skeleton branch: three DGCNN edge convs on the fixed one-ring
    graph + the 3-layer jointMLP, in ONE Pallas call per batch element.
    All weights stay resident in VMEM (~1.5 MB bf16); the neighbour gather is
    done with tiny (M, M) one-hot MXU matmuls (M = #joints is tens), so every
    intermediate stays on-chip and only (B, M, 128) is written back."""
    B, M, Cg = J.shape
    Ks = idx.shape[-1]
    (s1wd, s1ws, s1b), (s2wd, s2ws, s2b), (s3wd, s3ws, s3b) = skel_params
    w1a, w1b, w1c, b1, w2, b2, w3, b3 = mlp_params
    CO = w3.shape[1]                      # 3 padded to 128 lane-dense outputs

    def kernel(j_ref, idx_ref,
               s1wd_r, s1ws_r, s1b_r, s2wd_r, s2ws_r, s2b_r,
               s3wd_r, s3ws_r, s3b_r,
               w1a_r, w1b_r, w1c_r, b1_r, w2_r, b2_r, w3_r, b3_r,
               o_ref):
        idxv = idx_ref[...]                                       # (M, Ks) int32
        col = lax.broadcasted_iota(jnp.int32, (M, M), 1)

        def edge(xb, wd_r, ws_r, b_r):
            z = jnp.dot(xb, wd_r[...], preferred_element_type=jnp.float32)
            c = jnp.dot(xb, ws_r[...], preferred_element_type=jnp.float32) + b_r[...]
            zb = z.astype(jnp.bfloat16)
            zmax = None
            for kk in range(Ks):                                  # Ks is small/static
                onehot = (idxv[:, kk:kk + 1] == col).astype(jnp.bfloat16)
                g = jnp.dot(onehot, zb, preferred_element_type=jnp.float32)
                zmax = g if zmax is None else jnp.maximum(zmax, g)
            y = zmax + c
            y = jnp.where(y > 0, y, SLOPE * y)
            return y.astype(jnp.bfloat16)

        v1 = edge(j_ref[...], s1wd_r, s1ws_r, s1b_r)              # (M, 256)
        v2 = edge(v1, s2wd_r, s2ws_r, s2b_r)                      # (M, 128)
        v3 = edge(v2, s3wd_r, s3ws_r, s3b_r)                      # (M, 64)

        # jointMLP; w1 split by the [V1|V2|V3] concat to avoid a non-128-
        # aligned 448-wide concat inside the kernel.
        h = (jnp.dot(v1, w1a_r[...], preferred_element_type=jnp.float32)
             + jnp.dot(v2, w1b_r[...], preferred_element_type=jnp.float32)
             + jnp.dot(v3, w1c_r[...], preferred_element_type=jnp.float32)
             + b1_r[...])
        h = jnp.where(h > 0, h, SLOPE * h)
        h = jnp.dot(h.astype(jnp.bfloat16), w2_r[...],
                    preferred_element_type=jnp.float32) + b2_r[...]
        h = jnp.where(h > 0, h, SLOPE * h)
        o_ref[...] = jnp.dot(h.astype(jnp.bfloat16), w3_r[...],
                             preferred_element_type=jnp.float32) + b3_r[...]

    def resident(a):  # constant-index (weight) block spec
        return pl.BlockSpec(a.shape, lambda bi: (0, 0))

    weight_arrs = [s1wd, s1ws, s1b, s2wd, s2ws, s2b, s3wd, s3ws, s3b,
                   w1a, w1b, w1c, b1, w2, b2, w3, b3]
    # NOTE: constant-index weight blocks would ideally be single-buffered
    # (pipeline_mode=pl.Buffered(1)); skipped here for portability.
    wbytes = sum(int(a.size) * np.dtype(a.dtype).itemsize for a in weight_arrs)
    vmem = _vmem_limit(_nbytes((M, Cg), J.dtype),
                       _nbytes((M, Ks), jnp.int32),
                       wbytes,
                       _nbytes((M, CO), jnp.float32))
    return pl.pallas_call(
        kernel,
        out_shape=jax.ShapeDtypeStruct((B, M, CO), jnp.float32),
        grid=(B,),
        in_specs=[pl.BlockSpec((None, M, Cg), lambda bi: (bi, 0, 0)),
                  pl.BlockSpec((None, M, Ks), lambda bi: (bi, 0, 0))]
                 + [resident(a) for a in weight_arrs],
        out_specs=pl.BlockSpec((None, M, CO), lambda bi: (bi, 0, 0)),
        compiler_params=pltpu.CompilerParams(
            dimension_semantics=("parallel",),
            vmem_limit_bytes=vmem),
    )(J, idx, *weight_arrs)


# ----------------------------------------------------------------------------
# Parameters (deterministic; mimics torch Conv default init shapes)
# ----------------------------------------------------------------------------
def _init_linear(key, cin, cout):
    kw, kb = jax.random.split(key)
    bound = 1.0 / math.sqrt(cin)
    w = jax.random.uniform(kw, (cin, cout), jnp.float32, -bound, bound)
    b = jax.random.uniform(kb, (1, cout), jnp.float32, -bound, bound)
    return w, b


def _edge_split(w, b, pad_in=None):
    """Split a (2*Cin, Cout) edge-conv weight (edge feature [x_j-x_i, x_i])
    into the restructured (W_diff, W_self = W_ctr - W_diff, b) form, pre-cast
    to bf16, optionally zero-padding the input-channel rows to `pad_in`."""
    C = w.shape[0] // 2
    w_diff, w_ctr = w[:C], w[C:]
    w_self = w_ctr - w_diff
    if pad_in is not None and pad_in > C:
        padr = ((0, pad_in - C), (0, 0))
        w_diff = jnp.pad(w_diff, padr)
        w_self = jnp.pad(w_self, padr)
    return (w_diff.astype(jnp.bfloat16), w_self.astype(jnp.bfloat16), b)


def init_params(key, dgcnn_layers=(64, 128, 256)):
    keys = jax.random.split(key, 16)
    ki = iter(range(16))
    params = {}

    # geoNet edge convs (dynamic kNN graph)
    geo = []
    prev = 3
    for out_c in dgcnn_layers:
        w, b = _init_linear(keys[next(ki)], 2 * prev, out_c)
        geo.append(_edge_split(w, b))
        prev = out_c
    params["geo"] = geo

    geo_out = 3 + sum(dgcnn_layers)                     # 451
    vg_width = _round_up(geo_out, 128)                  # lane-dense 512 slab
    params["vg_width"] = vg_width

    # skeleton edge convs (fixed one-ring graph); skel1 input rows padded to
    # match the padded Vg slab.
    s1 = _init_linear(keys[next(ki)], 2 * geo_out, 256)
    s2 = _init_linear(keys[next(ki)], 2 * 256, 128)
    s3 = _init_linear(keys[next(ki)], 2 * 128, 64)
    params["skel"] = (_edge_split(*s1, pad_in=vg_width),
                      _edge_split(*s2),
                      _edge_split(*s3))

    # jointMLP: 448 -> 512 -> 256 -> 3.  w1 split by the [V1|V2|V3] concat;
    # final 3-wide projection padded to 128 output lanes (sliced in wrapper).
    w1, b1 = _init_linear(keys[next(ki)], 256 + 128 + 64, 512)
    w2, b2 = _init_linear(keys[next(ki)], 512, 256)
    w3, b3 = _init_linear(keys[next(ki)], 256, 3)
    w1a, w1b, w1c = w1[:256], w1[256:384], w1[384:448]
    CO = 128
    w3p = jnp.zeros((256, CO), jnp.float32).at[:, :3].set(w3)
    b3p = jnp.zeros((1, CO), jnp.float32).at[:, :3].set(b3)
    params["mlp"] = (w1a.astype(jnp.bfloat16), w1b.astype(jnp.bfloat16),
                     w1c.astype(jnp.bfloat16), b1,
                     w2.astype(jnp.bfloat16), b2,
                     w3p.astype(jnp.bfloat16), b3p)
    return params


# ----------------------------------------------------------------------------
# Full forward (JointNet_noGIDX.forward)
# ----------------------------------------------------------------------------
def jointnet_forward(V, W, skeleton_one_ring_idx, params, k=8):
    """V: (B, N, 3) f32, W: (B, M, N) f32, skeleton_one_ring_idx: (B, M, Ks)
    int32.  Returns joints (B, M, 3) f32 (== torch output after its final
    permute)."""
    # geoNet: dynamic-graph edge convs, concat input + all layer outputs.
    feats = [V.astype(jnp.bfloat16)]
    cur = V
    for (wd, ws, b) in params["geo"]:
        idx = knn_idx(cur, k)
        cur = edge_conv(cur, idx, wd, ws, b)
        feats.append(cur)
    Vg = jnp.concatenate(feats, axis=-1)                          # (B, N, 451) bf16
    Vg = jnp.pad(Vg, ((0, 0), (0, 0), (0, params["vg_width"] - Vg.shape[-1])))

    # skinning-weight pooling:  (W @ Vg) / (W.sum(-1) + 1e-5), N-tiled.
    J = bmm_norm(W.astype(jnp.bfloat16), Vg)                      # (B, M, 512) bf16

    # fused skeleton branch: 3 one-ring edge convs + jointMLP in one kernel.
    out = skeleton_head(J, skeleton_one_ring_idx,
                        params["skel"], params["mlp"])            # (B, M, 128) f32
    return out[..., :3]


# ----------------------------------------------------------------------------
if __name__ == "__main__":
    key = jax.random.PRNGKey(0)
    k_v, k_w, k_idx, k_p = jax.random.split(key, 4)

    B, N, M, Ks, K_KNN = 2, 64, 16, 4, 8

    V = jax.random.normal(k_v, (B, N, 3), jnp.float32)                 # points
    Wsk = jax.random.uniform(k_w, (B, M, N), jnp.float32)              # skin wts
    skel_idx = jax.random.randint(k_idx, (B, M, Ks), 0, M, jnp.int32)  # one-ring

    params = init_params(k_p)

    fwd = jax.jit(lambda v, w, i: jointnet_forward(v, w, i, params, k=K_KNN))
    joints = fwd(V, Wsk, skel_idx)
    jax.block_until_ready(joints)

    assert joints.shape == (B, M, 3), joints.shape
    assert joints.dtype == jnp.float32
    print("KERNEL_OK")
</pallas_src>

<mosaic_0001>
module attributes {stable_mosaic.version = 11 : i64} {
  func.func @kernel(%arg0: i32, %arg1: i32, %arg2: memref<1x64x3xf32, #tpu.memory_space<vmem>>, %arg3: memref<1x64x3xf32, #tpu.memory_space<vmem>>, %arg4: memref<1x1x64xf32, #tpu.memory_space<vmem>>, %arg5: memref<1x64x64xbf16, #tpu.memory_space<vmem>>) attributes {dimension_semantics = [#tpu.dimension_semantics<parallel>, #tpu.dimension_semantics<parallel>], iteration_bounds = array<i64: 2, 1>, scalar_prefetch = 0 : i64, scratch_operands = 0 : i64, tpu.core_type = #tpu.core_type<tc>, window_params = [{transform_indices = @transform_0, window_bounds = array<i64: 1, 64, 3>}, {transform_indices = @transform_1, window_bounds = array<i64: 1, 64, 3>}, {transform_indices = @transform_2, window_bounds = array<i64: 1, 1, 64>}, {transform_indices = @transform_3, window_bounds = array<i64: 1, 64, 64>}]} {
    %c0 = arith.constant 0 : index
    %c0_0 = arith.constant 0 : index
    %c0_1 = arith.constant 0 : index
    %0 = vector.load %arg2[%c0, %c0_0, %c0_1] : memref<1x64x3xf32, #tpu.memory_space<vmem>>, vector<1x64x3xf32>
    %1 = vector.shape_cast %0 : vector<1x64x3xf32> to vector<64x3xf32>
    %c0_2 = arith.constant 0 : index
    %c0_3 = arith.constant 0 : index
    %c0_4 = arith.constant 0 : index
    %2 = vector.load %arg3[%c0_2, %c0_3, %c0_4] : memref<1x64x3xf32, #tpu.memory_space<vmem>>, vector<1x64x3xf32>
    %3 = vector.shape_cast %2 : vector<1x64x3xf32> to vector<64x3xf32>
    %cst = arith.constant dense<0.000000e+00> : vector<64x64xf32>
    %4 = tpu.matmul %1, %3, %cst {dimension_numbers = #tpu.dot_dimension_numbers<[1], [1], [0], [0], [0, 0, 1, 0], [], []>} : vector<64x3xf32>, vector<64x3xf32>, vector<64x64xf32> -> vector<64x64xf32>
    %cst_5 = arith.constant 2.000000e+00 : f32
    %5 = vector.broadcast %cst_5 : f32 to vector<64x64xf32>
    %6 = arith.mulf %5, %4 : vector<64x64xf32>
    %c0_6 = arith.constant 0 : index
    %c0_7 = arith.constant 0 : index
    %c0_8 = arith.constant 0 : index
    %7 = vector.load %arg4[%c0_6, %c0_7, %c0_8] : memref<1x1x64xf32, #tpu.memory_space<vmem>>, vector<1x1x64xf32>
    %8 = vector.shape_cast %7 : vector<1x1x64xf32> to vector<1x64xf32>
    %9 = vector.broadcast %8 : vector<1x64xf32> to vector<64x64xf32>
    %10 = arith.subf %6, %9 : vector<64x64xf32>
    %11 = arith.truncf %10 : vector<64x64xf32> to vector<64x64xbf16>
    %c0_9 = arith.constant 0 : index
    %c0_10 = arith.constant 0 : index
    %c0_11 = arith.constant 0 : index
    %12 = vector.load %arg5[%c0_9, %c0_10, %c0_11] : memref<1x64x64xbf16, #tpu.memory_space<vmem>>, vector<1x64x64xbf16>
    %13 = vector.shape_cast %12 : vector<1x64x64xbf16> to vector<64x64xbf16>
    %14 = vector.shape_cast %11 : vector<64x64xbf16> to vector<1x64x64xbf16>
    tpu.vector_store %arg5[%c0_9, %c0_10, %c0_11], %14 {strides = array<i32>} : memref<1x64x64xbf16, #tpu.memory_space<vmem>>, vector<1x64x64xbf16>,
    return
  }
  func.func @transform_0(%arg0: i32, %arg1: i32) -> (i32, i32, i32) {
    %c0_i32 = arith.constant 0 : i32
    %c0_i32_0 = arith.constant 0 : i32
    return %arg0, %arg1, %c0_i32 : i32, i32, i32
  }
  func.func @transform_1(%arg0: i32, %arg1: i32) -> (i32, i32, i32) {
    %c0_i32 = arith.constant 0 : i32
    %c0_i32_0 = arith.constant 0 : i32
    %c0_i32_1 = arith.constant 0 : i32
    return %arg0, %c0_i32, %c0_i32_0 : i32, i32, i32
  }
  func.func @transform_2(%arg0: i32, %arg1: i32) -> (i32, i32, i32) {
    %c0_i32 = arith.constant 0 : i32
    %c0_i32_0 = arith.constant 0 : i32
    %c0_i32_1 = arith.constant 0 : i32
    return %arg0, %c0_i32, %c0_i32_0 : i32, i32, i32
  }
  func.func @transform_3(%arg0: i32, %arg1: i32) -> (i32, i32, i32) {
    %c0_i32 = arith.constant 0 : i32
    %c0_i32_0 = arith.constant 0 : i32
    return %arg0, %arg1, %c0_i32 : i32, i32, i32
  }
}

module attributes {stable_mosaic.version = 11 : i64} {
  func.func @kernel(%arg0: i32, %arg1: memref<64x3xf32, #tpu.memory_space<vmem>>, %arg2: memref<3x64xbf16, #tpu.memory_space<vmem>>, %arg3: memref<3x64xbf16, #tpu.memory_space<vmem>>, %arg4: memref<1x64xf32, #tpu.memory_space<vmem>>, %arg5: memref<64x64xbf16, #tpu.memory_space<vmem>>, %arg6: memref<64x64xbf16, #tpu.memory_space<vmem>>) attributes {dimension_semantics = [#tpu.dimension_semantics<parallel>], iteration_bounds = array<i64: 2>, scalar_prefetch = 0 : i64, scratch_operands = 0 : i64, tpu.core_type = #tpu.core_type<tc>, window_params = [{transform_indices = @transform_0, window_bounds = array<i64: 64, 3>}, {pipeline_mode = #tpu.pipeline_mode<synchronous>, transform_indices = @transform_1, window_bounds = array<i64: 3, 64>}, {pipeline_mode = #tpu.pipeline_mode<synchronous>, transform_indices = @transform_2, window_bounds = array<i64: 3, 64>}, {pipeline_mode = #tpu.pipeline_mode<synchronous>, transform_indices = @transform_3, window_bounds = array<i64: 1, 64>}, {transform_indices = @transform_4, window_bounds = array<i64: 64, 64>}, {transform_indices = @transform_5, window_bounds = array<i64: 64, 64>}]} {
    %c0 = arith.constant 0 : index
    %c0_0 = arith.constant 0 : index
    %0 = vector.load %arg1[%c0, %c0_0] : memref<64x3xf32, #tpu.memory_space<vmem>>, vector<64x3xf32>
    %1 = arith.truncf %0 : vector<64x3xf32> to vector<64x3xbf16>
    %c0_1 = arith.constant 0 : index
    %c0_2 = arith.constant 0 : index
    %2 = vector.load %arg2[%c0_1, %c0_2] : memref<3x64xbf16, #tpu.memory_space<vmem>>, vector<3x64xbf16>
    %cst = arith.constant dense<0.000000e+00> : vector<64x64xf32>
    %3 = tpu.matmul %1, %2, %cst {dimension_numbers = #tpu.dot_dimension_numbers<[1], [0], [0], [1], [0, 0, 1, 1], [], []>} : vector<64x3xbf16>, vector<3x64xbf16>, vector<64x64xf32> -> vector<64x64xf32>
    %c0_3 = arith.constant 0 : index
    %c0_4 = arith.constant 0 : index
    %4 = vector.load %arg3[%c0_3, %c0_4] : memref<3x64xbf16, #tpu.memory_space<vmem>>, vector<3x64xbf16>
    %cst_5 = arith.constant dense<0.000000e+00> : vector<64x64xf32>
    %5 = tpu.matmul %1, %4, %cst_5 {dimension_numbers = #tpu.dot_dimension_numbers<[1], [0], [0], [1], [0, 0, 1, 1], [], []>} : vector<64x3xbf16>, vector<3x64xbf16>, vector<64x64xf32> -> vector<64x64xf32>
    %c0_6 = arith.constant 0 : index
    %c0_7 = arith.constant 0 : index
    %6 = vector.load %arg4[%c0_6, %c0_7] : memref<1x64xf32, #tpu.memory_space<vmem>>, vector<1x64xf32>
    %7 = vector.broadcast %6 : vector<1x64xf32> to vector<64x64xf32>
    %8 = arith.addf %5, %7 : vector<64x64xf32>
    %9 = arith.truncf %3 : vector<64x64xf32> to vector<64x64xbf16>
    %c0_8 = arith.constant 0 : index
    %c0_9 = arith.constant 0 : index
    %10 = vector.load %arg5[%c0_8, %c0_9] : memref<64x64xbf16, #tpu.memory_space<vmem>>, vector<64x64xbf16>
    tpu.vector_store %arg5[%c0_8, %c0_9], %9 {strides = array<i32>} : memref<64x64xbf16, #tpu.memory_space<vmem>>, vector<64x64xbf16>,
    %11 = arith.truncf %8 : vector<64x64xf32> to vector<64x64xbf16>
    %c0_10 = arith.constant 0 : index
    %c0_11 = arith.constant 0 : index
    %12 = vector.load %arg6[%c0_10, %c0_11] : memref<64x64xbf16, #tpu.memory_space<vmem>>, vector<64x64xbf16>
    tpu.vector_store %arg6[%c0_10, %c0_11], %11 {strides = array<i32>} : memref<64x64xbf16, #tpu.memory_space<vmem>>, vector<64x64xbf16>,
    return
  }
  func.func @transform_0(%arg0: i32) -> (i32, i32) {
    %c0_i32 = arith.constant 0 : i32
    %c0_i32_0 = arith.constant 0 : i32
    return %arg0, %c0_i32 : i32, i32
  }
  func.func @transform_1(%arg0: i32) -> (i32, i32) {
    %c0_i32 = arith.constant 0 : i32
    %c0_i32_0 = arith.constant 0 : i32
    %c0_i32_1 = arith.constant 0 : i32
    return %c0_i32, %c0_i32_0 : i32, i32
  }
  func.func @transform_2(%arg0: i32) -> (i32, i32) {
    %c0_i32 = arith.constant 0 : i32
    %c0_i32_0 = arith.constant 0 : i32
    %c0_i32_1 = arith.constant 0 : i32
    return %c0_i32, %c0_i32_0 : i32, i32
  }
  func.func @transform_3(%arg0: i32) -> (i32, i32) {
    %c0_i32 = arith.constant 0 : i32
    %c0_i32_0 = arith.constant 0 : i32
    %c0_i32_1 = arith.constant 0 : i32
    return %c0_i32, %c0_i32_0 : i32, i32
  }
  func.func @transform_4(%arg0: i32) -> (i32, i32) {
    %c0_i32 = arith.constant 0 : i32
    %c0_i32_0 = arith.constant 0 : i32
    return %arg0, %c0_i32 : i32, i32
  }
  func.func @transform_5(%arg0: i32) -> (i32, i32) {
    %c0_i32 = arith.constant 0 : i32
    %c0_i32_0 = arith.constant 0 : i32
    return %arg0, %c0_i32 : i32, i32
  }
}

module attributes {stable_mosaic.version = 11 : i64} {
  func.func @kernel(%arg0: i32, %arg1: i32, %arg2: memref<1x64x64xbf16, #tpu.memory_space<vmem>>, %arg3: memref<1x64x64xbf16, #tpu.memory_space<vmem>>, %arg4: memref<1x1x64xf32, #tpu.memory_space<vmem>>, %arg5: memref<1x64x64xbf16, #tpu.memory_space<vmem>>) attributes {dimension_semantics = [#tpu.dimension_semantics<parallel>, #tpu.dimension_semantics<parallel>], iteration_bounds = array<i64: 2, 1>, scalar_prefetch = 0 : i64, scratch_operands = 0 : i64, tpu.core_type = #tpu.core_type<tc>, window_params = [{transform_indices = @transform_0, window_bounds = array<i64: 1, 64, 64>}, {transform_indices = @transform_1, window_bounds = array<i64: 1, 64, 64>}, {transform_indices = @transform_2, window_bounds = array<i64: 1, 1, 64>}, {transform_indices = @transform_3, window_bounds = array<i64: 1, 64, 64>}]} {
    %c0 = arith.constant 0 : index
    %c0_0 = arith.constant 0 : index
    %c0_1 = arith.constant 0 : index
    %0 = vector.load %arg2[%c0, %c0_0, %c0_1] : memref<1x64x64xbf16, #tpu.memory_space<vmem>>, vector<1x64x64xbf16>
    %1 = vector.shape_cast %0 : vector<1x64x64xbf16> to vector<64x64xbf16>
    %c0_2 = arith.constant 0 : index
    %c0_3 = arith.constant 0 : index
    %c0_4 = arith.constant 0 : index
    %2 = vector.load %arg3[%c0_2, %c0_3, %c0_4] : memref<1x64x64xbf16, #tpu.memory_space<vmem>>, vector<1x64x64xbf16>
    %3 = vector.shape_cast %2 : vector<1x64x64xbf16> to vector<64x64xbf16>
    %cst = arith.constant dense<0.000000e+00> : vector<64x64xf32>
    %4 = tpu.matmul %1, %3, %cst {dimension_numbers = #tpu.dot_dimension_numbers<[1], [1], [0], [0], [0, 0, 1, 0], [], []>} : vector<64x64xbf16>, vector<64x64xbf16>, vector<64x64xf32> -> vector<64x64xf32>
    %cst_5 = arith.constant 2.000000e+00 : f32
    %5 = vector.broadcast %cst_5 : f32 to vector<64x64xf32>
    %6 = arith.mulf %5, %4 : vector<64x64xf32>
    %c0_6 = arith.constant 0 : index
    %c0_7 = arith.constant 0 : index
    %c0_8 = arith.constant 0 : index
    %7 = vector.load %arg4[%c0_6, %c0_7, %c0_8] : memref<1x1x64xf32, #tpu.memory_space<vmem>>, vector<1x1x64xf32>
    %8 = vector.shape_cast %7 : vector<1x1x64xf32> to vector<1x64xf32>
    %9 = vector.broadcast %8 : vector<1x64xf32> to vector<64x64xf32>
    %10 = arith.subf %6, %9 : vector<64x64xf32>
    %11 = arith.truncf %10 : vector<64x64xf32> to vector<64x64xbf16>
    %c0_9 = arith.constant 0 : index
    %c0_10 = arith.constant 0 : index
    %c0_11 = arith.constant 0 : index
    %12 = vector.load %arg5[%c0_9, %c0_10, %c0_11] : memref<1x64x64xbf16, #tpu.memory_space<vmem>>, vector<1x64x64xbf16>
    %13 = vector.shape_cast %12 : vector<1x64x64xbf16> to vector<64x64xbf16>
    %14 = vector.shape_cast %11 : vector<64x64xbf16> to vector<1x64x64xbf16>
    tpu.vector_store %arg5[%c0_9, %c0_10, %c0_11], %14 {strides = array<i32>} : memref<1x64x64xbf16, #tpu.memory_space<vmem>>, vector<1x64x64xbf16>,
    return
  }
  func.func @transform_0(%arg0: i32, %arg1: i32) -> (i32, i32, i32) {
    %c0_i32 = arith.constant 0 : i32
    %c0_i32_0 = arith.constant 0 : i32
    return %arg0, %arg1, %c0_i32 : i32, i32, i32
  }
  func.func @transform_1(%arg0: i32, %arg1: i32) -> (i32, i32, i32) {
    %c0_i32 = arith.constant 0 : i32
    %c0_i32_0 = arith.constant 0 : i32
    %c0_i32_1 = arith.constant 0 : i32
    return %arg0, %c0_i32, %c0_i32_0 : i32, i32, i32
  }
  func.func @transform_2(%arg0: i32, %arg1: i32) -> (i32, i32, i32) {
    %c0_i32 = arith.constant 0 : i32
    %c0_i32_0 = arith.constant 0 : i32
    %c0_i32_1 = arith.constant 0 : i32
    return %arg0, %c0_i32, %c0_i32_0 : i32, i32, i32
  }
  func.func @transform_3(%arg0: i32, %arg1: i32) -> (i32, i32, i32) {
    %c0_i32 = arith.constant 0 : i32
    %c0_i32_0 = arith.constant 0 : i32
    return %arg0, %arg1, %c0_i32 : i32, i32, i32
  }
}

module attributes {stable_mosaic.version = 11 : i64} {
  func.func @kernel(%arg0: i32, %arg1: memref<64x64xbf16, #tpu.memory_space<vmem>>, %arg2: memref<64x128xbf16, #tpu.memory_space<vmem>>, %arg3: memref<64x128xbf16, #tpu.memory_space<vmem>>, %arg4: memref<1x128xf32, #tpu.memory_space<vmem>>, %arg5: memref<64x128xbf16, #tpu.memory_space<vmem>>, %arg6: memref<64x128xbf16, #tpu.memory_space<vmem>>) attributes {dimension_semantics = [#tpu.dimension_semantics<parallel>], iteration_bounds = array<i64: 2>, scalar_prefetch = 0 : i64, scratch_operands = 0 : i64, tpu.core_type = #tpu.core_type<tc>, window_params = [{transform_indices = @transform_0, window_bounds = array<i64: 64, 64>}, {pipeline_mode = #tpu.pipeline_mode<synchronous>, transform_indices = @transform_1, window_bounds = array<i64: 64, 128>}, {pipeline_mode = #tpu.pipeline_mode<synchronous>, transform_indices = @transform_2, window_bounds = array<i64: 64, 128>}, {pipeline_mode = #tpu.pipeline_mode<synchronous>, transform_indices = @transform_3, window_bounds = array<i64: 1, 128>}, {transform_indices = @transform_4, window_bounds = array<i64: 64, 128>}, {transform_indices = @transform_5, window_bounds = array<i64: 64, 128>}]} {
    %c0 = arith.constant 0 : index
    %c0_0 = arith.constant 0 : index
    %0 = vector.load %arg1[%c0, %c0_0] : memref<64x64xbf16, #tpu.memory_space<vmem>>, vector<64x64xbf16>
    %c0_1 = arith.constant 0 : index
    %c0_2 = arith.constant 0 : index
    %1 = vector.load %arg2[%c0_1, %c0_2] : memref<64x128xbf16, #tpu.memory_space<vmem>>, vector<64x128xbf16>
    %cst = arith.constant dense<0.000000e+00> : vector<64x128xf32>
    %2 = tpu.matmul %0, %1, %cst {dimension_numbers = #tpu.dot_dimension_numbers<[1], [0], [0], [1], [0, 0, 1, 1], [], []>} : vector<64x64xbf16>, vector<64x128xbf16>, vector<64x128xf32> -> vector<64x128xf32>
    %c0_3 = arith.constant 0 : index
    %c0_4 = arith.constant 0 : index
    %3 = vector.load %arg3[%c0_3, %c0_4] : memref<64x128xbf16, #tpu.memory_space<vmem>>, vector<64x128xbf16>
    %cst_5 = arith.constant dense<0.000000e+00> : vector<64x128xf32>
    %4 = tpu.matmul %0, %3, %cst_5 {dimension_numbers = #tpu.dot_dimension_numbers<[1], [0], [0], [1], [0, 0, 1, 1], [], []>} : vector<64x64xbf16>, vector<64x128xbf16>, vector<64x128xf32> -> vector<64x128xf32>
    %c0_6 = arith.constant 0 : index
    %c0_7 = arith.constant 0 : index
    %5 = vector.load %arg4[%c0_6, %c0_7] : memref<1x128xf32, #tpu.memory_space<vmem>>, vector<1x128xf32>
    %6 = vector.broadcast %5 : vector<1x128xf32> to vector<64x128xf32>
    %7 = arith.addf %4, %6 : vector<64x128xf32>
    %8 = arith.truncf %2 : vector<64x128xf32> to vector<64x128xbf16>
    %c0_8 = arith.constant 0 : index
    %c0_9 = arith.constant 0 : index
    %9 = vector.load %arg5[%c0_8, %c0_9] : memref<64x128xbf16, #tpu.memory_space<vmem>>, vector<64x128xbf16>
    tpu.vector_store %arg5[%c0_8, %c0_9], %8 {strides = array<i32>} : memref<64x128xbf16, #tpu.memory_space<vmem>>, vector<64x128xbf16>,
    %10 = arith.truncf %7 : vector<64x128xf32> to vector<64x128xbf16>
    %c0_10 = arith.constant 0 : index
    %c0_11 = arith.constant 0 : index
    %11 = vector.load %arg6[%c0_10, %c0_11] : memref<64x128xbf16, #tpu.memory_space<vmem>>, vector<64x128xbf16>
    tpu.vector_store %arg6[%c0_10, %c0_11], %10 {strides = array<i32>} : memref<64x128xbf16, #tpu.memory_space<vmem>>, vector<64x128xbf16>,
    return
  }
  func.func @transform_0(%arg0: i32) -> (i32, i32) {
    %c0_i32 = arith.constant 0 : i32
    %c0_i32_0 = arith.constant 0 : i32
    return %arg0, %c0_i32 : i32, i32
  }
  func.func @transform_1(%arg0: i32) -> (i32, i32) {
    %c0_i32 = arith.constant 0 : i32
    %c0_i32_0 = arith.constant 0 : i32
    %c0_i32_1 = arith.constant 0 : i32
    return %c0_i32, %c0_i32_0 : i32, i32
  }
  func.func @transform_2(%arg0: i32) -> (i32, i32) {
    %c0_i32 = arith.constant 0 : i32
    %c0_i32_0 = arith.constant 0 : i32
    %c0_i32_1 = arith.constant 0 : i32
    return %c0_i32, %c0_i32_0 : i32, i32
  }
  func.func @transform_3(%arg0: i32) -> (i32, i32) {
    %c0_i32 = arith.constant 0 : i32
    %c0_i32_0 = arith.constant 0 : i32
    %c0_i32_1 = arith.constant 0 : i32
    return %c0_i32, %c0_i32_0 : i32, i32
  }
  func.func @transform_4(%arg0: i32) -> (i32, i32) {
    %c0_i32 = arith.constant 0 : i32
    %c0_i32_0 = arith.constant 0 : i32
    return %arg0, %c0_i32 : i32, i32
  }
  func.func @transform_5(%arg0: i32) -> (i32, i32) {
    %c0_i32 = arith.constant 0 : i32
    %c0_i32_0 = arith.constant 0 : i32
    return %arg0, %c0_i32 : i32, i32
  }
}

module attributes {stable_mosaic.version = 11 : i64} {
  func.func @kernel(%arg0: i32, %arg1: i32, %arg2: memref<1x64x128xbf16, #tpu.memory_space<vmem>>, %arg3: memref<1x64x128xbf16, #tpu.memory_space<vmem>>, %arg4: memref<1x1x64xf32, #tpu.memory_space<vmem>>, %arg5: memref<1x64x64xbf16, #tpu.memory_space<vmem>>) attributes {dimension_semantics = [#tpu.dimension_semantics<parallel>, #tpu.dimension_semantics<parallel>], iteration_bounds = array<i64: 2, 1>, scalar_prefetch = 0 : i64, scratch_operands = 0 : i64, tpu.core_type = #tpu.core_type<tc>, window_params = [{transform_indices = @transform_0, window_bounds = array<i64: 1, 64, 128>}, {transform_indices = @transform_1, window_bounds = array<i64: 1, 64, 128>}, {transform_indices = @transform_2, window_bounds = array<i64: 1, 1, 64>}, {transform_indices = @transform_3, window_bounds = array<i64: 1, 64, 64>}]} {
    %c0 = arith.constant 0 : index
    %c0_0 = arith.constant 0 : index
    %c0_1 = arith.constant 0 : index
    %0 = vector.load %arg2[%c0, %c0_0, %c0_1] : memref<1x64x128xbf16, #tpu.memory_space<vmem>>, vector<1x64x128xbf16>
    %1 = vector.shape_cast %0 : vector<1x64x128xbf16> to vector<64x128xbf16>
    %c0_2 = arith.constant 0 : index
    %c0_3 = arith.constant 0 : index
    %c0_4 = arith.constant 0 : index
    %2 = vector.load %arg3[%c0_2, %c0_3, %c0_4] : memref<1x64x128xbf16, #tpu.memory_space<vmem>>, vector<1x64x128xbf16>
    %3 = vector.shape_cast %2 : vector<1x64x128xbf16> to vector<64x128xbf16>
    %cst = arith.constant dense<0.000000e+00> : vector<64x64xf32>
    %4 = tpu.matmul %1, %3, %cst {dimension_numbers = #tpu.dot_dimension_numbers<[1], [1], [0], [0], [0, 0, 1, 0], [], []>} : vector<64x128xbf16>, vector<64x128xbf16>, vector<64x64xf32> -> vector<64x64xf32>
    %cst_5 = arith.constant 2.000000e+00 : f32
    %5 = vector.broadcast %cst_5 : f32 to vector<64x64xf32>
    %6 = arith.mulf %5, %4 : vector<64x64xf32>
    %c0_6 = arith.constant 0 : index
    %c0_7 = arith.constant 0 : index
    %c0_8 = arith.constant 0 : index
    %7 = vector.load %arg4[%c0_6, %c0_7, %c0_8] : memref<1x1x64xf32, #tpu.memory_space<vmem>>, vector<1x1x64xf32>
    %8 = vector.shape_cast %7 : vector<1x1x64xf32> to vector<1x64xf32>
    %9 = vector.broadcast %8 : vector<1x64xf32> to vector<64x64xf32>
    %10 = arith.subf %6, %9 : vector<64x64xf32>
    %11 = arith.truncf %10 : vector<64x64xf32> to vector<64x64xbf16>
    %c0_9 = arith.constant 0 : index
    %c0_10 = arith.constant 0 : index
    %c0_11 = arith.constant 0 : index
    %12 = vector.load %arg5[%c0_9, %c0_10, %c0_11] : memref<1x64x64xbf16, #tpu.memory_space<vmem>>, vector<1x64x64xbf16>
    %13 = vector.shape_cast %12 : vector<1x64x64xbf16> to vector<64x64xbf16>
    %14 = vector.shape_cast %11 : vector<64x64xbf16> to vector<1x64x64xbf16>
    tpu.vector_store %arg5[%c0_9, %c0_10, %c0_11], %14 {strides = array<i32>} : memref<1x64x64xbf16, #tpu.memory_space<vmem>>, vector<1x64x64xbf16>,
    return
  }
  func.func @transform_0(%arg0: i32, %arg1: i32) -> (i32, i32, i32) {
    %c0_i32 = arith.constant 0 : i32
    %c0_i32_0 = arith.constant 0 : i32
    return %arg0, %arg1, %c0_i32 : i32, i32, i32
  }
  func.func @transform_1(%arg0: i32, %arg1: i32) -> (i32, i32, i32) {
    %c0_i32 = arith.constant 0 : i32
    %c0_i32_0 = arith.constant 0 : i32
    %c0_i32_1 = arith.constant 0 : i32
    return %arg0, %c0_i32, %c0_i32_0 : i32, i32, i32
  }
  func.func @transform_2(%arg0: i32, %arg1: i32) -> (i32, i32, i32) {
    %c0_i32 = arith.constant 0 : i32
    %c0_i32_0 = arith.constant 0 : i32
    %c0_i32_1 = arith.constant 0 : i32
    return %arg0, %c0_i32, %c0_i32_0 : i32, i32, i32
  }
  func.func @transform_3(%arg0: i32, %arg1: i32) -> (i32, i32, i32) {
    %c0_i32 = arith.constant 0 : i32
    %c0_i32_0 = arith.constant 0 : i32
    return %arg0, %arg1, %c0_i32 : i32, i32, i32
  }
}

module attributes {stable_mosaic.version = 11 : i64} {
  func.func @kernel(%arg0: i32, %arg1: memref<64x128xbf16, #tpu.memory_space<vmem>>, %arg2: memref<128x256xbf16, #tpu.memory_space<vmem>>, %arg3: memref<128x256xbf16, #tpu.memory_space<vmem>>, %arg4: memref<1x256xf32, #tpu.memory_space<vmem>>, %arg5: memref<64x256xbf16, #tpu.memory_space<vmem>>, %arg6: memref<64x256xbf16, #tpu.memory_space<vmem>>) attributes {dimension_semantics = [#tpu.dimension_semantics<parallel>], iteration_bounds = array<i64: 2>, scalar_prefetch = 0 : i64, scratch_operands = 0 : i64, tpu.core_type = #tpu.core_type<tc>, window_params = [{transform_indices = @transform_0, window_bounds = array<i64: 64, 128>}, {pipeline_mode = #tpu.pipeline_mode<synchronous>, transform_indices = @transform_1, window_bounds = array<i64: 128, 256>}, {pipeline_mode = #tpu.pipeline_mode<synchronous>, transform_indices = @transform_2, window_bounds = array<i64: 128, 256>}, {pipeline_mode = #tpu.pipeline_mode<synchronous>, transform_indices = @transform_3, window_bounds = array<i64: 1, 256>}, {transform_indices = @transform_4, window_bounds = array<i64: 64, 256>}, {transform_indices = @transform_5, window_bounds = array<i64: 64, 256>}]} {
    %c0 = arith.constant 0 : index
    %c0_0 = arith.constant 0 : index
    %0 = vector.load %arg1[%c0, %c0_0] : memref<64x128xbf16, #tpu.memory_space<vmem>>, vector<64x128xbf16>
    %c0_1 = arith.constant 0 : index
    %c0_2 = arith.constant 0 : index
    %1 = vector.load %arg2[%c0_1, %c0_2] : memref<128x256xbf16, #tpu.memory_space<vmem>>, vector<128x256xbf16>
    %cst = arith.constant dense<0.000000e+00> : vector<64x256xf32>
    %2 = tpu.matmul %0, %1, %cst {dimension_numbers = #tpu.dot_dimension_numbers<[1], [0], [0], [1], [0, 0, 1, 1], [], []>} : vector<64x128xbf16>, vector<128x256xbf16>, vector<64x256xf32> -> vector<64x256xf32>
    %c0_3 = arith.constant 0 : index
    %c0_4 = arith.constant 0 : index
    %3 = vector.load %arg3[%c0_3, %c0_4] : memref<128x256xbf16, #tpu.memory_space<vmem>>, vector<128x256xbf16>
    %cst_5 = arith.constant dense<0.000000e+00> : vector<64x256xf32>
    %4 = tpu.matmul %0, %3, %cst_5 {dimension_numbers = #tpu.dot_dimension_numbers<[1], [0], [0], [1], [0, 0, 1, 1], [], []>} : vector<64x128xbf16>, vector<128x256xbf16>, vector<64x256xf32> -> vector<64x256xf32>
    %c0_6 = arith.constant 0 : index
    %c0_7 = arith.constant 0 : index
    %5 = vector.load %arg4[%c0_6, %c0_7] : memref<1x256xf32, #tpu.memory_space<vmem>>, vector<1x256xf32>
    %6 = vector.broadcast %5 : vector<1x256xf32> to vector<64x256xf32>
    %7 = arith.addf %4, %6 : vector<64x256xf32>
    %8 = arith.truncf %2 : vector<64x256xf32> to vector<64x256xbf16>
    %c0_8 = arith.constant 0 : index
    %c0_9 = arith.constant 0 : index
    %9 = vector.load %arg5[%c0_8, %c0_9] : memref<64x256xbf16, #tpu.memory_space<vmem>>, vector<64x256xbf16>
    tpu.vector_store %arg5[%c0_8, %c0_9], %8 {strides = array<i32>} : memref<64x256xbf16, #tpu.memory_space<vmem>>, vector<64x256xbf16>,
    %10 = arith.truncf %7 : vector<64x256xf32> to vector<64x256xbf16>
    %c0_10 = arith.constant 0 : index
    %c0_11 = arith.constant 0 : index
    %11 = vector.load %arg6[%c0_10, %c0_11] : memref<64x256xbf16, #tpu.memory_space<vmem>>, vector<64x256xbf16>
    tpu.vector_store %arg6[%c0_10, %c0_11], %10 {strides = array<i32>} : memref<64x256xbf16, #tpu.memory_space<vmem>>, vector<64x256xbf16>,
    return
  }
  func.func @transform_0(%arg0: i32) -> (i32, i32) {
    %c0_i32 = arith.constant 0 : i32
    %c0_i32_0 = arith.constant 0 : i32
    return %arg0, %c0_i32 : i32, i32
  }
  func.func @transform_1(%arg0: i32) -> (i32, i32) {
    %c0_i32 = arith.constant 0 : i32
    %c0_i32_0 = arith.constant 0 : i32
    %c0_i32_1 = arith.constant 0 : i32
    return %c0_i32, %c0_i32_0 : i32, i32
  }
  func.func @transform_2(%arg0: i32) -> (i32, i32) {
    %c0_i32 = arith.constant 0 : i32
    %c0_i32_0 = arith.constant 0 : i32
    %c0_i32_1 = arith.constant 0 : i32
    return %c0_i32, %c0_i32_0 : i32, i32
  }
  func.func @transform_3(%arg0: i32) -> (i32, i32) {
    %c0_i32 = arith.constant 0 : i32
    %c0_i32_0 = arith.constant 0 : i32
    %c0_i32_1 = arith.constant 0 : i32
    return %c0_i32, %c0_i32_0 : i32, i32
  }
  func.func @transform_4(%arg0: i32) -> (i32, i32) {
    %c0_i32 = arith.constant 0 : i32
    %c0_i32_0 = arith.constant 0 : i32
    return %arg0, %c0_i32 : i32, i32
  }
  func.func @transform_5(%arg0: i32) -> (i32, i32) {
    %c0_i32 = arith.constant 0 : i32
    %c0_i32_0 = arith.constant 0 : i32
    return %arg0, %c0_i32 : i32, i32
  }
}

module attributes {stable_mosaic.version = 11 : i64} {
  func.func @kernel(%arg0: i32, %arg1: i32, %arg2: memref<1x16x64xbf16, #tpu.memory_space<vmem>>, %arg3: memref<1x64x512xbf16, #tpu.memory_space<vmem>>, %arg4: memref<1x16x512xbf16, #tpu.memory_space<vmem>>, %arg5: memref<16x512xf32, #tpu.memory_space<vmem>>, %arg6: memref<16x1xf32, #tpu.memory_space<vmem>>) attributes {dimension_semantics = [#tpu.dimension_semantics<parallel>, #tpu.dimension_semantics<arbitrary>], iteration_bounds = array<i64: 2, 1>, scalar_prefetch = 0 : i64, scratch_operands = 2 : i64, tpu.core_type = #tpu.core_type<tc>, window_params = [{transform_indices = @transform_0, window_bounds = array<i64: 1, 16, 64>}, {transform_indices = @transform_1, window_bounds = array<i64: 1, 64, 512>}, {transform_indices = @transform_2, window_bounds = array<i64: 1, 16, 512>}]} {
    %c0_i32 = arith.constant 0 : i32
    %0 = arith.cmpi eq, %arg1, %c0_i32 : i32
    %1 = arith.extui %0 : i1 to i32
    %c0_i32_0 = arith.constant 0 : i32
    %2 = arith.cmpi ne, %1, %c0_i32_0 : i32
    scf.if %2 {
      %cst_17 = arith.constant 0.000000e+00 : f32
      %20 = vector.broadcast %cst_17 : f32 to vector<16x512xf32>
      %c0_18 = arith.constant 0 : index
      %c0_19 = arith.constant 0 : index
      %21 = vector.load %arg5[%c0_18, %c0_19] : memref<16x512xf32, #tpu.memory_space<vmem>>, vector<16x512xf32>
      tpu.vector_store %arg5[%c0_18, %c0_19], %20 {strides = array<i32>} : memref<16x512xf32, #tpu.memory_space<vmem>>, vector<16x512xf32>,
      %cst_20 = arith.constant 0.000000e+00 : f32
      %22 = vector.broadcast %cst_20 : f32 to vector<16x1xf32>
      %c0_21 = arith.constant 0 : index
      %c0_22 = arith.constant 0 : index
      %23 = vector.load %arg6[%c0_21, %c0_22] : memref<16x1xf32, #tpu.memory_space<vmem>>, vector<16x1xf32>
      tpu.vector_store %arg6[%c0_21, %c0_22], %22 {strides = array<i32>} : memref<16x1xf32, #tpu.memory_space<vmem>>, vector<16x1xf32>,
    } else {
    }
    %c0 = arith.constant 0 : index
    %c0_1 = arith.constant 0 : index
    %c0_2 = arith.constant 0 : index
    %3 = vector.load %arg2[%c0, %c0_1, %c0_2] : memref<1x16x64xbf16, #tpu.memory_space<vmem>>, vector<1x16x64xbf16>
    %4 = vector.shape_cast %3 : vector<1x16x64xbf16> to vector<16x64xbf16>
    %c0_3 = arith.constant 0 : index
    %c0_4 = arith.constant 0 : index
    %5 = vector.load %arg5[%c0_3, %c0_4] : memref<16x512xf32, #tpu.memory_space<vmem>>, vector<16x512xf32>
    %c0_5 = arith.constant 0 : index
    %c0_6 = arith.constant 0 : index
    %c0_7 = arith.constant 0 : index
    %6 = vector.load %arg3[%c0_5, %c0_6, %c0_7] : memref<1x64x512xbf16, #tpu.memory_space<vmem>>, vector<1x64x512xbf16>
    %7 = vector.shape_cast %6 : vector<1x64x512xbf16> to vector<64x512xbf16>
    %cst = arith.constant dense<0.000000e+00> : vector<16x512xf32>
    %8 = tpu.matmul %4, %7, %cst {dimension_numbers = #tpu.dot_dimension_numbers<[1], [0], [0], [1], [0, 0, 1, 1], [], []>} : vector<16x64xbf16>, vector<64x512xbf16>, vector<16x512xf32> -> vector<16x512xf32>
    %9 = arith.addf %5, %8 : vector<16x512xf32>
    %c0_8 = arith.constant 0 : index
    %c0_9 = arith.constant 0 : index
    %10 = vector.load %arg5[%c0_8, %c0_9] : memref<16x512xf32, #tpu.memory_space<vmem>>, vector<16x512xf32>
    tpu.vector_store %arg5[%c0_8, %c0_9], %9 {strides = array<i32>} : memref<16x512xf32, #tpu.memory_space<vmem>>, vector<16x512xf32>,
    %c0_10 = arith.constant 0 : index
    %c0_11 = arith.constant 0 : index
    %11 = vector.load %arg6[%c0_10, %c0_11] : memref<16x1xf32, #tpu.memory_space<vmem>>, vector<16x1xf32>
    %12 = arith.extf %4 : vector<16x64xbf16> to vector<16x64xf32>
    %cst_12 = arith.constant dense<0.000000e+00> : vector<16xf32>
    %13 = vector.multi_reduction <add>, %12, %cst_12 [1] : vector<16x64xf32> to vector<16xf32>
    %14 = vector.shape_cast %13 : vector<16xf32> to vector<16x1xf32>
    %15 = arith.addf %11, %14 : vector<16x1xf32>
    %c0_13 = arith.constant 0 : index
    %c0_14 = arith.constant 0 : index
    %16 = vector.load %arg6[%c0_13, %c0_14] : memref<16x1xf32, #tpu.memory_space<vmem>>, vector<16x1xf32>
    tpu.vector_store %arg6[%c0_13, %c0_14], %15 {strides = array<i32>} : memref<16x1xf32, #tpu.memory_space<vmem>>, vector<16x1xf32>,
    %c0_i32_15 = arith.constant 0 : i32
    %17 = arith.cmpi eq, %arg1, %c0_i32_15 : i32
    %18 = arith.extui %17 : i1 to i32
    %c0_i32_16 = arith.constant 0 : i32
    %19 = arith.cmpi ne, %18, %c0_i32_16 : i32
    scf.if %19 {
      %c0_17 = arith.constant 0 : index
      %c0_18 = arith.constant 0 : index
      %20 = vector.load %arg6[%c0_17, %c0_18] : memref<16x1xf32, #tpu.memory_space<vmem>>, vector<16x1xf32>
      %cst_19 = arith.constant 9.99999974E-6 : f32
      %21 = vector.broadcast %cst_19 : f32 to vector<16x1xf32>
      %22 = arith.addf %20, %21 : vector<16x1xf32>
      %23 = tpu.reciprocal %22 {approx = true} : vector<16x1xf32> -> vector<16x1xf32>
      %c0_20 = arith.constant 0 : index
      %c0_21 = arith.constant 0 : index
      %24 = vector.load %arg5[%c0_20, %c0_21] : memref<16x512xf32, #tpu.memory_space<vmem>>, vector<16x512xf32>
      %25 = vector.broadcast %23 : vector<16x1xf32> to vector<16x512xf32>
      %26 = arith.mulf %24, %25 : vector<16x512xf32>
      %27 = arith.truncf %26 : vector<16x512xf32> to vector<16x512xbf16>
      %c0_22 = arith.constant 0 : index
      %c0_23 = arith.constant 0 : index
      %c0_24 = arith.constant 0 : index
      %28 = vector.load %arg4[%c0_22, %c0_23, %c0_24] : memref<1x16x512xbf16, #tpu.memory_space<vmem>>, vector<1x16x512xbf16>
      %29 = vector.shape_cast %28 : vector<1x16x512xbf16> to vector<16x512xbf16>
      %30 = vector.shape_cast %27 : vector<16x512xbf16> to vector<1x16x512xbf16>
      tpu.vector_store %arg4[%c0_22, %c0_23, %c0_24], %30 {strides = array<i32>} : memref<1x16x512xbf16, #tpu.memory_space<vmem>>, vector<1x16x512xbf16>,
    } else {
    }
    return
  }
  func.func @transform_0(%arg0: i32, %arg1: i32) -> (i32, i32, i32) {
    %c0_i32 = arith.constant 0 : i32
    %c0_i32_0 = arith.constant 0 : i32
    return %arg0, %c0_i32, %arg1 : i32, i32, i32
  }
  func.func @transform_1(%arg0: i32, %arg1: i32) -> (i32, i32, i32) {
    %c0_i32 = arith.constant 0 : i32
    %c0_i32_0 = arith.constant 0 : i32
    return %arg0, %arg1, %c0_i32 : i32, i32, i32
  }
  func.func @transform_2(%arg0: i32, %arg1: i32) -> (i32, i32, i32) {
    %c0_i32 = arith.constant 0 : i32
    %c0_i32_0 = arith.constant 0 : i32
    %c0_i32_1 = arith.constant 0 : i32
    return %arg0, %c0_i32, %c0_i32_0 : i32, i32, i32
  }
}

module attributes {stable_mosaic.version = 11 : i64} {
  func.func @kernel(%arg0: i32, %arg1: memref<1x16x512xbf16, #tpu.memory_space<vmem>>, %arg2: memref<1x16x4xi32, #tpu.memory_space<vmem>>, %arg3: memref<512x256xbf16, #tpu.memory_space<vmem>>, %arg4: memref<512x256xbf16, #tpu.memory_space<vmem>>, %arg5: memref<1x256xf32, #tpu.memory_space<vmem>>, %arg6: memref<256x128xbf16, #tpu.memory_space<vmem>>, %arg7: memref<256x128xbf16, #tpu.memory_space<vmem>>, %arg8: memref<1x128xf32, #tpu.memory_space<vmem>>, %arg9: memref<128x64xbf16, #tpu.memory_space<vmem>>, %arg10: memref<128x64xbf16, #tpu.memory_space<vmem>>, %arg11: memref<1x64xf32, #tpu.memory_space<vmem>>, %arg12: memref<256x512xbf16, #tpu.memory_space<vmem>>, %arg13: memref<128x512xbf16, #tpu.memory_space<vmem>>, %arg14: memref<64x512xbf16, #tpu.memory_space<vmem>>, %arg15: memref<1x512xf32, #tpu.memory_space<vmem>>, %arg16: memref<512x256xbf16, #tpu.memory_space<vmem>>, %arg17: memref<1x256xf32, #tpu.memory_space<vmem>>, %arg18: memref<256x128xbf16, #tpu.memory_space<vmem>>, %arg19: memref<1x128xf32, #tpu.memory_space<vmem>>, %arg20: memref<1x16x128xf32, #tpu.memory_space<vmem>>) attributes {dimension_semantics = [#tpu.dimension_semantics<parallel>], iteration_bounds = array<i64: 2>, scalar_prefetch = 0 : i64, scratch_operands = 0 : i64, tpu.core_type = #tpu.core_type<tc>, window_params = [{transform_indices = @transform_0, window_bounds = array<i64: 1, 16, 512>}, {transform_indices = @transform_1, window_bounds = array<i64: 1, 16, 4>}, {pipeline_mode = #tpu.pipeline_mode<synchronous>, transform_indices = @transform_2, window_bounds = array<i64: 512, 256>}, {pipeline_mode = #tpu.pipeline_mode<synchronous>, transform_indices = @transform_3, window_bounds = array<i64: 512, 256>}, {pipeline_mode = #tpu.pipeline_mode<synchronous>, transform_indices = @transform_4, window_bounds = array<i64: 1, 256>}, {pipeline_mode = #tpu.pipeline_mode<synchronous>, transform_indices = @transform_5, window_bounds = array<i64: 256, 128>}, {pipeline_mode = #tpu.pipeline_mode<synchronous>, transform_indices = @transform_6, window_bounds = array<i64: 256, 128>}, {pipeline_mode = #tpu.pipeline_mode<synchronous>, transform_indices = @transform_7, window_bounds = array<i64: 1, 128>}, {pipeline_mode = #tpu.pipeline_mode<synchronous>, transform_indices = @transform_8, window_bounds = array<i64: 128, 64>}, {pipeline_mode = #tpu.pipeline_mode<synchronous>, transform_indices = @transform_9, window_bounds = array<i64: 128, 64>}, {pipeline_mode = #tpu.pipeline_mode<synchronous>, transform_indices = @transform_10, window_bounds = array<i64: 1, 64>}, {pipeline_mode = #tpu.pipeline_mode<synchronous>, transform_indices = @transform_11, window_bounds = array<i64: 256, 512>}, {pipeline_mode = #tpu.pipeline_mode<synchronous>, transform_indices = @transform_12, window_bounds = array<i64: 128, 512>}, {pipeline_mode = #tpu.pipeline_mode<synchronous>, transform_indices = @transform_13, window_bounds = array<i64: 64, 512>}, {pipeline_mode = #tpu.pipeline_mode<synchronous>, transform_indices = @transform_14, window_bounds = array<i64: 1, 512>}, {pipeline_mode = #tpu.pipeline_mode<synchronous>, transform_indices = @transform_15, window_bounds = array<i64: 512, 256>}, {pipeline_mode = #tpu.pipeline_mode<synchronous>, transform_indices = @transform_16, window_bounds = array<i64: 1, 256>}, {pipeline_mode = #tpu.pipeline_mode<synchronous>, transform_indices = @transform_17, window_bounds = array<i64: 256, 128>}, {pipeline_mode = #tpu.pipeline_mode<synchronous>, transform_indices = @transform_18, window_bounds = array<i64: 1, 128>}, {transform_indices = @transform_19, window_bounds = array<i64: 1, 16, 128>}]} {
    %c0 = arith.constant 0 : index
    %c0_0 = arith.constant 0 : index
    %c0_1 = arith.constant 0 : index
    %0 = vector.load %arg2[%c0, %c0_0, %c0_1] : memref<1x16x4xi32, #tpu.memory_space<vmem>>, vector<1x16x4xi32>
    %1 = vector.shape_cast %0 : vector<1x16x4xi32> to vector<16x4xi32>
    %2 = tpu.iota {dimensions = array<i32: 1>} : vector<16x16xi32>
    %c0_2 = arith.constant 0 : index
    %c0_3 = arith.constant 0 : index
    %c0_4 = arith.constant 0 : index
    %3 = vector.load %arg1[%c0_2, %c0_3, %c0_4] : memref<1x16x512xbf16, #tpu.memory_space<vmem>>, vector<1x16x512xbf16>
    %4 = vector.shape_cast %3 : vector<1x16x512xbf16> to vector<16x512xbf16>
    %c0_5 = arith.constant 0 : index
    %c0_6 = arith.constant 0 : index
    %5 = vector.load %arg3[%c0_5, %c0_6] : memref<512x256xbf16, #tpu.memory_space<vmem>>, vector<512x256xbf16>
    %cst = arith.constant dense<0.000000e+00> : vector<16x256xf32>
    %6 = tpu.matmul %4, %5, %cst {dimension_numbers = #tpu.dot_dimension_numbers<[1], [0], [0], [1], [0, 0, 1, 1], [], []>} : vector<16x512xbf16>, vector<512x256xbf16>, vector<16x256xf32> -> vector<16x256xf32>
    %c0_7 = arith.constant 0 : index
    %c0_8 = arith.constant 0 : index
    %7 = vector.load %arg4[%c0_7, %c0_8] : memref<512x256xbf16, #tpu.memory_space<vmem>>, vector<512x256xbf16>
    %cst_9 = arith.constant dense<0.000000e+00> : vector<16x256xf32>
    %8 = tpu.matmul %4, %7, %cst_9 {dimension_numbers = #tpu.dot_dimension_numbers<[1], [0], [0], [1], [0, 0, 1, 1], [], []>} : vector<16x512xbf16>, vector<512x256xbf16>, vector<16x256xf32> -> vector<16x256xf32>
    %c0_10 = arith.constant 0 : index
    %c0_11 = arith.constant 0 : index
    %9 = vector.load %arg5[%c0_10, %c0_11] : memref<1x256xf32, #tpu.memory_space<vmem>>, vector<1x256xf32>
    %10 = vector.broadcast %9 : vector<1x256xf32> to vector<16x256xf32>
    %11 = arith.addf %8, %10 : vector<16x256xf32>
    %12 = arith.truncf %6 : vector<16x256xf32> to vector<16x256xbf16>
    %13 = vector.extract_strided_slice %1 {offsets = [0, 0], sizes = [16, 1], strides = [1, 1]} : vector<16x4xi32> to vector<16x1xi32>
    %14 = vector.broadcast %13 : vector<16x1xi32> to vector<16x16xi32>
    %15 = arith.cmpi eq, %14, %2 : vector<16x16xi32>
    %16 = arith.extui %15 : vector<16x16xi1> to vector<16x16xi32>
    %17 = arith.sitofp %16 : vector<16x16xi32> to vector<16x16xf32>
    %18 = arith.truncf %17 : vector<16x16xf32> to vector<16x16xbf16>
    %cst_12 = arith.constant dense<0.000000e+00> : vector<16x256xf32>
    %19 = tpu.matmul %18, %12, %cst_12 {dimension_numbers = #tpu.dot_dimension_numbers<[1], [0], [0], [1], [0, 0, 1, 1], [], []>} : vector<16x16xbf16>, vector<16x256xbf16>, vector<16x256xf32> -> vector<16x256xf32>
    %20 = vector.extract_strided_slice %1 {offsets = [0, 1], sizes = [16, 1], strides = [1, 1]} : vector<16x4xi32> to vector<16x1xi32>
    %21 = vector.broadcast %20 : vector<16x1xi32> to vector<16x16xi32>
    %22 = arith.cmpi eq, %21, %2 : vector<16x16xi32>
    %23 = arith.extui %22 : vector<16x16xi1> to vector<16x16xi32>
    %24 = arith.sitofp %23 : vector<16x16xi32> to vector<16x16xf32>
    %25 = arith.truncf %24 : vector<16x16xf32> to vector<16x16xbf16>
    %cst_13 = arith.constant dense<0.000000e+00> : vector<16x256xf32>
    %26 = tpu.matmul %25, %12, %cst_13 {dimension_numbers = #tpu.dot_dimension_numbers<[1], [0], [0], [1], [0, 0, 1, 1], [], []>} : vector<16x16xbf16>, vector<16x256xbf16>, vector<16x256xf32> -> vector<16x256xf32>
    %27 = arith.maximumf %19, %26 : vector<16x256xf32>
    %28 = vector.extract_strided_slice %1 {offsets = [0, 2], sizes = [16, 1], strides = [1, 1]} : vector<16x4xi32> to vector<16x1xi32>
    %29 = vector.broadcast %28 : vector<16x1xi32> to vector<16x16xi32>
    %30 = arith.cmpi eq, %29, %2 : vector<16x16xi32>
    %31 = arith.extui %30 : vector<16x16xi1> to vector<16x16xi32>
    %32 = arith.sitofp %31 : vector<16x16xi32> to vector<16x16xf32>
    %33 = arith.truncf %32 : vector<16x16xf32> to vector<16x16xbf16>
    %cst_14 = arith.constant dense<0.000000e+00> : vector<16x256xf32>
    %34 = tpu.matmul %33, %12, %cst_14 {dimension_numbers = #tpu.dot_dimension_numbers<[1], [0], [0], [1], [0, 0, 1, 1], [], []>} : vector<16x16xbf16>, vector<16x256xbf16>, vector<16x256xf32> -> vector<16x256xf32>
    %35 = arith.maximumf %27, %34 : vector<16x256xf32>
    %36 = vector.extract_strided_slice %1 {offsets = [0, 3], sizes = [16, 1], strides = [1, 1]} : vector<16x4xi32> to vector<16x1xi32>
    %37 = vector.broadcast %36 : vector<16x1xi32> to vector<16x16xi32>
    %38 = arith.cmpi eq, %37, %2 : vector<16x16xi32>
    %39 = arith.extui %38 : vector<16x16xi1> to vector<16x16xi32>
    %40 = arith.sitofp %39 : vector<16x16xi32> to vector<16x16xf32>
    %41 = arith.truncf %40 : vector<16x16xf32> to vector<16x16xbf16>
    %cst_15 = arith.constant dense<0.000000e+00> : vector<16x256xf32>
    %42 = tpu.matmul %41, %12, %cst_15 {dimension_numbers = #tpu.dot_dimension_numbers<[1], [0], [0], [1], [0, 0, 1, 1], [], []>} : vector<16x16xbf16>, vector<16x256xbf16>, vector<16x256xf32> -> vector<16x256xf32>
    %43 = arith.maximumf %35, %42 : vector<16x256xf32>
    %44 = arith.addf %43, %11 : vector<16x256xf32>
    %cst_16 = arith.constant 0.000000e+00 : f32
    %45 = vector.broadcast %cst_16 : f32 to vector<16x256xf32>
    %46 = arith.cmpf ogt, %44, %45 : vector<16x256xf32>
    %cst_17 = arith.constant 2.000000e-01 : f32
    %47 = vector.broadcast %cst_17 : f32 to vector<16x256xf32>
    %48 = arith.mulf %47, %44 : vector<16x256xf32>
    %49 = arith.select %46, %44, %48 : vector<16x256xi1>, vector<16x256xf32>
    %50 = arith.truncf %49 : vector<16x256xf32> to vector<16x256xbf16>
    %c0_18 = arith.constant 0 : index
    %c0_19 = arith.constant 0 : index
    %51 = vector.load %arg6[%c0_18, %c0_19] : memref<256x128xbf16, #tpu.memory_space<vmem>>, vector<256x128xbf16>
    %cst_20 = arith.constant dense<0.000000e+00> : vector<16x128xf32>
    %52 = tpu.matmul %50, %51, %cst_20 {dimension_numbers = #tpu.dot_dimension_numbers<[1], [0], [0], [1], [0, 0, 1, 1], [], []>} : vector<16x256xbf16>, vector<256x128xbf16>, vector<16x128xf32> -> vector<16x128xf32>
    %c0_21 = arith.constant 0 : index
    %c0_22 = arith.constant 0 : index
    %53 = vector.load %arg7[%c0_21, %c0_22] : memref<256x128xbf16, #tpu.memory_space<vmem>>, vector<256x128xbf16>
    %cst_23 = arith.constant dense<0.000000e+00> : vector<16x128xf32>
    %54 = tpu.matmul %50, %53, %cst_23 {dimension_numbers = #tpu.dot_dimension_numbers<[1], [0], [0], [1], [0, 0, 1, 1], [], []>} : vector<16x256xbf16>, vector<256x128xbf16>, vector<16x128xf32> -> vector<16x128xf32>
    %c0_24 = arith.constant 0 : index
    %c0_25 = arith.constant 0 : index
    %55 = vector.load %arg8[%c0_24, %c0_25] : memref<1x128xf32, #tpu.memory_space<vmem>>, vector<1x128xf32>
    %56 = vector.broadcast %55 : vector<1x128xf32> to vector<16x128xf32>
    %57 = arith.addf %54, %56 : vector<16x128xf32>
    %58 = arith.truncf %52 : vector<16x128xf32> to vector<16x128xbf16>
    %59 = vector.extract_strided_slice %1 {offsets = [0, 0], sizes = [16, 1], strides = [1, 1]} : vector<16x4xi32> to vector<16x1xi32>
    %60 = vector.broadcast %59 : vector<16x1xi32> to vector<16x16xi32>
    %61 = arith.cmpi eq, %60, %2 : vector<16x16xi32>
    %62 = arith.extui %61 : vector<16x16xi1> to vector<16x16xi32>
    %63 = arith.sitofp %62 : vector<16x16xi32> to vector<16x16xf32>
    %64 = arith.truncf %63 : vector<16x16xf32> to vector<16x16xbf16>
    %cst_26 = arith.constant dense<0.000000e+00> : vector<16x128xf32>
    %65 = tpu.matmul %64, %58, %cst_26 {dimension_numbers = #tpu.dot_dimension_numbers<[1], [0], [0], [1], [0, 0, 1, 1], [], []>} : vector<16x16xbf16>, vector<16x128xbf16>, vector<16x128xf32> -> vector<16x128xf32>
    %66 = vector.extract_strided_slice %1 {offsets = [0, 1], sizes = [16, 1], strides = [1, 1]} : vector<16x4xi32> to vector<16x1xi32>
    %67 = vector.broadcast %66 : vector<16x1xi32> to vector<16x16xi32>
    %68 = arith.cmpi eq, %67, %2 : vector<16x16xi32>
    %69 = arith.extui %68 : vector<16x16xi1> to vector<16x16xi32>
    %70 = arith.sitofp %69 : vector<16x16xi32> to vector<16x16xf32>
    %71 = arith.truncf %70 : vector<16x16xf32> to vector<16x16xbf16>
    %cst_27 = arith.constant dense<0.000000e+00> : vector<16x128xf32>
    %72 = tpu.matmul %71, %58, %cst_27 {dimension_numbers = #tpu.dot_dimension_numbers<[1], [0], [0], [1], [0, 0, 1, 1], [], []>} : vector<16x16xbf16>, vector<16x128xbf16>, vector<16x128xf32> -> vector<16x128xf32>
    %73 = arith.maximumf %65, %72 : vector<16x128xf32>
    %74 = vector.extract_strided_slice %1 {offsets = [0, 2], sizes = [16, 1], strides = [1, 1]} : vector<16x4xi32> to vector<16x1xi32>
    %75 = vector.broadcast %74 : vector<16x1xi32> to vector<16x16xi32>
    %76 = arith.cmpi eq, %75, %2 : vector<16x16xi32>
    %77 = arith.extui %76 : vector<16x16xi1> to vector<16x16xi32>
    %78 = arith.sitofp %77 : vector<16x16xi32> to vector<16x16xf32>
    %79 = arith.truncf %78 : vector<16x16xf32> to vector<16x16xbf16>
    %cst_28 = arith.constant dense<0.000000e+00> : vector<16x128xf32>
    %80 = tpu.matmul %79, %58, %cst_28 {dimension_numbers = #tpu.dot_dimension_numbers<[1], [0], [0], [1], [0, 0, 1, 1], [], []>} : vector<16x16xbf16>, vector<16x128xbf16>, vector<16x128xf32> -> vector<16x128xf32>
    %81 = arith.maximumf %73, %80 : vector<16x128xf32>
    %82 = vector.extract_strided_slice %1 {offsets = [0, 3], sizes = [16, 1], strides = [1, 1]} : vector<16x4xi32> to vector<16x1xi32>
    %83 = vector.broadcast %82 : vector<16x1xi32> to vector<16x16xi32>
    %84 = arith.cmpi eq, %83, %2 : vector<16x16xi32>
    %85 = arith.extui %84 : vector<16x16xi1> to vector<16x16xi32>
    %86 = arith.sitofp %85 : vector<16x16xi32> to vector<16x16xf32>
    %87 = arith.truncf %86 : vector<16x16xf32> to vector<16x16xbf16>
    %cst_29 = arith.constant dense<0.000000e+00> : vector<16x128xf32>
    %88 = tpu.matmul %87, %58, %cst_29 {dimension_numbers = #tpu.dot_dimension_numbers<[1], [0], [0], [1], [0, 0, 1, 1], [], []>} : vector<16x16xbf16>, vector<16x128xbf16>, vector<16x128xf32> -> vector<16x128xf32>
    %89 = arith.maximumf %81, %88 : vector<16x128xf32>
    %90 = arith.addf %89, %57 : vector<16x128xf32>
    %cst_30 = arith.constant 0.000000e+00 : f32
    %91 = vector.broadcast %cst_30 : f32 to vector<16x128xf32>
    %92 = arith.cmpf ogt, %90, %91 : vector<16x128xf32>
    %cst_31 = arith.constant 2.000000e-01 : f32
    %93 = vector.broadcast %cst_31 : f32 to vector<16x128xf32>
    %94 = arith.mulf %93, %90 : vector<16x128xf32>
    %95 = arith.select %92, %90, %94 : vector<16x128xi1>, vector<16x128xf32>
    %96 = arith.truncf %95 : vector<16x128xf32> to vector<16x128xbf16>
    %c0_32 = arith.constant 0 : index
    %c0_33 = arith.constant 0 : index
    %97 = vector.load %arg9[%c0_32, %c0_33] : memref<128x64xbf16, #tpu.memory_space<vmem>>, vector<128x64xbf16>
    %cst_34 = arith.constant dense<0.000000e+00> : vector<16x64xf32>
    %98 = tpu.matmul %96, %97, %cst_34 {dimension_numbers = #tpu.dot_dimension_numbers<[1], [0], [0], [1], [0, 0, 1, 1], [], []>} : vector<16x128xbf16>, vector<128x64xbf16>, vector<16x64xf32> -> vector<16x64xf32>
    %c0_35 = arith.constant 0 : index
    %c0_36 = arith.constant 0 : index
    %99 = vector.load %arg10[%c0_35, %c0_36] : memref<128x64xbf16, #tpu.memory_space<vmem>>, vector<128x64xbf16>
    %cst_37 = arith.constant dense<0.000000e+00> : vector<16x64xf32>
    %100 = tpu.matmul %96, %99, %cst_37 {dimension_numbers = #tpu.dot_dimension_numbers<[1], [0], [0], [1], [0, 0, 1, 1], [], []>} : vector<16x128xbf16>, vector<128x64xbf16>, vector<16x64xf32> -> vector<16x64xf32>
    %c0_38 = arith.constant 0 : index
    %c0_39 = arith.constant 0 : index
    %101 = vector.load %arg11[%c0_38, %c0_39] : memref<1x64xf32, #tpu.memory_space<vmem>>, vector<1x64xf32>
    %102 = vector.broadcast %101 : vector<1x64xf32> to vector<16x64xf32>
    %103 = arith.addf %100, %102 : vector<16x64xf32>
    %104 = arith.truncf %98 : vector<16x64xf32> to vector<16x64xbf16>
    %105 = vector.extract_strided_slice %1 {offsets = [0, 0], sizes = [16, 1], strides = [1, 1]} : vector<16x4xi32> to vector<16x1xi32>
    %106 = vector.broadcast %105 : vector<16x1xi32> to vector<16x16xi32>
    %107 = arith.cmpi eq, %106, %2 : vector<16x16xi32>
    %108 = arith.extui %107 : vector<16x16xi1> to vector<16x16xi32>
    %109 = arith.sitofp %108 : vector<16x16xi32> to vector<16x16xf32>
    %110 = arith.truncf %109 : vector<16x16xf32> to vector<16x16xbf16>
    %cst_40 = arith.constant dense<0.000000e+00> : vector<16x64xf32>
    %111 = tpu.matmul %110, %104, %cst_40 {dimension_numbers = #tpu.dot_dimension_numbers<[1], [0], [0], [1], [0, 0, 1, 1], [], []>} : vector<16x16xbf16>, vector<16x64xbf16>, vector<16x64xf32> -> vector<16x64xf32>
    %112 = vector.extract_strided_slice %1 {offsets = [0, 1], sizes = [16, 1], strides = [1, 1]} : vector<16x4xi32> to vector<16x1xi32>
    %113 = vector.broadcast %112 : vector<16x1xi32> to vector<16x16xi32>
    %114 = arith.cmpi eq, %113, %2 : vector<16x16xi32>
    %115 = arith.extui %114 : vector<16x16xi1> to vector<16x16xi32>
    %116 = arith.sitofp %115 : vector<16x16xi32> to vector<16x16xf32>
    %117 = arith.truncf %116 : vector<16x16xf32> to vector<16x16xbf16>
    %cst_41 = arith.constant dense<0.000000e+00> : vector<16x64xf32>
    %118 = tpu.matmul %117, %104, %cst_41 {dimension_numbers = #tpu.dot_dimension_numbers<[1], [0], [0], [1], [0, 0, 1, 1], [], []>} : vector<16x16xbf16>, vector<16x64xbf16>, vector<16x64xf32> -> vector<16x64xf32>
    %119 = arith.maximumf %111, %118 : vector<16x64xf32>
    %120 = vector.extract_strided_slice %1 {offsets = [0, 2], sizes = [16, 1], strides = [1, 1]} : vector<16x4xi32> to vector<16x1xi32>
    %121 = vector.broadcast %120 : vector<16x1xi32> to vector<16x16xi32>
    %122 = arith.cmpi eq, %121, %2 : vector<16x16xi32>
    %123 = arith.extui %122 : vector<16x16xi1> to vector<16x16xi32>
    %124 = arith.sitofp %123 : vector<16x16xi32> to vector<16x16xf32>
    %125 = arith.truncf %124 : vector<16x16xf32> to vector<16x16xbf16>
    %cst_42 = arith.constant dense<0.000000e+00> : vector<16x64xf32>
    %126 = tpu.matmul %125, %104, %cst_42 {dimension_numbers = #tpu.dot_dimension_numbers<[1], [0], [0], [1], [0, 0, 1, 1], [], []>} : vector<16x16xbf16>, vector<16x64xbf16>, vector<16x64xf32> -> vector<16x64xf32>
    %127 = arith.maximumf %119, %126 : vector<16x64xf32>
    %128 = vector.extract_strided_slice %1 {offsets = [0, 3], sizes = [16, 1], strides = [1, 1]} : vector<16x4xi32> to vector<16x1xi32>
    %129 = vector.broadcast %128 : vector<16x1xi32> to vector<16x16xi32>
    %130 = arith.cmpi eq, %129, %2 : vector<16x16xi32>
    %131 = arith.extui %130 : vector<16x16xi1> to vector<16x16xi32>
    %132 = arith.sitofp %131 : vector<16x16xi32> to vector<16x16xf32>
    %133 = arith.truncf %132 : vector<16x16xf32> to vector<16x16xbf16>
    %cst_43 = arith.constant dense<0.000000e+00> : vector<16x64xf32>
    %134 = tpu.matmul %133, %104, %cst_43 {dimension_numbers = #tpu.dot_dimension_numbers<[1], [0], [0], [1], [0, 0, 1, 1], [], []>} : vector<16x16xbf16>, vector<16x64xbf16>, vector<16x64xf32> -> vector<16x64xf32>
    %135 = arith.maximumf %127, %134 : vector<16x64xf32>
    %136 = arith.addf %135, %103 : vector<16x64xf32>
    %cst_44 = arith.constant 0.000000e+00 : f32
    %137 = vector.broadcast %cst_44 : f32 to vector<16x64xf32>
    %138 = arith.cmpf ogt, %136, %137 : vector<16x64xf32>
    %cst_45 = arith.constant 2.000000e-01 : f32
    %139 = vector.broadcast %cst_45 : f32 to vector<16x64xf32>
    %140 = arith.mulf %139, %136 : vector<16x64xf32>
    %141 = arith.select %138, %136, %140 : vector<16x64xi1>, vector<16x64xf32>
    %142 = arith.truncf %141 : vector<16x64xf32> to vector<16x64xbf16>
    %c0_46 = arith.constant 0 : index
    %c0_47 = arith.constant 0 : index
    %143 = vector.load %arg12[%c0_46, %c0_47] : memref<256x512xbf16, #tpu.memory_space<vmem>>, vector<256x512xbf16>
    %cst_48 = arith.constant dense<0.000000e+00> : vector<16x512xf32>
    %144 = tpu.matmul %50, %143, %cst_48 {dimension_numbers = #tpu.dot_dimension_numbers<[1], [0], [0], [1], [0, 0, 1, 1], [], []>} : vector<16x256xbf16>, vector<256x512xbf16>, vector<16x512xf32> -> vector<16x512xf32>
    %c0_49 = arith.constant 0 : index
    %c0_50 = arith.constant 0 : index
    %145 = vector.load %arg13[%c0_49, %c0_50] : memref<128x512xbf16, #tpu.memory_space<vmem>>, vector<128x512xbf16>
    %cst_51 = arith.constant dense<0.000000e+00> : vector<16x512xf32>
    %146 = tpu.matmul %96, %145, %cst_51 {dimension_numbers = #tpu.dot_dimension_numbers<[1], [0], [0], [1], [0, 0, 1, 1], [], []>} : vector<16x128xbf16>, vector<128x512xbf16>, vector<16x512xf32> -> vector<16x512xf32>
    %147 = arith.addf %144, %146 : vector<16x512xf32>
    %c0_52 = arith.constant 0 : index
    %c0_53 = arith.constant 0 : index
    %148 = vector.load %arg14[%c0_52, %c0_53] : memref<64x512xbf16, #tpu.memory_space<vmem>>, vector<64x512xbf16>
    %cst_54 = arith.constant dense<0.000000e+00> : vector<16x512xf32>
    %149 = tpu.matmul %142, %148, %cst_54 {dimension_numbers = #tpu.dot_dimension_numbers<[1], [0], [0], [1], [0, 0, 1, 1], [], []>} : vector<16x64xbf16>, vector<64x512xbf16>, vector<16x512xf32> -> vector<16x512xf32>
    %150 = arith.addf %147, %149 : vector<16x512xf32>
    %c0_55 = arith.constant 0 : index
    %c0_56 = arith.constant 0 : index
    %151 = vector.load %arg15[%c0_55, %c0_56] : memref<1x512xf32, #tpu.memory_space<vmem>>, vector<1x512xf32>
    %152 = vector.broadcast %151 : vector<1x512xf32> to vector<16x512xf32>
    %153 = arith.addf %150, %152 : vector<16x512xf32>
    %cst_57 = arith.constant 0.000000e+00 : f32
    %154 = vector.broadcast %cst_57 : f32 to vector<16x512xf32>
    %155 = arith.cmpf ogt, %153, %154 : vector<16x512xf32>
    %cst_58 = arith.constant 2.000000e-01 : f32
    %156 = vector.broadcast %cst_58 : f32 to vector<16x512xf32>
    %157 = arith.mulf %156, %153 : vector<16x512xf32>
    %158 = arith.select %155, %153, %157 : vector<16x512xi1>, vector<16x512xf32>
    %159 = arith.truncf %158 : vector<16x512xf32> to vector<16x512xbf16>
    %c0_59 = arith.constant 0 : index
    %c0_60 = arith.constant 0 : index
    %160 = vector.load %arg16[%c0_59, %c0_60] : memref<512x256xbf16, #tpu.memory_space<vmem>>, vector<512x256xbf16>
    %cst_61 = arith.constant dense<0.000000e+00> : vector<16x256xf32>
    %161 = tpu.matmul %159, %160, %cst_61 {dimension_numbers = #tpu.dot_dimension_numbers<[1], [0], [0], [1], [0, 0, 1, 1], [], []>} : vector<16x512xbf16>, vector<512x256xbf16>, vector<16x256xf32> -> vector<16x256xf32>
    %c0_62 = arith.constant 0 : index
    %c0_63 = arith.constant 0 : index
    %162 = vector.load %arg17[%c0_62, %c0_63] : memref<1x256xf32, #tpu.memory_space<vmem>>, vector<1x256xf32>
    %163 = vector.broadcast %162 : vector<1x256xf32> to vector<16x256xf32>
    %164 = arith.addf %161, %163 : vector<16x256xf32>
    %cst_64 = arith.constant 0.000000e+00 : f32
    %165 = vector.broadcast %cst_64 : f32 to vector<16x256xf32>
    %166 = arith.cmpf ogt, %164, %165 : vector<16x256xf32>
    %cst_65 = arith.constant 2.000000e-01 : f32
    %167 = vector.broadcast %cst_65 : f32 to vector<16x256xf32>
    %168 = arith.mulf %167, %164 : vector<16x256xf32>
    %169 = arith.select %166, %164, %168 : vector<16x256xi1>, vector<16x256xf32>
    %170 = arith.truncf %169 : vector<16x256xf32> to vector<16x256xbf16>
    %c0_66 = arith.constant 0 : index
    %c0_67 = arith.constant 0 : index
    %171 = vector.load %arg18[%c0_66, %c0_67] : memref<256x128xbf16, #tpu.memory_space<vmem>>, vector<256x128xbf16>
    %cst_68 = arith.constant dense<0.000000e+00> : vector<16x128xf32>
    %172 = tpu.matmul %170, %171, %cst_68 {dimension_numbers = #tpu.dot_dimension_numbers<[1], [0], [0], [1], [0, 0, 1, 1], [], []>} : vector<16x256xbf16>, vector<256x128xbf16>, vector<16x128xf32> -> vector<16x128xf32>
    %c0_69 = arith.constant 0 : index
    %c0_70 = arith.constant 0 : index
    %173 = vector.load %arg19[%c0_69, %c0_70] : memref<1x128xf32, #tpu.memory_space<vmem>>, vector<1x128xf32>
    %174 = vector.broadcast %173 : vector<1x128xf32> to vector<16x128xf32>
    %175 = arith.addf %172, %174 : vector<16x128xf32>
    %c0_71 = arith.constant 0 : index
    %c0_72 = arith.constant 0 : index
    %c0_73 = arith.constant 0 : index
    %176 = vector.load %arg20[%c0_71, %c0_72, %c0_73] : memref<1x16x128xf32, #tpu.memory_space<vmem>>, vector<1x16x128xf32>
    %177 = vector.shape_cast %176 : vector<1x16x128xf32> to vector<16x128xf32>
    %178 = vector.shape_cast %175 : vector<16x128xf32> to vector<1x16x128xf32>
    tpu.vector_store %arg20[%c0_71, %c0_72, %c0_73], %178 {strides = array<i32>} : memref<1x16x128xf32, #tpu.memory_space<vmem>>, vector<1x16x128xf32>,
    return
  }
  func.func @transform_0(%arg0: i32) -> (i32, i32, i32) {
    %c0_i32 = arith.constant 0 : i32
    %c0_i32_0 = arith.constant 0 : i32
    %c0_i32_1 = arith.constant 0 : i32
    return %arg0, %c0_i32, %c0_i32_0 : i32, i32, i32
  }
  func.func @transform_1(%arg0: i32) -> (i32, i32, i32) {
    %c0_i32 = arith.constant 0 : i32
    %c0_i32_0 = arith.constant 0 : i32
    %c0_i32_1 = arith.constant 0 : i32
    return %arg0, %c0_i32, %c0_i32_0 : i32, i32, i32
  }
  func.func @transform_2(%arg0: i32) -> (i32, i32) {
    %c0_i32 = arith.constant 0 : i32
    %c0_i32_0 = arith.constant 0 : i32
    %c0_i32_1 = arith.constant 0 : i32
    return %c0_i32, %c0_i32_0 : i32, i32
  }
  func.func @transform_3(%arg0: i32) -> (i32, i32) {
    %c0_i32 = arith.constant 0 : i32
    %c0_i32_0 = arith.constant 0 : i32
    %c0_i32_1 = arith.constant 0 : i32
    return %c0_i32, %c0_i32_0 : i32, i32
  }
  func.func @transform_4(%arg0: i32) -> (i32, i32) {
    %c0_i32 = arith.constant 0 : i32
    %c0_i32_0 = arith.constant 0 : i32
    %c0_i32_1 = arith.constant 0 : i32
    return %c0_i32, %c0_i32_0 : i32, i32
  }
  func.func @transform_5(%arg0: i32) -> (i32, i32) {
    %c0_i32 = arith.constant 0 : i32
    %c0_i32_0 = arith.constant 0 : i32
    %c0_i32_1 = arith.constant 0 : i32
    return %c0_i32, %c0_i32_0 : i32, i32
  }
  func.func @transform_6(%arg0: i32) -> (i32, i32) {
    %c0_i32 = arith.constant 0 : i32
    %c0_i32_0 = arith.constant 0 : i32
    %c0_i32_1 = arith.constant 0 : i32
    return %c0_i32, %c0_i32_0 : i32, i32
  }
  func.func @transform_7(%arg0: i32) -> (i32, i32) {
    %c0_i32 = arith.constant 0 : i32
    %c0_i32_0 = arith.constant 0 : i32
    %c0_i32_1 = arith.constant 0 : i32
    return %c0_i32, %c0_i32_0 : i32, i32
  }
  func.func @transform_8(%arg0: i32) -> (i32, i32) {
    %c0_i32 = arith.constant 0 : i32
    %c0_i32_0 = arith.constant 0 : i32
    %c0_i32_1 = arith.constant 0 : i32
    return %c0_i32, %c0_i32_0 : i32, i32
  }
  func.func @transform_9(%arg0: i32) -> (i32, i32) {
    %c0_i32 = arith.constant 0 : i32
    %c0_i32_0 = arith.constant 0 : i32
    %c0_i32_1 = arith.constant 0 : i32
    return %c0_i32, %c0_i32_0 : i32, i32
  }
  func.func @transform_10(%arg0: i32) -> (i32, i32) {
    %c0_i32 = arith.constant 0 : i32
    %c0_i32_0 = arith.constant 0 : i32
    %c0_i32_1 = arith.constant 0 : i32
    return %c0_i32, %c0_i32_0 : i32, i32
  }
  func.func @transform_11(%arg0: i32) -> (i32, i32) {
    %c0_i32 = arith.constant 0 : i32
    %c0_i32_0 = arith.constant 0 : i32
    %c0_i32_1 = arith.constant 0 : i32
    return %c0_i32, %c0_i32_0 : i32, i32
  }
  func.func @transform_12(%arg0: i32) -> (i32, i32) {
    %c0_i32 = arith.constant 0 : i32
    %c0_i32_0 = arith.constant 0 : i32
    %c0_i32_1 = arith.constant 0 : i32
    return %c0_i32, %c0_i32_0 : i32, i32
  }
  func.func @transform_13(%arg0: i32) -> (i32, i32) {
    %c0_i32 = arith.constant 0 : i32
    %c0_i32_0 = arith.constant 0 : i32
    %c0_i32_1 = arith.constant 0 : i32
    return %c0_i32, %c0_i32_0 : i32, i32
  }
  func.func @transform_14(%arg0: i32) -> (i32, i32) {
    %c0_i32 = arith.constant 0 : i32
    %c0_i32_0 = arith.constant 0 : i32
    %c0_i32_1 = arith.constant 0 : i32
    return %c0_i32, %c0_i32_0 : i32, i32
  }
  func.func @transform_15(%arg0: i32) -> (i32, i32) {
    %c0_i32 = arith.constant 0 : i32
    %c0_i32_0 = arith.constant 0 : i32
    %c0_i32_1 = arith.constant 0 : i32
    return %c0_i32, %c0_i32_0 : i32, i32
  }
  func.func @transform_16(%arg0: i32) -> (i32, i32) {
    %c0_i32 = arith.constant 0 : i32
    %c0_i32_0 = arith.constant 0 : i32
    %c0_i32_1 = arith.constant 0 : i32
    return %c0_i32, %c0_i32_0 : i32, i32
  }
  func.func @transform_17(%arg0: i32) -> (i32, i32) {
    %c0_i32 = arith.constant 0 : i32
    %c0_i32_0 = arith.constant 0 : i32
    %c0_i32_1 = arith.constant 0 : i32
    return %c0_i32, %c0_i32_0 : i32, i32
  }
  func.func @transform_18(%arg0: i32) -> (i32, i32) {
    %c0_i32 = arith.constant 0 : i32
    %c0_i32_0 = arith.constant 0 : i32
    %c0_i32_1 = arith.constant 0 : i32
    return %c0_i32, %c0_i32_0 : i32, i32
  }
  func.func @transform_19(%arg0: i32) -> (i32, i32, i32) {
    %c0_i32 = arith.constant 0 : i32
    %c0_i32_0 = arith.constant 0 : i32
    %c0_i32_1 = arith.constant 0 : i32
    return %arg0, %c0_i32, %c0_i32_0 : i32, i32, i32
  }
}

</mosaic_0001>

<llo_original>
// kernel: _lambda_.8
$region0: #{_lambda_.8}
  #allocation0 [shape = 'u32[]', space=smem, size = 0x4, offset = 0x4, fixed_abs, tag = 'smem constant byte address 0x4 - core index']
  #allocation1 [shape = 'u32[144,128]{1,0:T(1,128)}', space=vmem, size = 0x12000, scoped, tag = 'internal scratch']
  %s0 = inlined_call_operand.vmem [shape: f32[2,64,3], index: 0, kind: input, shape index: {}, may-alias: {0,1}]
  %s1 = inlined_call_operand.vmem [shape: f32[2,64,3], index: 1, kind: input, shape index: {}, may-alias: {0,1}]
  %s2 = inlined_call_operand.vmem [shape: f32[2,1,64], index: 2, kind: input, shape index: {}]
  %s3 = inlined_call_operand.vmem [shape: bf16[2,64,64], index: 3, kind: output, shape index: {}]
  %s4 = sld [smem:[#allocation0]]
  $region45: #{_lambda_.8} parent=0
    _
  %s6 = ssub.s32 1, %s4
  %s7 = scalar_select 0, %s6, %s4
  loop: start=0, step=1, limit=4
  $region2: #{_lambda_.8} parent=0 // loop_pre_header
    _
  $region3: #{_lambda_.8} parent=0 // loop_header
    %s9 = sphi 0, %s13
    %p10 = scmp.ge.s32.totalorder %s9, 4
    %s16 = sphi 0, %s28
    %s17 = sphi 0, %s24
    %s18 = sphi 0, %s16
    %s19 = sphi 0, %s17
    %s20 = sphi 0, %s18
    %s21 = sphi 0, %s19
    %s33 = sphi 0, %s35
    %s36 = sphi 0, %s33
    %s37 = sphi 0, %s36
    %s53 = sphi 0, %s37
    %s59 = sphi 0, %s61
    %s62 = sphi 0, %s59
    %s63 = sphi 0, %s62
    %s79 = sphi 0, %s63
    %s85 = sphi 0, %s87
    %s88 = sphi 0, %s85
    %s89 = sphi 0, %s88
    %s105 = sphi 0, %s89
    %s113 = sphi 0, %s115
    %s116 = sphi 0, %s113
    %s117 = sphi 0, %s116
    %s133 = sphi 0, %s117
  $region4: #{_lambda_.8} parent=0 // loop_header_branch
    %12 = sbr.rel (%p10) target = $region8
  $region5: #{_lambda_.8} parent=0 // loop_body
    %s14 = ssub.s32 %s9, 1
    %s15 = ssub.s32 %s9, 2
    %s22 = sadd.s32 1, %s17
    %p23 = scmp.ge.s32.totalorder %s22, 1
    %s24 = scalar_select %p23, 0, %s22
    %s25 = sadd.s32 1, %s16
    %s26 = scalar_select %p23, %s25, %s16
    %p27 = scmp.ge.s32.totalorder %s26, 2
    %s28 = scalar_select %p27, 0, %s26
    %s29 = ssub.s32 %s16, %s28
    %s30 = ssub.s32 %s17, %s24
    %s31 = sor.u32 %s29, %s30
    %p32 = scmp.eq.s32.totalorder %s31, 0
    %s34 = sadd.s32 %s33, 1
    %s35 = scalar_select %p32, %s33, %s34
    %p38 = pneg %p32
    %p39 = scmp.eq.s32.totalorder %s9, 1
    %p40 = por %p38, %p39
    %p41 = scmp.ne.s32.totalorder %s33, %s36
    %p42 = scmp.eq.s32.totalorder %s9, 0
    %p43 = por %p41, %p42
    %p44 = scmp.ne.s32.totalorder %s33, %s36
    %p45 = scmp.eq.s32.totalorder %s14, 1
    %p46 = por %p44, %p45
    %p47 = scmp.ne.s32.totalorder %s36, %s37
    %p48 = scmp.eq.s32.totalorder %s14, 0
    %p49 = por %p47, %p48
    %p50 = scmp.ne.s32.totalorder %s36, %s37
    %p51 = scmp.eq.s32.totalorder %s15, 1
    %p52 = por %p50, %p51
    %p54 = scmp.ne.s32.totalorder %s37, %s53
    %p55 = scmp.eq.s32.totalorder %s15, 0
    %p56 = por %p54, %p55
    %s57 = ssub.s32 %s16, %s28
    %p58 = scmp.eq.s32.totalorder %s57, 0
    %s60 = sadd.s32 %s59, 1
    %s61 = scalar_select %p58, %s59, %s60
    %p64 = pneg %p58
    %p65 = scmp.eq.s32.totalorder %s9, 1
    %p66 = por %p64, %p65
    %p67 = scmp.ne.s32.totalorder %s59, %s62
    %p68 = scmp.eq.s32.totalorder %s9, 0
    %p69 = por %p67, %p68
    %p70 = scmp.ne.s32.totalorder %s59, %s62
    %p71 = scmp.eq.s32.totalorder %s14, 1
    %p72 = por %p70, %p71
    %p73 = scmp.ne.s32.totalorder %s62, %s63
    %p74 = scmp.eq.s32.totalorder %s14, 0
    %p75 = por %p73, %p74
    %p76 = scmp.ne.s32.totalorder %s62, %s63
    %p77 = scmp.eq.s32.totalorder %s15, 1
    %p78 = por %p76, %p77
    %p80 = scmp.ne.s32.totalorder %s63, %s79
    %p81 = scmp.eq.s32.totalorder %s15, 0
    %p82 = por %p80, %p81
    %s83 = ssub.s32 %s16, %s28
    %p84 = scmp.eq.s32.totalorder %s83, 0
    %s86 = sadd.s32 %s85, 1
    %s87 = scalar_select %p84, %s85, %s86
    %p90 = pneg %p84
    %p91 = scmp.eq.s32.totalorder %s9, 1
    %p92 = por %p90, %p91
    %p93 = scmp.ne.s32.totalorder %s85, %s88
    %p94 = scmp.eq.s32.totalorder %s9, 0
    %p95 = por %p93, %p94
    %p96 = scmp.ne.s32.totalorder %s85, %s88
    %p97 = scmp.eq.s32.totalorder %s14, 1
    %p98 = por %p96, %p97
    %p99 = scmp.ne.s32.totalorder %s88, %s89
    %p100 = scmp.eq.s32.totalorder %s14, 0
    %p101 = por %p99, %p100
    %p102 = scmp.ne.s32.totalorder %s88, %s89
    %p103 = scmp.eq.s32.totalorder %s15, 1
    %p104 = por %p102, %p103
    %p106 = scmp.ne.s32.totalorder %s89, %s105
    %p107 = scmp.eq.s32.totalorder %s15, 0
    %p108 = por %p106, %p107
    %s109 = ssub.s32 %s16, %s28
    %s110 = ssub.s32 %s17, %s24
    %s111 = sor.u32 %s109, %s110
    %p112 = scmp.eq.s32.totalorder %s111, 0
    %s114 = sadd.s32 %s113, 1
    %s115 = scalar_select %p112, %s113, %s114
    %p118 = pneg %p112
    %p119 = scmp.eq.s32.totalorder %s9, 1
    %p120 = por %p118, %p119
    %p121 = scmp.ne.s32.totalorder %s113, %s116
    %p122 = scmp.eq.s32.totalorder %s9, 0
    %p123 = por %p121, %p122
    %p124 = scmp.ne.s32.totalorder %s113, %s116
    %p125 = scmp.eq.s32.totalorder %s14, 1
    %p126 = por %p124, %p125
    %p127 = scmp.ne.s32.totalorder %s116, %s117
    %p128 = scmp.eq.s32.totalorder %s14, 0
    %p129 = por %p127, %p128
    %p130 = scmp.ne.s32.totalorder %s116, %s117
    %p131 = scmp.eq.s32.totalorder %s15, 1
    %p132 = por %p130, %p131
    %p134 = scmp.ne.s32.totalorder %s117, %s133
    %p135 = scmp.eq.s32.totalorder %s15, 0
    %p136 = por %p134, %p135
    %p137 = scmp.le.s32.totalorder 1, %s9
    %p138 = scmp.lt.s32.totalorder %s9, 3
    %p139 = pnand %p137, %p138
    %p140 = pneg %p139
    // Predicated region
    $region9: #{_lambda_.8} parent=5 // pred_check
      _
    $region10: #{_lambda_.8} parent=5 // pred_check_branch
      %142 = sbr.rel (%p139) target = $region12
    $region11: #{_lambda_.8} parent=5 // pred_region
      %s143 = ssub.s32 %s9, 1
    $region12: #{_lambda_.8} parent=5 // pred_fallthru
      _
    %p144 = scmp.lt.s32.totalorder %s9, 2
    // Predicated region
    $region13: #{_lambda_.8} parent=5 // pred_check
      %p145 = pneg %p144
    $region14: #{_lambda_.8} parent=5 // pred_check_branch
      %147 = sbr.rel (%p145) target = $region16
    $region15: #{_lambda_.8} parent=5 // pred_region
      // Predicated region
      $region17: #{_lambda_.8} parent=15 // pred_check
        %p148 = pneg %p43
      $region18: #{_lambda_.8} parent=15 // pred_check_branch
        %150 = sbr.rel (%p148) target = $region20
      $region19: #{_lambda_.8} parent=15 // pred_region
        %s151 = smul.u32 8, %s17
        %p152 = scmp.lt.s32.totalorder %s16, 1
        %s153 = scalar_select %p152, %s16, 1
        %p154 = scmp.lt.s32.totalorder %s151, 7
        %s155 = scalar_select %p154, %s151, 7
        %s156 = smul.addr %s153, 8
        %s157 = sadd.s32 %s155, %s156
        %s158 = smul.addr %s157, 8
        %s159 = scalar_lea.vmem %s0, %s158
        %s160 = smul.u32 8, %s17
      $region20: #{_lambda_.8} parent=15 // pred_fallthru
        _
      // Predicated region
      $region21: #{_lambda_.8} parent=15 // pred_check
        %p161 = pneg %p69
      $region22: #{_lambda_.8} parent=15 // pred_check_branch
        %163 = sbr.rel (%p161) target = $region24
      $region23: #{_lambda_.8} parent=15 // pred_region
        %p164 = scmp.lt.s32.totalorder %s16, 1
        %s165 = scalar_select %p164, %s16, 1
        %s166 = smul.addr %s165, 8
        %s167 = smul.addr %s166, 8
        %s168 = scalar_lea.vmem %s1, %s167
      $region24: #{_lambda_.8} parent=15 // pred_fallthru
        _
      // Predicated region
      $region25: #{_lambda_.8} parent=15 // pred_check
        %p169 = pneg %p95
      $region26: #{_lambda_.8} parent=15 // pred_check_branch
        %171 = sbr.rel (%p169) target = $region28
      $region27: #{_lambda_.8} parent=15 // pred_region
        %p172 = scmp.lt.s32.totalorder %s16, 1
        %s173 = scalar_select %p172, %s16, 1
        %s174 = scalar_lea.vmem %s2, %s173
      $region28: #{_lambda_.8} parent=15 // pred_fallthru
        _
    $region16: #{_lambda_.8} parent=5 // pred_fallthru
      _
    %p175 = scmp.le.s32.totalorder 1, %s9
    %p176 = scmp.lt.s32.totalorder %s9, 3
    %p177 = pnand %p175, %p176
    %p178 = pneg %p177
    // Predicated region
    $region29: #{_lambda_.8} parent=5 // pred_check
      _
    $region30: #{_lambda_.8} parent=5 // pred_check_branch
      %180 = sbr.rel (%p177) target = $region32
    $region31: #{_lambda_.8} parent=5 // pred_region
      %s181 = ssub.s32 %s9, 1
      %s182 = smul.u32 8, %s19
      %p183 = scmp.lt.s32.totalorder %s18, 1
      %s184 = scalar_select %p183, %s18, 1
      %p185 = scmp.lt.s32.totalorder %s182, 7
      %s186 = scalar_select %p185, %s182, 7
      %s187 = smul.addr %s184, 8
      %s188 = sadd.s32 %s186, %s187
      %s189 = smul.addr %s188, 8
      %s190 = scalar_lea.vmem %s0, %s189
      %p191 = pneg %p49
      %p192 = pneg %p46
      %p193 = scmp.lt.s32.totalorder %s18, 1
      %s194 = scalar_select %p193, %s18, 1
      %s195 = smul.addr %s194, 8
      %s196 = smul.addr %s195, 8
      %s197 = scalar_lea.vmem %s1, %s196
      %p198 = pneg %p75
      %p199 = pneg %p72
      %p200 = scmp.lt.s32.totalorder %s18, 1
      %s201 = scalar_select %p200, %s18, 1
      %s202 = scalar_lea.vmem %s2, %s201
      %p203 = pneg %p101
      %p204 = pneg %p98
      %p205 = pneg %p129
      %p206 = pneg %p126
      %s207 = smul.u32 8, %s19
      %p208 = scmp.lt.s32.totalorder %s18, 1
      %s209 = scalar_select %p208, %s18, 1
      %p210 = scmp.lt.s32.totalorder %s207, 7
      %s211 = scalar_select %p210, %s207, 7
      %s212 = smul.addr %s209, 8
      %s213 = sadd.s32 %s211, %s212
      %s214 = smul.addr %s213, 4
      %s215 = scalar_lea.vmem %s3, %s214
      %s216 = smul.u32 8, %s19
      %p217 = scmp.lt.s32.totalorder %s18, 1
      %s218 = scalar_select %p217, %s18, 1
      %p219 = scmp.lt.s32.totalorder %s216, 7
      %s220 = scalar_select %p219, %s216, 7
      %s221 = smul.addr %s218, 8
      %s222 = sadd.s32 %s220, %s221
      %s223 = smul.addr %s222, 8
      %s224 = scalar_lea.vmem %s0, %s223
      %s225 = smul.u32 8, %s19
      %p226 = scmp.lt.s32.totalorder %s18, 1
      %s227 = scalar_select %p226, %s18, 1
      %s228 = smul.addr %s227, 8
      %s229 = smul.addr %s228, 8
      %s230 = scalar_lea.vmem %s1, %s229
      %p231 = scmp.lt.s32.totalorder %s18, 1
      %s232 = scalar_select %p231, %s18, 1
      %s233 = scalar_lea.vmem %s2, %s232
      %s234 = smul.u32 8, %s19
      %p235 = scmp.lt.s32.totalorder %s18, 1
      %s236 = scalar_select %p235, %s18, 1
      %p237 = scmp.lt.s32.totalorder %s234, 7
      %s238 = scalar_select %p237, %s234, 7
      %s239 = smul.addr %s236, 8
      %s240 = sadd.s32 %s238, %s239
      %s241 = smul.addr %s240, 4
      %s242 = scalar_lea.vmem %s3, %s241
      %s243 = smul.u32 8, %s19
      %v244 = vld [vmem:[%s224] sm:$0xff]
      %v245 = vld [vmem:[%s224 + $0x8] sm:$0xff]
      %v246 = vld [vmem:[%s224 + $0x10] sm:$0xff]
      %v247 = vld [vmem:[%s224 + $0x18] sm:$0xff]
      %v248 = vld [vmem:[%s224 + $0x20] sm:$0xff]
      %v249 = vld [vmem:[%s224 + $0x28] sm:$0xff]
      %v250 = vld [vmem:[%s224 + $0x30] sm:$0xff]
      %v251 = vld [vmem:[%s224 + $0x38] sm:$0xff]
      %v252 = vld [vmem:[%s230] sm:$0xff]
      %v253 = vld [vmem:[%s230 + $0x8] sm:$0xff]
      %v254 = vld [vmem:[%s230 + $0x10] sm:$0xff]
      %v255 = vld [vmem:[%s230 + $0x18] sm:$0xff]
      %v256 = vld [vmem:[%s230 + $0x20] sm:$0xff]
      %v257 = vld [vmem:[%s230 + $0x28] sm:$0xff]
      %v258 = vld [vmem:[%s230 + $0x30] sm:$0xff]
      %v259 = vld [vmem:[%s230 + $0x38] sm:$0xff]
      %vm260 = vcmask 23552
      %v262 = vsel %vm260, %v244, 0
      %v265 = vsel %vm260, %v245, 0
      %v268 = vsel %vm260, %v246, 0
      %v271 = vsel %vm260, %v247, 0
      %v274 = vsel %vm260, %v248, 0
      %v277 = vsel %vm260, %v249, 0
      %v280 = vsel %vm260, %v250, 0
      %v283 = vsel %vm260, %v251, 0
      %v286 = vsel %vm260, %v252, 0
      %v289 = vsel %vm260, %v253, 0
      %v292 = vsel %vm260, %v254, 0
      %v295 = vsel %vm260, %v255, 0
      %v298 = vsel %vm260, %v256, 0
      %v301 = vsel %vm260, %v257, 0
      %v304 = vsel %vm260, %v258, 0
      %v307 = vsel %vm260, %v259, 0
      %309 = vmatprep.subr.mxu0 0.0
      %310 = vmatpush1.xpose.msra.mxu0 %v286
      %311 = vmatprep.subr.mxu0 0.0
      %312 = vmatpush1.xpose.msra.mxu0 %v289
      %313 = vmatprep.subr.mxu0 0.0
      %314 = vmatpush1.xpose.msra.mxu0 %v292
      %315 = vmatprep.subr.mxu0 0.0
      %316 = vmatpush1.xpose.msra.mxu0 %v295
      %317 = vmatprep.subr.mxu0 0.0
      %318 = vmatpush1.xpose.msra.mxu0 %v298
      %319 = vmatprep.subr.mxu0 0.0
      %320 = vmatpush1.xpose.msra.mxu0 %v301
      %321 = vmatprep.subr.mxu0 0.0
      %322 = vmatpush1.xpose.msra.mxu0 %v304
      %323 = vmatprep.subr.mxu0 0.0
      %324 = vmatpush1.xpose.msra.mxu0 %v307
      %325 = vmatprep.subr.mxu0 0.0
      %326 = vmatpush1.xpose.msra.mxu0 0.0
      %327 = vmatprep.subr.mxu0 0.0
      %328 = vmatpush1.xpose.msra.mxu0 0.0
      %329 = vmatprep.subr.mxu0 0.0
      %330 = vmatpush1.xpose.msra.mxu0 0.0
      %331 = vmatprep.subr.mxu0 0.0
      %332 = vmatpush1.xpose.msra.mxu0 0.0
      %333 = vmatprep.subr.mxu0 0.0
      %334 = vmatpush1.xpose.msra.mxu0 0.0
      %335 = vmatprep.subr.mxu0 0.0
      %336 = vmatpush1.xpose.msra.mxu0 0.0
      %337 = vmatprep.subr.mxu0 0.0
      %338 = vmatpush1.xpose.msra.mxu0 0.0
      %339 = vmatprep.subr.mxu0 0.0
      %340 = vmatpush1.xpose.msra.mxu0 0.0
      %341 = vmatprep.subr.mxu0 0.0
      %342 = vmatpush1.xpose.msra.mxu0 0.0
      %343 = vmatprep.subr.mxu0 0.0
      %344 = vmatpush1.xpose.msra.mxu0 0.0
      %345 = vmatprep.subr.mxu0 0.0
      %346 = vmatpush1.xpose.msra.mxu0 0.0
      %347 = vmatprep.subr.mxu0 0.0
      %348 = vmatpush1.xpose.msra.mxu0 0.0
      %349 = vmatprep.subr.mxu0 0.0
      %350 = vmatpush1.xpose.msra.mxu0 0.0
      %351 = vmatprep.subr.mxu0 0.0
      %352 = vmatpush1.xpose.msra.mxu0 0.0
      %353 = vmatprep.subr.mxu0 0.0
      %354 = vmatpush1.xpose.msra.mxu0 0.0
      %355 = vmatprep.subr.mxu0 0.0
      %356 = vmatpush1.xpose.msra.mxu0 0.0
      %357 = vmatprep.subr.mxu0 0.0
      %358 = vmatpush1.xpose.msra.mxu0 0.0
      %359 = vmatprep.subr.mxu0 0.0
      %360 = vmatpush1.xpose.msra.mxu0 0.0
      %361 = vmatprep.subr.mxu0 0.0
      %362 = vmatpush1.xpose.msra.mxu0 0.0
      %363 = vmatprep.subr.mxu0 0.0
      %364 = vmatpush1.xpose.msra.mxu0 0.0
      %365 = vmatprep.subr.mxu0 0.0
      %366 = vmatpush1.xpose.msra.mxu0 0.0
      %367 = vmatprep.subr.mxu0 0.0
      %368 = vmatpush1.xpose.msra.mxu0 0.0
      %369 = vmatprep.subr.mxu0 0.0
      %370 = vmatpush1.xpose.msra.mxu0 0.0
      %371 = vmatprep.subr.mxu0 0.0
      %372 = vmatpush1.xpose.msra.mxu0 0.0
      %373 = vmatprep.mubr.f32.mxu0 0.0
      %374 = vmatmul.mubr.f32.gmra.mrb[0].mxu0 %v262
      %v375 = vpop.f32.mrb[0].mxu0
      %v376 = vadd.f32 0.0, %v375
      %v377 = vpop.f32.mrb[0].mxu0
      %378 = vmatprep.mubr.f32.mxu0 0.0
      %379 = vmatmul.mubr.f32.gmra.mrb[0].mxu0 %v265
      %v380 = vpop.f32.mrb[0].mxu0
      %v381 = vadd.f32 0.0, %v380
      %v382 = vpop.f32.mrb[0].mxu0
      %383 = vmatprep.mubr.f32.mxu0 0.0
      %384 = vmatmul.mubr.f32.gmra.mrb[0].mxu0 %v268
      %v385 = vpop.f32.mrb[0].mxu0
      %v386 = vadd.f32 0.0, %v385
      %v387 = vpop.f32.mrb[0].mxu0
      %388 = vmatprep.mubr.f32.mxu0 0.0
      %389 = vmatmul.mubr.f32.gmra.mrb[0].mxu0 %v271
      %v390 = vpop.f32.mrb[0].mxu0
      %v391 = vadd.f32 0.0, %v390
      %v392 = vpop.f32.mrb[0].mxu0
      %393 = vmatprep.mubr.f32.mxu0 0.0
      %394 = vmatmul.mubr.f32.gmra.mrb[0].mxu0 %v274
      %v395 = vpop.f32.mrb[0].mxu0
      %v396 = vadd.f32 0.0, %v395
      %v397 = vpop.f32.mrb[0].mxu0
      %398 = vmatprep.mubr.f32.mxu0 0.0
      %399 = vmatmul.mubr.f32.gmra.mrb[0].mxu0 %v277
      %v400 = vpop.f32.mrb[0].mxu0
      %v401 = vadd.f32 0.0, %v400
      %v402 = vpop.f32.mrb[0].mxu0
      %403 = vmatprep.mubr.f32.mxu0 0.0
      %404 = vmatmul.mubr.f32.gmra.mrb[0].mxu0 %v280
      %v405 = vpop.f32.mrb[0].mxu0
      %v406 = vadd.f32 0.0, %v405
      %v407 = vpop.f32.mrb[0].mxu0
      %408 = vmatprep.mubr.f32.mxu0 0.0
      %409 = vmatmul.mubr.f32.gmra.mrb[0].mxu0 %v283
      %v410 = vpop.f32.mrb[0].mxu0
      %v411 = vadd.f32 0.0, %v410
      %v412 = vpop.f32.mrb[0].mxu0
      %413 = vdwg.mxu0
      %v414 = vmul.f32 %v376, 2.0
      %v415 = vmul.f32 %v381, 2.0
      %v416 = vmul.f32 %v386, 2.0
      %v417 = vmul.f32 %v391, 2.0
      %v418 = vmul.f32 %v396, 2.0
      %v419 = vmul.f32 %v401, 2.0
      %v420 = vmul.f32 %v406, 2.0
      %v421 = vmul.f32 %v411, 2.0
      %v422 = vld [vmem:[%s233] sm:$0x1]
      %v424 = vlaneseq
      %v425 = vshrl.u32 %v424, 7
      %v426 = vsub.s32 0, %v425
      %v427 = vrot.slane %v422, %v426
      %v429 = vsub.f32 %v414, %v427
      %v430 = vsub.f32 %v415, %v427
      %v431 = vsub.f32 %v416, %v427
      %v432 = vsub.f32 %v417, %v427
      %v433 = vsub.f32 %v418, %v427
      %v434 = vsub.f32 %v419, %v427
      %v435 = vsub.f32 %v420, %v427
      %v436 = vsub.f32 %v421, %v427
      %v437 = vpack.c.bf16 %v430, %v429
      %v438 = vpack.c.bf16 %v432, %v431
      %v439 = vpack.c.bf16 %v434, %v433
      %v440 = vpack.c.bf16 %v436, %v435
      %v445 = vunpack.c.l.b16 %v437
      %v446 = vunpack.c.h.b16 %v437
      %v447 = vunpack.c.l.b16 %v438
      %v448 = vunpack.c.h.b16 %v438
      %v449 = vunpack.c.l.b16 %v439
      %v450 = vunpack.c.h.b16 %v439
      %v451 = vunpack.c.l.b16 %v440
      %v452 = vunpack.c.h.b16 %v440
      %v453 = vpack.c.b16 %v445, %v445
      %v454 = vpack.c.b16 %v446, %v446
      %v455 = vpack.c.b16 %v447, %v447
      %v456 = vpack.c.b16 %v448, %v448
      %v457 = vpack.c.b16 %v449, %v449
      %v458 = vpack.c.b16 %v450, %v450
      %v459 = vpack.c.b16 %v451, %v451
      %v460 = vpack.c.b16 %v452, %v452
      %vm469 = vcmask 519168
      %470 = vst.msk [vmem:[%s242] sm:$0xf] %vm469, %v453
      %471 = vst.msk [vmem:[%s242 + $0x4] sm:$0xf] %vm469, %v454
      %472 = vst.msk [vmem:[%s242 + $0x8] sm:$0xf] %vm469, %v455
      %473 = vst.msk [vmem:[%s242 + $0xc] sm:$0xf] %vm469, %v456
      %474 = vst.msk [vmem:[%s242 + $0x10] sm:$0xf] %vm469, %v457
      %475 = vst.msk [vmem:[%s242 + $0x14] sm:$0xf] %vm469, %v458
      %476 = vst.msk [vmem:[%s242 + $0x18] sm:$0xf] %vm469, %v459
      %477 = vst.msk [vmem:[%s242 + $0x1c] sm:$0xf] %vm469, %v460
      %s478 = smul.u32 8, %s19
      %p479 = scmp.lt.s32.totalorder %s18, 1
      %s480 = scalar_select %p479, %s18, 1
      %p481 = scmp.lt.s32.totalorder %s478, 7
      %s482 = scalar_select %p481, %s478, 7
      %s483 = smul.addr %s480, 8
      %s484 = sadd.s32 %s482, %s483
      %s485 = smul.addr %s484, 4
      %s486 = scalar_lea.vmem %s3, %s485
      // Predicated region
      $region33: #{_lambda_.8} parent=31 // pred_check
        %p487 = pneg %p126
      $region34: #{_lambda_.8} parent=31 // pred_check_branch
        %489 = sbr.rel (%p487) target = $region36
      $region35: #{_lambda_.8} parent=31 // pred_region
        %s490 = smul.u32 8, %s19
      $region36: #{_lambda_.8} parent=31 // pred_fallthru
        _
    $region32: #{_lambda_.8} parent=5 // pred_fallthru
      _
    %p491 = scmp.le.s32.totalorder 2, %s9
    // Predicated region
    $region37: #{_lambda_.8} parent=5 // pred_check
      %p492 = pneg %p491
    $region38: #{_lambda_.8} parent=5 // pred_check_branch
      %494 = sbr.rel (%p492) target = $region40
    $region39: #{_lambda_.8} parent=5 // pred_region
      %s495 = ssub.s32 %s9, 2
      // Predicated region
      $region41: #{_lambda_.8} parent=39 // pred_check
        %p496 = pneg %p132
      $region42: #{_lambda_.8} parent=39 // pred_check_branch
        %498 = sbr.rel (%p496) target = $region44
      $region43: #{_lambda_.8} parent=39 // pred_region
        %s499 = smul.u32 8, %s21
        %p500 = scmp.lt.s32.totalorder %s20, 1
        %s501 = scalar_select %p500, %s20, 1
        %p502 = scmp.lt.s32.totalorder %s499, 7
        %s503 = scalar_select %p502, %s499, 7
        %s504 = smul.addr %s501, 8
        %s505 = sadd.s32 %s503, %s504
        %s506 = smul.addr %s505, 4
        %s507 = scalar_lea.vmem %s3, %s506
      $region44: #{_lambda_.8} parent=39 // pred_fallthru
        _
    $region40: #{_lambda_.8} parent=5 // pred_fallthru
      _
  $region6: #{_lambda_.8} parent=0 // loop_footer
    %s13 = sadd.s32 1, %s9
  $region7: #{_lambda_.8} parent=0 // loop_footer_branch
    %8 = sbr.rel target = $region3
  $region8: #{_lambda_.8} parent=0 // loop_exit
    _

// kernel: _lambda_.9
$region0: #{_lambda_.9}
  #allocation0 [shape = 'u32[]', space=smem, size = 0x4, offset = 0x4, fixed_abs, tag = 'smem constant byte address 0x4 - core index']
  #allocation1 [shape = 'u32[144,128]{1,0:T(1,128)}', space=vmem, size = 0x12000, scoped, tag = 'internal scratch']
  %s0 = inlined_call_operand.vmem [shape: f32[128,3], index: 0, kind: input, shape index: {}]
  %s1 = inlined_call_operand.vmem [shape: bf16[3,64], index: 1, kind: input, shape index: {}]
  %s2 = inlined_call_operand.vmem [shape: bf16[3,64], index: 2, kind: input, shape index: {}]
  %s3 = inlined_call_operand.vmem [shape: f32[1,64], index: 3, kind: input, shape index: {}]
  %s4 = inlined_call_operand.vmem [shape: bf16[128,64], index: 4, kind: output, shape index: {0}]
  %s5 = inlined_call_operand.vmem [shape: bf16[128,64], index: 5, kind: output, shape index: {1}]
  %6 = xla_tuple %s4, %s5
  %s7 = sld [smem:[#allocation0]]
  $region57: #{_lambda_.9} parent=0
    _
  %s9 = ssub.s32 1, %s7
  %s10 = scalar_select 0, %s9, %s7
  loop: start=0, step=1, limit=4
  $region2: #{_lambda_.9} parent=0 // loop_pre_header
    _
  $region3: #{_lambda_.9} parent=0 // loop_header
    %s12 = sphi 0, %s16
    %p13 = scmp.ge.s32.totalorder %s12, 4
    %s22 = sphi 0, %s24
    %s25 = sphi 0, %s22
    %s26 = sphi 0, %s25
    %s42 = sphi 0, %s26
    %s46 = sphi 0, %s46
    %s48 = sphi 0, %s46
    %s49 = sphi 0, %s48
    %s63 = sphi 0, %s49
    %s67 = sphi 0, %s67
    %s69 = sphi 0, %s67
    %s70 = sphi 0, %s69
    %s84 = sphi 0, %s70
    %s88 = sphi 0, %s88
    %s90 = sphi 0, %s88
    %s91 = sphi 0, %s90
    %s105 = sphi 0, %s91
    %s111 = sphi 0, %s113
    %s114 = sphi 0, %s111
    %s115 = sphi 0, %s114
    %s131 = sphi 0, %s115
    %s137 = sphi 0, %s139
    %s140 = sphi 0, %s137
    %s141 = sphi 0, %s140
    %s157 = sphi 0, %s141
  $region4: #{_lambda_.9} parent=0 // loop_header_branch
    %15 = sbr.rel (%p13) target = $region8
  $region5: #{_lambda_.9} parent=0 // loop_body
    %s17 = ssub.s32 %s12, 1
    %s18 = ssub.s32 %s12, 2
    %s19 = sadd.s32 %s12, 1
    %s20 = ssub.s32 %s12, %s19
    %p21 = scmp.eq.s32.totalorder %s20, 0
    %s23 = sadd.s32 %s22, 1
    %s24 = scalar_select %p21, %s22, %s23
    %p27 = pneg %p21
    %p28 = scmp.eq.s32.totalorder %s12, 1
    %p29 = por %p27, %p28
    %p30 = scmp.ne.s32.totalorder %s22, %s25
    %p31 = scmp.eq.s32.totalorder %s12, 0
    %p32 = por %p30, %p31
    %p33 = scmp.ne.s32.totalorder %s22, %s25
    %p34 = scmp.eq.s32.totalorder %s17, 1
    %p35 = por %p33, %p34
    %p36 = scmp.ne.s32.totalorder %s25, %s26
    %p37 = scmp.eq.s32.totalorder %s17, 0
    %p38 = por %p36, %p37
    %p39 = scmp.ne.s32.totalorder %s25, %s26
    %p40 = scmp.eq.s32.totalorder %s18, 1
    %p41 = por %p39, %p40
    %p43 = scmp.ne.s32.totalorder %s26, %s42
    %p44 = scmp.eq.s32.totalorder %s18, 0
    %p45 = por %p43, %p44
    %s47 = sadd.s32 %s46, 1
    %p50 = scmp.eq.s32.totalorder %s12, 1
    %p51 = scmp.ne.s32.totalorder %s46, %s48
    %p52 = scmp.eq.s32.totalorder %s12, 0
    %p53 = por %p51, %p52
    %p54 = scmp.ne.s32.totalorder %s46, %s48
    %p55 = scmp.eq.s32.totalorder %s17, 1
    %p56 = por %p54, %p55
    %p57 = scmp.ne.s32.totalorder %s48, %s49
    %p58 = scmp.eq.s32.totalorder %s17, 0
    %p59 = por %p57, %p58
    %p60 = scmp.ne.s32.totalorder %s48, %s49
    %p61 = scmp.eq.s32.totalorder %s18, 1
    %p62 = por %p60, %p61
    %p64 = scmp.ne.s32.totalorder %s49, %s63
    %p65 = scmp.eq.s32.totalorder %s18, 0
    %p66 = por %p64, %p65
    %s68 = sadd.s32 %s67, 1
    %p71 = scmp.eq.s32.totalorder %s12, 1
    %p72 = scmp.ne.s32.totalorder %s67, %s69
    %p73 = scmp.eq.s32.totalorder %s12, 0
    %p74 = por %p72, %p73
    %p75 = scmp.ne.s32.totalorder %s67, %s69
    %p76 = scmp.eq.s32.totalorder %s17, 1
    %p77 = por %p75, %p76
    %p78 = scmp.ne.s32.totalorder %s69, %s70
    %p79 = scmp.eq.s32.totalorder %s17, 0
    %p80 = por %p78, %p79
    %p81 = scmp.ne.s32.totalorder %s69, %s70
    %p82 = scmp.eq.s32.totalorder %s18, 1
    %p83 = por %p81, %p82
    %p85 = scmp.ne.s32.totalorder %s70, %s84
    %p86 = scmp.eq.s32.totalorder %s18, 0
    %p87 = por %p85, %p86
    %s89 = sadd.s32 %s88, 1
    %p92 = scmp.eq.s32.totalorder %s12, 1
    %p93 = scmp.ne.s32.totalorder %s88, %s90
    %p94 = scmp.eq.s32.totalorder %s12, 0
    %p95 = por %p93, %p94
    %p96 = scmp.ne.s32.totalorder %s88, %s90
    %p97 = scmp.eq.s32.totalorder %s17, 1
    %p98 = por %p96, %p97
    %p99 = scmp.ne.s32.totalorder %s90, %s91
    %p100 = scmp.eq.s32.totalorder %s17, 0
    %p101 = por %p99, %p100
    %p102 = scmp.ne.s32.totalorder %s90, %s91
    %p103 = scmp.eq.s32.totalorder %s18, 1
    %p104 = por %p102, %p103
    %p106 = scmp.ne.s32.totalorder %s91, %s105
    %p107 = scmp.eq.s32.totalorder %s18, 0
    %p108 = por %p106, %p107
    %s109 = ssub.s32 %s12, %s19
    %p110 = scmp.eq.s32.totalorder %s109, 0
    %s112 = sadd.s32 %s111, 1
    %s113 = scalar_select %p110, %s111, %s112
    %p116 = pneg %p110
    %p117 = scmp.eq.s32.totalorder %s12, 1
    %p118 = por %p116, %p117
    %p119 = scmp.ne.s32.totalorder %s111, %s114
    %p120 = scmp.eq.s32.totalorder %s12, 0
    %p121 = por %p119, %p120
    %p122 = scmp.ne.s32.totalorder %s111, %s114
    %p123 = scmp.eq.s32.totalorder %s17, 1
    %p124 = por %p122, %p123
    %p125 = scmp.ne.s32.totalorder %s114, %s115
    %p126 = scmp.eq.s32.totalorder %s17, 0
    %p127 = por %p125, %p126
    %p128 = scmp.ne.s32.totalorder %s114, %s115
    %p129 = scmp.eq.s32.totalorder %s18, 1
    %p130 = por %p128, %p129
    %p132 = scmp.ne.s32.totalorder %s115, %s131
    %p133 = scmp.eq.s32.totalorder %s18, 0
    %p134 = por %p132, %p133
    %s135 = ssub.s32 %s12, %s19
    %p136 = scmp.eq.s32.totalorder %s135, 0
    %s138 = sadd.s32 %s137, 1
    %s139 = scalar_select %p136, %s137, %s138
    %p142 = pneg %p136
    %p143 = scmp.eq.s32.totalorder %s12, 1
    %p144 = por %p142, %p143
    %p145 = scmp.ne.s32.totalorder %s137, %s140
    %p146 = scmp.eq.s32.totalorder %s12, 0
    %p147 = por %p145, %p146
    %p148 = scmp.ne.s32.totalorder %s137, %s140
    %p149 = scmp.eq.s32.totalorder %s17, 1
    %p150 = por %p148, %p149
    %p151 = scmp.ne.s32.totalorder %s140, %s141
    %p152 = scmp.eq.s32.totalorder %s17, 0
    %p153 = por %p151, %p152
    %p154 = scmp.ne.s32.totalorder %s140, %s141
    %p155 = scmp.eq.s32.totalorder %s18, 1
    %p156 = por %p154, %p155
    %p158 = scmp.ne.s32.totalorder %s141, %s157
    %p159 = scmp.eq.s32.totalorder %s18, 0
    %p160 = por %p158, %p159
    %p161 = scmp.le.s32.totalorder 1, %s12
    %p162 = scmp.lt.s32.totalorder %s12, 3
    %p163 = pnand %p161, %p162
    %p164 = pneg %p163
    // Predicated region
    $region9: #{_lambda_.9} parent=5 // pred_check
      _
    $region10: #{_lambda_.9} parent=5 // pred_check_branch
      %166 = sbr.rel (%p163) target = $region12
    $region11: #{_lambda_.9} parent=5 // pred_region
      %s167 = ssub.s32 %s12, 1
      // Predicated region
      $region13: #{_lambda_.9} parent=11 // pred_check
        %p168 = pneg %p59
      $region14: #{_lambda_.9} parent=11 // pred_check_branch
        %170 = sbr.rel (%p168) target = $region16
      $region15: #{_lambda_.9} parent=11 // pred_region
        _
      $region16: #{_lambda_.9} parent=11 // pred_fallthru
        _
      // Predicated region
      $region17: #{_lambda_.9} parent=11 // pred_check
        %p171 = pneg %p80
      $region18: #{_lambda_.9} parent=11 // pred_check_branch
        %173 = sbr.rel (%p171) target = $region20
      $region19: #{_lambda_.9} parent=11 // pred_region
        _
      $region20: #{_lambda_.9} parent=11 // pred_fallthru
        _
      // Predicated region
      $region21: #{_lambda_.9} parent=11 // pred_check
        %p174 = pneg %p101
      $region22: #{_lambda_.9} parent=11 // pred_check_branch
        %176 = sbr.rel (%p174) target = $region24
      $region23: #{_lambda_.9} parent=11 // pred_region
        _
      $region24: #{_lambda_.9} parent=11 // pred_fallthru
        _
    $region12: #{_lambda_.9} parent=5 // pred_fallthru
      _
    %p177 = scmp.lt.s32.totalorder %s12, 2
    // Predicated region
    $region25: #{_lambda_.9} parent=5 // pred_check
      %p178 = pneg %p177
    $region26: #{_lambda_.9} parent=5 // pred_check_branch
      %180 = sbr.rel (%p178) target = $region28
    $region27: #{_lambda_.9} parent=5 // pred_region
      // Predicated region
      $region29: #{_lambda_.9} parent=27 // pred_check
        %p181 = pneg %p32
      $region30: #{_lambda_.9} parent=27 // pred_check_branch
        %183 = sbr.rel (%p181) target = $region32
      $region31: #{_lambda_.9} parent=27 // pred_region
        %s184 = smul.u32 8, %s12
        %p185 = scmp.lt.s32.totalorder %s184, 15
        %s186 = scalar_select %p185, %s184, 15
        %s187 = smul.addr %s186, 8
        %s188 = scalar_lea.vmem %s0, %s187
        %s189 = smul.u32 8, %s12
      $region32: #{_lambda_.9} parent=27 // pred_fallthru
        _
    $region28: #{_lambda_.9} parent=5 // pred_fallthru
      _
    %p190 = scmp.le.s32.totalorder 1, %s12
    %p191 = scmp.lt.s32.totalorder %s12, 3
    %p192 = pnand %p190, %p191
    %p193 = pneg %p192
    // Predicated region
    $region33: #{_lambda_.9} parent=5 // pred_check
      _
    $region34: #{_lambda_.9} parent=5 // pred_check_branch
      %195 = sbr.rel (%p192) target = $region36
    $region35: #{_lambda_.9} parent=5 // pred_region
      %s196 = ssub.s32 %s12, 1
      %s197 = smul.u32 8, %s17
      %p198 = scmp.lt.s32.totalorder %s197, 15
      %s199 = scalar_select %p198, %s197, 15
      %s200 = smul.addr %s199, 8
      %s201 = scalar_lea.vmem %s0, %s200
      %p202 = pneg %p38
      %p203 = pneg %p35
      %p204 = pneg %p59
      %p205 = pneg %p56
      %p206 = pneg %p80
      %p207 = pneg %p77
      %p208 = pneg %p101
      %p209 = pneg %p98
      %p210 = pneg %p127
      %p211 = pneg %p124
      %s212 = smul.u32 8, %s17
      %p213 = scmp.lt.s32.totalorder %s212, 15
      %s214 = scalar_select %p213, %s212, 15
      %s215 = smul.addr %s214, 4
      %s216 = scalar_lea.vmem %s4, %s215
      %p217 = pneg %p153
      %p218 = pneg %p150
      %s219 = smul.u32 8, %s17
      %p220 = scmp.lt.s32.totalorder %s219, 15
      %s221 = scalar_select %p220, %s219, 15
      %s222 = smul.addr %s221, 4
      %s223 = scalar_lea.vmem %s5, %s222
      %s224 = smul.u32 8, %s17
      %p225 = scmp.lt.s32.totalorder %s224, 15
      %s226 = scalar_select %p225, %s224, 15
      %s227 = smul.addr %s226, 8
      %s228 = scalar_lea.vmem %s0, %s227
      %s229 = smul.u32 8, %s17
      %s230 = smul.u32 8, %s17
      %p231 = scmp.lt.s32.totalorder %s230, 15
      %s232 = scalar_select %p231, %s230, 15
      %s233 = smul.addr %s232, 4
      %s234 = scalar_lea.vmem %s4, %s233
      %s235 = smul.u32 8, %s17
      %s236 = smul.u32 8, %s17
      %p237 = scmp.lt.s32.totalorder %s236, 15
      %s238 = scalar_select %p237, %s236, 15
      %s239 = smul.addr %s238, 4
      %s240 = scalar_lea.vmem %s5, %s239
      %s241 = smul.u32 8, %s17
      %v243 = vld [vmem:[%s228] sm:$0xff]
      %v244 = vld [vmem:[%s228 + $0x8] sm:$0xff]
      %v245 = vld [vmem:[%s228 + $0x10] sm:$0xff]
      %v246 = vld [vmem:[%s228 + $0x18] sm:$0xff]
      %v247 = vld [vmem:[%s228 + $0x20] sm:$0xff]
      %v248 = vld [vmem:[%s228 + $0x28] sm:$0xff]
      %v249 = vld [vmem:[%s228 + $0x30] sm:$0xff]
      %v250 = vld [vmem:[%s228 + $0x38] sm:$0xff]
      %v251 = vpack.c.bf16 %v244, %v243
      %v252 = vpack.c.bf16 %v246, %v245
      %v253 = vpack.c.bf16 %v248, %v247
      %v254 = vpack.c.bf16 %v250, %v249
      %v255 = vld [vmem:[%s1] sm:$0x3]
      %vm256 = vcmask 23552
      %v258 = vsel %vm256, %v251, 0
      %v261 = vsel %vm256, %v252, 0
      %v264 = vsel %vm256, %v253, 0
      %v267 = vsel %vm256, %v254, 0
      %vm269 = vcmask 1040384
      %vm270 = vcmask 1041408
      %v271 = vsel %vm269, 4294967295, 65535
      %v272 = vsel %vm270, %v271, 0
      %v274 = vand.u32 %v255, %v272
      %276 = vmatprep.subr.bf16.mxu0 0
      %277 = vmatpush1.bf16.msra.mxu0 %v274
      %278 = vmatprep.subr.bf16.mxu0 0
      %279 = vmatpush1.bf16.msra.mxu0 0
      %280 = vmatprep.subr.bf16.mxu0 0
      %281 = vmatpush1.bf16.msra.mxu0 0
      %282 = vmatprep.subr.bf16.mxu0 0
      %283 = vmatpush1.bf16.msra.mxu0 0
      %284 = vmatprep.subr.bf16.mxu0 0
      %285 = vmatpush1.bf16.msra.mxu0 0
      %286 = vmatprep.subr.bf16.mxu0 0
      %287 = vmatpush1.bf16.msra.mxu0 0
      %288 = vmatprep.subr.bf16.mxu0 0
      %289 = vmatpush1.bf16.msra.mxu0 0
      %290 = vmatprep.subr.bf16.mxu0 0
      %291 = vmatpush1.bf16.msra.mxu0 0
      %292 = vmatprep.subr.bf16.mxu0 0
      %293 = vmatpush1.bf16.msra.mxu0 0
      %294 = vmatprep.subr.bf16.mxu0 0
      %295 = vmatpush1.bf16.msra.mxu0 0
      %296 = vmatprep.subr.bf16.mxu0 0
      %297 = vmatpush1.bf16.msra.mxu0 0
      %298 = vmatprep.subr.bf16.mxu0 0
      %299 = vmatpush1.bf16.msra.mxu0 0
      %300 = vmatprep.subr.bf16.mxu0 0
      %301 = vmatpush1.bf16.msra.mxu0 0
      %302 = vmatprep.subr.bf16.mxu0 0
      %303 = vmatpush1.bf16.msra.mxu0 0
      %304 = vmatprep.subr.bf16.mxu0 0
      %305 = vmatpush1.bf16.msra.mxu0 0
      %306 = vmatprep.subr.bf16.mxu0 0
      %307 = vmatpush1.bf16.msra.mxu0 0
      %308 = vmatprep.mubr.bf16.mxu0 0
      %309 = vmatmul.mubr.bf16.gmra.mrb[0].mxu0 %v258
      %v310 = vpop.f32.mrb[0].mxu0
      %v311 = vadd.f32 0.0, %v310
      %v312 = vpop.f32.mrb[0].mxu0
      %v313 = vpop.f32.mrb[0].mxu0
      %v314 = vadd.f32 0.0, %v313
      %v315 = vpop.f32.mrb[0].mxu0
      %316 = vmatprep.mubr.bf16.mxu0 0
      %317 = vmatmul.mubr.bf16.gmra.mrb[0].mxu0 %v261
      %v318 = vpop.f32.mrb[0].mxu0
      %v319 = vadd.f32 0.0, %v318
      %v320 = vpop.f32.mrb[0].mxu0
      %v321 = vpop.f32.mrb[0].mxu0
      %v322 = vadd.f32 0.0, %v321
      %v323 = vpop.f32.mrb[0].mxu0
      %324 = vmatprep.mubr.bf16.mxu0 0
      %325 = vmatmul.mubr.bf16.gmra.mrb[0].mxu0 %v264
      %v326 = vpop.f32.mrb[0].mxu0
      %v327 = vadd.f32 0.0, %v326
      %v328 = vpop.f32.mrb[0].mxu0
      %v329 = vpop.f32.mrb[0].mxu0
      %v330 = vadd.f32 0.0, %v329
      %v331 = vpop.f32.mrb[0].mxu0
      %332 = vmatprep.mubr.bf16.mxu0 0
      %333 = vmatmul.mubr.bf16.gmra.mrb[0].mxu0 %v267
      %v334 = vpop.f32.mrb[0].mxu0
      %v335 = vadd.f32 0.0, %v334
      %v336 = vpop.f32.mrb[0].mxu0
      %v337 = vpop.f32.mrb[0].mxu0
      %v338 = vadd.f32 0.0, %v337
      %v339 = vpop.f32.mrb[0].mxu0
      %340 = vdwg.mxu0
      %v341 = vld [vmem:[%s2] sm:$0x3]
      %v342 = vld [vmem:[%s3] sm:$0x1]
      %v344 = vlaneseq
      %v345 = vshrl.u32 %v344, 7
      %v346 = vsub.s32 0, %v345
      %v347 = vrot.slane %v342, %v346
      %v350 = vand.u32 %v341, %v272
      %352 = vmatprep.subr.bf16.mxu0 0
      %353 = vmatpush1.bf16.msra.mxu0 %v350
      %354 = vmatprep.subr.bf16.mxu0 0
      %355 = vmatpush1.bf16.msra.mxu0 0
      %356 = vmatprep.subr.bf16.mxu0 0
      %357 = vmatpush1.bf16.msra.mxu0 0
      %358 = vmatprep.subr.bf16.mxu0 0
      %359 = vmatpush1.bf16.msra.mxu0 0
      %360 = vmatprep.subr.bf16.mxu0 0
      %361 = vmatpush1.bf16.msra.mxu0 0
      %362 = vmatprep.subr.bf16.mxu0 0
      %363 = vmatpush1.bf16.msra.mxu0 0
      %364 = vmatprep.subr.bf16.mxu0 0
      %365 = vmatpush1.bf16.msra.mxu0 0
      %366 = vmatprep.subr.bf16.mxu0 0
      %367 = vmatpush1.bf16.msra.mxu0 0
      %368 = vmatprep.subr.bf16.mxu0 0
      %369 = vmatpush1.bf16.msra.mxu0 0
      %370 = vmatprep.subr.bf16.mxu0 0
      %371 = vmatpush1.bf16.msra.mxu0 0
      %372 = vmatprep.subr.bf16.mxu0 0
      %373 = vmatpush1.bf16.msra.mxu0 0
      %374 = vmatprep.subr.bf16.mxu0 0
      %375 = vmatpush1.bf16.msra.mxu0 0
      %376 = vmatprep.subr.bf16.mxu0 0
      %377 = vmatpush1.bf16.msra.mxu0 0
      %378 = vmatprep.subr.bf16.mxu0 0
      %379 = vmatpush1.bf16.msra.mxu0 0
      %380 = vmatprep.subr.bf16.mxu0 0
      %381 = vmatpush1.bf16.msra.mxu0 0
      %382 = vmatprep.subr.bf16.mxu0 0
      %383 = vmatpush1.bf16.msra.mxu0 0
      %384 = vmatprep.mubr.bf16.mxu0 0
      %385 = vmatmul.mubr.bf16.gmra.mrb[0].mxu0 %v258
      %v386 = vpop.f32.mrb[0].mxu0
      %v387 = vadd.f32 %v347, %v386
      %v388 = vpop.f32.mrb[0].mxu0
      %v389 = vpop.f32.mrb[0].mxu0
      %v390 = vadd.f32 %v347, %v389
      %v391 = vpop.f32.mrb[0].mxu0
      %392 = vmatprep.mubr.bf16.mxu0 0
      %393 = vmatmul.mubr.bf16.gmra.mrb[0].mxu0 %v261
      %v394 = vpop.f32.mrb[0].mxu0
      %v395 = vadd.f32 %v347, %v394
      %v396 = vpop.f32.mrb[0].mxu0
      %v397 = vpop.f32.mrb[0].mxu0
      %v398 = vadd.f32 %v347, %v397
      %v399 = vpop.f32.mrb[0].mxu0
      %400 = vmatprep.mubr.bf16.mxu0 0
      %401 = vmatmul.mubr.bf16.gmra.mrb[0].mxu0 %v264
      %v402 = vpop.f32.mrb[0].mxu0
      %v403 = vadd.f32 %v347, %v402
      %v404 = vpop.f32.mrb[0].mxu0
      %v405 = vpop.f32.mrb[0].mxu0
      %v406 = vadd.f32 %v347, %v405
      %v407 = vpop.f32.mrb[0].mxu0
      %408 = vmatprep.mubr.bf16.mxu0 0
      %409 = vmatmul.mubr.bf16.gmra.mrb[0].mxu0 %v267
      %v410 = vpop.f32.mrb[0].mxu0
      %v411 = vadd.f32 %v347, %v410
      %v412 = vpop.f32.mrb[0].mxu0
      %v413 = vpop.f32.mrb[0].mxu0
      %v414 = vadd.f32 %v347, %v413
      %v415 = vpop.f32.mrb[0].mxu0
      %416 = vdwg.mxu0
      %v417 = vpack.c.bf16 %v314, %v311
      %v418 = vpack.c.bf16 %v322, %v319
      %v419 = vpack.c.bf16 %v330, %v327
      %v420 = vpack.c.bf16 %v338, %v335
      %v425 = vunpack.c.l.b16 %v417
      %v426 = vunpack.c.h.b16 %v417
      %v427 = vunpack.c.l.b16 %v418
      %v428 = vunpack.c.h.b16 %v418
      %v429 = vunpack.c.l.b16 %v419
      %v430 = vunpack.c.h.b16 %v419
      %v431 = vunpack.c.l.b16 %v420
      %v432 = vunpack.c.h.b16 %v420
      %v433 = vpack.c.b16 %v425, %v425
      %v434 = vpack.c.b16 %v426, %v426
      %v435 = vpack.c.b16 %v427, %v427
      %v436 = vpack.c.b16 %v428, %v428
      %v437 = vpack.c.b16 %v429, %v429
      %v438 = vpack.c.b16 %v430, %v430
      %v439 = vpack.c.b16 %v431, %v431
      %v440 = vpack.c.b16 %v432, %v432
      %vm449 = vcmask 519168
      %450 = vst.msk [vmem:[%s234] sm:$0xf] %vm449, %v433
      %451 = vst.msk [vmem:[%s234 + $0x4] sm:$0xf] %vm449, %v434
      %452 = vst.msk [vmem:[%s234 + $0x8] sm:$0xf] %vm449, %v435
      %453 = vst.msk [vmem:[%s234 + $0xc] sm:$0xf] %vm449, %v436
      %454 = vst.msk [vmem:[%s234 + $0x10] sm:$0xf] %vm449, %v437
      %455 = vst.msk [vmem:[%s234 + $0x14] sm:$0xf] %vm449, %v438
      %456 = vst.msk [vmem:[%s234 + $0x18] sm:$0xf] %vm449, %v439
      %457 = vst.msk [vmem:[%s234 + $0x1c] sm:$0xf] %vm449, %v440
      %v458 = vpack.c.bf16 %v390, %v387
      %v459 = vpack.c.bf16 %v398, %v395
      %v460 = vpack.c.bf16 %v406, %v403
      %v461 = vpack.c.bf16 %v414, %v411
      %v466 = vunpack.c.l.b16 %v458
      %v467 = vunpack.c.h.b16 %v458
      %v468 = vunpack.c.l.b16 %v459
      %v469 = vunpack.c.h.b16 %v459
      %v470 = vunpack.c.l.b16 %v460
      %v471 = vunpack.c.h.b16 %v460
      %v472 = vunpack.c.l.b16 %v461
      %v473 = vunpack.c.h.b16 %v461
      %v474 = vpack.c.b16 %v466, %v466
      %v475 = vpack.c.b16 %v467, %v467
      %v476 = vpack.c.b16 %v468, %v468
      %v477 = vpack.c.b16 %v469, %v469
      %v478 = vpack.c.b16 %v470, %v470
      %v479 = vpack.c.b16 %v471, %v471
      %v480 = vpack.c.b16 %v472, %v472
      %v481 = vpack.c.b16 %v473, %v473
      %490 = vst.msk [vmem:[%s240] sm:$0xf] %vm449, %v474
      %491 = vst.msk [vmem:[%s240 + $0x4] sm:$0xf] %vm449, %v475
      %492 = vst.msk [vmem:[%s240 + $0x8] sm:$0xf] %vm449, %v476
      %493 = vst.msk [vmem:[%s240 + $0xc] sm:$0xf] %vm449, %v477
      %494 = vst.msk [vmem:[%s240 + $0x10] sm:$0xf] %vm449, %v478
      %495 = vst.msk [vmem:[%s240 + $0x14] sm:$0xf] %vm449, %v479
      %496 = vst.msk [vmem:[%s240 + $0x18] sm:$0xf] %vm449, %v480
      %497 = vst.msk [vmem:[%s240 + $0x1c] sm:$0xf] %vm449, %v481
      %s498 = smul.u32 8, %s17
      %p499 = scmp.lt.s32.totalorder %s498, 15
      %s500 = scalar_select %p499, %s498, 15
      %s501 = smul.addr %s500, 4
      %s502 = scalar_lea.vmem %s4, %s501
      %s503 = smul.u32 8, %s17
      %p504 = scmp.lt.s32.totalorder %s503, 15
      %s505 = scalar_select %p504, %s503, 15
      %s506 = smul.addr %s505, 4
      %s507 = scalar_lea.vmem %s5, %s506
      // Predicated region
      $region37: #{_lambda_.9} parent=35 // pred_check
        %p508 = pneg %p124
      $region38: #{_lambda_.9} parent=35 // pred_check_branch
        %510 = sbr.rel (%p508) target = $region40
      $region39: #{_lambda_.9} parent=35 // pred_region
        %s511 = smul.u32 8, %s17
      $region40: #{_lambda_.9} parent=35 // pred_fallthru
        _
      // Predicated region
      $region41: #{_lambda_.9} parent=35 // pred_check
        %p512 = pneg %p150
      $region42: #{_lambda_.9} parent=35 // pred_check_branch
        %514 = sbr.rel (%p512) target = $region44
      $region43: #{_lambda_.9} parent=35 // pred_region
        %s515 = smul.u32 8, %s17
      $region44: #{_lambda_.9} parent=35 // pred_fallthru
        _
    $region36: #{_lambda_.9} parent=5 // pred_fallthru
      _
    %p516 = scmp.le.s32.totalorder 2, %s12
    // Predicated region
    $region45: #{_lambda_.9} parent=5 // pred_check
      %p517 = pneg %p516
    $region46: #{_lambda_.9} parent=5 // pred_check_branch
      %519 = sbr.rel (%p517) target = $region48
    $region47: #{_lambda_.9} parent=5 // pred_region
      %s520 = ssub.s32 %s12, 2
      // Predicated region
      $region49: #{_lambda_.9} parent=47 // pred_check
        %p521 = pneg %p130
      $region50: #{_lambda_.9} parent=47 // pred_check_branch
        %523 = sbr.rel (%p521) target = $region52
      $region51: #{_lambda_.9} parent=47 // pred_region
        %s524 = smul.u32 8, %s18
        %p525 = scmp.lt.s32.totalorder %s524, 15
        %s526 = scalar_select %p525, %s524, 15
        %s527 = smul.addr %s526, 4
        %s528 = scalar_lea.vmem %s4, %s527
      $region52: #{_lambda_.9} parent=47 // pred_fallthru
        _
      // Predicated region
      $region53: #{_lambda_.9} parent=47 // pred_check
        %p529 = pneg %p156
      $region54: #{_lambda_.9} parent=47 // pred_check_branch
        %531 = sbr.rel (%p529) target = $region56
      $region55: #{_lambda_.9} parent=47 // pred_region
        %s532 = smul.u32 8, %s18
        %p533 = scmp.lt.s32.totalorder %s532, 15
        %s534 = scalar_select %p533, %s532, 15
        %s535 = smul.addr %s534, 4
        %s536 = scalar_lea.vmem %s5, %s535
      $region56: #{_lambda_.9} parent=47 // pred_fallthru
        _
    $region48: #{_lambda_.9} parent=5 // pred_fallthru
      _
  $region6: #{_lambda_.9} parent=0 // loop_footer
    %s16 = sadd.s32 1, %s12
  $region7: #{_lambda_.9} parent=0 // loop_footer_branch
    %11 = sbr.rel target = $region3
  $region8: #{_lambda_.9} parent=0 // loop_exit
    _

// kernel: _lambda_.10
$region0: #{_lambda_.10}
  #allocation0 [shape = 'u32[]', space=smem, size = 0x4, offset = 0x4, fixed_abs, tag = 'smem constant byte address 0x4 - core index']
  #allocation1 [shape = 'u32[144,128]{1,0:T(1,128)}', space=vmem, size = 0x12000, scoped, tag = 'internal scratch']
  %s0 = inlined_call_operand.vmem [shape: bf16[2,64,64], index: 0, kind: input, shape index: {}, may-alias: {0,1}]
  %s1 = inlined_call_operand.vmem [shape: bf16[2,64,64], index: 1, kind: input, shape index: {}, may-alias: {0,1}]
  %s2 = inlined_call_operand.vmem [shape: f32[2,1,64], index: 2, kind: input, shape index: {}]
  %s3 = inlined_call_operand.vmem [shape: bf16[2,64,64], index: 3, kind: output, shape index: {}]
  %s4 = sld [smem:[#allocation0]]
  $region45: #{_lambda_.10} parent=0
    _
  %s6 = ssub.s32 1, %s4
  %s7 = scalar_select 0, %s6, %s4
  loop: start=0, step=1, limit=4
  $region2: #{_lambda_.10} parent=0 // loop_pre_header
    _
  $region3: #{_lambda_.10} parent=0 // loop_header
    %s9 = sphi 0, %s13
    %p10 = scmp.ge.s32.totalorder %s9, 4
    %s16 = sphi 0, %s28
    %s17 = sphi 0, %s24
    %s18 = sphi 0, %s16
    %s19 = sphi 0, %s17
    %s20 = sphi 0, %s18
    %s21 = sphi 0, %s19
    %s33 = sphi 0, %s35
    %s36 = sphi 0, %s33
    %s37 = sphi 0, %s36
    %s53 = sphi 0, %s37
    %s59 = sphi 0, %s61
    %s62 = sphi 0, %s59
    %s63 = sphi 0, %s62
    %s79 = sphi 0, %s63
    %s85 = sphi 0, %s87
    %s88 = sphi 0, %s85
    %s89 = sphi 0, %s88
    %s105 = sphi 0, %s89
    %s113 = sphi 0, %s115
    %s116 = sphi 0, %s113
    %s117 = sphi 0, %s116
    %s133 = sphi 0, %s117
  $region4: #{_lambda_.10} parent=0 // loop_header_branch
    %12 = sbr.rel (%p10) target = $region8
  $region5: #{_lambda_.10} parent=0 // loop_body
    %s14 = ssub.s32 %s9, 1
    %s15 = ssub.s32 %s9, 2
    %s22 = sadd.s32 1, %s17
    %p23 = scmp.ge.s32.totalorder %s22, 1
    %s24 = scalar_select %p23, 0, %s22
    %s25 = sadd.s32 1, %s16
    %s26 = scalar_select %p23, %s25, %s16
    %p27 = scmp.ge.s32.totalorder %s26, 2
    %s28 = scalar_select %p27, 0, %s26
    %s29 = ssub.s32 %s16, %s28
    %s30 = ssub.s32 %s17, %s24
    %s31 = sor.u32 %s29, %s30
    %p32 = scmp.eq.s32.totalorder %s31, 0
    %s34 = sadd.s32 %s33, 1
    %s35 = scalar_select %p32, %s33, %s34
    %p38 = pneg %p32
    %p39 = scmp.eq.s32.totalorder %s9, 1
    %p40 = por %p38, %p39
    %p41 = scmp.ne.s32.totalorder %s33, %s36
    %p42 = scmp.eq.s32.totalorder %s9, 0
    %p43 = por %p41, %p42
    %p44 = scmp.ne.s32.totalorder %s33, %s36
    %p45 = scmp.eq.s32.totalorder %s14, 1
    %p46 = por %p44, %p45
    %p47 = scmp.ne.s32.totalorder %s36, %s37
    %p48 = scmp.eq.s32.totalorder %s14, 0
    %p49 = por %p47, %p48
    %p50 = scmp.ne.s32.totalorder %s36, %s37
    %p51 = scmp.eq.s32.totalorder %s15, 1
    %p52 = por %p50, %p51
    %p54 = scmp.ne.s32.totalorder %s37, %s53
    %p55 = scmp.eq.s32.totalorder %s15, 0
    %p56 = por %p54, %p55
    %s57 = ssub.s32 %s16, %s28
    %p58 = scmp.eq.s32.totalorder %s57, 0
    %s60 = sadd.s32 %s59, 1
    %s61 = scalar_select %p58, %s59, %s60
    %p64 = pneg %p58
    %p65 = scmp.eq.s32.totalorder %s9, 1
    %p66 = por %p64, %p65
    %p67 = scmp.ne.s32.totalorder %s59, %s62
    %p68 = scmp.eq.s32.totalorder %s9, 0
    %p69 = por %p67, %p68
    %p70 = scmp.ne.s32.totalorder %s59, %s62
    %p71 = scmp.eq.s32.totalorder %s14, 1
    %p72 = por %p70, %p71
    %p73 = scmp.ne.s32.totalorder %s62, %s63
    %p74 = scmp.eq.s32.totalorder %s14, 0
    %p75 = por %p73, %p74
    %p76 = scmp.ne.s32.totalorder %s62, %s63
    %p77 = scmp.eq.s32.totalorder %s15, 1
    %p78 = por %p76, %p77
    %p80 = scmp.ne.s32.totalorder %s63, %s79
    %p81 = scmp.eq.s32.totalorder %s15, 0
    %p82 = por %p80, %p81
    %s83 = ssub.s32 %s16, %s28
    %p84 = scmp.eq.s32.totalorder %s83, 0
    %s86 = sadd.s32 %s85, 1
    %s87 = scalar_select %p84, %s85, %s86
    %p90 = pneg %p84
    %p91 = scmp.eq.s32.totalorder %s9, 1
    %p92 = por %p90, %p91
    %p93 = scmp.ne.s32.totalorder %s85, %s88
    %p94 = scmp.eq.s32.totalorder %s9, 0
    %p95 = por %p93, %p94
    %p96 = scmp.ne.s32.totalorder %s85, %s88
    %p97 = scmp.eq.s32.totalorder %s14, 1
    %p98 = por %p96, %p97
    %p99 = scmp.ne.s32.totalorder %s88, %s89
    %p100 = scmp.eq.s32.totalorder %s14, 0
    %p101 = por %p99, %p100
    %p102 = scmp.ne.s32.totalorder %s88, %s89
    %p103 = scmp.eq.s32.totalorder %s15, 1
    %p104 = por %p102, %p103
    %p106 = scmp.ne.s32.totalorder %s89, %s105
    %p107 = scmp.eq.s32.totalorder %s15, 0
    %p108 = por %p106, %p107
    %s109 = ssub.s32 %s16, %s28
    %s110 = ssub.s32 %s17, %s24
    %s111 = sor.u32 %s109, %s110
    %p112 = scmp.eq.s32.totalorder %s111, 0
    %s114 = sadd.s32 %s113, 1
    %s115 = scalar_select %p112, %s113, %s114
    %p118 = pneg %p112
    %p119 = scmp.eq.s32.totalorder %s9, 1
    %p120 = por %p118, %p119
    %p121 = scmp.ne.s32.totalorder %s113, %s116
    %p122 = scmp.eq.s32.totalorder %s9, 0
    %p123 = por %p121, %p122
    %p124 = scmp.ne.s32.totalorder %s113, %s116
    %p125 = scmp.eq.s32.totalorder %s14, 1
    %p126 = por %p124, %p125
    %p127 = scmp.ne.s32.totalorder %s116, %s117
    %p128 = scmp.eq.s32.totalorder %s14, 0
    %p129 = por %p127, %p128
    %p130 = scmp.ne.s32.totalorder %s116, %s117
    %p131 = scmp.eq.s32.totalorder %s15, 1
    %p132 = por %p130, %p131
    %p134 = scmp.ne.s32.totalorder %s117, %s133
    %p135 = scmp.eq.s32.totalorder %s15, 0
    %p136 = por %p134, %p135
    %p137 = scmp.le.s32.totalorder 1, %s9
    %p138 = scmp.lt.s32.totalorder %s9, 3
    %p139 = pnand %p137, %p138
    %p140 = pneg %p139
    // Predicated region
    $region9: #{_lambda_.10} parent=5 // pred_check
      _
    $region10: #{_lambda_.10} parent=5 // pred_check_branch
      %142 = sbr.rel (%p139) target = $region12
    $region11: #{_lambda_.10} parent=5 // pred_region
      %s143 = ssub.s32 %s9, 1
    $region12: #{_lambda_.10} parent=5 // pred_fallthru
      _
    %p144 = scmp.lt.s32.totalorder %s9, 2
    // Predicated region
    $region13: #{_lambda_.10} parent=5 // pred_check
      %p145 = pneg %p144
    $region14: #{_lambda_.10} parent=5 // pred_check_branch
      %147 = sbr.rel (%p145) target = $region16
    $region15: #{_lambda_.10} parent=5 // pred_region
      // Predicated region
      $region17: #{_lambda_.10} parent=15 // pred_check
        %p148 = pneg %p43
      $region18: #{_lambda_.10} parent=15 // pred_check_branch
        %150 = sbr.rel (%p148) target = $region20
      $region19: #{_lambda_.10} parent=15 // pred_region
        %s151 = smul.u32 8, %s17
        %p152 = scmp.lt.s32.totalorder %s16, 1
        %s153 = scalar_select %p152, %s16, 1
        %p154 = scmp.lt.s32.totalorder %s151, 7
        %s155 = scalar_select %p154, %s151, 7
        %s156 = smul.addr %s153, 8
        %s157 = sadd.s32 %s155, %s156
        %s158 = smul.addr %s157, 4
        %s159 = scalar_lea.vmem %s0, %s158
        %s160 = smul.u32 8, %s17
      $region20: #{_lambda_.10} parent=15 // pred_fallthru
        _
      // Predicated region
      $region21: #{_lambda_.10} parent=15 // pred_check
        %p161 = pneg %p69
      $region22: #{_lambda_.10} parent=15 // pred_check_branch
        %163 = sbr.rel (%p161) target = $region24
      $region23: #{_lambda_.10} parent=15 // pred_region
        %p164 = scmp.lt.s32.totalorder %s16, 1
        %s165 = scalar_select %p164, %s16, 1
        %s166 = smul.addr %s165, 8
        %s167 = smul.addr %s166, 4
        %s168 = scalar_lea.vmem %s1, %s167
      $region24: #{_lambda_.10} parent=15 // pred_fallthru
        _
      // Predicated region
      $region25: #{_lambda_.10} parent=15 // pred_check
        %p169 = pneg %p95
      $region26: #{_lambda_.10} parent=15 // pred_check_branch
        %171 = sbr.rel (%p169) target = $region28
      $region27: #{_lambda_.10} parent=15 // pred_region
        %p172 = scmp.lt.s32.totalorder %s16, 1
        %s173 = scalar_select %p172, %s16, 1
        %s174 = scalar_lea.vmem %s2, %s173
      $region28: #{_lambda_.10} parent=15 // pred_fallthru
        _
    $region16: #{_lambda_.10} parent=5 // pred_fallthru
      _
    %p175 = scmp.le.s32.totalorder 1, %s9
    %p176 = scmp.lt.s32.totalorder %s9, 3
    %p177 = pnand %p175, %p176
    %p178 = pneg %p177
    // Predicated region
    $region29: #{_lambda_.10} parent=5 // pred_check
      _
    $region30: #{_lambda_.10} parent=5 // pred_check_branch
      %180 = sbr.rel (%p177) target = $region32
    $region31: #{_lambda_.10} parent=5 // pred_region
      %s181 = ssub.s32 %s9, 1
      %s182 = smul.u32 8, %s19
      %p183 = scmp.lt.s32.totalorder %s18, 1
      %s184 = scalar_select %p183, %s18, 1
      %p185 = scmp.lt.s32.totalorder %s182, 7
      %s186 = scalar_select %p185, %s182, 7
      %s187 = smul.addr %s184, 8
      %s188 = sadd.s32 %s186, %s187
      %s189 = smul.addr %s188, 4
      %s190 = scalar_lea.vmem %s0, %s189
      %p191 = pneg %p49
      %p192 = pneg %p46
      %p193 = scmp.lt.s32.totalorder %s18, 1
      %s194 = scalar_select %p193, %s18, 1
      %s195 = smul.addr %s194, 8
      %s196 = smul.addr %s195, 4
      %s197 = scalar_lea.vmem %s1, %s196
      %p198 = pneg %p75
      %p199 = pneg %p72
      %p200 = scmp.lt.s32.totalorder %s18, 1
      %s201 = scalar_select %p200, %s18, 1
      %s202 = scalar_lea.vmem %s2, %s201
      %p203 = pneg %p101
      %p204 = pneg %p98
      %p205 = pneg %p129
      %p206 = pneg %p126
      %s207 = smul.u32 8, %s19
      %p208 = scmp.lt.s32.totalorder %s18, 1
      %s209 = scalar_select %p208, %s18, 1
      %p210 = scmp.lt.s32.totalorder %s207, 7
      %s211 = scalar_select %p210, %s207, 7
      %s212 = smul.addr %s209, 8
      %s213 = sadd.s32 %s211, %s212
      %s214 = smul.addr %s213, 4
      %s215 = scalar_lea.vmem %s3, %s214
      %s216 = smul.u32 8, %s19
      %p217 = scmp.lt.s32.totalorder %s18, 1
      %s218 = scalar_select %p217, %s18, 1
      %p219 = scmp.lt.s32.totalorder %s216, 7
      %s220 = scalar_select %p219, %s216, 7
      %s221 = smul.addr %s218, 8
      %s222 = sadd.s32 %s220, %s221
      %s223 = smul.addr %s222, 4
      %s224 = scalar_lea.vmem %s0, %s223
      %s225 = smul.u32 8, %s19
      %p226 = scmp.lt.s32.totalorder %s18, 1
      %s227 = scalar_select %p226, %s18, 1
      %s228 = smul.addr %s227, 8
      %s229 = smul.addr %s228, 4
      %s230 = scalar_lea.vmem %s1, %s229
      %p231 = scmp.lt.s32.totalorder %s18, 1
      %s232 = scalar_select %p231, %s18, 1
      %s233 = scalar_lea.vmem %s2, %s232
      %s234 = smul.u32 8, %s19
      %p235 = scmp.lt.s32.totalorder %s18, 1
      %s236 = scalar_select %p235, %s18, 1
      %p237 = scmp.lt.s32.totalorder %s234, 7
      %s238 = scalar_select %p237, %s234, 7
      %s239 = smul.addr %s236, 8
      %s240 = sadd.s32 %s238, %s239
      %s241 = smul.addr %s240, 4
      %s242 = scalar_lea.vmem %s3, %s241
      %s243 = smul.u32 8, %s19
      %v245 = vld [vmem:[%s224] sm:$0xf]
      %v246 = vld [vmem:[%s224 + $0x4] sm:$0xf]
      %v247 = vld [vmem:[%s224 + $0x8] sm:$0xf]
      %v248 = vld [vmem:[%s224 + $0xc] sm:$0xf]
      %v249 = vld [vmem:[%s224 + $0x10] sm:$0xf]
      %v250 = vld [vmem:[%s224 + $0x14] sm:$0xf]
      %v251 = vld [vmem:[%s224 + $0x18] sm:$0xf]
      %v252 = vld [vmem:[%s224 + $0x1c] sm:$0xf]
      %v253 = vld [vmem:[%s230] sm:$0xf]
      %v254 = vld [vmem:[%s230 + $0x4] sm:$0xf]
      %v255 = vld [vmem:[%s230 + $0x8] sm:$0xf]
      %v256 = vld [vmem:[%s230 + $0xc] sm:$0xf]
      %v257 = vld [vmem:[%s230 + $0x10] sm:$0xf]
      %v258 = vld [vmem:[%s230 + $0x14] sm:$0xf]
      %v259 = vld [vmem:[%s230 + $0x18] sm:$0xf]
      %v260 = vld [vmem:[%s230 + $0x1c] sm:$0xf]
      %v269 = vunpack.c.l.b16 %v245
      %v270 = vunpack.c.l.b16 %v246
      %v271 = vunpack.c.l.b16 %v247
      %v272 = vunpack.c.l.b16 %v248
      %v273 = vunpack.c.l.b16 %v249
      %v274 = vunpack.c.l.b16 %v250
      %v275 = vunpack.c.l.b16 %v251
      %v276 = vunpack.c.l.b16 %v252
      %v277 = vpack.c.b16 %v270, %v269
      %v278 = vpack.c.b16 %v272, %v271
      %v279 = vpack.c.b16 %v274, %v273
      %v280 = vpack.c.b16 %v276, %v275
      %v289 = vunpack.c.l.b16 %v253
      %v290 = vunpack.c.l.b16 %v254
      %v291 = vunpack.c.l.b16 %v255
      %v292 = vunpack.c.l.b16 %v256
      %v293 = vunpack.c.l.b16 %v257
      %v294 = vunpack.c.l.b16 %v258
      %v295 = vunpack.c.l.b16 %v259
      %v296 = vunpack.c.l.b16 %v260
      %v297 = vpack.c.b16 %v290, %v289
      %v298 = vpack.c.b16 %v292, %v291
      %v299 = vpack.c.b16 %v294, %v293
      %v300 = vpack.c.b16 %v296, %v295
      %vm301 = vcmask 523264
      %v303 = vsel %vm301, %v277, 0
      %v306 = vsel %vm301, %v278, 0
      %v309 = vsel %vm301, %v279, 0
      %v312 = vsel %vm301, %v280, 0
      %v315 = vsel %vm301, %v297, 0
      %v318 = vsel %vm301, %v298, 0
      %v321 = vsel %vm301, %v299, 0
      %v324 = vsel %vm301, %v300, 0
      %326 = vmatprep.subr.bf16.mxu0 0
      %327 = vmatpush1.bf16.xpose.msra.mxu0 %v315
      %328 = vmatprep.subr.bf16.mxu0 0
      %329 = vmatpush1.bf16.xpose.msra.mxu0 %v318
      %330 = vmatprep.subr.bf16.mxu0 0
      %331 = vmatpush1.bf16.xpose.msra.mxu0 %v321
      %332 = vmatprep.subr.bf16.mxu0 0
      %333 = vmatpush1.bf16.xpose.msra.mxu0 %v324
      %334 = vmatprep.subr.bf16.mxu0 0
      %335 = vmatpush1.bf16.xpose.msra.mxu0 0
      %336 = vmatprep.subr.bf16.mxu0 0
      %337 = vmatpush1.bf16.xpose.msra.mxu0 0
      %338 = vmatprep.subr.bf16.mxu0 0
      %339 = vmatpush1.bf16.xpose.msra.mxu0 0
      %340 = vmatprep.subr.bf16.mxu0 0
      %341 = vmatpush1.bf16.xpose.msra.mxu0 0
      %342 = vmatprep.subr.bf16.mxu0 0
      %343 = vmatpush1.bf16.xpose.msra.mxu0 0
      %344 = vmatprep.subr.bf16.mxu0 0
      %345 = vmatpush1.bf16.xpose.msra.mxu0 0
      %346 = vmatprep.subr.bf16.mxu0 0
      %347 = vmatpush1.bf16.xpose.msra.mxu0 0
      %348 = vmatprep.subr.bf16.mxu0 0
      %349 = vmatpush1.bf16.xpose.msra.mxu0 0
      %350 = vmatprep.subr.bf16.mxu0 0
      %351 = vmatpush1.bf16.xpose.msra.mxu0 0
      %352 = vmatprep.subr.bf16.mxu0 0
      %353 = vmatpush1.bf16.xpose.msra.mxu0 0
      %354 = vmatprep.subr.bf16.mxu0 0
      %355 = vmatpush1.bf16.xpose.msra.mxu0 0
      %356 = vmatprep.subr.bf16.mxu0 0
      %357 = vmatpush1.bf16.xpose.msra.mxu0 0
      %358 = vmatprep.mubr.bf16.mxu0 0
      %359 = vmatmul.mubr.bf16.gmra.mrb[0].mxu0 %v303
      %v360 = vpop.f32.mrb[0].mxu0
      %v361 = vadd.f32 0.0, %v360
      %v362 = vpop.f32.mrb[0].mxu0
      %v363 = vpop.f32.mrb[0].mxu0
      %v364 = vadd.f32 0.0, %v363
      %v365 = vpop.f32.mrb[0].mxu0
      %366 = vmatprep.mubr.bf16.mxu0 0
      %367 = vmatmul.mubr.bf16.gmra.mrb[0].mxu0 %v306
      %v368 = vpop.f32.mrb[0].mxu0
      %v369 = vadd.f32 0.0, %v368
      %v370 = vpop.f32.mrb[0].mxu0
      %v371 = vpop.f32.mrb[0].mxu0
      %v372 = vadd.f32 0.0, %v371
      %v373 = vpop.f32.mrb[0].mxu0
      %374 = vmatprep.mubr.bf16.mxu0 0
      %375 = vmatmul.mubr.bf16.gmra.mrb[0].mxu0 %v309
      %v376 = vpop.f32.mrb[0].mxu0
      %v377 = vadd.f32 0.0, %v376
      %v378 = vpop.f32.mrb[0].mxu0
      %v379 = vpop.f32.mrb[0].mxu0
      %v380 = vadd.f32 0.0, %v379
      %v381 = vpop.f32.mrb[0].mxu0
      %382 = vmatprep.mubr.bf16.mxu0 0
      %383 = vmatmul.mubr.bf16.gmra.mrb[0].mxu0 %v312
      %v384 = vpop.f32.mrb[0].mxu0
      %v385 = vadd.f32 0.0, %v384
      %v386 = vpop.f32.mrb[0].mxu0
      %v387 = vpop.f32.mrb[0].mxu0
      %v388 = vadd.f32 0.0, %v387
      %v389 = vpop.f32.mrb[0].mxu0
      %390 = vdwg.mxu0
      %v391 = vmul.f32 %v361, 2.0
      %v392 = vmul.f32 %v364, 2.0
      %v393 = vmul.f32 %v369, 2.0
      %v394 = vmul.f32 %v372, 2.0
      %v395 = vmul.f32 %v377, 2.0
      %v396 = vmul.f32 %v380, 2.0
      %v397 = vmul.f32 %v385, 2.0
      %v398 = vmul.f32 %v388, 2.0
      %v399 = vld [vmem:[%s233] sm:$0x1]
      %v401 = vlaneseq
      %v402 = vshrl.u32 %v401, 7
      %v403 = vsub.s32 0, %v402
      %v404 = vrot.slane %v399, %v403
      %v406 = vsub.f32 %v391, %v404
      %v407 = vsub.f32 %v392, %v404
      %v408 = vsub.f32 %v393, %v404
      %v409 = vsub.f32 %v394, %v404
      %v410 = vsub.f32 %v395, %v404
      %v411 = vsub.f32 %v396, %v404
      %v412 = vsub.f32 %v397, %v404
      %v413 = vsub.f32 %v398, %v404
      %v414 = vpack.c.bf16 %v407, %v406
      %v415 = vpack.c.bf16 %v409, %v408
      %v416 = vpack.c.bf16 %v411, %v410
      %v417 = vpack.c.bf16 %v413, %v412
      %v422 = vunpack.c.l.b16 %v414
      %v423 = vunpack.c.h.b16 %v414
      %v424 = vunpack.c.l.b16 %v415
      %v425 = vunpack.c.h.b16 %v415
      %v426 = vunpack.c.l.b16 %v416
      %v427 = vunpack.c.h.b16 %v416
      %v428 = vunpack.c.l.b16 %v417
      %v429 = vunpack.c.h.b16 %v417
      %v430 = vpack.c.b16 %v422, %v422
      %v431 = vpack.c.b16 %v423, %v423
      %v432 = vpack.c.b16 %v424, %v424
      %v433 = vpack.c.b16 %v425, %v425
      %v434 = vpack.c.b16 %v426, %v426
      %v435 = vpack.c.b16 %v427, %v427
      %v436 = vpack.c.b16 %v428, %v428
      %v437 = vpack.c.b16 %v429, %v429
      %vm446 = vcmask 519168
      %447 = vst.msk [vmem:[%s242] sm:$0xf] %vm446, %v430
      %448 = vst.msk [vmem:[%s242 + $0x4] sm:$0xf] %vm446, %v431
      %449 = vst.msk [vmem:[%s242 + $0x8] sm:$0xf] %vm446, %v432
      %450 = vst.msk [vmem:[%s242 + $0xc] sm:$0xf] %vm446, %v433
      %451 = vst.msk [vmem:[%s242 + $0x10] sm:$0xf] %vm446, %v434
      %452 = vst.msk [vmem:[%s242 + $0x14] sm:$0xf] %vm446, %v435
      %453 = vst.msk [vmem:[%s242 + $0x18] sm:$0xf] %vm446, %v436
      %454 = vst.msk [vmem:[%s242 + $0x1c] sm:$0xf] %vm446, %v437
      %s455 = smul.u32 8, %s19
      %p456 = scmp.lt.s32.totalorder %s18, 1
      %s457 = scalar_select %p456, %s18, 1
      %p458 = scmp.lt.s32.totalorder %s455, 7
      %s459 = scalar_select %p458, %s455, 7
      %s460 = smul.addr %s457, 8
      %s461 = sadd.s32 %s459, %s460
      %s462 = smul.addr %s461, 4
      %s463 = scalar_lea.vmem %s3, %s462
      // Predicated region
      $region33: #{_lambda_.10} parent=31 // pred_check
        %p464 = pneg %p126
      $region34: #{_lambda_.10} parent=31 // pred_check_branch
        %466 = sbr.rel (%p464) target = $region36
      $region35: #{_lambda_.10} parent=31 // pred_region
        %s467 = smul.u32 8, %s19
      $region36: #{_lambda_.10} parent=31 // pred_fallthru
        _
    $region32: #{_lambda_.10} parent=5 // pred_fallthru
      _
    %p468 = scmp.le.s32.totalorder 2, %s9
    // Predicated region
    $region37: #{_lambda_.10} parent=5 // pred_check
      %p469 = pneg %p468
    $region38: #{_lambda_.10} parent=5 // pred_check_branch
      %471 = sbr.rel (%p469) target = $region40
    $region39: #{_lambda_.10} parent=5 // pred_region
      %s472 = ssub.s32 %s9, 2
      // Predicated region
      $region41: #{_lambda_.10} parent=39 // pred_check
        %p473 = pneg %p132
      $region42: #{_lambda_.10} parent=39 // pred_check_branch
        %475 = sbr.rel (%p473) target = $region44
      $region43: #{_lambda_.10} parent=39 // pred_region
        %s476 = smul.u32 8, %s21
        %p477 = scmp.lt.s32.totalorder %s20, 1
        %s478 = scalar_select %p477, %s20, 1
        %p479 = scmp.lt.s32.totalorder %s476, 7
        %s480 = scalar_select %p479, %s476, 7
        %s481 = smul.addr %s478, 8
        %s482 = sadd.s32 %s480, %s481
        %s483 = smul.addr %s482, 4
        %s484 = scalar_lea.vmem %s3, %s483
      $region44: #{_lambda_.10} parent=39 // pred_fallthru
        _
    $region40: #{_lambda_.10} parent=5 // pred_fallthru
      _
  $region6: #{_lambda_.10} parent=0 // loop_footer
    %s13 = sadd.s32 1, %s9
  $region7: #{_lambda_.10} parent=0 // loop_footer_branch
    %8 = sbr.rel target = $region3
  $region8: #{_lambda_.10} parent=0 // loop_exit
    _

// kernel: _lambda_.11
$region0: #{_lambda_.11}
  #allocation0 [shape = 'u32[]', space=smem, size = 0x4, offset = 0x4, fixed_abs, tag = 'smem constant byte address 0x4 - core index']
  #allocation1 [shape = 'u32[144,128]{1,0:T(1,128)}', space=vmem, size = 0x12000, scoped, tag = 'internal scratch']
  %s0 = inlined_call_operand.vmem [shape: bf16[128,64], index: 0, kind: input, shape index: {}]
  %s1 = inlined_call_operand.vmem [shape: bf16[64,128], index: 1, kind: input, shape index: {}]
  %s2 = inlined_call_operand.vmem [shape: bf16[64,128], index: 2, kind: input, shape index: {}]
  %s3 = inlined_call_operand.vmem [shape: f32[1,128], index: 3, kind: input, shape index: {}]
  %s4 = inlined_call_operand.vmem [shape: bf16[128,128], index: 4, kind: output, shape index: {0}]
  %s5 = inlined_call_operand.vmem [shape: bf16[128,128], index: 5, kind: output, shape index: {1}]
  %6 = xla_tuple %s4, %s5
  %s7 = sld [smem:[#allocation0]]
  $region57: #{_lambda_.11} parent=0
    _
  %s9 = ssub.s32 1, %s7
  %s10 = scalar_select 0, %s9, %s7
  loop: start=0, step=1, limit=4
  $region2: #{_lambda_.11} parent=0 // loop_pre_header
    _
  $region3: #{_lambda_.11} parent=0 // loop_header
    %s12 = sphi 0, %s16
    %p13 = scmp.ge.s32.totalorder %s12, 4
    %s22 = sphi 0, %s24
    %s25 = sphi 0, %s22
    %s26 = sphi 0, %s25
    %s42 = sphi 0, %s26
    %s46 = sphi 0, %s46
    %s48 = sphi 0, %s46
    %s49 = sphi 0, %s48
    %s63 = sphi 0, %s49
    %s67 = sphi 0, %s67
    %s69 = sphi 0, %s67
    %s70 = sphi 0, %s69
    %s84 = sphi 0, %s70
    %s88 = sphi 0, %s88
    %s90 = sphi 0, %s88
    %s91 = sphi 0, %s90
    %s105 = sphi 0, %s91
    %s111 = sphi 0, %s113
    %s114 = sphi 0, %s111
    %s115 = sphi 0, %s114
    %s131 = sphi 0, %s115
    %s137 = sphi 0, %s139
    %s140 = sphi 0, %s137
    %s141 = sphi 0, %s140
    %s157 = sphi 0, %s141
  $region4: #{_lambda_.11} parent=0 // loop_header_branch
    %15 = sbr.rel (%p13) target = $region8
  $region5: #{_lambda_.11} parent=0 // loop_body
    %s17 = ssub.s32 %s12, 1
    %s18 = ssub.s32 %s12, 2
    %s19 = sadd.s32 %s12, 1
    %s20 = ssub.s32 %s12, %s19
    %p21 = scmp.eq.s32.totalorder %s20, 0
    %s23 = sadd.s32 %s22, 1
    %s24 = scalar_select %p21, %s22, %s23
    %p27 = pneg %p21
    %p28 = scmp.eq.s32.totalorder %s12, 1
    %p29 = por %p27, %p28
    %p30 = scmp.ne.s32.totalorder %s22, %s25
    %p31 = scmp.eq.s32.totalorder %s12, 0
    %p32 = por %p30, %p31
    %p33 = scmp.ne.s32.totalorder %s22, %s25
    %p34 = scmp.eq.s32.totalorder %s17, 1
    %p35 = por %p33, %p34
    %p36 = scmp.ne.s32.totalorder %s25, %s26
    %p37 = scmp.eq.s32.totalorder %s17, 0
    %p38 = por %p36, %p37
    %p39 = scmp.ne.s32.totalorder %s25, %s26
    %p40 = scmp.eq.s32.totalorder %s18, 1
    %p41 = por %p39, %p40
    %p43 = scmp.ne.s32.totalorder %s26, %s42
    %p44 = scmp.eq.s32.totalorder %s18, 0
    %p45 = por %p43, %p44
    %s47 = sadd.s32 %s46, 1
    %p50 = scmp.eq.s32.totalorder %s12, 1
    %p51 = scmp.ne.s32.totalorder %s46, %s48
    %p52 = scmp.eq.s32.totalorder %s12, 0
    %p53 = por %p51, %p52
    %p54 = scmp.ne.s32.totalorder %s46, %s48
    %p55 = scmp.eq.s32.totalorder %s17, 1
    %p56 = por %p54, %p55
    %p57 = scmp.ne.s32.totalorder %s48, %s49
    %p58 = scmp.eq.s32.totalorder %s17, 0
    %p59 = por %p57, %p58
    %p60 = scmp.ne.s32.totalorder %s48, %s49
    %p61 = scmp.eq.s32.totalorder %s18, 1
    %p62 = por %p60, %p61
    %p64 = scmp.ne.s32.totalorder %s49, %s63
    %p65 = scmp.eq.s32.totalorder %s18, 0
    %p66 = por %p64, %p65
    %s68 = sadd.s32 %s67, 1
    %p71 = scmp.eq.s32.totalorder %s12, 1
    %p72 = scmp.ne.s32.totalorder %s67, %s69
    %p73 = scmp.eq.s32.totalorder %s12, 0
    %p74 = por %p72, %p73
    %p75 = scmp.ne.s32.totalorder %s67, %s69
    %p76 = scmp.eq.s32.totalorder %s17, 1
    %p77 = por %p75, %p76
    %p78 = scmp.ne.s32.totalorder %s69, %s70
    %p79 = scmp.eq.s32.totalorder %s17, 0
    %p80 = por %p78, %p79
    %p81 = scmp.ne.s32.totalorder %s69, %s70
    %p82 = scmp.eq.s32.totalorder %s18, 1
    %p83 = por %p81, %p82
    %p85 = scmp.ne.s32.totalorder %s70, %s84
    %p86 = scmp.eq.s32.totalorder %s18, 0
    %p87 = por %p85, %p86
    %s89 = sadd.s32 %s88, 1
    %p92 = scmp.eq.s32.totalorder %s12, 1
    %p93 = scmp.ne.s32.totalorder %s88, %s90
    %p94 = scmp.eq.s32.totalorder %s12, 0
    %p95 = por %p93, %p94
    %p96 = scmp.ne.s32.totalorder %s88, %s90
    %p97 = scmp.eq.s32.totalorder %s17, 1
    %p98 = por %p96, %p97
    %p99 = scmp.ne.s32.totalorder %s90, %s91
    %p100 = scmp.eq.s32.totalorder %s17, 0
    %p101 = por %p99, %p100
    %p102 = scmp.ne.s32.totalorder %s90, %s91
    %p103 = scmp.eq.s32.totalorder %s18, 1
    %p104 = por %p102, %p103
    %p106 = scmp.ne.s32.totalorder %s91, %s105
    %p107 = scmp.eq.s32.totalorder %s18, 0
    %p108 = por %p106, %p107
    %s109 = ssub.s32 %s12, %s19
    %p110 = scmp.eq.s32.totalorder %s109, 0
    %s112 = sadd.s32 %s111, 1
    %s113 = scalar_select %p110, %s111, %s112
    %p116 = pneg %p110
    %p117 = scmp.eq.s32.totalorder %s12, 1
    %p118 = por %p116, %p117
    %p119 = scmp.ne.s32.totalorder %s111, %s114
    %p120 = scmp.eq.s32.totalorder %s12, 0
    %p121 = por %p119, %p120
    %p122 = scmp.ne.s32.totalorder %s111, %s114
    %p123 = scmp.eq.s32.totalorder %s17, 1
    %p124 = por %p122, %p123
    %p125 = scmp.ne.s32.totalorder %s114, %s115
    %p126 = scmp.eq.s32.totalorder %s17, 0
    %p127 = por %p125, %p126
    %p128 = scmp.ne.s32.totalorder %s114, %s115
    %p129 = scmp.eq.s32.totalorder %s18, 1
    %p130 = por %p128, %p129
    %p132 = scmp.ne.s32.totalorder %s115, %s131
    %p133 = scmp.eq.s32.totalorder %s18, 0
    %p134 = por %p132, %p133
    %s135 = ssub.s32 %s12, %s19
    %p136 = scmp.eq.s32.totalorder %s135, 0
    %s138 = sadd.s32 %s137, 1
    %s139 = scalar_select %p136, %s137, %s138
    %p142 = pneg %p136
    %p143 = scmp.eq.s32.totalorder %s12, 1
    %p144 = por %p142, %p143
    %p145 = scmp.ne.s32.totalorder %s137, %s140
    %p146 = scmp.eq.s32.totalorder %s12, 0
    %p147 = por %p145, %p146
    %p148 = scmp.ne.s32.totalorder %s137, %s140
    %p149 = scmp.eq.s32.totalorder %s17, 1
    %p150 = por %p148, %p149
    %p151 = scmp.ne.s32.totalorder %s140, %s141
    %p152 = scmp.eq.s32.totalorder %s17, 0
    %p153 = por %p151, %p152
    %p154 = scmp.ne.s32.totalorder %s140, %s141
    %p155 = scmp.eq.s32.totalorder %s18, 1
    %p156 = por %p154, %p155
    %p158 = scmp.ne.s32.totalorder %s141, %s157
    %p159 = scmp.eq.s32.totalorder %s18, 0
    %p160 = por %p158, %p159
    %p161 = scmp.le.s32.totalorder 1, %s12
    %p162 = scmp.lt.s32.totalorder %s12, 3
    %p163 = pnand %p161, %p162
    %p164 = pneg %p163
    // Predicated region
    $region9: #{_lambda_.11} parent=5 // pred_check
      _
    $region10: #{_lambda_.11} parent=5 // pred_check_branch
      %166 = sbr.rel (%p163) target = $region12
    $region11: #{_lambda_.11} parent=5 // pred_region
      %s167 = ssub.s32 %s12, 1
      // Predicated region
      $region13: #{_lambda_.11} parent=11 // pred_check
        %p168 = pneg %p59
      $region14: #{_lambda_.11} parent=11 // pred_check_branch
        %170 = sbr.rel (%p168) target = $region16
      $region15: #{_lambda_.11} parent=11 // pred_region
        _
      $region16: #{_lambda_.11} parent=11 // pred_fallthru
        _
      // Predicated region
      $region17: #{_lambda_.11} parent=11 // pred_check
        %p171 = pneg %p80
      $region18: #{_lambda_.11} parent=11 // pred_check_branch
        %173 = sbr.rel (%p171) target = $region20
      $region19: #{_lambda_.11} parent=11 // pred_region
        _
      $region20: #{_lambda_.11} parent=11 // pred_fallthru
        _
      // Predicated region
      $region21: #{_lambda_.11} parent=11 // pred_check
        %p174 = pneg %p101
      $region22: #{_lambda_.11} parent=11 // pred_check_branch
        %176 = sbr.rel (%p174) target = $region24
      $region23: #{_lambda_.11} parent=11 // pred_region
        _
      $region24: #{_lambda_.11} parent=11 // pred_fallthru
        _
    $region12: #{_lambda_.11} parent=5 // pred_fallthru
      _
    %p177 = scmp.lt.s32.totalorder %s12, 2
    // Predicated region
    $region25: #{_lambda_.11} parent=5 // pred_check
      %p178 = pneg %p177
    $region26: #{_lambda_.11} parent=5 // pred_check_branch
      %180 = sbr.rel (%p178) target = $region28
    $region27: #{_lambda_.11} parent=5 // pred_region
      // Predicated region
      $region29: #{_lambda_.11} parent=27 // pred_check
        %p181 = pneg %p32
      $region30: #{_lambda_.11} parent=27 // pred_check_branch
        %183 = sbr.rel (%p181) target = $region32
      $region31: #{_lambda_.11} parent=27 // pred_region
        %s184 = smul.u32 8, %s12
        %p185 = scmp.lt.s32.totalorder %s184, 15
        %s186 = scalar_select %p185, %s184, 15
        %s187 = smul.addr %s186, 4
        %s188 = scalar_lea.vmem %s0, %s187
        %s189 = smul.u32 8, %s12
      $region32: #{_lambda_.11} parent=27 // pred_fallthru
        _
    $region28: #{_lambda_.11} parent=5 // pred_fallthru
      _
    %p190 = scmp.le.s32.totalorder 1, %s12
    %p191 = scmp.lt.s32.totalorder %s12, 3
    %p192 = pnand %p190, %p191
    %p193 = pneg %p192
    // Predicated region
    $region33: #{_lambda_.11} parent=5 // pred_check
      _
    $region34: #{_lambda_.11} parent=5 // pred_check_branch
      %195 = sbr.rel (%p192) target = $region36
    $region35: #{_lambda_.11} parent=5 // pred_region
      %s196 = ssub.s32 %s12, 1
      %s197 = smul.u32 8, %s17
      %p198 = scmp.lt.s32.totalorder %s197, 15
      %s199 = scalar_select %p198, %s197, 15
      %s200 = smul.addr %s199, 4
      %s201 = scalar_lea.vmem %s0, %s200
      %p202 = pneg %p38
      %p203 = pneg %p35
      %p204 = pneg %p59
      %p205 = pneg %p56
      %p206 = pneg %p80
      %p207 = pneg %p77
      %p208 = pneg %p101
      %p209 = pneg %p98
      %p210 = pneg %p127
      %p211 = pneg %p124
      %s212 = smul.u32 8, %s17
      %p213 = scmp.lt.s32.totalorder %s212, 15
      %s214 = scalar_select %p213, %s212, 15
      %s215 = smul.addr %s214, 4
      %s216 = scalar_lea.vmem %s4, %s215
      %p217 = pneg %p153
      %p218 = pneg %p150
      %s219 = smul.u32 8, %s17
      %p220 = scmp.lt.s32.totalorder %s219, 15
      %s221 = scalar_select %p220, %s219, 15
      %s222 = smul.addr %s221, 4
      %s223 = scalar_lea.vmem %s5, %s222
      %s224 = smul.u32 8, %s17
      %p225 = scmp.lt.s32.totalorder %s224, 15
      %s226 = scalar_select %p225, %s224, 15
      %s227 = smul.addr %s226, 4
      %s228 = scalar_lea.vmem %s0, %s227
      %s229 = smul.u32 8, %s17
      %s230 = smul.u32 8, %s17
      %p231 = scmp.lt.s32.totalorder %s230, 15
      %s232 = scalar_select %p231, %s230, 15
      %s233 = smul.addr %s232, 4
      %s234 = scalar_lea.vmem %s4, %s233
      %s235 = smul.u32 8, %s17
      %s236 = smul.u32 8, %s17
      %p237 = scmp.lt.s32.totalorder %s236, 15
      %s238 = scalar_select %p237, %s236, 15
      %s239 = smul.addr %s238, 4
      %s240 = scalar_lea.vmem %s5, %s239
      %s241 = smul.u32 8, %s17
      %v243 = vld [vmem:[%s228] sm:$0xf]
      %v244 = vld [vmem:[%s228 + $0x4] sm:$0xf]
      %v245 = vld [vmem:[%s228 + $0x8] sm:$0xf]
      %v246 = vld [vmem:[%s228 + $0xc] sm:$0xf]
      %v247 = vld [vmem:[%s228 + $0x10] sm:$0xf]
      %v248 = vld [vmem:[%s228 + $0x14] sm:$0xf]
      %v249 = vld [vmem:[%s228 + $0x18] sm:$0xf]
      %v250 = vld [vmem:[%s228 + $0x1c] sm:$0xf]
      %v251 = vld [vmem:[%s1] sm:$0xf]
      %v252 = vld [vmem:[%s1 + $0x4] sm:$0xf]
      %v253 = vld [vmem:[%s1 + $0x8] sm:$0xf]
      %v254 = vld [vmem:[%s1 + $0xc] sm:$0xf]
      %v255 = vld [vmem:[%s1 + $0x10] sm:$0xf]
      %v256 = vld [vmem:[%s1 + $0x14] sm:$0xf]
      %v257 = vld [vmem:[%s1 + $0x18] sm:$0xf]
      %v258 = vld [vmem:[%s1 + $0x1c] sm:$0xf]
      %v267 = vunpack.c.l.b16 %v243
      %v268 = vunpack.c.l.b16 %v244
      %v269 = vunpack.c.l.b16 %v245
      %v270 = vunpack.c.l.b16 %v246
      %v271 = vunpack.c.l.b16 %v247
      %v272 = vunpack.c.l.b16 %v248
      %v273 = vunpack.c.l.b16 %v249
      %v274 = vunpack.c.l.b16 %v250
      %v275 = vpack.c.b16 %v268, %v267
      %v276 = vpack.c.b16 %v270, %v269
      %v277 = vpack.c.b16 %v272, %v271
      %v278 = vpack.c.b16 %v274, %v273
      %v287 = vunpack.c.l.b16 %v251
      %v288 = vunpack.c.l.b16 %v252
      %v289 = vunpack.c.l.b16 %v253
      %v290 = vunpack.c.l.b16 %v254
      %v291 = vunpack.c.l.b16 %v255
      %v292 = vunpack.c.l.b16 %v256
      %v293 = vunpack.c.l.b16 %v257
      %v294 = vunpack.c.l.b16 %v258
      %v295 = vpack.c.b16 %v288, %v287
      %v296 = vpack.c.b16 %v290, %v289
      %v297 = vpack.c.b16 %v292, %v291
      %v298 = vpack.c.b16 %v294, %v293
      %vm303 = vcmask 523264
      %v305 = vsel %vm303, %v275, 0
      %v308 = vsel %vm303, %v276, 0
      %v311 = vsel %vm303, %v277, 0
      %v314 = vsel %vm303, %v278, 0
      %316 = vmatprep.subr.bf16.mxu0 0
      %317 = vmatpush1.bf16.msra.mxu0 %v295
      %318 = vmatprep.subr.bf16.mxu0 0
      %319 = vmatpush1.bf16.msra.mxu0 %v296
      %320 = vmatprep.subr.bf16.mxu0 0
      %321 = vmatpush1.bf16.msra.mxu0 %v297
      %322 = vmatprep.subr.bf16.mxu0 0
      %323 = vmatpush1.bf16.msra.mxu0 %v298
      %324 = vmatprep.subr.bf16.mxu0 0
      %325 = vmatpush1.bf16.msra.mxu0 0
      %326 = vmatprep.subr.bf16.mxu0 0
      %327 = vmatpush1.bf16.msra.mxu0 0
      %328 = vmatprep.subr.bf16.mxu0 0
      %329 = vmatpush1.bf16.msra.mxu0 0
      %330 = vmatprep.subr.bf16.mxu0 0
      %331 = vmatpush1.bf16.msra.mxu0 0
      %332 = vmatprep.subr.bf16.mxu0 0
      %333 = vmatpush1.bf16.msra.mxu0 0
      %334 = vmatprep.subr.bf16.mxu0 0
      %335 = vmatpush1.bf16.msra.mxu0 0
      %336 = vmatprep.subr.bf16.mxu0 0
      %337 = vmatpush1.bf16.msra.mxu0 0
      %338 = vmatprep.subr.bf16.mxu0 0
      %339 = vmatpush1.bf16.msra.mxu0 0
      %340 = vmatprep.subr.bf16.mxu0 0
      %341 = vmatpush1.bf16.msra.mxu0 0
      %342 = vmatprep.subr.bf16.mxu0 0
      %343 = vmatpush1.bf16.msra.mxu0 0
      %344 = vmatprep.subr.bf16.mxu0 0
      %345 = vmatpush1.bf16.msra.mxu0 0
      %346 = vmatprep.subr.bf16.mxu0 0
      %347 = vmatpush1.bf16.msra.mxu0 0
      %348 = vmatprep.mubr.bf16.mxu0 0
      %349 = vmatmul.mubr.bf16.gmra.mrb[0].mxu0 %v305
      %v350 = vpop.f32.mrb[0].mxu0
      %v351 = vadd.f32 0.0, %v350
      %v352 = vpop.f32.mrb[0].mxu0
      %v353 = vpop.f32.mrb[0].mxu0
      %v354 = vadd.f32 0.0, %v353
      %v355 = vpop.f32.mrb[0].mxu0
      %356 = vmatprep.mubr.bf16.mxu0 0
      %357 = vmatmul.mubr.bf16.gmra.mrb[0].mxu0 %v308
      %v358 = vpop.f32.mrb[0].mxu0
      %v359 = vadd.f32 0.0, %v358
      %v360 = vpop.f32.mrb[0].mxu0
      %v361 = vpop.f32.mrb[0].mxu0
      %v362 = vadd.f32 0.0, %v361
      %v363 = vpop.f32.mrb[0].mxu0
      %364 = vmatprep.mubr.bf16.mxu0 0
      %365 = vmatmul.mubr.bf16.gmra.mrb[0].mxu0 %v311
      %v366 = vpop.f32.mrb[0].mxu0
      %v367 = vadd.f32 0.0, %v366
      %v368 = vpop.f32.mrb[0].mxu0
      %v369 = vpop.f32.mrb[0].mxu0
      %v370 = vadd.f32 0.0, %v369
      %v371 = vpop.f32.mrb[0].mxu0
      %372 = vmatprep.mubr.bf16.mxu0 0
      %373 = vmatmul.mubr.bf16.gmra.mrb[0].mxu0 %v314
      %v374 = vpop.f32.mrb[0].mxu0
      %v375 = vadd.f32 0.0, %v374
      %v376 = vpop.f32.mrb[0].mxu0
      %v377 = vpop.f32.mrb[0].mxu0
      %v378 = vadd.f32 0.0, %v377
      %v379 = vpop.f32.mrb[0].mxu0
      %380 = vdwg.mxu0
      %v381 = vld [vmem:[%s2] sm:$0xf]
      %v382 = vld [vmem:[%s2 + $0x4] sm:$0xf]
      %v383 = vld [vmem:[%s2 + $0x8] sm:$0xf]
      %v384 = vld [vmem:[%s2 + $0xc] sm:$0xf]
      %v385 = vld [vmem:[%s2 + $0x10] sm:$0xf]
      %v386 = vld [vmem:[%s2 + $0x14] sm:$0xf]
      %v387 = vld [vmem:[%s2 + $0x18] sm:$0xf]
      %v388 = vld [vmem:[%s2 + $0x1c] sm:$0xf]
      %v389 = vld [vmem:[%s3] sm:$0x1]
      %v391 = vlaneseq
      %v392 = vshrl.u32 %v391, 7
      %v393 = vsub.s32 0, %v392
      %v394 = vrot.slane %v389, %v393
      %v404 = vunpack.c.l.b16 %v381
      %v405 = vunpack.c.l.b16 %v382
      %v406 = vunpack.c.l.b16 %v383
      %v407 = vunpack.c.l.b16 %v384
      %v408 = vunpack.c.l.b16 %v385
      %v409 = vunpack.c.l.b16 %v386
      %v410 = vunpack.c.l.b16 %v387
      %v411 = vunpack.c.l.b16 %v388
      %v412 = vpack.c.b16 %v405, %v404
      %v413 = vpack.c.b16 %v407, %v406
      %v414 = vpack.c.b16 %v409, %v408
      %v415 = vpack.c.b16 %v411, %v410
      %420 = vmatprep.subr.bf16.mxu0 0
      %421 = vmatpush1.bf16.msra.mxu0 %v412
      %422 = vmatprep.subr.bf16.mxu0 0
      %423 = vmatpush1.bf16.msra.mxu0 %v413
      %424 = vmatprep.subr.bf16.mxu0 0
      %425 = vmatpush1.bf16.msra.mxu0 %v414
      %426 = vmatprep.subr.bf16.mxu0 0
      %427 = vmatpush1.bf16.msra.mxu0 %v415
      %428 = vmatprep.subr.bf16.mxu0 0
      %429 = vmatpush1.bf16.msra.mxu0 0
      %430 = vmatprep.subr.bf16.mxu0 0
      %431 = vmatpush1.bf16.msra.mxu0 0
      %432 = vmatprep.subr.bf16.mxu0 0
      %433 = vmatpush1.bf16.msra.mxu0 0
      %434 = vmatprep.subr.bf16.mxu0 0
      %435 = vmatpush1.bf16.msra.mxu0 0
      %436 = vmatprep.subr.bf16.mxu0 0
      %437 = vmatpush1.bf16.msra.mxu0 0
      %438 = vmatprep.subr.bf16.mxu0 0
      %439 = vmatpush1.bf16.msra.mxu0 0
      %440 = vmatprep.subr.bf16.mxu0 0
      %441 = vmatpush1.bf16.msra.mxu0 0
      %442 = vmatprep.subr.bf16.mxu0 0
      %443 = vmatpush1.bf16.msra.mxu0 0
      %444 = vmatprep.subr.bf16.mxu0 0
      %445 = vmatpush1.bf16.msra.mxu0 0
      %446 = vmatprep.subr.bf16.mxu0 0
      %447 = vmatpush1.bf16.msra.mxu0 0
      %448 = vmatprep.subr.bf16.mxu0 0
      %449 = vmatpush1.bf16.msra.mxu0 0
      %450 = vmatprep.subr.bf16.mxu0 0
      %451 = vmatpush1.bf16.msra.mxu0 0
      %452 = vmatprep.mubr.bf16.mxu0 0
      %453 = vmatmul.mubr.bf16.gmra.mrb[0].mxu0 %v305
      %v454 = vpop.f32.mrb[0].mxu0
      %v455 = vadd.f32 %v394, %v454
      %v456 = vpop.f32.mrb[0].mxu0
      %v457 = vpop.f32.mrb[0].mxu0
      %v458 = vadd.f32 %v394, %v457
      %v459 = vpop.f32.mrb[0].mxu0
      %460 = vmatprep.mubr.bf16.mxu0 0
      %461 = vmatmul.mubr.bf16.gmra.mrb[0].mxu0 %v308
      %v462 = vpop.f32.mrb[0].mxu0
      %v463 = vadd.f32 %v394, %v462
      %v464 = vpop.f32.mrb[0].mxu0
      %v465 = vpop.f32.mrb[0].mxu0
      %v466 = vadd.f32 %v394, %v465
      %v467 = vpop.f32.mrb[0].mxu0
      %468 = vmatprep.mubr.bf16.mxu0 0
      %469 = vmatmul.mubr.bf16.gmra.mrb[0].mxu0 %v311
      %v470 = vpop.f32.mrb[0].mxu0
      %v471 = vadd.f32 %v394, %v470
      %v472 = vpop.f32.mrb[0].mxu0
      %v473 = vpop.f32.mrb[0].mxu0
      %v474 = vadd.f32 %v394, %v473
      %v475 = vpop.f32.mrb[0].mxu0
      %476 = vmatprep.mubr.bf16.mxu0 0
      %477 = vmatmul.mubr.bf16.gmra.mrb[0].mxu0 %v314
      %v478 = vpop.f32.mrb[0].mxu0
      %v479 = vadd.f32 %v394, %v478
      %v480 = vpop.f32.mrb[0].mxu0
      %v481 = vpop.f32.mrb[0].mxu0
      %v482 = vadd.f32 %v394, %v481
      %v483 = vpop.f32.mrb[0].mxu0
      %484 = vdwg.mxu0
      %v485 = vpack.c.bf16 %v354, %v351
      %v486 = vpack.c.bf16 %v362, %v359
      %v487 = vpack.c.bf16 %v370, %v367
      %v488 = vpack.c.bf16 %v378, %v375
      %v493 = vunpack.c.l.b16 %v485
      %v494 = vunpack.c.h.b16 %v485
      %v495 = vunpack.c.l.b16 %v486
      %v496 = vunpack.c.h.b16 %v486
      %v497 = vunpack.c.l.b16 %v487
      %v498 = vunpack.c.h.b16 %v487
      %v499 = vunpack.c.l.b16 %v488
      %v500 = vunpack.c.h.b16 %v488
      %v501 = vpack.c.b16 %v493, %v493
      %v502 = vpack.c.b16 %v494, %v494
      %v503 = vpack.c.b16 %v495, %v495
      %v504 = vpack.c.b16 %v496, %v496
      %v505 = vpack.c.b16 %v497, %v497
      %v506 = vpack.c.b16 %v498, %v498
      %v507 = vpack.c.b16 %v499, %v499
      %v508 = vpack.c.b16 %v500, %v500
      %517 = vst [vmem:[%s234] sm:$0xf] %v501
      %518 = vst [vmem:[%s234 + $0x4] sm:$0xf] %v502
      %519 = vst [vmem:[%s234 + $0x8] sm:$0xf] %v503
      %520 = vst [vmem:[%s234 + $0xc] sm:$0xf] %v504
      %521 = vst [vmem:[%s234 + $0x10] sm:$0xf] %v505
      %522 = vst [vmem:[%s234 + $0x14] sm:$0xf] %v506
      %523 = vst [vmem:[%s234 + $0x18] sm:$0xf] %v507
      %524 = vst [vmem:[%s234 + $0x1c] sm:$0xf] %v508
      %v525 = vpack.c.bf16 %v458, %v455
      %v526 = vpack.c.bf16 %v466, %v463
      %v527 = vpack.c.bf16 %v474, %v471
      %v528 = vpack.c.bf16 %v482, %v479
      %v533 = vunpack.c.l.b16 %v525
      %v534 = vunpack.c.h.b16 %v525
      %v535 = vunpack.c.l.b16 %v526
      %v536 = vunpack.c.h.b16 %v526
      %v537 = vunpack.c.l.b16 %v527
      %v538 = vunpack.c.h.b16 %v527
      %v539 = vunpack.c.l.b16 %v528
      %v540 = vunpack.c.h.b16 %v528
      %v541 = vpack.c.b16 %v533, %v533
      %v542 = vpack.c.b16 %v534, %v534
      %v543 = vpack.c.b16 %v535, %v535
      %v544 = vpack.c.b16 %v536, %v536
      %v545 = vpack.c.b16 %v537, %v537
      %v546 = vpack.c.b16 %v538, %v538
      %v547 = vpack.c.b16 %v539, %v539
      %v548 = vpack.c.b16 %v540, %v540
      %557 = vst [vmem:[%s240] sm:$0xf] %v541
      %558 = vst [vmem:[%s240 + $0x4] sm:$0xf] %v542
      %559 = vst [vmem:[%s240 + $0x8] sm:$0xf] %v543
      %560 = vst [vmem:[%s240 + $0xc] sm:$0xf] %v544
      %561 = vst [vmem:[%s240 + $0x10] sm:$0xf] %v545
      %562 = vst [vmem:[%s240 + $0x14] sm:$0xf] %v546
      %563 = vst [vmem:[%s240 + $0x18] sm:$0xf] %v547
      %564 = vst [vmem:[%s240 + $0x1c] sm:$0xf] %v548
      %s565 = smul.u32 8, %s17
      %p566 = scmp.lt.s32.totalorder %s565, 15
      %s567 = scalar_select %p566, %s565, 15
      %s568 = smul.addr %s567, 4
      %s569 = scalar_lea.vmem %s4, %s568
      %s570 = smul.u32 8, %s17
      %p571 = scmp.lt.s32.totalorder %s570, 15
      %s572 = scalar_select %p571, %s570, 15
      %s573 = smul.addr %s572, 4
      %s574 = scalar_lea.vmem %s5, %s573
      // Predicated region
      $region37: #{_lambda_.11} parent=35 // pred_check
        %p575 = pneg %p124
      $region38: #{_lambda_.11} parent=35 // pred_check_branch
        %577 = sbr.rel (%p575) target = $region40
      $region39: #{_lambda_.11} parent=35 // pred_region
        %s578 = smul.u32 8, %s17
      $region40: #{_lambda_.11} parent=35 // pred_fallthru
        _
      // Predicated region
      $region41: #{_lambda_.11} parent=35 // pred_check
        %p579 = pneg %p150
      $region42: #{_lambda_.11} parent=35 // pred_check_branch
        %581 = sbr.rel (%p579) target = $region44
      $region43: #{_lambda_.11} parent=35 // pred_region
        %s582 = smul.u32 8, %s17
      $region44: #{_lambda_.11} parent=35 // pred_fallthru
        _
    $region36: #{_lambda_.11} parent=5 // pred_fallthru
      _
    %p583 = scmp.le.s32.totalorder 2, %s12
    // Predicated region
    $region45: #{_lambda_.11} parent=5 // pred_check
      %p584 = pneg %p583
    $region46: #{_lambda_.11} parent=5 // pred_check_branch
      %586 = sbr.rel (%p584) target = $region48
    $region47: #{_lambda_.11} parent=5 // pred_region
      %s587 = ssub.s32 %s12, 2
      // Predicated region
      $region49: #{_lambda_.11} parent=47 // pred_check
        %p588 = pneg %p130
      $region50: #{_lambda_.11} parent=47 // pred_check_branch
        %590 = sbr.rel (%p588) target = $region52
      $region51: #{_lambda_.11} parent=47 // pred_region
        %s591 = smul.u32 8, %s18
        %p592 = scmp.lt.s32.totalorder %s591, 15
        %s593 = scalar_select %p592, %s591, 15
        %s594 = smul.addr %s593, 4
        %s595 = scalar_lea.vmem %s4, %s594
      $region52: #{_lambda_.11} parent=47 // pred_fallthru
        _
      // Predicated region
      $region53: #{_lambda_.11} parent=47 // pred_check
        %p596 = pneg %p156
      $region54: #{_lambda_.11} parent=47 // pred_check_branch
        %598 = sbr.rel (%p596) target = $region56
      $region55: #{_lambda_.11} parent=47 // pred_region
        %s599 = smul.u32 8, %s18
        %p600 = scmp.lt.s32.totalorder %s599, 15
        %s601 = scalar_select %p600, %s599, 15
        %s602 = smul.addr %s601, 4
        %s603 = scalar_lea.vmem %s5, %s602
      $region56: #{_lambda_.11} parent=47 // pred_fallthru
        _
    $region48: #{_lambda_.11} parent=5 // pred_fallthru
      _
  $region6: #{_lambda_.11} parent=0 // loop_footer
    %s16 = sadd.s32 1, %s12
  $region7: #{_lambda_.11} parent=0 // loop_footer_branch
    %11 = sbr.rel target = $region3
  $region8: #{_lambda_.11} parent=0 // loop_exit
    _

// kernel: _lambda_.12
$region0: #{_lambda_.12}
  #allocation0 [shape = 'u32[]', space=smem, size = 0x4, offset = 0x4, fixed_abs, tag = 'smem constant byte address 0x4 - core index']
  #allocation1 [shape = 'u32[144,128]{1,0:T(1,128)}', space=vmem, size = 0x12000, scoped, tag = 'internal scratch']
  %s0 = inlined_call_operand.vmem [shape: bf16[2,64,128], index: 0, kind: input, shape index: {}, may-alias: {0,1}]
  %s1 = inlined_call_operand.vmem [shape: bf16[2,64,128], index: 1, kind: input, shape index: {}, may-alias: {0,1}]
  %s2 = inlined_call_operand.vmem [shape: f32[2,1,64], index: 2, kind: input, shape index: {}]
  %s3 = inlined_call_operand.vmem [shape: bf16[2,64,64], index: 3, kind: output, shape index: {}]
  %s4 = sld [smem:[#allocation0]]
  $region45: #{_lambda_.12} parent=0
    _
  %s6 = ssub.s32 1, %s4
  %s7 = scalar_select 0, %s6, %s4
  loop: start=0, step=1, limit=4
  $region2: #{_lambda_.12} parent=0 // loop_pre_header
    _
  $region3: #{_lambda_.12} parent=0 // loop_header
    %s9 = sphi 0, %s13
    %p10 = scmp.ge.s32.totalorder %s9, 4
    %s16 = sphi 0, %s28
    %s17 = sphi 0, %s24
    %s18 = sphi 0, %s16
    %s19 = sphi 0, %s17
    %s20 = sphi 0, %s18
    %s21 = sphi 0, %s19
    %s33 = sphi 0, %s35
    %s36 = sphi 0, %s33
    %s37 = sphi 0, %s36
    %s53 = sphi 0, %s37
    %s59 = sphi 0, %s61
    %s62 = sphi 0, %s59
    %s63 = sphi 0, %s62
    %s79 = sphi 0, %s63
    %s85 = sphi 0, %s87
    %s88 = sphi 0, %s85
    %s89 = sphi 0, %s88
    %s105 = sphi 0, %s89
    %s113 = sphi 0, %s115
    %s116 = sphi 0, %s113
    %s117 = sphi 0, %s116
    %s133 = sphi 0, %s117
  $region4: #{_lambda_.12} parent=0 // loop_header_branch
    %12 = sbr.rel (%p10) target = $region8
  $region5: #{_lambda_.12} parent=0 // loop_body
    %s14 = ssub.s32 %s9, 1
    %s15 = ssub.s32 %s9, 2
    %s22 = sadd.s32 1, %s17
    %p23 = scmp.ge.s32.totalorder %s22, 1
    %s24 = scalar_select %p23, 0, %s22
    %s25 = sadd.s32 1, %s16
    %s26 = scalar_select %p23, %s25, %s16
    %p27 = scmp.ge.s32.totalorder %s26, 2
    %s28 = scalar_select %p27, 0, %s26
    %s29 = ssub.s32 %s16, %s28
    %s30 = ssub.s32 %s17, %s24
    %s31 = sor.u32 %s29, %s30
    %p32 = scmp.eq.s32.totalorder %s31, 0
    %s34 = sadd.s32 %s33, 1
    %s35 = scalar_select %p32, %s33, %s34
    %p38 = pneg %p32
    %p39 = scmp.eq.s32.totalorder %s9, 1
    %p40 = por %p38, %p39
    %p41 = scmp.ne.s32.totalorder %s33, %s36
    %p42 = scmp.eq.s32.totalorder %s9, 0
    %p43 = por %p41, %p42
    %p44 = scmp.ne.s32.totalorder %s33, %s36
    %p45 = scmp.eq.s32.totalorder %s14, 1
    %p46 = por %p44, %p45
    %p47 = scmp.ne.s32.totalorder %s36, %s37
    %p48 = scmp.eq.s32.totalorder %s14, 0
    %p49 = por %p47, %p48
    %p50 = scmp.ne.s32.totalorder %s36, %s37
    %p51 = scmp.eq.s32.totalorder %s15, 1
    %p52 = por %p50, %p51
    %p54 = scmp.ne.s32.totalorder %s37, %s53
    %p55 = scmp.eq.s32.totalorder %s15, 0
    %p56 = por %p54, %p55
    %s57 = ssub.s32 %s16, %s28
    %p58 = scmp.eq.s32.totalorder %s57, 0
    %s60 = sadd.s32 %s59, 1
    %s61 = scalar_select %p58, %s59, %s60
    %p64 = pneg %p58
    %p65 = scmp.eq.s32.totalorder %s9, 1
    %p66 = por %p64, %p65
    %p67 = scmp.ne.s32.totalorder %s59, %s62
    %p68 = scmp.eq.s32.totalorder %s9, 0
    %p69 = por %p67, %p68
    %p70 = scmp.ne.s32.totalorder %s59, %s62
    %p71 = scmp.eq.s32.totalorder %s14, 1
    %p72 = por %p70, %p71
    %p73 = scmp.ne.s32.totalorder %s62, %s63
    %p74 = scmp.eq.s32.totalorder %s14, 0
    %p75 = por %p73, %p74
    %p76 = scmp.ne.s32.totalorder %s62, %s63
    %p77 = scmp.eq.s32.totalorder %s15, 1
    %p78 = por %p76, %p77
    %p80 = scmp.ne.s32.totalorder %s63, %s79
    %p81 = scmp.eq.s32.totalorder %s15, 0
    %p82 = por %p80, %p81
    %s83 = ssub.s32 %s16, %s28
    %p84 = scmp.eq.s32.totalorder %s83, 0
    %s86 = sadd.s32 %s85, 1
    %s87 = scalar_select %p84, %s85, %s86
    %p90 = pneg %p84
    %p91 = scmp.eq.s32.totalorder %s9, 1
    %p92 = por %p90, %p91
    %p93 = scmp.ne.s32.totalorder %s85, %s88
    %p94 = scmp.eq.s32.totalorder %s9, 0
    %p95 = por %p93, %p94
    %p96 = scmp.ne.s32.totalorder %s85, %s88
    %p97 = scmp.eq.s32.totalorder %s14, 1
    %p98 = por %p96, %p97
    %p99 = scmp.ne.s32.totalorder %s88, %s89
    %p100 = scmp.eq.s32.totalorder %s14, 0
    %p101 = por %p99, %p100
    %p102 = scmp.ne.s32.totalorder %s88, %s89
    %p103 = scmp.eq.s32.totalorder %s15, 1
    %p104 = por %p102, %p103
    %p106 = scmp.ne.s32.totalorder %s89, %s105
    %p107 = scmp.eq.s32.totalorder %s15, 0
    %p108 = por %p106, %p107
    %s109 = ssub.s32 %s16, %s28
    %s110 = ssub.s32 %s17, %s24
    %s111 = sor.u32 %s109, %s110
    %p112 = scmp.eq.s32.totalorder %s111, 0
    %s114 = sadd.s32 %s113, 1
    %s115 = scalar_select %p112, %s113, %s114
    %p118 = pneg %p112
    %p119 = scmp.eq.s32.totalorder %s9, 1
    %p120 = por %p118, %p119
    %p121 = scmp.ne.s32.totalorder %s113, %s116
    %p122 = scmp.eq.s32.totalorder %s9, 0
    %p123 = por %p121, %p122
    %p124 = scmp.ne.s32.totalorder %s113, %s116
    %p125 = scmp.eq.s32.totalorder %s14, 1
    %p126 = por %p124, %p125
    %p127 = scmp.ne.s32.totalorder %s116, %s117
    %p128 = scmp.eq.s32.totalorder %s14, 0
    %p129 = por %p127, %p128
    %p130 = scmp.ne.s32.totalorder %s116, %s117
    %p131 = scmp.eq.s32.totalorder %s15, 1
    %p132 = por %p130, %p131
    %p134 = scmp.ne.s32.totalorder %s117, %s133
    %p135 = scmp.eq.s32.totalorder %s15, 0
    %p136 = por %p134, %p135
    %p137 = scmp.le.s32.totalorder 1, %s9
    %p138 = scmp.lt.s32.totalorder %s9, 3
    %p139 = pnand %p137, %p138
    %p140 = pneg %p139
    // Predicated region
    $region9: #{_lambda_.12} parent=5 // pred_check
      _
    $region10: #{_lambda_.12} parent=5 // pred_check_branch
      %142 = sbr.rel (%p139) target = $region12
    $region11: #{_lambda_.12} parent=5 // pred_region
      %s143 = ssub.s32 %s9, 1
    $region12: #{_lambda_.12} parent=5 // pred_fallthru
      _
    %p144 = scmp.lt.s32.totalorder %s9, 2
    // Predicated region
    $region13: #{_lambda_.12} parent=5 // pred_check
      %p145 = pneg %p144
    $region14: #{_lambda_.12} parent=5 // pred_check_branch
      %147 = sbr.rel (%p145) target = $region16
    $region15: #{_lambda_.12} parent=5 // pred_region
      // Predicated region
      $region17: #{_lambda_.12} parent=15 // pred_check
        %p148 = pneg %p43
      $region18: #{_lambda_.12} parent=15 // pred_check_branch
        %150 = sbr.rel (%p148) target = $region20
      $region19: #{_lambda_.12} parent=15 // pred_region
        %s151 = smul.u32 8, %s17
        %p152 = scmp.lt.s32.totalorder %s16, 1
        %s153 = scalar_select %p152, %s16, 1
        %p154 = scmp.lt.s32.totalorder %s151, 7
        %s155 = scalar_select %p154, %s151, 7
        %s156 = smul.addr %s153, 8
        %s157 = sadd.s32 %s155, %s156
        %s158 = smul.addr %s157, 4
        %s159 = scalar_lea.vmem %s0, %s158
        %s160 = smul.u32 8, %s17
      $region20: #{_lambda_.12} parent=15 // pred_fallthru
        _
      // Predicated region
      $region21: #{_lambda_.12} parent=15 // pred_check
        %p161 = pneg %p69
      $region22: #{_lambda_.12} parent=15 // pred_check_branch
        %163 = sbr.rel (%p161) target = $region24
      $region23: #{_lambda_.12} parent=15 // pred_region
        %p164 = scmp.lt.s32.totalorder %s16, 1
        %s165 = scalar_select %p164, %s16, 1
        %s166 = smul.addr %s165, 8
        %s167 = smul.addr %s166, 4
        %s168 = scalar_lea.vmem %s1, %s167
      $region24: #{_lambda_.12} parent=15 // pred_fallthru
        _
      // Predicated region
      $region25: #{_lambda_.12} parent=15 // pred_check
        %p169 = pneg %p95
      $region26: #{_lambda_.12} parent=15 // pred_check_branch
        %171 = sbr.rel (%p169) target = $region28
      $region27: #{_lambda_.12} parent=15 // pred_region
        %p172 = scmp.lt.s32.totalorder %s16, 1
        %s173 = scalar_select %p172, %s16, 1
        %s174 = scalar_lea.vmem %s2, %s173
      $region28: #{_lambda_.12} parent=15 // pred_fallthru
        _
    $region16: #{_lambda_.12} parent=5 // pred_fallthru
      _
    %p175 = scmp.le.s32.totalorder 1, %s9
    %p176 = scmp.lt.s32.totalorder %s9, 3
    %p177 = pnand %p175, %p176
    %p178 = pneg %p177
    // Predicated region
    $region29: #{_lambda_.12} parent=5 // pred_check
      _
    $region30: #{_lambda_.12} parent=5 // pred_check_branch
      %180 = sbr.rel (%p177) target = $region32
    $region31: #{_lambda_.12} parent=5 // pred_region
      %s181 = ssub.s32 %s9, 1
      %s182 = smul.u32 8, %s19
      %p183 = scmp.lt.s32.totalorder %s18, 1
      %s184 = scalar_select %p183, %s18, 1
      %p185 = scmp.lt.s32.totalorder %s182, 7
      %s186 = scalar_select %p185, %s182, 7
      %s187 = smul.addr %s184, 8
      %s188 = sadd.s32 %s186, %s187
      %s189 = smul.addr %s188, 4
      %s190 = scalar_lea.vmem %s0, %s189
      %p191 = pneg %p49
      %p192 = pneg %p46
      %p193 = scmp.lt.s32.totalorder %s18, 1
      %s194 = scalar_select %p193, %s18, 1
      %s195 = smul.addr %s194, 8
      %s196 = smul.addr %s195, 4
      %s197 = scalar_lea.vmem %s1, %s196
      %p198 = pneg %p75
      %p199 = pneg %p72
      %p200 = scmp.lt.s32.totalorder %s18, 1
      %s201 = scalar_select %p200, %s18, 1
      %s202 = scalar_lea.vmem %s2, %s201
      %p203 = pneg %p101
      %p204 = pneg %p98
      %p205 = pneg %p129
      %p206 = pneg %p126
      %s207 = smul.u32 8, %s19
      %p208 = scmp.lt.s32.totalorder %s18, 1
      %s209 = scalar_select %p208, %s18, 1
      %p210 = scmp.lt.s32.totalorder %s207, 7
      %s211 = scalar_select %p210, %s207, 7
      %s212 = smul.addr %s209, 8
      %s213 = sadd.s32 %s211, %s212
      %s214 = smul.addr %s213, 4
      %s215 = scalar_lea.vmem %s3, %s214
      %s216 = smul.u32 8, %s19
      %p217 = scmp.lt.s32.totalorder %s18, 1
      %s218 = scalar_select %p217, %s18, 1
      %p219 = scmp.lt.s32.totalorder %s216, 7
      %s220 = scalar_select %p219, %s216, 7
      %s221 = smul.addr %s218, 8
      %s222 = sadd.s32 %s220, %s221
      %s223 = smul.addr %s222, 4
      %s224 = scalar_lea.vmem %s0, %s223
      %s225 = smul.u32 8, %s19
      %p226 = scmp.lt.s32.totalorder %s18, 1
      %s227 = scalar_select %p226, %s18, 1
      %s228 = smul.addr %s227, 8
      %s229 = smul.addr %s228, 4
      %s230 = scalar_lea.vmem %s1, %s229
      %p231 = scmp.lt.s32.totalorder %s18, 1
      %s232 = scalar_select %p231, %s18, 1
      %s233 = scalar_lea.vmem %s2, %s232
      %s234 = smul.u32 8, %s19
      %p235 = scmp.lt.s32.totalorder %s18, 1
      %s236 = scalar_select %p235, %s18, 1
      %p237 = scmp.lt.s32.totalorder %s234, 7
      %s238 = scalar_select %p237, %s234, 7
      %s239 = smul.addr %s236, 8
      %s240 = sadd.s32 %s238, %s239
      %s241 = smul.addr %s240, 4
      %s242 = scalar_lea.vmem %s3, %s241
      %s243 = smul.u32 8, %s19
      %v245 = vld [vmem:[%s224] sm:$0xf]
      %v246 = vld [vmem:[%s224 + $0x4] sm:$0xf]
      %v247 = vld [vmem:[%s224 + $0x8] sm:$0xf]
      %v248 = vld [vmem:[%s224 + $0xc] sm:$0xf]
      %v249 = vld [vmem:[%s224 + $0x10] sm:$0xf]
      %v250 = vld [vmem:[%s224 + $0x14] sm:$0xf]
      %v251 = vld [vmem:[%s224 + $0x18] sm:$0xf]
      %v252 = vld [vmem:[%s224 + $0x1c] sm:$0xf]
      %v253 = vld [vmem:[%s230] sm:$0xf]
      %v254 = vld [vmem:[%s230 + $0x4] sm:$0xf]
      %v255 = vld [vmem:[%s230 + $0x8] sm:$0xf]
      %v256 = vld [vmem:[%s230 + $0xc] sm:$0xf]
      %v257 = vld [vmem:[%s230 + $0x10] sm:$0xf]
      %v258 = vld [vmem:[%s230 + $0x14] sm:$0xf]
      %v259 = vld [vmem:[%s230 + $0x18] sm:$0xf]
      %v260 = vld [vmem:[%s230 + $0x1c] sm:$0xf]
      %v269 = vunpack.c.l.b16 %v245
      %v270 = vunpack.c.l.b16 %v246
      %v271 = vunpack.c.l.b16 %v247
      %v272 = vunpack.c.l.b16 %v248
      %v273 = vunpack.c.l.b16 %v249
      %v274 = vunpack.c.l.b16 %v250
      %v275 = vunpack.c.l.b16 %v251
      %v276 = vunpack.c.l.b16 %v252
      %v277 = vpack.c.b16 %v270, %v269
      %v278 = vpack.c.b16 %v272, %v271
      %v279 = vpack.c.b16 %v274, %v273
      %v280 = vpack.c.b16 %v276, %v275
      %v293 = vunpack.c.l.b16 %v253
      %v294 = vunpack.c.l.b16 %v254
      %v295 = vunpack.c.l.b16 %v255
      %v296 = vunpack.c.l.b16 %v256
      %v297 = vunpack.c.l.b16 %v257
      %v298 = vunpack.c.l.b16 %v258
      %v299 = vunpack.c.l.b16 %v259
      %v300 = vunpack.c.l.b16 %v260
      %v301 = vpack.c.b16 %v294, %v293
      %v302 = vpack.c.b16 %v296, %v295
      %v303 = vpack.c.b16 %v298, %v297
      %v304 = vpack.c.b16 %v300, %v299
      %309 = vmatprep.subr.bf16.mxu0 0
      %310 = vmatpush1.bf16.xpose.msra.mxu0 %v301
      %311 = vmatprep.subr.bf16.mxu0 0
      %312 = vmatpush1.bf16.xpose.msra.mxu0 %v302
      %313 = vmatprep.subr.bf16.mxu0 0
      %314 = vmatpush1.bf16.xpose.msra.mxu0 %v303
      %315 = vmatprep.subr.bf16.mxu0 0
      %316 = vmatpush1.bf16.xpose.msra.mxu0 %v304
      %317 = vmatprep.subr.bf16.mxu0 0
      %318 = vmatpush1.bf16.xpose.msra.mxu0 0
      %319 = vmatprep.subr.bf16.mxu0 0
      %320 = vmatpush1.bf16.xpose.msra.mxu0 0
      %321 = vmatprep.subr.bf16.mxu0 0
      %322 = vmatpush1.bf16.xpose.msra.mxu0 0
      %323 = vmatprep.subr.bf16.mxu0 0
      %324 = vmatpush1.bf16.xpose.msra.mxu0 0
      %325 = vmatprep.subr.bf16.mxu0 0
      %326 = vmatpush1.bf16.xpose.msra.mxu0 0
      %327 = vmatprep.subr.bf16.mxu0 0
      %328 = vmatpush1.bf16.xpose.msra.mxu0 0
      %329 = vmatprep.subr.bf16.mxu0 0
      %330 = vmatpush1.bf16.xpose.msra.mxu0 0
      %331 = vmatprep.subr.bf16.mxu0 0
      %332 = vmatpush1.bf16.xpose.msra.mxu0 0
      %333 = vmatprep.subr.bf16.mxu0 0
      %334 = vmatpush1.bf16.xpose.msra.mxu0 0
      %335 = vmatprep.subr.bf16.mxu0 0
      %336 = vmatpush1.bf16.xpose.msra.mxu0 0
      %337 = vmatprep.subr.bf16.mxu0 0
      %338 = vmatpush1.bf16.xpose.msra.mxu0 0
      %339 = vmatprep.subr.bf16.mxu0 0
      %340 = vmatpush1.bf16.xpose.msra.mxu0 0
      %341 = vmatprep.mubr.bf16.mxu0 0
      %342 = vmatmul.mubr.bf16.gmra.mrb[0].mxu0 %v277
      %v343 = vpop.f32.mrb[0].mxu0
      %v344 = vadd.f32 0.0, %v343
      %v345 = vpop.f32.mrb[0].mxu0
      %v346 = vpop.f32.mrb[0].mxu0
      %v347 = vadd.f32 0.0, %v346
      %v348 = vpop.f32.mrb[0].mxu0
      %349 = vmatprep.mubr.bf16.mxu0 0
      %350 = vmatmul.mubr.bf16.gmra.mrb[0].mxu0 %v278
      %v351 = vpop.f32.mrb[0].mxu0
      %v352 = vadd.f32 0.0, %v351
      %v353 = vpop.f32.mrb[0].mxu0
      %v354 = vpop.f32.mrb[0].mxu0
      %v355 = vadd.f32 0.0, %v354
      %v356 = vpop.f32.mrb[0].mxu0
      %357 = vmatprep.mubr.bf16.mxu0 0
      %358 = vmatmul.mubr.bf16.gmra.mrb[0].mxu0 %v279
      %v359 = vpop.f32.mrb[0].mxu0
      %v360 = vadd.f32 0.0, %v359
      %v361 = vpop.f32.mrb[0].mxu0
      %v362 = vpop.f32.mrb[0].mxu0
      %v363 = vadd.f32 0.0, %v362
      %v364 = vpop.f32.mrb[0].mxu0
      %365 = vmatprep.mubr.bf16.mxu0 0
      %366 = vmatmul.mubr.bf16.gmra.mrb[0].mxu0 %v280
      %v367 = vpop.f32.mrb[0].mxu0
      %v368 = vadd.f32 0.0, %v367
      %v369 = vpop.f32.mrb[0].mxu0
      %v370 = vpop.f32.mrb[0].mxu0
      %v371 = vadd.f32 0.0, %v370
      %v372 = vpop.f32.mrb[0].mxu0
      %373 = vdwg.mxu0
      %v374 = vmul.f32 %v344, 2.0
      %v375 = vmul.f32 %v347, 2.0
      %v376 = vmul.f32 %v352, 2.0
      %v377 = vmul.f32 %v355, 2.0
      %v378 = vmul.f32 %v360, 2.0
      %v379 = vmul.f32 %v363, 2.0
      %v380 = vmul.f32 %v368, 2.0
      %v381 = vmul.f32 %v371, 2.0
      %v382 = vld [vmem:[%s233] sm:$0x1]
      %v384 = vlaneseq
      %v385 = vshrl.u32 %v384, 7
      %v386 = vsub.s32 0, %v385
      %v387 = vrot.slane %v382, %v386
      %v389 = vsub.f32 %v374, %v387
      %v390 = vsub.f32 %v375, %v387
      %v391 = vsub.f32 %v376, %v387
      %v392 = vsub.f32 %v377, %v387
      %v393 = vsub.f32 %v378, %v387
      %v394 = vsub.f32 %v379, %v387
      %v395 = vsub.f32 %v380, %v387
      %v396 = vsub.f32 %v381, %v387
      %v397 = vpack.c.bf16 %v390, %v389
      %v398 = vpack.c.bf16 %v392, %v391
      %v399 = vpack.c.bf16 %v394, %v393
      %v400 = vpack.c.bf16 %v396, %v395
      %v405 = vunpack.c.l.b16 %v397
      %v406 = vunpack.c.h.b16 %v397
      %v407 = vunpack.c.l.b16 %v398
      %v408 = vunpack.c.h.b16 %v398
      %v409 = vunpack.c.l.b16 %v399
      %v410 = vunpack.c.h.b16 %v399
      %v411 = vunpack.c.l.b16 %v400
      %v412 = vunpack.c.h.b16 %v400
      %v413 = vpack.c.b16 %v405, %v405
      %v414 = vpack.c.b16 %v406, %v406
      %v415 = vpack.c.b16 %v407, %v407
      %v416 = vpack.c.b16 %v408, %v408
      %v417 = vpack.c.b16 %v409, %v409
      %v418 = vpack.c.b16 %v410, %v410
      %v419 = vpack.c.b16 %v411, %v411
      %v420 = vpack.c.b16 %v412, %v412
      %vm429 = vcmask 519168
      %430 = vst.msk [vmem:[%s242] sm:$0xf] %vm429, %v413
      %431 = vst.msk [vmem:[%s242 + $0x4] sm:$0xf] %vm429, %v414
      %432 = vst.msk [vmem:[%s242 + $0x8] sm:$0xf] %vm429, %v415
      %433 = vst.msk [vmem:[%s242 + $0xc] sm:$0xf] %vm429, %v416
      %434 = vst.msk [vmem:[%s242 + $0x10] sm:$0xf] %vm429, %v417
      %435 = vst.msk [vmem:[%s242 + $0x14] sm:$0xf] %vm429, %v418
      %436 = vst.msk [vmem:[%s242 + $0x18] sm:$0xf] %vm429, %v419
      %437 = vst.msk [vmem:[%s242 + $0x1c] sm:$0xf] %vm429, %v420
      %s438 = smul.u32 8, %s19
      %p439 = scmp.lt.s32.totalorder %s18, 1
      %s440 = scalar_select %p439, %s18, 1
      %p441 = scmp.lt.s32.totalorder %s438, 7
      %s442 = scalar_select %p441, %s438, 7
      %s443 = smul.addr %s440, 8
      %s444 = sadd.s32 %s442, %s443
      %s445 = smul.addr %s444, 4
      %s446 = scalar_lea.vmem %s3, %s445
      // Predicated region
      $region33: #{_lambda_.12} parent=31 // pred_check
        %p447 = pneg %p126
      $region34: #{_lambda_.12} parent=31 // pred_check_branch
        %449 = sbr.rel (%p447) target = $region36
      $region35: #{_lambda_.12} parent=31 // pred_region
        %s450 = smul.u32 8, %s19
      $region36: #{_lambda_.12} parent=31 // pred_fallthru
        _
    $region32: #{_lambda_.12} parent=5 // pred_fallthru
      _
    %p451 = scmp.le.s32.totalorder 2, %s9
    // Predicated region
    $region37: #{_lambda_.12} parent=5 // pred_check
      %p452 = pneg %p451
    $region38: #{_lambda_.12} parent=5 // pred_check_branch
      %454 = sbr.rel (%p452) target = $region40
    $region39: #{_lambda_.12} parent=5 // pred_region
      %s455 = ssub.s32 %s9, 2
      // Predicated region
      $region41: #{_lambda_.12} parent=39 // pred_check
        %p456 = pneg %p132
      $region42: #{_lambda_.12} parent=39 // pred_check_branch
        %458 = sbr.rel (%p456) target = $region44
      $region43: #{_lambda_.12} parent=39 // pred_region
        %s459 = smul.u32 8, %s21
        %p460 = scmp.lt.s32.totalorder %s20, 1
        %s461 = scalar_select %p460, %s20, 1
        %p462 = scmp.lt.s32.totalorder %s459, 7
        %s463 = scalar_select %p462, %s459, 7
        %s464 = smul.addr %s461, 8
        %s465 = sadd.s32 %s463, %s464
        %s466 = smul.addr %s465, 4
        %s467 = scalar_lea.vmem %s3, %s466
      $region44: #{_lambda_.12} parent=39 // pred_fallthru
        _
    $region40: #{_lambda_.12} parent=5 // pred_fallthru
      _
  $region6: #{_lambda_.12} parent=0 // loop_footer
    %s13 = sadd.s32 1, %s9
  $region7: #{_lambda_.12} parent=0 // loop_footer_branch
    %8 = sbr.rel target = $region3
  $region8: #{_lambda_.12} parent=0 // loop_exit
    _

// kernel: _lambda_.13
$region0: #{_lambda_.13}
  #allocation0 [shape = 'u32[]', space=smem, size = 0x4, offset = 0x4, fixed_abs, tag = 'smem constant byte address 0x4 - core index']
  #allocation1 [shape = 'u32[144,128]{1,0:T(1,128)}', space=vmem, size = 0x12000, scoped, tag = 'internal scratch']
  %s0 = inlined_call_operand.vmem [shape: bf16[128,128], index: 0, kind: input, shape index: {}]
  %s1 = inlined_call_operand.vmem [shape: bf16[128,256], index: 1, kind: input, shape index: {}]
  %s2 = inlined_call_operand.vmem [shape: bf16[128,256], index: 2, kind: input, shape index: {}]
  %s3 = inlined_call_operand.vmem [shape: f32[1,256], index: 3, kind: input, shape index: {}]
  %s4 = inlined_call_operand.vmem [shape: bf16[128,256], index: 4, kind: output, shape index: {0}]
  %s5 = inlined_call_operand.vmem [shape: bf16[128,256], index: 5, kind: output, shape index: {1}]
  %6 = xla_tuple %s4, %s5
  %s7 = sld [smem:[#allocation0]]
  $region57: #{_lambda_.13} parent=0
    _
  %s9 = ssub.s32 1, %s7
  %s10 = scalar_select 0, %s9, %s7
  loop: start=0, step=1, limit=4
  $region2: #{_lambda_.13} parent=0 // loop_pre_header
    _
  $region3: #{_lambda_.13} parent=0 // loop_header
    %s12 = sphi 0, %s16
    %p13 = scmp.ge.s32.totalorder %s12, 4
    %s22 = sphi 0, %s24
    %s25 = sphi 0, %s22
    %s26 = sphi 0, %s25
    %s42 = sphi 0, %s26
    %s46 = sphi 0, %s46
    %s48 = sphi 0, %s46
    %s49 = sphi 0, %s48
    %s63 = sphi 0, %s49
    %s67 = sphi 0, %s67
    %s69 = sphi 0, %s67
    %s70 = sphi 0, %s69
    %s84 = sphi 0, %s70
    %s88 = sphi 0, %s88
    %s90 = sphi 0, %s88
    %s91 = sphi 0, %s90
    %s105 = sphi 0, %s91
    %s111 = sphi 0, %s113
    %s114 = sphi 0, %s111
    %s115 = sphi 0, %s114
    %s131 = sphi 0, %s115
    %s137 = sphi 0, %s139
    %s140 = sphi 0, %s137
    %s141 = sphi 0, %s140
    %s157 = sphi 0, %s141
  $region4: #{_lambda_.13} parent=0 // loop_header_branch
    %15 = sbr.rel (%p13) target = $region8
  $region5: #{_lambda_.13} parent=0 // loop_body
    %s17 = ssub.s32 %s12, 1
    %s18 = ssub.s32 %s12, 2
    %s19 = sadd.s32 %s12, 1
    %s20 = ssub.s32 %s12, %s19
    %p21 = scmp.eq.s32.totalorder %s20, 0
    %s23 = sadd.s32 %s22, 1
    %s24 = scalar_select %p21, %s22, %s23
    %p27 = pneg %p21
    %p28 = scmp.eq.s32.totalorder %s12, 1
    %p29 = por %p27, %p28
    %p30 = scmp.ne.s32.totalorder %s22, %s25
    %p31 = scmp.eq.s32.totalorder %s12, 0
    %p32 = por %p30, %p31
    %p33 = scmp.ne.s32.totalorder %s22, %s25
    %p34 = scmp.eq.s32.totalorder %s17, 1
    %p35 = por %p33, %p34
    %p36 = scmp.ne.s32.totalorder %s25, %s26
    %p37 = scmp.eq.s32.totalorder %s17, 0
    %p38 = por %p36, %p37
    %p39 = scmp.ne.s32.totalorder %s25, %s26
    %p40 = scmp.eq.s32.totalorder %s18, 1
    %p41 = por %p39, %p40
    %p43 = scmp.ne.s32.totalorder %s26, %s42
    %p44 = scmp.eq.s32.totalorder %s18, 0
    %p45 = por %p43, %p44
    %s47 = sadd.s32 %s46, 1
    %p50 = scmp.eq.s32.totalorder %s12, 1
    %p51 = scmp.ne.s32.totalorder %s46, %s48
    %p52 = scmp.eq.s32.totalorder %s12, 0
    %p53 = por %p51, %p52
    %p54 = scmp.ne.s32.totalorder %s46, %s48
    %p55 = scmp.eq.s32.totalorder %s17, 1
    %p56 = por %p54, %p55
    %p57 = scmp.ne.s32.totalorder %s48, %s49
    %p58 = scmp.eq.s32.totalorder %s17, 0
    %p59 = por %p57, %p58
    %p60 = scmp.ne.s32.totalorder %s48, %s49
    %p61 = scmp.eq.s32.totalorder %s18, 1
    %p62 = por %p60, %p61
    %p64 = scmp.ne.s32.totalorder %s49, %s63
    %p65 = scmp.eq.s32.totalorder %s18, 0
    %p66 = por %p64, %p65
    %s68 = sadd.s32 %s67, 1
    %p71 = scmp.eq.s32.totalorder %s12, 1
    %p72 = scmp.ne.s32.totalorder %s67, %s69
    %p73 = scmp.eq.s32.totalorder %s12, 0
    %p74 = por %p72, %p73
    %p75 = scmp.ne.s32.totalorder %s67, %s69
    %p76 = scmp.eq.s32.totalorder %s17, 1
    %p77 = por %p75, %p76
    %p78 = scmp.ne.s32.totalorder %s69, %s70
    %p79 = scmp.eq.s32.totalorder %s17, 0
    %p80 = por %p78, %p79
    %p81 = scmp.ne.s32.totalorder %s69, %s70
    %p82 = scmp.eq.s32.totalorder %s18, 1
    %p83 = por %p81, %p82
    %p85 = scmp.ne.s32.totalorder %s70, %s84
    %p86 = scmp.eq.s32.totalorder %s18, 0
    %p87 = por %p85, %p86
    %s89 = sadd.s32 %s88, 1
    %p92 = scmp.eq.s32.totalorder %s12, 1
    %p93 = scmp.ne.s32.totalorder %s88, %s90
    %p94 = scmp.eq.s32.totalorder %s12, 0
    %p95 = por %p93, %p94
    %p96 = scmp.ne.s32.totalorder %s88, %s90
    %p97 = scmp.eq.s32.totalorder %s17, 1
    %p98 = por %p96, %p97
    %p99 = scmp.ne.s32.totalorder %s90, %s91
    %p100 = scmp.eq.s32.totalorder %s17, 0
    %p101 = por %p99, %p100
    %p102 = scmp.ne.s32.totalorder %s90, %s91
    %p103 = scmp.eq.s32.totalorder %s18, 1
    %p104 = por %p102, %p103
    %p106 = scmp.ne.s32.totalorder %s91, %s105
    %p107 = scmp.eq.s32.totalorder %s18, 0
    %p108 = por %p106, %p107
    %s109 = ssub.s32 %s12, %s19
    %p110 = scmp.eq.s32.totalorder %s109, 0
    %s112 = sadd.s32 %s111, 1
    %s113 = scalar_select %p110, %s111, %s112
    %p116 = pneg %p110
    %p117 = scmp.eq.s32.totalorder %s12, 1
    %p118 = por %p116, %p117
    %p119 = scmp.ne.s32.totalorder %s111, %s114
    %p120 = scmp.eq.s32.totalorder %s12, 0
    %p121 = por %p119, %p120
    %p122 = scmp.ne.s32.totalorder %s111, %s114
    %p123 = scmp.eq.s32.totalorder %s17, 1
    %p124 = por %p122, %p123
    %p125 = scmp.ne.s32.totalorder %s114, %s115
    %p126 = scmp.eq.s32.totalorder %s17, 0
    %p127 = por %p125, %p126
    %p128 = scmp.ne.s32.totalorder %s114, %s115
    %p129 = scmp.eq.s32.totalorder %s18, 1
    %p130 = por %p128, %p129
    %p132 = scmp.ne.s32.totalorder %s115, %s131
    %p133 = scmp.eq.s32.totalorder %s18, 0
    %p134 = por %p132, %p133
    %s135 = ssub.s32 %s12, %s19
    %p136 = scmp.eq.s32.totalorder %s135, 0
    %s138 = sadd.s32 %s137, 1
    %s139 = scalar_select %p136, %s137, %s138
    %p142 = pneg %p136
    %p143 = scmp.eq.s32.totalorder %s12, 1
    %p144 = por %p142, %p143
    %p145 = scmp.ne.s32.totalorder %s137, %s140
    %p146 = scmp.eq.s32.totalorder %s12, 0
    %p147 = por %p145, %p146
    %p148 = scmp.ne.s32.totalorder %s137, %s140
    %p149 = scmp.eq.s32.totalorder %s17, 1
    %p150 = por %p148, %p149
    %p151 = scmp.ne.s32.totalorder %s140, %s141
    %p152 = scmp.eq.s32.totalorder %s17, 0
    %p153 = por %p151, %p152
    %p154 = scmp.ne.s32.totalorder %s140, %s141
    %p155 = scmp.eq.s32.totalorder %s18, 1
    %p156 = por %p154, %p155
    %p158 = scmp.ne.s32.totalorder %s141, %s157
    %p159 = scmp.eq.s32.totalorder %s18, 0
    %p160 = por %p158, %p159
    %p161 = scmp.le.s32.totalorder 1, %s12
    %p162 = scmp.lt.s32.totalorder %s12, 3
    %p163 = pnand %p161, %p162
    %p164 = pneg %p163
    // Predicated region
    $region9: #{_lambda_.13} parent=5 // pred_check
      _
    $region10: #{_lambda_.13} parent=5 // pred_check_branch
      %166 = sbr.rel (%p163) target = $region12
    $region11: #{_lambda_.13} parent=5 // pred_region
      %s167 = ssub.s32 %s12, 1
      // Predicated region
      $region13: #{_lambda_.13} parent=11 // pred_check
        %p168 = pneg %p59
      $region14: #{_lambda_.13} parent=11 // pred_check_branch
        %170 = sbr.rel (%p168) target = $region16
      $region15: #{_lambda_.13} parent=11 // pred_region
        _
      $region16: #{_lambda_.13} parent=11 // pred_fallthru
        _
      // Predicated region
      $region17: #{_lambda_.13} parent=11 // pred_check
        %p171 = pneg %p80
      $region18: #{_lambda_.13} parent=11 // pred_check_branch
        %173 = sbr.rel (%p171) target = $region20
      $region19: #{_lambda_.13} parent=11 // pred_region
        _
      $region20: #{_lambda_.13} parent=11 // pred_fallthru
        _
      // Predicated region
      $region21: #{_lambda_.13} parent=11 // pred_check
        %p174 = pneg %p101
      $region22: #{_lambda_.13} parent=11 // pred_check_branch
        %176 = sbr.rel (%p174) target = $region24
      $region23: #{_lambda_.13} parent=11 // pred_region
        _
      $region24: #{_lambda_.13} parent=11 // pred_fallthru
        _
    $region12: #{_lambda_.13} parent=5 // pred_fallthru
      _
    %p177 = scmp.lt.s32.totalorder %s12, 2
    // Predicated region
    $region25: #{_lambda_.13} parent=5 // pred_check
      %p178 = pneg %p177
    $region26: #{_lambda_.13} parent=5 // pred_check_branch
      %180 = sbr.rel (%p178) target = $region28
    $region27: #{_lambda_.13} parent=5 // pred_region
      // Predicated region
      $region29: #{_lambda_.13} parent=27 // pred_check
        %p181 = pneg %p32
      $region30: #{_lambda_.13} parent=27 // pred_check_branch
        %183 = sbr.rel (%p181) target = $region32
      $region31: #{_lambda_.13} parent=27 // pred_region
        %s184 = smul.u32 8, %s12
        %p185 = scmp.lt.s32.totalorder %s184, 15
        %s186 = scalar_select %p185, %s184, 15
        %s187 = smul.addr %s186, 4
        %s188 = scalar_lea.vmem %s0, %s187
        %s189 = smul.u32 8, %s12
      $region32: #{_lambda_.13} parent=27 // pred_fallthru
        _
    $region28: #{_lambda_.13} parent=5 // pred_fallthru
      _
    %p190 = scmp.le.s32.totalorder 1, %s12
    %p191 = scmp.lt.s32.totalorder %s12, 3
    %p192 = pnand %p190, %p191
    %p193 = pneg %p192
    // Predicated region
    $region33: #{_lambda_.13} parent=5 // pred_check
      _
    $region34: #{_lambda_.13} parent=5 // pred_check_branch
      %195 = sbr.rel (%p192) target = $region36
    $region35: #{_lambda_.13} parent=5 // pred_region
      %s196 = ssub.s32 %s12, 1
      %s197 = smul.u32 8, %s17
      %p198 = scmp.lt.s32.totalorder %s197, 15
      %s199 = scalar_select %p198, %s197, 15
      %s200 = smul.addr %s199, 4
      %s201 = scalar_lea.vmem %s0, %s200
      %p202 = pneg %p38
      %p203 = pneg %p35
      %p204 = pneg %p59
      %p205 = pneg %p56
      %p206 = pneg %p80
      %p207 = pneg %p77
      %p208 = pneg %p101
      %p209 = pneg %p98
      %p210 = pneg %p127
      %p211 = pneg %p124
      %s212 = smul.u32 8, %s17
      %p213 = scmp.lt.s32.totalorder %s212, 15
      %s214 = scalar_select %p213, %s212, 15
      %s215 = smul.addr %s214, 2
      %s216 = smul.addr %s215, 4
      %s217 = scalar_lea.vmem %s4, %s216
      %p218 = pneg %p153
      %p219 = pneg %p150
      %s220 = smul.u32 8, %s17
      %p221 = scmp.lt.s32.totalorder %s220, 15
      %s222 = scalar_select %p221, %s220, 15
      %s223 = smul.addr %s222, 2
      %s224 = smul.addr %s223, 4
      %s225 = scalar_lea.vmem %s5, %s224
      %s226 = smul.u32 8, %s17
      %p227 = scmp.lt.s32.totalorder %s226, 15
      %s228 = scalar_select %p227, %s226, 15
      %s229 = smul.addr %s228, 4
      %s230 = scalar_lea.vmem %s0, %s229
      %s231 = smul.u32 8, %s17
      %s232 = smul.u32 8, %s17
      %p233 = scmp.lt.s32.totalorder %s232, 15
      %s234 = scalar_select %p233, %s232, 15
      %s235 = smul.addr %s234, 2
      %s236 = smul.addr %s235, 4
      %s237 = scalar_lea.vmem %s4, %s236
      %s238 = smul.u32 8, %s17
      %s239 = smul.u32 8, %s17
      %p240 = scmp.lt.s32.totalorder %s239, 15
      %s241 = scalar_select %p240, %s239, 15
      %s242 = smul.addr %s241, 2
      %s243 = smul.addr %s242, 4
      %s244 = scalar_lea.vmem %s5, %s243
      %s245 = smul.u32 8, %s17
      %v247 = vld [vmem:[%s230] sm:$0xf]
      %v248 = vld [vmem:[%s230 + $0x4] sm:$0xf]
      %v249 = vld [vmem:[%s230 + $0x8] sm:$0xf]
      %v250 = vld [vmem:[%s230 + $0xc] sm:$0xf]
      %v251 = vld [vmem:[%s230 + $0x10] sm:$0xf]
      %v252 = vld [vmem:[%s230 + $0x14] sm:$0xf]
      %v253 = vld [vmem:[%s230 + $0x18] sm:$0xf]
      %v254 = vld [vmem:[%s230 + $0x1c] sm:$0xf]
      %v255 = vld [vmem:[%s1] sm:$0xff]
      %v256 = vld [vmem:[%s1 + $0x8] sm:$0xff]
      %v257 = vld [vmem:[%s1 + $0x10] sm:$0xff]
      %v258 = vld [vmem:[%s1 + $0x18] sm:$0xff]
      %v259 = vld [vmem:[%s1 + $0x20] sm:$0xff]
      %v260 = vld [vmem:[%s1 + $0x28] sm:$0xff]
      %v261 = vld [vmem:[%s1 + $0x30] sm:$0xff]
      %v262 = vld [vmem:[%s1 + $0x38] sm:$0xff]
      %v263 = vld [vmem:[%s1 + $0x40] sm:$0xff]
      %v264 = vld [vmem:[%s1 + $0x48] sm:$0xff]
      %v265 = vld [vmem:[%s1 + $0x50] sm:$0xff]
      %v266 = vld [vmem:[%s1 + $0x58] sm:$0xff]
      %v267 = vld [vmem:[%s1 + $0x60] sm:$0xff]
      %v268 = vld [vmem:[%s1 + $0x68] sm:$0xff]
      %v269 = vld [vmem:[%s1 + $0x70] sm:$0xff]
      %v270 = vld [vmem:[%s1 + $0x78] sm:$0xff]
      %v279 = vunpack.c.l.b16 %v247
      %v280 = vunpack.c.l.b16 %v248
      %v281 = vunpack.c.l.b16 %v249
      %v282 = vunpack.c.l.b16 %v250
      %v283 = vunpack.c.l.b16 %v251
      %v284 = vunpack.c.l.b16 %v252
      %v285 = vunpack.c.l.b16 %v253
      %v286 = vunpack.c.l.b16 %v254
      %v287 = vpack.c.b16 %v280, %v279
      %v288 = vpack.c.b16 %v282, %v281
      %v289 = vpack.c.b16 %v284, %v283
      %v290 = vpack.c.b16 %v286, %v285
      %v311 = vunpack.c.l.b16 %v255
      %v312 = vunpack.c.h.b16 %v255
      %v313 = vunpack.c.l.b16 %v256
      %v314 = vunpack.c.h.b16 %v256
      %v315 = vunpack.c.l.b16 %v257
      %v316 = vunpack.c.h.b16 %v257
      %v317 = vunpack.c.l.b16 %v258
      %v318 = vunpack.c.h.b16 %v258
      %v319 = vunpack.c.l.b16 %v259
      %v320 = vunpack.c.h.b16 %v259
      %v321 = vunpack.c.l.b16 %v260
      %v322 = vunpack.c.h.b16 %v260
      %v323 = vunpack.c.l.b16 %v261
      %v324 = vunpack.c.h.b16 %v261
      %v325 = vunpack.c.l.b16 %v262
      %v326 = vunpack.c.h.b16 %v262
      %v327 = vunpack.c.l.b16 %v263
      %v328 = vunpack.c.h.b16 %v263
      %v329 = vunpack.c.l.b16 %v264
      %v330 = vunpack.c.h.b16 %v264
      %v331 = vunpack.c.l.b16 %v265
      %v332 = vunpack.c.h.b16 %v265
      %v333 = vunpack.c.l.b16 %v266
      %v334 = vunpack.c.h.b16 %v266
      %v335 = vunpack.c.l.b16 %v267
      %v336 = vunpack.c.h.b16 %v267
      %v337 = vunpack.c.l.b16 %v268
      %v338 = vunpack.c.h.b16 %v268
      %v339 = vunpack.c.l.b16 %v269
      %v340 = vunpack.c.h.b16 %v269
      %v341 = vunpack.c.l.b16 %v270
      %v342 = vunpack.c.h.b16 %v270
      %v343 = vpack.c.b16 %v313, %v311
      %v344 = vpack.c.b16 %v314, %v312
      %v345 = vpack.c.b16 %v317, %v315
      %v346 = vpack.c.b16 %v318, %v316
      %v347 = vpack.c.b16 %v321, %v319
      %v348 = vpack.c.b16 %v322, %v320
      %v349 = vpack.c.b16 %v325, %v323
      %v350 = vpack.c.b16 %v326, %v324
      %v351 = vpack.c.b16 %v329, %v327
      %v352 = vpack.c.b16 %v330, %v328
      %v353 = vpack.c.b16 %v333, %v331
      %v354 = vpack.c.b16 %v334, %v332
      %v355 = vpack.c.b16 %v337, %v335
      %v356 = vpack.c.b16 %v338, %v336
      %v357 = vpack.c.b16 %v341, %v339
      %v358 = vpack.c.b16 %v342, %v340
      %375 = vmatprep.subr.bf16.mxu0 %v344
      %376 = vmatpush1.bf16.msra.mxu0 %v343
      %377 = vmatprep.subr.bf16.mxu0 %v346
      %378 = vmatpush1.bf16.msra.mxu0 %v345
      %379 = vmatprep.subr.bf16.mxu0 %v348
      %380 = vmatpush1.bf16.msra.mxu0 %v347
      %381 = vmatprep.subr.bf16.mxu0 %v350
      %382 = vmatpush1.bf16.msra.mxu0 %v349
      %383 = vmatprep.subr.bf16.mxu0 %v352
      %384 = vmatpush1.bf16.msra.mxu0 %v351
      %385 = vmatprep.subr.bf16.mxu0 %v354
      %386 = vmatpush1.bf16.msra.mxu0 %v353
      %387 = vmatprep.subr.bf16.mxu0 %v356
      %388 = vmatpush1.bf16.msra.mxu0 %v355
      %389 = vmatprep.subr.bf16.mxu0 %v358
      %390 = vmatpush1.bf16.msra.mxu0 %v357
      %391 = vmatprep.subr.bf16.mxu0 0
      %392 = vmatpush1.bf16.msra.mxu0 0
      %393 = vmatprep.subr.bf16.mxu0 0
      %394 = vmatpush1.bf16.msra.mxu0 0
      %395 = vmatprep.subr.bf16.mxu0 0
      %396 = vmatpush1.bf16.msra.mxu0 0
      %397 = vmatprep.subr.bf16.mxu0 0
      %398 = vmatpush1.bf16.msra.mxu0 0
      %399 = vmatprep.subr.bf16.mxu0 0
      %400 = vmatpush1.bf16.msra.mxu0 0
      %401 = vmatprep.subr.bf16.mxu0 0
      %402 = vmatpush1.bf16.msra.mxu0 0
      %403 = vmatprep.subr.bf16.mxu0 0
      %404 = vmatpush1.bf16.msra.mxu0 0
      %405 = vmatprep.subr.bf16.mxu0 0
      %406 = vmatpush1.bf16.msra.mxu0 0
      %407 = vmatprep.mubr.bf16.mxu0 0
      %408 = vmatmul.mubr.bf16.gmra.mrb[0].mxu0 %v287
      %v409 = vpop.f32.mrb[0].mxu0
      %v410 = vadd.f32 0.0, %v409
      %v411 = vpop.f32.mrb[0].mxu0
      %v412 = vadd.f32 0.0, %v411
      %v413 = vpop.f32.mrb[0].mxu0
      %v414 = vadd.f32 0.0, %v413
      %v415 = vpop.f32.mrb[0].mxu0
      %v416 = vadd.f32 0.0, %v415
      %417 = vmatprep.mubr.bf16.mxu0 0
      %418 = vmatmul.mubr.bf16.gmra.mrb[0].mxu0 %v288
      %v419 = vpop.f32.mrb[0].mxu0
      %v420 = vadd.f32 0.0, %v419
      %v421 = vpop.f32.mrb[0].mxu0
      %v422 = vadd.f32 0.0, %v421
      %v423 = vpop.f32.mrb[0].mxu0
      %v424 = vadd.f32 0.0, %v423
      %v425 = vpop.f32.mrb[0].mxu0
      %v426 = vadd.f32 0.0, %v425
      %427 = vmatprep.mubr.bf16.mxu0 0
      %428 = vmatmul.mubr.bf16.gmra.mrb[0].mxu0 %v289
      %v429 = vpop.f32.mrb[0].mxu0
      %v430 = vadd.f32 0.0, %v429
      %v431 = vpop.f32.mrb[0].mxu0
      %v432 = vadd.f32 0.0, %v431
      %v433 = vpop.f32.mrb[0].mxu0
      %v434 = vadd.f32 0.0, %v433
      %v435 = vpop.f32.mrb[0].mxu0
      %v436 = vadd.f32 0.0, %v435
      %437 = vmatprep.mubr.bf16.mxu0 0
      %438 = vmatmul.mubr.bf16.gmra.mrb[0].mxu0 %v290
      %v439 = vpop.f32.mrb[0].mxu0
      %v440 = vadd.f32 0.0, %v439
      %v441 = vpop.f32.mrb[0].mxu0
      %v442 = vadd.f32 0.0, %v441
      %v443 = vpop.f32.mrb[0].mxu0
      %v444 = vadd.f32 0.0, %v443
      %v445 = vpop.f32.mrb[0].mxu0
      %v446 = vadd.f32 0.0, %v445
      %447 = vdwg.mxu0
      %v448 = vld [vmem:[%s2] sm:$0xff]
      %v449 = vld [vmem:[%s2 + $0x8] sm:$0xff]
      %v450 = vld [vmem:[%s2 + $0x10] sm:$0xff]
      %v451 = vld [vmem:[%s2 + $0x18] sm:$0xff]
      %v452 = vld [vmem:[%s2 + $0x20] sm:$0xff]
      %v453 = vld [vmem:[%s2 + $0x28] sm:$0xff]
      %v454 = vld [vmem:[%s2 + $0x30] sm:$0xff]
      %v455 = vld [vmem:[%s2 + $0x38] sm:$0xff]
      %v456 = vld [vmem:[%s2 + $0x40] sm:$0xff]
      %v457 = vld [vmem:[%s2 + $0x48] sm:$0xff]
      %v458 = vld [vmem:[%s2 + $0x50] sm:$0xff]
      %v459 = vld [vmem:[%s2 + $0x58] sm:$0xff]
      %v460 = vld [vmem:[%s2 + $0x60] sm:$0xff]
      %v461 = vld [vmem:[%s2 + $0x68] sm:$0xff]
      %v462 = vld [vmem:[%s2 + $0x70] sm:$0xff]
      %v463 = vld [vmem:[%s2 + $0x78] sm:$0xff]
      %v464 = vld [vmem:[%s3] sm:$0x3]
      %v466 = vlaneseq
      %v467 = vshrl.u32 %v466, 7
      %v468 = vsub.s32 0, %v467
      %v469 = vrot.slane %v464, %v468
      %v470 = vlaneseq
      %v471 = vshrl.u32 %v470, 7
      %v472 = vsub.s32 1, %v471
      %v473 = vrot.slane %v464, %v472
      %v492 = vunpack.c.l.b16 %v448
      %v493 = vunpack.c.h.b16 %v448
      %v494 = vunpack.c.l.b16 %v449
      %v495 = vunpack.c.h.b16 %v449
      %v496 = vunpack.c.l.b16 %v450
      %v497 = vunpack.c.h.b16 %v450
      %v498 = vunpack.c.l.b16 %v451
      %v499 = vunpack.c.h.b16 %v451
      %v500 = vunpack.c.l.b16 %v452
      %v501 = vunpack.c.h.b16 %v452
      %v502 = vunpack.c.l.b16 %v453
      %v503 = vunpack.c.h.b16 %v453
      %v504 = vunpack.c.l.b16 %v454
      %v505 = vunpack.c.h.b16 %v454
      %v506 = vunpack.c.l.b16 %v455
      %v507 = vunpack.c.h.b16 %v455
      %v508 = vunpack.c.l.b16 %v456
      %v509 = vunpack.c.h.b16 %v456
      %v510 = vunpack.c.l.b16 %v457
      %v511 = vunpack.c.h.b16 %v457
      %v512 = vunpack.c.l.b16 %v458
      %v513 = vunpack.c.h.b16 %v458
      %v514 = vunpack.c.l.b16 %v459
      %v515 = vunpack.c.h.b16 %v459
      %v516 = vunpack.c.l.b16 %v460
      %v517 = vunpack.c.h.b16 %v460
      %v518 = vunpack.c.l.b16 %v461
      %v519 = vunpack.c.h.b16 %v461
      %v520 = vunpack.c.l.b16 %v462
      %v521 = vunpack.c.h.b16 %v462
      %v522 = vunpack.c.l.b16 %v463
      %v523 = vunpack.c.h.b16 %v463
      %v524 = vpack.c.b16 %v494, %v492
      %v525 = vpack.c.b16 %v495, %v493
      %v526 = vpack.c.b16 %v498, %v496
      %v527 = vpack.c.b16 %v499, %v497
      %v528 = vpack.c.b16 %v502, %v500
      %v529 = vpack.c.b16 %v503, %v501
      %v530 = vpack.c.b16 %v506, %v504
      %v531 = vpack.c.b16 %v507, %v505
      %v532 = vpack.c.b16 %v510, %v508
      %v533 = vpack.c.b16 %v511, %v509
      %v534 = vpack.c.b16 %v514, %v512
      %v535 = vpack.c.b16 %v515, %v513
      %v536 = vpack.c.b16 %v518, %v516
      %v537 = vpack.c.b16 %v519, %v517
      %v538 = vpack.c.b16 %v522, %v520
      %v539 = vpack.c.b16 %v523, %v521
      %556 = vmatprep.subr.bf16.mxu0 %v525
      %557 = vmatpush1.bf16.msra.mxu0 %v524
      %558 = vmatprep.subr.bf16.mxu0 %v527
      %559 = vmatpush1.bf16.msra.mxu0 %v526
      %560 = vmatprep.subr.bf16.mxu0 %v529
      %561 = vmatpush1.bf16.msra.mxu0 %v528
      %562 = vmatprep.subr.bf16.mxu0 %v531
      %563 = vmatpush1.bf16.msra.mxu0 %v530
      %564 = vmatprep.subr.bf16.mxu0 %v533
      %565 = vmatpush1.bf16.msra.mxu0 %v532
      %566 = vmatprep.subr.bf16.mxu0 %v535
      %567 = vmatpush1.bf16.msra.mxu0 %v534
      %568 = vmatprep.subr.bf16.mxu0 %v537
      %569 = vmatpush1.bf16.msra.mxu0 %v536
      %570 = vmatprep.subr.bf16.mxu0 %v539
      %571 = vmatpush1.bf16.msra.mxu0 %v538
      %572 = vmatprep.subr.bf16.mxu0 0
      %573 = vmatpush1.bf16.msra.mxu0 0
      %574 = vmatprep.subr.bf16.mxu0 0
      %575 = vmatpush1.bf16.msra.mxu0 0
      %576 = vmatprep.subr.bf16.mxu0 0
      %577 = vmatpush1.bf16.msra.mxu0 0
      %578 = vmatprep.subr.bf16.mxu0 0
      %579 = vmatpush1.bf16.msra.mxu0 0
      %580 = vmatprep.subr.bf16.mxu0 0
      %581 = vmatpush1.bf16.msra.mxu0 0
      %582 = vmatprep.subr.bf16.mxu0 0
      %583 = vmatpush1.bf16.msra.mxu0 0
      %584 = vmatprep.subr.bf16.mxu0 0
      %585 = vmatpush1.bf16.msra.mxu0 0
      %586 = vmatprep.subr.bf16.mxu0 0
      %587 = vmatpush1.bf16.msra.mxu0 0
      %588 = vmatprep.mubr.bf16.mxu0 0
      %589 = vmatmul.mubr.bf16.gmra.mrb[0].mxu0 %v287
      %v590 = vpop.f32.mrb[0].mxu0
      %v591 = vadd.f32 %v469, %v590
      %v592 = vpop.f32.mrb[0].mxu0
      %v593 = vadd.f32 %v473, %v592
      %v594 = vpop.f32.mrb[0].mxu0
      %v595 = vadd.f32 %v469, %v594
      %v596 = vpop.f32.mrb[0].mxu0
      %v597 = vadd.f32 %v473, %v596
      %598 = vmatprep.mubr.bf16.mxu0 0
      %599 = vmatmul.mubr.bf16.gmra.mrb[0].mxu0 %v288
      %v600 = vpop.f32.mrb[0].mxu0
      %v601 = vadd.f32 %v469, %v600
      %v602 = vpop.f32.mrb[0].mxu0
      %v603 = vadd.f32 %v473, %v602
      %v604 = vpop.f32.mrb[0].mxu0
      %v605 = vadd.f32 %v469, %v604
      %v606 = vpop.f32.mrb[0].mxu0
      %v607 = vadd.f32 %v473, %v606
      %608 = vmatprep.mubr.bf16.mxu0 0
      %609 = vmatmul.mubr.bf16.gmra.mrb[0].mxu0 %v289
      %v610 = vpop.f32.mrb[0].mxu0
      %v611 = vadd.f32 %v469, %v610
      %v612 = vpop.f32.mrb[0].mxu0
      %v613 = vadd.f32 %v473, %v612
      %v614 = vpop.f32.mrb[0].mxu0
      %v615 = vadd.f32 %v469, %v614
      %v616 = vpop.f32.mrb[0].mxu0
      %v617 = vadd.f32 %v473, %v616
      %618 = vmatprep.mubr.bf16.mxu0 0
      %619 = vmatmul.mubr.bf16.gmra.mrb[0].mxu0 %v290
      %v620 = vpop.f32.mrb[0].mxu0
      %v621 = vadd.f32 %v469, %v620
      %v622 = vpop.f32.mrb[0].mxu0
      %v623 = vadd.f32 %v473, %v622
      %v624 = vpop.f32.mrb[0].mxu0
      %v625 = vadd.f32 %v469, %v624
      %v626 = vpop.f32.mrb[0].mxu0
      %v627 = vadd.f32 %v473, %v626
      %628 = vdwg.mxu0
      %v629 = vpack.c.bf16 %v414, %v410
      %v630 = vpack.c.bf16 %v416, %v412
      %v631 = vpack.c.bf16 %v424, %v420
      %v632 = vpack.c.bf16 %v426, %v422
      %v633 = vpack.c.bf16 %v434, %v430
      %v634 = vpack.c.bf16 %v436, %v432
      %v635 = vpack.c.bf16 %v444, %v440
      %v636 = vpack.c.bf16 %v446, %v442
      %v645 = vunpack.c.l.b16 %v629
      %v646 = vunpack.c.l.b16 %v630
      %v647 = vunpack.c.h.b16 %v629
      %v648 = vunpack.c.h.b16 %v630
      %v649 = vunpack.c.l.b16 %v631
      %v650 = vunpack.c.l.b16 %v632
      %v651 = vunpack.c.h.b16 %v631
      %v652 = vunpack.c.h.b16 %v632
      %v653 = vunpack.c.l.b16 %v633
      %v654 = vunpack.c.l.b16 %v634
      %v655 = vunpack.c.h.b16 %v633
      %v656 = vunpack.c.h.b16 %v634
      %v657 = vunpack.c.l.b16 %v635
      %v658 = vunpack.c.l.b16 %v636
      %v659 = vunpack.c.h.b16 %v635
      %v660 = vunpack.c.h.b16 %v636
      %v661 = vpack.c.b16 %v646, %v645
      %v662 = vpack.c.b16 %v648, %v647
      %v663 = vpack.c.b16 %v650, %v649
      %v664 = vpack.c.b16 %v652, %v651
      %v665 = vpack.c.b16 %v654, %v653
      %v666 = vpack.c.b16 %v656, %v655
      %v667 = vpack.c.b16 %v658, %v657
      %v668 = vpack.c.b16 %v660, %v659
      %677 = vst [vmem:[%s237] sm:$0xff] %v661
      %678 = vst [vmem:[%s237 + $0x8] sm:$0xff] %v662
      %679 = vst [vmem:[%s237 + $0x10] sm:$0xff] %v663
      %680 = vst [vmem:[%s237 + $0x18] sm:$0xff] %v664
      %681 = vst [vmem:[%s237 + $0x20] sm:$0xff] %v665
      %682 = vst [vmem:[%s237 + $0x28] sm:$0xff] %v666
      %683 = vst [vmem:[%s237 + $0x30] sm:$0xff] %v667
      %684 = vst [vmem:[%s237 + $0x38] sm:$0xff] %v668
      %v685 = vpack.c.bf16 %v595, %v591
      %v686 = vpack.c.bf16 %v597, %v593
      %v687 = vpack.c.bf16 %v605, %v601
      %v688 = vpack.c.bf16 %v607, %v603
      %v689 = vpack.c.bf16 %v615, %v611
      %v690 = vpack.c.bf16 %v617, %v613
      %v691 = vpack.c.bf16 %v625, %v621
      %v692 = vpack.c.bf16 %v627, %v623
      %v701 = vunpack.c.l.b16 %v685
      %v702 = vunpack.c.l.b16 %v686
      %v703 = vunpack.c.h.b16 %v685
      %v704 = vunpack.c.h.b16 %v686
      %v705 = vunpack.c.l.b16 %v687
      %v706 = vunpack.c.l.b16 %v688
      %v707 = vunpack.c.h.b16 %v687
      %v708 = vunpack.c.h.b16 %v688
      %v709 = vunpack.c.l.b16 %v689
      %v710 = vunpack.c.l.b16 %v690
      %v711 = vunpack.c.h.b16 %v689
      %v712 = vunpack.c.h.b16 %v690
      %v713 = vunpack.c.l.b16 %v691
      %v714 = vunpack.c.l.b16 %v692
      %v715 = vunpack.c.h.b16 %v691
      %v716 = vunpack.c.h.b16 %v692
      %v717 = vpack.c.b16 %v702, %v701
      %v718 = vpack.c.b16 %v704, %v703
      %v719 = vpack.c.b16 %v706, %v705
      %v720 = vpack.c.b16 %v708, %v707
      %v721 = vpack.c.b16 %v710, %v709
      %v722 = vpack.c.b16 %v712, %v711
      %v723 = vpack.c.b16 %v714, %v713
      %v724 = vpack.c.b16 %v716, %v715
      %733 = vst [vmem:[%s244] sm:$0xff] %v717
      %734 = vst [vmem:[%s244 + $0x8] sm:$0xff] %v718
      %735 = vst [vmem:[%s244 + $0x10] sm:$0xff] %v719
      %736 = vst [vmem:[%s244 + $0x18] sm:$0xff] %v720
      %737 = vst [vmem:[%s244 + $0x20] sm:$0xff] %v721
      %738 = vst [vmem:[%s244 + $0x28] sm:$0xff] %v722
      %739 = vst [vmem:[%s244 + $0x30] sm:$0xff] %v723
      %740 = vst [vmem:[%s244 + $0x38] sm:$0xff] %v724
      %s741 = smul.u32 8, %s17
      %p742 = scmp.lt.s32.totalorder %s741, 15
      %s743 = scalar_select %p742, %s741, 15
      %s744 = smul.addr %s743, 2
      %s745 = smul.addr %s744, 4
      %s746 = scalar_lea.vmem %s4, %s745
      %s747 = smul.u32 8, %s17
      %p748 = scmp.lt.s32.totalorder %s747, 15
      %s749 = scalar_select %p748, %s747, 15
      %s750 = smul.addr %s749, 2
      %s751 = smul.addr %s750, 4
      %s752 = scalar_lea.vmem %s5, %s751
      // Predicated region
      $region37: #{_lambda_.13} parent=35 // pred_check
        %p753 = pneg %p124
      $region38: #{_lambda_.13} parent=35 // pred_check_branch
        %755 = sbr.rel (%p753) target = $region40
      $region39: #{_lambda_.13} parent=35 // pred_region
        %s756 = smul.u32 8, %s17
      $region40: #{_lambda_.13} parent=35 // pred_fallthru
        _
      // Predicated region
      $region41: #{_lambda_.13} parent=35 // pred_check
        %p757 = pneg %p150
      $region42: #{_lambda_.13} parent=35 // pred_check_branch
        %759 = sbr.rel (%p757) target = $region44
      $region43: #{_lambda_.13} parent=35 // pred_region
        %s760 = smul.u32 8, %s17
      $region44: #{_lambda_.13} parent=35 // pred_fallthru
        _
    $region36: #{_lambda_.13} parent=5 // pred_fallthru
      _
    %p761 = scmp.le.s32.totalorder 2, %s12
    // Predicated region
    $region45: #{_lambda_.13} parent=5 // pred_check
      %p762 = pneg %p761
    $region46: #{_lambda_.13} parent=5 // pred_check_branch
      %764 = sbr.rel (%p762) target = $region48
    $region47: #{_lambda_.13} parent=5 // pred_region
      %s765 = ssub.s32 %s12, 2
      // Predicated region
      $region49: #{_lambda_.13} parent=47 // pred_check
        %p766 = pneg %p130
      $region50: #{_lambda_.13} parent=47 // pred_check_branch
        %768 = sbr.rel (%p766) target = $region52
      $region51: #{_lambda_.13} parent=47 // pred_region
        %s769 = smul.u32 8, %s18
        %p770 = scmp.lt.s32.totalorder %s769, 15
        %s771 = scalar_select %p770, %s769, 15
        %s772 = smul.addr %s771, 2
        %s773 = smul.addr %s772, 4
        %s774 = scalar_lea.vmem %s4, %s773
      $region52: #{_lambda_.13} parent=47 // pred_fallthru
        _
      // Predicated region
      $region53: #{_lambda_.13} parent=47 // pred_check
        %p775 = pneg %p156
      $region54: #{_lambda_.13} parent=47 // pred_check_branch
        %777 = sbr.rel (%p775) target = $region56
      $region55: #{_lambda_.13} parent=47 // pred_region
        %s778 = smul.u32 8, %s18
        %p779 = scmp.lt.s32.totalorder %s778, 15
        %s780 = scalar_select %p779, %s778, 15
        %s781 = smul.addr %s780, 2
        %s782 = smul.addr %s781, 4
        %s783 = scalar_lea.vmem %s5, %s782
      $region56: #{_lambda_.13} parent=47 // pred_fallthru
        _
    $region48: #{_lambda_.13} parent=5 // pred_fallthru
      _
  $region6: #{_lambda_.13} parent=0 // loop_footer
    %s16 = sadd.s32 1, %s12
  $region7: #{_lambda_.13} parent=0 // loop_footer_branch
    %11 = sbr.rel target = $region3
  $region8: #{_lambda_.13} parent=0 // loop_exit
    _

// kernel: _lambda_.14
$region0: #{_lambda_.14}
  #allocation0 [shape = 'u32[]', space=smem, size = 0x4, offset = 0x4, fixed_abs, tag = 'smem constant byte address 0x4 - core index']
  #allocation1 [shape = 'u32[144,128]{1,0:T(1,128)}', space=vmem, size = 0x12000, scoped, tag = 'internal scratch']
  #allocation2 [shape = 'f32[16,512]{1,0:T(8,128)}', space=vmem, size = 0x8000, scoped, tag = 'scratch operand']
  #allocation3 [shape = 'f32[16,1]{1,0:T(8,128)}', space=vmem, size = 0x2000, scoped, tag = 'scratch operand']
  %s0 = inlined_call_operand.vmem [shape: bf16[2,16,64], index: 0, kind: input, shape index: {}]
  %s1 = inlined_call_operand.vmem [shape: bf16[2,64,512], index: 1, kind: input, shape index: {}]
  %s2 = inlined_call_operand.vmem [shape: bf16[2,16,512], index: 2, kind: output, shape index: {}]
  %s3 = sld [smem:[#allocation0]]
  $region49: #{_lambda_.14} parent=0
    _
  %s5 = ssub.s32 1, %s3
  %s6 = scalar_select 0, %s5, %s3
  loop: start=0, step=1, limit=4
  $region2: #{_lambda_.14} parent=0 // loop_pre_header
    _
  $region3: #{_lambda_.14} parent=0 // loop_header
    %s8 = sphi 0, %s12
    %p9 = scmp.ge.s32.totalorder %s8, 4
    %s15 = sphi 0, %s27
    %s16 = sphi 0, %s23
    %s17 = sphi 0, %s15
    %s18 = sphi 0, %s16
    %s19 = sphi 0, %s17
    %s20 = sphi 0, %s18
    %s32 = sphi 0, %s34
    %s35 = sphi 0, %s32
    %s36 = sphi 0, %s35
    %s52 = sphi 0, %s36
    %s60 = sphi 0, %s62
    %s63 = sphi 0, %s60
    %s64 = sphi 0, %s63
    %s80 = sphi 0, %s64
    %s86 = sphi 0, %s88
    %s89 = sphi 0, %s86
    %s90 = sphi 0, %s89
    %s106 = sphi 0, %s90
  $region4: #{_lambda_.14} parent=0 // loop_header_branch
    %11 = sbr.rel (%p9) target = $region8
  $region5: #{_lambda_.14} parent=0 // loop_body
    %s13 = ssub.s32 %s8, 1
    %s14 = ssub.s32 %s8, 2
    %s21 = sadd.s32 1, %s16
    %p22 = scmp.ge.s32.totalorder %s21, 1
    %s23 = scalar_select %p22, 0, %s21
    %s24 = sadd.s32 1, %s15
    %s25 = scalar_select %p22, %s24, %s15
    %p26 = scmp.ge.s32.totalorder %s25, 2
    %s27 = scalar_select %p26, 0, %s25
    %s28 = ssub.s32 %s15, %s27
    %s29 = ssub.s32 %s16, %s23
    %s30 = sor.u32 %s28, %s29
    %p31 = scmp.eq.s32.totalorder %s30, 0
    %s33 = sadd.s32 %s32, 1
    %s34 = scalar_select %p31, %s32, %s33
    %p37 = pneg %p31
    %p38 = scmp.eq.s32.totalorder %s8, 1
    %p39 = por %p37, %p38
    %p40 = scmp.ne.s32.totalorder %s32, %s35
    %p41 = scmp.eq.s32.totalorder %s8, 0
    %p42 = por %p40, %p41
    %p43 = scmp.ne.s32.totalorder %s32, %s35
    %p44 = scmp.eq.s32.totalorder %s13, 1
    %p45 = por %p43, %p44
    %p46 = scmp.ne.s32.totalorder %s35, %s36
    %p47 = scmp.eq.s32.totalorder %s13, 0
    %p48 = por %p46, %p47
    %p49 = scmp.ne.s32.totalorder %s35, %s36
    %p50 = scmp.eq.s32.totalorder %s14, 1
    %p51 = por %p49, %p50
    %p53 = scmp.ne.s32.totalorder %s36, %s52
    %p54 = scmp.eq.s32.totalorder %s14, 0
    %p55 = por %p53, %p54
    %s56 = ssub.s32 %s15, %s27
    %s57 = ssub.s32 %s16, %s23
    %s58 = sor.u32 %s56, %s57
    %p59 = scmp.eq.s32.totalorder %s58, 0
    %s61 = sadd.s32 %s60, 1
    %s62 = scalar_select %p59, %s60, %s61
    %p65 = pneg %p59
    %p66 = scmp.eq.s32.totalorder %s8, 1
    %p67 = por %p65, %p66
    %p68 = scmp.ne.s32.totalorder %s60, %s63
    %p69 = scmp.eq.s32.totalorder %s8, 0
    %p70 = por %p68, %p69
    %p71 = scmp.ne.s32.totalorder %s60, %s63
    %p72 = scmp.eq.s32.totalorder %s13, 1
    %p73 = por %p71, %p72
    %p74 = scmp.ne.s32.totalorder %s63, %s64
    %p75 = scmp.eq.s32.totalorder %s13, 0
    %p76 = por %p74, %p75
    %p77 = scmp.ne.s32.totalorder %s63, %s64
    %p78 = scmp.eq.s32.totalorder %s14, 1
    %p79 = por %p77, %p78
    %p81 = scmp.ne.s32.totalorder %s64, %s80
    %p82 = scmp.eq.s32.totalorder %s14, 0
    %p83 = por %p81, %p82
    %s84 = ssub.s32 %s15, %s27
    %p85 = scmp.eq.s32.totalorder %s84, 0
    %s87 = sadd.s32 %s86, 1
    %s88 = scalar_select %p85, %s86, %s87
    %p91 = pneg %p85
    %p92 = scmp.eq.s32.totalorder %s8, 1
    %p93 = por %p91, %p92
    %p94 = scmp.ne.s32.totalorder %s86, %s89
    %p95 = scmp.eq.s32.totalorder %s8, 0
    %p96 = por %p94, %p95
    %p97 = scmp.ne.s32.totalorder %s86, %s89
    %p98 = scmp.eq.s32.totalorder %s13, 1
    %p99 = por %p97, %p98
    %p100 = scmp.ne.s32.totalorder %s89, %s90
    %p101 = scmp.eq.s32.totalorder %s13, 0
    %p102 = por %p100, %p101
    %p103 = scmp.ne.s32.totalorder %s89, %s90
    %p104 = scmp.eq.s32.totalorder %s14, 1
    %p105 = por %p103, %p104
    %p107 = scmp.ne.s32.totalorder %s90, %s106
    %p108 = scmp.eq.s32.totalorder %s14, 0
    %p109 = por %p107, %p108
    %p110 = scmp.le.s32.totalorder 1, %s8
    %p111 = scmp.lt.s32.totalorder %s8, 3
    %p112 = pnand %p110, %p111
    %p113 = pneg %p112
    // Predicated region
    $region9: #{_lambda_.14} parent=5 // pred_check
      _
    $region10: #{_lambda_.14} parent=5 // pred_check_branch
      %115 = sbr.rel (%p112) target = $region12
    $region11: #{_lambda_.14} parent=5 // pred_region
      %s116 = ssub.s32 %s8, 1
    $region12: #{_lambda_.14} parent=5 // pred_fallthru
      _
    %p117 = scmp.lt.s32.totalorder %s8, 2
    // Predicated region
    $region13: #{_lambda_.14} parent=5 // pred_check
      %p118 = pneg %p117
    $region14: #{_lambda_.14} parent=5 // pred_check_branch
      %120 = sbr.rel (%p118) target = $region16
    $region15: #{_lambda_.14} parent=5 // pred_region
      // Predicated region
      $region17: #{_lambda_.14} parent=15 // pred_check
        %p121 = pneg %p42
      $region18: #{_lambda_.14} parent=15 // pred_check_branch
        %123 = sbr.rel (%p121) target = $region20
      $region19: #{_lambda_.14} parent=15 // pred_region
        %p124 = scmp.lt.s32.totalorder %s15, 1
        %s125 = scalar_select %p124, %s15, 1
        %p126 = scmp.lt.s32.totalorder %s16, 0
        %s127 = scalar_select %p126, %s16, 0
        %s128 = smul.addr %s125, 2
        %s129 = sadd.s32 %s127, %s128
        %s130 = smul.addr %s129, 4
        %s131 = scalar_lea.vmem %s0, %s130
      $region20: #{_lambda_.14} parent=15 // pred_fallthru
        _
      // Predicated region
      $region21: #{_lambda_.14} parent=15 // pred_check
        %p132 = pneg %p70
      $region22: #{_lambda_.14} parent=15 // pred_check_branch
        %134 = sbr.rel (%p132) target = $region24
      $region23: #{_lambda_.14} parent=15 // pred_region
        %s135 = smul.u32 8, %s16
        %p136 = scmp.lt.s32.totalorder %s15, 1
        %s137 = scalar_select %p136, %s15, 1
        %p138 = scmp.lt.s32.totalorder %s135, 7
        %s139 = scalar_select %p138, %s135, 7
        %s140 = smul.addr %s139, 4
        %s141 = smul.addr %s137, 32
        %s142 = sadd.s32 %s140, %s141
        %s143 = smul.addr %s142, 4
        %s144 = scalar_lea.vmem %s1, %s143
        %s145 = smul.u32 8, %s16
      $region24: #{_lambda_.14} parent=15 // pred_fallthru
        _
    $region16: #{_lambda_.14} parent=5 // pred_fallthru
      _
    %p146 = scmp.le.s32.totalorder 1, %s8
    %p147 = scmp.lt.s32.totalorder %s8, 3
    %p148 = pnand %p146, %p147
    %p149 = pneg %p148
    // Predicated region
    $region25: #{_lambda_.14} parent=5 // pred_check
      _
    $region26: #{_lambda_.14} parent=5 // pred_check_branch
      %151 = sbr.rel (%p148) target = $region28
    $region27: #{_lambda_.14} parent=5 // pred_region
      %s152 = ssub.s32 %s8, 1
      %p153 = scmp.lt.s32.totalorder %s17, 1
      %s154 = scalar_select %p153, %s17, 1
      %p155 = scmp.lt.s32.totalorder %s18, 0
      %s156 = scalar_select %p155, %s18, 0
      %s157 = smul.addr %s154, 2
      %s158 = sadd.s32 %s156, %s157
      %s159 = smul.addr %s158, 4
      %s160 = scalar_lea.vmem %s0, %s159
      %p161 = pneg %p48
      %p162 = pneg %p45
      %s163 = smul.u32 8, %s18
      %p164 = scmp.lt.s32.totalorder %s17, 1
      %s165 = scalar_select %p164, %s17, 1
      %p166 = scmp.lt.s32.totalorder %s163, 7
      %s167 = scalar_select %p166, %s163, 7
      %s168 = smul.addr %s167, 4
      %s169 = smul.addr %s165, 32
      %s170 = sadd.s32 %s168, %s169
      %s171 = smul.addr %s170, 4
      %s172 = scalar_lea.vmem %s1, %s171
      %p173 = pneg %p76
      %p174 = pneg %p73
      %p175 = pneg %p102
      %p176 = pneg %p99
      %p177 = scmp.lt.s32.totalorder %s17, 1
      %s178 = scalar_select %p177, %s17, 1
      %s179 = smul.addr %s178, 8
      %s180 = smul.addr %s179, 4
      %s181 = scalar_lea.vmem %s2, %s180
      %p182 = scmp.lt.s32.totalorder %s17, 1
      %s183 = scalar_select %p182, %s17, 1
      %p184 = scmp.lt.s32.totalorder %s18, 0
      %s185 = scalar_select %p184, %s18, 0
      %s186 = smul.addr %s183, 2
      %s187 = sadd.s32 %s185, %s186
      %s188 = smul.addr %s187, 4
      %s189 = scalar_lea.vmem %s0, %s188
      %s190 = smul.u32 8, %s18
      %p191 = scmp.lt.s32.totalorder %s17, 1
      %s192 = scalar_select %p191, %s17, 1
      %p193 = scmp.lt.s32.totalorder %s190, 7
      %s194 = scalar_select %p193, %s190, 7
      %s195 = smul.addr %s194, 4
      %s196 = smul.addr %s192, 32
      %s197 = sadd.s32 %s195, %s196
      %s198 = smul.addr %s197, 4
      %s199 = scalar_lea.vmem %s1, %s198
      %s200 = smul.u32 8, %s18
      %p201 = scmp.lt.s32.totalorder %s17, 1
      %s202 = scalar_select %p201, %s17, 1
      %s203 = smul.addr %s202, 8
      %s204 = smul.addr %s203, 4
      %s205 = scalar_lea.vmem %s2, %s204
      %p207 = scmp.eq.s32.totalorder %s18, 0
      // Predicated region
      $region29: #{_lambda_.14} parent=27 // pred_check
        %p208 = pneg %p207
      $region30: #{_lambda_.14} parent=27 // pred_check_branch
        %210 = sbr.rel (%p208) target = $region32
      $region31: #{_lambda_.14} parent=27 // pred_region
        %211 = vst [vmem:[#allocation2] sm:$0xff] 0.0
        %212 = vst [vmem:[#allocation2 + $0x8] sm:$0xff] 0.0
        %213 = vst [vmem:[#allocation2 + $0x10] sm:$0xff] 0.0
        %214 = vst [vmem:[#allocation2 + $0x18] sm:$0xff] 0.0
        %215 = vst [vmem:[#allocation2 + $0x20] sm:$0xff] 0.0
        %216 = vst [vmem:[#allocation2 + $0x28] sm:$0xff] 0.0
        %217 = vst [vmem:[#allocation2 + $0x30] sm:$0xff] 0.0
        %218 = vst [vmem:[#allocation2 + $0x38] sm:$0xff] 0.0
        %vm219 = vcmask 7168
        %220 = vst.msk [vmem:[#allocation3] sm:$0xff] %vm219, 0.0
        %221 = vst.msk [vmem:[#allocation3 + $0x8] sm:$0xff] %vm219, 0.0
      $region32: #{_lambda_.14} parent=27 // pred_fallthru
        _
      %v222 = vld [vmem:[%s189] sm:$0xf]
      %v223 = vld [vmem:[%s189 + $0x4] sm:$0xf]
      %v224 = vld [vmem:[#allocation2] sm:$0xff]
      %v225 = vld [vmem:[#allocation2 + $0x8] sm:$0xff]
      %v226 = vld [vmem:[#allocation2 + $0x10] sm:$0xff]
      %v227 = vld [vmem:[#allocation2 + $0x18] sm:$0xff]
      %v228 = vld [vmem:[#allocation2 + $0x20] sm:$0xff]
      %v229 = vld [vmem:[#allocation2 + $0x28] sm:$0xff]
      %v230 = vld [vmem:[#allocation2 + $0x30] sm:$0xff]
      %v231 = vld [vmem:[#allocation2 + $0x38] sm:$0xff]
      %v232 = vld [vmem:[%s199] sm:$0xff]
      %v233 = vld [vmem:[%s199 + $0x8] sm:$0xff]
      %v234 = vld [vmem:[%s199 + $0x10] sm:$0xff]
      %v235 = vld [vmem:[%s199 + $0x18] sm:$0xff]
      %v236 = vld [vmem:[%s199 + $0x20] sm:$0xff]
      %v237 = vld [vmem:[%s199 + $0x28] sm:$0xff]
      %v238 = vld [vmem:[%s199 + $0x30] sm:$0xff]
      %v239 = vld [vmem:[%s199 + $0x38] sm:$0xff]
      %v240 = vld [vmem:[%s199 + $0x40] sm:$0xff]
      %v241 = vld [vmem:[%s199 + $0x48] sm:$0xff]
      %v242 = vld [vmem:[%s199 + $0x50] sm:$0xff]
      %v243 = vld [vmem:[%s199 + $0x58] sm:$0xff]
      %v244 = vld [vmem:[%s199 + $0x60] sm:$0xff]
      %v245 = vld [vmem:[%s199 + $0x68] sm:$0xff]
      %v246 = vld [vmem:[%s199 + $0x70] sm:$0xff]
      %v247 = vld [vmem:[%s199 + $0x78] sm:$0xff]
      %v250 = vunpack.c.l.b16 %v222
      %v251 = vunpack.c.l.b16 %v223
      %v252 = vpack.c.b16 %v251, %v250
      %v269 = vunpack.c.l.b16 %v232
      %v270 = vunpack.c.h.b16 %v232
      %v271 = vunpack.c.l.b16 %v233
      %v272 = vunpack.c.h.b16 %v233
      %v273 = vunpack.c.l.b16 %v234
      %v274 = vunpack.c.h.b16 %v234
      %v275 = vunpack.c.l.b16 %v235
      %v276 = vunpack.c.h.b16 %v235
      %v277 = vunpack.c.l.b16 %v236
      %v278 = vunpack.c.h.b16 %v236
      %v279 = vunpack.c.l.b16 %v237
      %v280 = vunpack.c.h.b16 %v237
      %v281 = vunpack.c.l.b16 %v238
      %v282 = vunpack.c.h.b16 %v238
      %v283 = vunpack.c.l.b16 %v239
      %v284 = vunpack.c.h.b16 %v239
      %v285 = vunpack.c.l.b16 %v240
      %v286 = vunpack.c.h.b16 %v240
      %v287 = vunpack.c.l.b16 %v241
      %v288 = vunpack.c.h.b16 %v241
      %v289 = vunpack.c.l.b16 %v242
      %v290 = vunpack.c.h.b16 %v242
      %v291 = vunpack.c.l.b16 %v243
      %v292 = vunpack.c.h.b16 %v243
      %v293 = vunpack.c.l.b16 %v244
      %v294 = vunpack.c.h.b16 %v244
      %v295 = vunpack.c.l.b16 %v245
      %v296 = vunpack.c.h.b16 %v245
      %v297 = vunpack.c.l.b16 %v246
      %v298 = vunpack.c.h.b16 %v246
      %v299 = vunpack.c.l.b16 %v247
      %v300 = vunpack.c.h.b16 %v247
      %v301 = vpack.c.b16 %v273, %v269
      %v302 = vpack.c.b16 %v274, %v270
      %v303 = vpack.c.b16 %v275, %v271
      %v304 = vpack.c.b16 %v276, %v272
      %v305 = vpack.c.b16 %v281, %v277
      %v306 = vpack.c.b16 %v282, %v278
      %v307 = vpack.c.b16 %v283, %v279
      %v308 = vpack.c.b16 %v284, %v280
      %v309 = vpack.c.b16 %v289, %v285
      %v310 = vpack.c.b16 %v290, %v286
      %v311 = vpack.c.b16 %v291, %v287
      %v312 = vpack.c.b16 %v292, %v288
      %v313 = vpack.c.b16 %v297, %v293
      %v314 = vpack.c.b16 %v298, %v294
      %v315 = vpack.c.b16 %v299, %v295
      %v316 = vpack.c.b16 %v300, %v296
      %vm333 = vcmask 523264
      %v335 = vsel %vm333, %v252, 0
      %337 = vmatprep.subr.bf16.mxu0 %v302
      %338 = vmatpush1.bf16.msra.mxu0 %v301
      %339 = vmatprep.subr.bf16.mxu0 %v306
      %340 = vmatpush1.bf16.msra.mxu0 %v305
      %341 = vmatprep.subr.bf16.mxu0 %v310
      %342 = vmatpush1.bf16.msra.mxu0 %v309
      %343 = vmatprep.subr.bf16.mxu0 %v314
      %344 = vmatpush1.bf16.msra.mxu0 %v313
      %345 = vmatprep.subr.bf16.mxu0 0
      %346 = vmatpush1.bf16.msra.mxu0 0
      %347 = vmatprep.subr.bf16.mxu0 0
      %348 = vmatpush1.bf16.msra.mxu0 0
      %349 = vmatprep.subr.bf16.mxu0 0
      %350 = vmatpush1.bf16.msra.mxu0 0
      %351 = vmatprep.subr.bf16.mxu0 0
      %352 = vmatpush1.bf16.msra.mxu0 0
      %353 = vmatprep.subr.bf16.mxu0 0
      %354 = vmatpush1.bf16.msra.mxu0 0
      %355 = vmatprep.subr.bf16.mxu0 0
      %356 = vmatpush1.bf16.msra.mxu0 0
      %357 = vmatprep.subr.bf16.mxu0 0
      %358 = vmatpush1.bf16.msra.mxu0 0
      %359 = vmatprep.subr.bf16.mxu0 0
      %360 = vmatpush1.bf16.msra.mxu0 0
      %361 = vmatprep.subr.bf16.mxu0 0
      %362 = vmatpush1.bf16.msra.mxu0 0
      %363 = vmatprep.subr.bf16.mxu0 0
      %364 = vmatpush1.bf16.msra.mxu0 0
      %365 = vmatprep.subr.bf16.mxu0 0
      %366 = vmatpush1.bf16.msra.mxu0 0
      %367 = vmatprep.subr.bf16.mxu0 0
      %368 = vmatpush1.bf16.msra.mxu0 0
      %369 = vmatprep.mubr.bf16.mxu0 0
      %370 = vmatmul.mubr.bf16.gmra.mrb[0].mxu0 %v335
      %v371 = vpop.f32.mrb[0].mxu0
      %v372 = vadd.f32 0.0, %v371
      %v373 = vpop.f32.mrb[0].mxu0
      %v374 = vadd.f32 0.0, %v373
      %v375 = vpop.f32.mrb[0].mxu0
      %v376 = vadd.f32 0.0, %v375
      %v377 = vpop.f32.mrb[0].mxu0
      %v378 = vadd.f32 0.0, %v377
      %379 = vdwg.mxu0
      %380 = vmatprep.subr.bf16.mxu0 %v304
      %381 = vmatpush1.bf16.msra.mxu0 %v303
      %382 = vmatprep.subr.bf16.mxu0 %v308
      %383 = vmatpush1.bf16.msra.mxu0 %v307
      %384 = vmatprep.subr.bf16.mxu0 %v312
      %385 = vmatpush1.bf16.msra.mxu0 %v311
      %386 = vmatprep.subr.bf16.mxu0 %v316
      %387 = vmatpush1.bf16.msra.mxu0 %v315
      %388 = vmatprep.subr.bf16.mxu0 0
      %389 = vmatpush1.bf16.msra.mxu0 0
      %390 = vmatprep.subr.bf16.mxu0 0
      %391 = vmatpush1.bf16.msra.mxu0 0
      %392 = vmatprep.subr.bf16.mxu0 0
      %393 = vmatpush1.bf16.msra.mxu0 0
      %394 = vmatprep.subr.bf16.mxu0 0
      %395 = vmatpush1.bf16.msra.mxu0 0
      %396 = vmatprep.subr.bf16.mxu0 0
      %397 = vmatpush1.bf16.msra.mxu0 0
      %398 = vmatprep.subr.bf16.mxu0 0
      %399 = vmatpush1.bf16.msra.mxu0 0
      %400 = vmatprep.subr.bf16.mxu0 0
      %401 = vmatpush1.bf16.msra.mxu0 0
      %402 = vmatprep.subr.bf16.mxu0 0
      %403 = vmatpush1.bf16.msra.mxu0 0
      %404 = vmatprep.subr.bf16.mxu0 0
      %405 = vmatpush1.bf16.msra.mxu0 0
      %406 = vmatprep.subr.bf16.mxu0 0
      %407 = vmatpush1.bf16.msra.mxu0 0
      %408 = vmatprep.subr.bf16.mxu0 0
      %409 = vmatpush1.bf16.msra.mxu0 0
      %410 = vmatprep.subr.bf16.mxu0 0
      %411 = vmatpush1.bf16.msra.mxu0 0
      %412 = vmatprep.mubr.bf16.mxu0 0
      %413 = vmatmul.mubr.bf16.gmra.mrb[0].mxu0 %v335
      %v414 = vpop.f32.mrb[0].mxu0
      %v415 = vadd.f32 0.0, %v414
      %v416 = vpop.f32.mrb[0].mxu0
      %v417 = vadd.f32 0.0, %v416
      %v418 = vpop.f32.mrb[0].mxu0
      %v419 = vadd.f32 0.0, %v418
      %v420 = vpop.f32.mrb[0].mxu0
      %v421 = vadd.f32 0.0, %v420
      %422 = vdwg.mxu0
      %v423 = vadd.f32 %v224, %v372
      %v424 = vadd.f32 %v225, %v374
      %v425 = vadd.f32 %v226, %v415
      %v426 = vadd.f32 %v227, %v417
      %v427 = vadd.f32 %v228, %v376
      %v428 = vadd.f32 %v229, %v378
      %v429 = vadd.f32 %v230, %v419
      %v430 = vadd.f32 %v231, %v421
      %431 = vst [vmem:[#allocation2] sm:$0xff] %v423
      %432 = vst [vmem:[#allocation2 + $0x8] sm:$0xff] %v424
      %433 = vst [vmem:[#allocation2 + $0x10] sm:$0xff] %v425
      %434 = vst [vmem:[#allocation2 + $0x18] sm:$0xff] %v426
      %435 = vst [vmem:[#allocation2 + $0x20] sm:$0xff] %v427
      %436 = vst [vmem:[#allocation2 + $0x28] sm:$0xff] %v428
      %437 = vst [vmem:[#allocation2 + $0x30] sm:$0xff] %v429
      %438 = vst [vmem:[#allocation2 + $0x38] sm:$0xff] %v430
      %v439 = vld [vmem:[#allocation3] sm:$0xff]
      %v440 = vld [vmem:[#allocation3 + $0x8] sm:$0xff]
      %v441 = vunpack.c.l.bf16 %v222
      %v442 = vunpack.c.l.bf16 %v223
      %v443 = vsel %vm333, %v441, 0.0
      %444 = vadd.xlane.f32.xlu0 %v443
      %v445 = vpop.xlane.xlu0 %444
      %v446 = vsel %vm333, %v442, 0.0
      %447 = vadd.xlane.f32.xlu0 %v446
      %v448 = vpop.xlane.xlu0 %447
      %v449 = vadd.f32 %v439, %v445
      %v450 = vadd.f32 %v440, %v448
      %vm451 = vcmask 7168
      %452 = vst.msk [vmem:[#allocation3] sm:$0xff] %vm451, %v449
      %453 = vst.msk [vmem:[#allocation3 + $0x8] sm:$0xff] %vm451, %v450
      // Predicated region
      $region33: #{_lambda_.14} parent=27 // pred_check
        %p454 = pneg %p207
      $region34: #{_lambda_.14} parent=27 // pred_check_branch
        %456 = sbr.rel (%p454) target = $region36
      $region35: #{_lambda_.14} parent=27 // pred_region
        %v457 = vld [vmem:[#allocation3] sm:$0xff]
        %v458 = vld [vmem:[#allocation3 + $0x8] sm:$0xff]
        %v459 = vadd.f32 %v457, 1e-05
        %v460 = vadd.f32 %v458, 1e-05
        %v461 = vrcp.pop %v459
        %v462 = vrcp.pop %v460
        %v463 = vld [vmem:[#allocation2] sm:$0xff]
        %v464 = vld [vmem:[#allocation2 + $0x8] sm:$0xff]
        %v465 = vld [vmem:[#allocation2 + $0x10] sm:$0xff]
        %v466 = vld [vmem:[#allocation2 + $0x18] sm:$0xff]
        %v467 = vld [vmem:[#allocation2 + $0x20] sm:$0xff]
        %v468 = vld [vmem:[#allocation2 + $0x28] sm:$0xff]
        %v469 = vld [vmem:[#allocation2 + $0x30] sm:$0xff]
        %v470 = vld [vmem:[#allocation2 + $0x38] sm:$0xff]
        %472 = vset.pattern.permute.xlu0 0
        %473 = vperm.xlu0 %472, %v461
        %v474 = vpop.permute.xlu0 %473
        %477 = vset.pattern.permute.xlu0 0
        %478 = vperm.xlu0 %477, %v462
        %v479 = vpop.permute.xlu0 %478
        %v481 = vmul.f32 %v463, %v474
        %v482 = vmul.f32 %v464, %v474
        %v483 = vmul.f32 %v465, %v474
        %v484 = vmul.f32 %v466, %v474
        %v485 = vmul.f32 %v467, %v479
        %v486 = vmul.f32 %v468, %v479
        %v487 = vmul.f32 %v469, %v479
        %v488 = vmul.f32 %v470, %v479
        %v489 = vpack.c.bf16 %v485, %v481
        %v490 = vpack.c.bf16 %v486, %v482
        %v491 = vpack.c.bf16 %v487, %v483
        %v492 = vpack.c.bf16 %v488, %v484
        %v497 = vunpack.c.l.b16 %v489
        %v498 = vunpack.c.l.b16 %v490
        %v499 = vunpack.c.l.b16 %v491
        %v500 = vunpack.c.l.b16 %v492
        %v501 = vunpack.c.h.b16 %v489
        %v502 = vunpack.c.h.b16 %v490
        %v503 = vunpack.c.h.b16 %v491
        %v504 = vunpack.c.h.b16 %v492
        %v505 = vpack.c.b16 %v498, %v497
        %v506 = vpack.c.b16 %v500, %v499
        %v507 = vpack.c.b16 %v502, %v501
        %v508 = vpack.c.b16 %v504, %v503
        %513 = vst [vmem:[%s205] sm:$0xff] %v505
        %514 = vst [vmem:[%s205 + $0x8] sm:$0xff] %v506
        %515 = vst [vmem:[%s205 + $0x10] sm:$0xff] %v507
        %516 = vst [vmem:[%s205 + $0x18] sm:$0xff] %v508
      $region36: #{_lambda_.14} parent=27 // pred_fallthru
        _
      %p517 = scmp.lt.s32.totalorder %s17, 1
      %s518 = scalar_select %p517, %s17, 1
      %s519 = smul.addr %s518, 8
      %s520 = smul.addr %s519, 4
      %s521 = scalar_lea.vmem %s2, %s520
      // Predicated region
      $region37: #{_lambda_.14} parent=27 // pred_check
        %p522 = pneg %p99
      $region38: #{_lambda_.14} parent=27 // pred_check_branch
        %524 = sbr.rel (%p522) target = $region40
      $region39: #{_lambda_.14} parent=27 // pred_region
        _
      $region40: #{_lambda_.14} parent=27 // pred_fallthru
        _
    $region28: #{_lambda_.14} parent=5 // pred_fallthru
      _
    %p525 = scmp.le.s32.totalorder 2, %s8
    // Predicated region
    $region41: #{_lambda_.14} parent=5 // pred_check
      %p526 = pneg %p525
    $region42: #{_lambda_.14} parent=5 // pred_check_branch
      %528 = sbr.rel (%p526) target = $region44
    $region43: #{_lambda_.14} parent=5 // pred_region
      %s529 = ssub.s32 %s8, 2
      // Predicated region
      $region45: #{_lambda_.14} parent=43 // pred_check
        %p530 = pneg %p105
      $region46: #{_lambda_.14} parent=43 // pred_check_branch
        %532 = sbr.rel (%p530) target = $region48
      $region47: #{_lambda_.14} parent=43 // pred_region
        %p533 = scmp.lt.s32.totalorder %s19, 1
        %s534 = scalar_select %p533, %s19, 1
        %s535 = smul.addr %s534, 8
        %s536 = smul.addr %s535, 4
        %s537 = scalar_lea.vmem %s2, %s536
      $region48: #{_lambda_.14} parent=43 // pred_fallthru
        _
    $region44: #{_lambda_.14} parent=5 // pred_fallthru
      _
  $region6: #{_lambda_.14} parent=0 // loop_footer
    %s12 = sadd.s32 1, %s8
  $region7: #{_lambda_.14} parent=0 // loop_footer_branch
    %7 = sbr.rel target = $region3
  $region8: #{_lambda_.14} parent=0 // loop_exit
    _

// kernel: _lambda_.15
$region0: #{_lambda_.15}
  #allocation0 [shape = 'u32[]', space=smem, size = 0x4, offset = 0x4, fixed_abs, tag = 'smem constant byte address 0x4 - core index']
  #allocation1 [shape = 'u32[144,128]{1,0:T(1,128)}', space=vmem, size = 0x12000, scoped, tag = 'internal scratch']
  %s0 = inlined_call_operand.vmem [shape: bf16[2,16,512], index: 0, kind: input, shape index: {}]
  %s1 = inlined_call_operand.vmem [shape: s32[2,16,4], index: 1, kind: input, shape index: {}]
  %s2 = inlined_call_operand.vmem [shape: bf16[512,256], index: 2, kind: input, shape index: {}]
  %s3 = inlined_call_operand.vmem [shape: bf16[512,256], index: 3, kind: input, shape index: {}]
  %s4 = inlined_call_operand.vmem [shape: f32[1,256], index: 4, kind: input, shape index: {}]
  %s5 = inlined_call_operand.vmem [shape: bf16[256,128], index: 5, kind: input, shape index: {}]
  %s6 = inlined_call_operand.vmem [shape: bf16[256,128], index: 6, kind: input, shape index: {}]
  %s7 = inlined_call_operand.vmem [shape: f32[1,128], index: 7, kind: input, shape index: {}]
  %s8 = inlined_call_operand.vmem [shape: bf16[128,64], index: 8, kind: input, shape index: {}]
  %s9 = inlined_call_operand.vmem [shape: bf16[128,64], index: 9, kind: input, shape index: {}]
  %s10 = inlined_call_operand.vmem [shape: f32[1,64], index: 10, kind: input, shape index: {}]
  %s11 = inlined_call_operand.vmem [shape: bf16[256,512], index: 11, kind: input, shape index: {}]
  %s12 = inlined_call_operand.vmem [shape: bf16[128,512], index: 12, kind: input, shape index: {}]
  %s13 = inlined_call_operand.vmem [shape: bf16[64,512], index: 13, kind: input, shape index: {}]
  %s14 = inlined_call_operand.vmem [shape: f32[1,512], index: 14, kind: input, shape index: {}]
  %s15 = inlined_call_operand.vmem [shape: bf16[512,256], index: 15, kind: input, shape index: {}]
  %s16 = inlined_call_operand.vmem [shape: f32[1,256], index: 16, kind: input, shape index: {}]
  %s17 = inlined_call_operand.vmem [shape: bf16[256,128], index: 17, kind: input, shape index: {}]
  %s18 = inlined_call_operand.vmem [shape: f32[1,128], index: 18, kind: input, shape index: {}]
  %s19 = inlined_call_operand.vmem [shape: f32[2,16,128], index: 19, kind: output, shape index: {}]
  %s20 = sld [smem:[#allocation0]]
  $region109: #{_lambda_.15} parent=0
    _
  %s22 = ssub.s32 1, %s20
  %s23 = scalar_select 0, %s22, %s20
  loop: start=0, step=1, limit=4
  $region2: #{_lambda_.15} parent=0 // loop_pre_header
    _
  $region3: #{_lambda_.15} parent=0 // loop_header
    %s25 = sphi 0, %s29
    %p26 = scmp.ge.s32.totalorder %s25, 4
    %s35 = sphi 0, %s37
    %s38 = sphi 0, %s35
    %s39 = sphi 0, %s38
    %s55 = sphi 0, %s39
    %s61 = sphi 0, %s63
    %s64 = sphi 0, %s61
    %s65 = sphi 0, %s64
    %s81 = sphi 0, %s65
    %s85 = sphi 0, %s85
    %s87 = sphi 0, %s85
    %s88 = sphi 0, %s87
    %s102 = sphi 0, %s88
    %s106 = sphi 0, %s106
    %s108 = sphi 0, %s106
    %s109 = sphi 0, %s108
    %s123 = sphi 0, %s109
    %s127 = sphi 0, %s127
    %s129 = sphi 0, %s127
    %s130 = sphi 0, %s129
    %s144 = sphi 0, %s130
    %s148 = sphi 0, %s148
    %s150 = sphi 0, %s148
    %s151 = sphi 0, %s150
    %s165 = sphi 0, %s151
    %s169 = sphi 0, %s169
    %s171 = sphi 0, %s169
    %s172 = sphi 0, %s171
    %s186 = sphi 0, %s172
    %s190 = sphi 0, %s190
    %s192 = sphi 0, %s190
    %s193 = sphi 0, %s192
    %s207 = sphi 0, %s193
    %s211 = sphi 0, %s211
    %s213 = sphi 0, %s211
    %s214 = sphi 0, %s213
    %s228 = sphi 0, %s214
    %s232 = sphi 0, %s232
    %s234 = sphi 0, %s232
    %s235 = sphi 0, %s234
    %s249 = sphi 0, %s235
    %s253 = sphi 0, %s253
    %s255 = sphi 0, %s253
    %s256 = sphi 0, %s255
    %s270 = sphi 0, %s256
    %s274 = sphi 0, %s274
    %s276 = sphi 0, %s274
    %s277 = sphi 0, %s276
    %s291 = sphi 0, %s277
    %s295 = sphi 0, %s295
    %s297 = sphi 0, %s295
    %s298 = sphi 0, %s297
    %s312 = sphi 0, %s298
    %s316 = sphi 0, %s316
    %s318 = sphi 0, %s316
    %s319 = sphi 0, %s318
    %s333 = sphi 0, %s319
    %s337 = sphi 0, %s337
    %s339 = sphi 0, %s337
    %s340 = sphi 0, %s339
    %s354 = sphi 0, %s340
    %s358 = sphi 0, %s358
    %s360 = sphi 0, %s358
    %s361 = sphi 0, %s360
    %s375 = sphi 0, %s361
    %s379 = sphi 0, %s379
    %s381 = sphi 0, %s379
    %s382 = sphi 0, %s381
    %s396 = sphi 0, %s382
    %s400 = sphi 0, %s400
    %s402 = sphi 0, %s400
    %s403 = sphi 0, %s402
    %s417 = sphi 0, %s403
    %s421 = sphi 0, %s421
    %s423 = sphi 0, %s421
    %s424 = sphi 0, %s423
    %s438 = sphi 0, %s424
    %s444 = sphi 0, %s446
    %s447 = sphi 0, %s444
    %s448 = sphi 0, %s447
    %s464 = sphi 0, %s448
  $region4: #{_lambda_.15} parent=0 // loop_header_branch
    %28 = sbr.rel (%p26) target = $region8
  $region5: #{_lambda_.15} parent=0 // loop_body
    %s30 = ssub.s32 %s25, 1
    %s31 = ssub.s32 %s25, 2
    %s32 = sadd.s32 %s25, 1
    %s33 = ssub.s32 %s25, %s32
    %p34 = scmp.eq.s32.totalorder %s33, 0
    %s36 = sadd.s32 %s35, 1
    %s37 = scalar_select %p34, %s35, %s36
    %p40 = pneg %p34
    %p41 = scmp.eq.s32.totalorder %s25, 1
    %p42 = por %p40, %p41
    %p43 = scmp.ne.s32.totalorder %s35, %s38
    %p44 = scmp.eq.s32.totalorder %s25, 0
    %p45 = por %p43, %p44
    %p46 = scmp.ne.s32.totalorder %s35, %s38
    %p47 = scmp.eq.s32.totalorder %s30, 1
    %p48 = por %p46, %p47
    %p49 = scmp.ne.s32.totalorder %s38, %s39
    %p50 = scmp.eq.s32.totalorder %s30, 0
    %p51 = por %p49, %p50
    %p52 = scmp.ne.s32.totalorder %s38, %s39
    %p53 = scmp.eq.s32.totalorder %s31, 1
    %p54 = por %p52, %p53
    %p56 = scmp.ne.s32.totalorder %s39, %s55
    %p57 = scmp.eq.s32.totalorder %s31, 0
    %p58 = por %p56, %p57
    %s59 = ssub.s32 %s25, %s32
    %p60 = scmp.eq.s32.totalorder %s59, 0
    %s62 = sadd.s32 %s61, 1
    %s63 = scalar_select %p60, %s61, %s62
    %p66 = pneg %p60
    %p67 = scmp.eq.s32.totalorder %s25, 1
    %p68 = por %p66, %p67
    %p69 = scmp.ne.s32.totalorder %s61, %s64
    %p70 = scmp.eq.s32.totalorder %s25, 0
    %p71 = por %p69, %p70
    %p72 = scmp.ne.s32.totalorder %s61, %s64
    %p73 = scmp.eq.s32.totalorder %s30, 1
    %p74 = por %p72, %p73
    %p75 = scmp.ne.s32.totalorder %s64, %s65
    %p76 = scmp.eq.s32.totalorder %s30, 0
    %p77 = por %p75, %p76
    %p78 = scmp.ne.s32.totalorder %s64, %s65
    %p79 = scmp.eq.s32.totalorder %s31, 1
    %p80 = por %p78, %p79
    %p82 = scmp.ne.s32.totalorder %s65, %s81
    %p83 = scmp.eq.s32.totalorder %s31, 0
    %p84 = por %p82, %p83
    %s86 = sadd.s32 %s85, 1
    %p89 = scmp.eq.s32.totalorder %s25, 1
    %p90 = scmp.ne.s32.totalorder %s85, %s87
    %p91 = scmp.eq.s32.totalorder %s25, 0
    %p92 = por %p90, %p91
    %p93 = scmp.ne.s32.totalorder %s85, %s87
    %p94 = scmp.eq.s32.totalorder %s30, 1
    %p95 = por %p93, %p94
    %p96 = scmp.ne.s32.totalorder %s87, %s88
    %p97 = scmp.eq.s32.totalorder %s30, 0
    %p98 = por %p96, %p97
    %p99 = scmp.ne.s32.totalorder %s87, %s88
    %p100 = scmp.eq.s32.totalorder %s31, 1
    %p101 = por %p99, %p100
    %p103 = scmp.ne.s32.totalorder %s88, %s102
    %p104 = scmp.eq.s32.totalorder %s31, 0
    %p105 = por %p103, %p104
    %s107 = sadd.s32 %s106, 1
    %p110 = scmp.eq.s32.totalorder %s25, 1
    %p111 = scmp.ne.s32.totalorder %s106, %s108
    %p112 = scmp.eq.s32.totalorder %s25, 0
    %p113 = por %p111, %p112
    %p114 = scmp.ne.s32.totalorder %s106, %s108
    %p115 = scmp.eq.s32.totalorder %s30, 1
    %p116 = por %p114, %p115
    %p117 = scmp.ne.s32.totalorder %s108, %s109
    %p118 = scmp.eq.s32.totalorder %s30, 0
    %p119 = por %p117, %p118
    %p120 = scmp.ne.s32.totalorder %s108, %s109
    %p121 = scmp.eq.s32.totalorder %s31, 1
    %p122 = por %p120, %p121
    %p124 = scmp.ne.s32.totalorder %s109, %s123
    %p125 = scmp.eq.s32.totalorder %s31, 0
    %p126 = por %p124, %p125
    %s128 = sadd.s32 %s127, 1
    %p131 = scmp.eq.s32.totalorder %s25, 1
    %p132 = scmp.ne.s32.totalorder %s127, %s129
    %p133 = scmp.eq.s32.totalorder %s25, 0
    %p134 = por %p132, %p133
    %p135 = scmp.ne.s32.totalorder %s127, %s129
    %p136 = scmp.eq.s32.totalorder %s30, 1
    %p137 = por %p135, %p136
    %p138 = scmp.ne.s32.totalorder %s129, %s130
    %p139 = scmp.eq.s32.totalorder %s30, 0
    %p140 = por %p138, %p139
    %p141 = scmp.ne.s32.totalorder %s129, %s130
    %p142 = scmp.eq.s32.totalorder %s31, 1
    %p143 = por %p141, %p142
    %p145 = scmp.ne.s32.totalorder %s130, %s144
    %p146 = scmp.eq.s32.totalorder %s31, 0
    %p147 = por %p145, %p146
    %s149 = sadd.s32 %s148, 1
    %p152 = scmp.eq.s32.totalorder %s25, 1
    %p153 = scmp.ne.s32.totalorder %s148, %s150
    %p154 = scmp.eq.s32.totalorder %s25, 0
    %p155 = por %p153, %p154
    %p156 = scmp.ne.s32.totalorder %s148, %s150
    %p157 = scmp.eq.s32.totalorder %s30, 1
    %p158 = por %p156, %p157
    %p159 = scmp.ne.s32.totalorder %s150, %s151
    %p160 = scmp.eq.s32.totalorder %s30, 0
    %p161 = por %p159, %p160
    %p162 = scmp.ne.s32.totalorder %s150, %s151
    %p163 = scmp.eq.s32.totalorder %s31, 1
    %p164 = por %p162, %p163
    %p166 = scmp.ne.s32.totalorder %s151, %s165
    %p167 = scmp.eq.s32.totalorder %s31, 0
    %p168 = por %p166, %p167
    %s170 = sadd.s32 %s169, 1
    %p173 = scmp.eq.s32.totalorder %s25, 1
    %p174 = scmp.ne.s32.totalorder %s169, %s171
    %p175 = scmp.eq.s32.totalorder %s25, 0
    %p176 = por %p174, %p175
    %p177 = scmp.ne.s32.totalorder %s169, %s171
    %p178 = scmp.eq.s32.totalorder %s30, 1
    %p179 = por %p177, %p178
    %p180 = scmp.ne.s32.totalorder %s171, %s172
    %p181 = scmp.eq.s32.totalorder %s30, 0
    %p182 = por %p180, %p181
    %p183 = scmp.ne.s32.totalorder %s171, %s172
    %p184 = scmp.eq.s32.totalorder %s31, 1
    %p185 = por %p183, %p184
    %p187 = scmp.ne.s32.totalorder %s172, %s186
    %p188 = scmp.eq.s32.totalorder %s31, 0
    %p189 = por %p187, %p188
    %s191 = sadd.s32 %s190, 1
    %p194 = scmp.eq.s32.totalorder %s25, 1
    %p195 = scmp.ne.s32.totalorder %s190, %s192
    %p196 = scmp.eq.s32.totalorder %s25, 0
    %p197 = por %p195, %p196
    %p198 = scmp.ne.s32.totalorder %s190, %s192
    %p199 = scmp.eq.s32.totalorder %s30, 1
    %p200 = por %p198, %p199
    %p201 = scmp.ne.s32.totalorder %s192, %s193
    %p202 = scmp.eq.s32.totalorder %s30, 0
    %p203 = por %p201, %p202
    %p204 = scmp.ne.s32.totalorder %s192, %s193
    %p205 = scmp.eq.s32.totalorder %s31, 1
    %p206 = por %p204, %p205
    %p208 = scmp.ne.s32.totalorder %s193, %s207
    %p209 = scmp.eq.s32.totalorder %s31, 0
    %p210 = por %p208, %p209
    %s212 = sadd.s32 %s211, 1
    %p215 = scmp.eq.s32.totalorder %s25, 1
    %p216 = scmp.ne.s32.totalorder %s211, %s213
    %p217 = scmp.eq.s32.totalorder %s25, 0
    %p218 = por %p216, %p217
    %p219 = scmp.ne.s32.totalorder %s211, %s213
    %p220 = scmp.eq.s32.totalorder %s30, 1
    %p221 = por %p219, %p220
    %p222 = scmp.ne.s32.totalorder %s213, %s214
    %p223 = scmp.eq.s32.totalorder %s30, 0
    %p224 = por %p222, %p223
    %p225 = scmp.ne.s32.totalorder %s213, %s214
    %p226 = scmp.eq.s32.totalorder %s31, 1
    %p227 = por %p225, %p226
    %p229 = scmp.ne.s32.totalorder %s214, %s228
    %p230 = scmp.eq.s32.totalorder %s31, 0
    %p231 = por %p229, %p230
    %s233 = sadd.s32 %s232, 1
    %p236 = scmp.eq.s32.totalorder %s25, 1
    %p237 = scmp.ne.s32.totalorder %s232, %s234
    %p238 = scmp.eq.s32.totalorder %s25, 0
    %p239 = por %p237, %p238
    %p240 = scmp.ne.s32.totalorder %s232, %s234
    %p241 = scmp.eq.s32.totalorder %s30, 1
    %p242 = por %p240, %p241
    %p243 = scmp.ne.s32.totalorder %s234, %s235
    %p244 = scmp.eq.s32.totalorder %s30, 0
    %p245 = por %p243, %p244
    %p246 = scmp.ne.s32.totalorder %s234, %s235
    %p247 = scmp.eq.s32.totalorder %s31, 1
    %p248 = por %p246, %p247
    %p250 = scmp.ne.s32.totalorder %s235, %s249
    %p251 = scmp.eq.s32.totalorder %s31, 0
    %p252 = por %p250, %p251
    %s254 = sadd.s32 %s253, 1
    %p257 = scmp.eq.s32.totalorder %s25, 1
    %p258 = scmp.ne.s32.totalorder %s253, %s255
    %p259 = scmp.eq.s32.totalorder %s25, 0
    %p260 = por %p258, %p259
    %p261 = scmp.ne.s32.totalorder %s253, %s255
    %p262 = scmp.eq.s32.totalorder %s30, 1
    %p263 = por %p261, %p262
    %p264 = scmp.ne.s32.totalorder %s255, %s256
    %p265 = scmp.eq.s32.totalorder %s30, 0
    %p266 = por %p264, %p265
    %p267 = scmp.ne.s32.totalorder %s255, %s256
    %p268 = scmp.eq.s32.totalorder %s31, 1
    %p269 = por %p267, %p268
    %p271 = scmp.ne.s32.totalorder %s256, %s270
    %p272 = scmp.eq.s32.totalorder %s31, 0
    %p273 = por %p271, %p272
    %s275 = sadd.s32 %s274, 1
    %p278 = scmp.eq.s32.totalorder %s25, 1
    %p279 = scmp.ne.s32.totalorder %s274, %s276
    %p280 = scmp.eq.s32.totalorder %s25, 0
    %p281 = por %p279, %p280
    %p282 = scmp.ne.s32.totalorder %s274, %s276
    %p283 = scmp.eq.s32.totalorder %s30, 1
    %p284 = por %p282, %p283
    %p285 = scmp.ne.s32.totalorder %s276, %s277
    %p286 = scmp.eq.s32.totalorder %s30, 0
    %p287 = por %p285, %p286
    %p288 = scmp.ne.s32.totalorder %s276, %s277
    %p289 = scmp.eq.s32.totalorder %s31, 1
    %p290 = por %p288, %p289
    %p292 = scmp.ne.s32.totalorder %s277, %s291
    %p293 = scmp.eq.s32.totalorder %s31, 0
    %p294 = por %p292, %p293
    %s296 = sadd.s32 %s295, 1
    %p299 = scmp.eq.s32.totalorder %s25, 1
    %p300 = scmp.ne.s32.totalorder %s295, %s297
    %p301 = scmp.eq.s32.totalorder %s25, 0
    %p302 = por %p300, %p301
    %p303 = scmp.ne.s32.totalorder %s295, %s297
    %p304 = scmp.eq.s32.totalorder %s30, 1
    %p305 = por %p303, %p304
    %p306 = scmp.ne.s32.totalorder %s297, %s298
    %p307 = scmp.eq.s32.totalorder %s30, 0
    %p308 = por %p306, %p307
    %p309 = scmp.ne.s32.totalorder %s297, %s298
    %p310 = scmp.eq.s32.totalorder %s31, 1
    %p311 = por %p309, %p310
    %p313 = scmp.ne.s32.totalorder %s298, %s312
    %p314 = scmp.eq.s32.totalorder %s31, 0
    %p315 = por %p313, %p314
    %s317 = sadd.s32 %s316, 1
    %p320 = scmp.eq.s32.totalorder %s25, 1
    %p321 = scmp.ne.s32.totalorder %s316, %s318
    %p322 = scmp.eq.s32.totalorder %s25, 0
    %p323 = por %p321, %p322
    %p324 = scmp.ne.s32.totalorder %s316, %s318
    %p325 = scmp.eq.s32.totalorder %s30, 1
    %p326 = por %p324, %p325
    %p327 = scmp.ne.s32.totalorder %s318, %s319
    %p328 = scmp.eq.s32.totalorder %s30, 0
    %p329 = por %p327, %p328
    %p330 = scmp.ne.s32.totalorder %s318, %s319
    %p331 = scmp.eq.s32.totalorder %s31, 1
    %p332 = por %p330, %p331
    %p334 = scmp.ne.s32.totalorder %s319, %s333
    %p335 = scmp.eq.s32.totalorder %s31, 0
    %p336 = por %p334, %p335
    %s338 = sadd.s32 %s337, 1
    %p341 = scmp.eq.s32.totalorder %s25, 1
    %p342 = scmp.ne.s32.totalorder %s337, %s339
    %p343 = scmp.eq.s32.totalorder %s25, 0
    %p344 = por %p342, %p343
    %p345 = scmp.ne.s32.totalorder %s337, %s339
    %p346 = scmp.eq.s32.totalorder %s30, 1
    %p347 = por %p345, %p346
    %p348 = scmp.ne.s32.totalorder %s339, %s340
    %p349 = scmp.eq.s32.totalorder %s30, 0
    %p350 = por %p348, %p349
    %p351 = scmp.ne.s32.totalorder %s339, %s340
    %p352 = scmp.eq.s32.totalorder %s31, 1
    %p353 = por %p351, %p352
    %p355 = scmp.ne.s32.totalorder %s340, %s354
    %p356 = scmp.eq.s32.totalorder %s31, 0
    %p357 = por %p355, %p356
    %s359 = sadd.s32 %s358, 1
    %p362 = scmp.eq.s32.totalorder %s25, 1
    %p363 = scmp.ne.s32.totalorder %s358, %s360
    %p364 = scmp.eq.s32.totalorder %s25, 0
    %p365 = por %p363, %p364
    %p366 = scmp.ne.s32.totalorder %s358, %s360
    %p367 = scmp.eq.s32.totalorder %s30, 1
    %p368 = por %p366, %p367
    %p369 = scmp.ne.s32.totalorder %s360, %s361
    %p370 = scmp.eq.s32.totalorder %s30, 0
    %p371 = por %p369, %p370
    %p372 = scmp.ne.s32.totalorder %s360, %s361
    %p373 = scmp.eq.s32.totalorder %s31, 1
    %p374 = por %p372, %p373
    %p376 = scmp.ne.s32.totalorder %s361, %s375
    %p377 = scmp.eq.s32.totalorder %s31, 0
    %p378 = por %p376, %p377
    %s380 = sadd.s32 %s379, 1
    %p383 = scmp.eq.s32.totalorder %s25, 1
    %p384 = scmp.ne.s32.totalorder %s379, %s381
    %p385 = scmp.eq.s32.totalorder %s25, 0
    %p386 = por %p384, %p385
    %p387 = scmp.ne.s32.totalorder %s379, %s381
    %p388 = scmp.eq.s32.totalorder %s30, 1
    %p389 = por %p387, %p388
    %p390 = scmp.ne.s32.totalorder %s381, %s382
    %p391 = scmp.eq.s32.totalorder %s30, 0
    %p392 = por %p390, %p391
    %p393 = scmp.ne.s32.totalorder %s381, %s382
    %p394 = scmp.eq.s32.totalorder %s31, 1
    %p395 = por %p393, %p394
    %p397 = scmp.ne.s32.totalorder %s382, %s396
    %p398 = scmp.eq.s32.totalorder %s31, 0
    %p399 = por %p397, %p398
    %s401 = sadd.s32 %s400, 1
    %p404 = scmp.eq.s32.totalorder %s25, 1
    %p405 = scmp.ne.s32.totalorder %s400, %s402
    %p406 = scmp.eq.s32.totalorder %s25, 0
    %p407 = por %p405, %p406
    %p408 = scmp.ne.s32.totalorder %s400, %s402
    %p409 = scmp.eq.s32.totalorder %s30, 1
    %p410 = por %p408, %p409
    %p411 = scmp.ne.s32.totalorder %s402, %s403
    %p412 = scmp.eq.s32.totalorder %s30, 0
    %p413 = por %p411, %p412
    %p414 = scmp.ne.s32.totalorder %s402, %s403
    %p415 = scmp.eq.s32.totalorder %s31, 1
    %p416 = por %p414, %p415
    %p418 = scmp.ne.s32.totalorder %s403, %s417
    %p419 = scmp.eq.s32.totalorder %s31, 0
    %p420 = por %p418, %p419
    %s422 = sadd.s32 %s421, 1
    %p425 = scmp.eq.s32.totalorder %s25, 1
    %p426 = scmp.ne.s32.totalorder %s421, %s423
    %p427 = scmp.eq.s32.totalorder %s25, 0
    %p428 = por %p426, %p427
    %p429 = scmp.ne.s32.totalorder %s421, %s423
    %p430 = scmp.eq.s32.totalorder %s30, 1
    %p431 = por %p429, %p430
    %p432 = scmp.ne.s32.totalorder %s423, %s424
    %p433 = scmp.eq.s32.totalorder %s30, 0
    %p434 = por %p432, %p433
    %p435 = scmp.ne.s32.totalorder %s423, %s424
    %p436 = scmp.eq.s32.totalorder %s31, 1
    %p437 = por %p435, %p436
    %p439 = scmp.ne.s32.totalorder %s424, %s438
    %p440 = scmp.eq.s32.totalorder %s31, 0
    %p441 = por %p439, %p440
    %s442 = ssub.s32 %s25, %s32
    %p443 = scmp.eq.s32.totalorder %s442, 0
    %s445 = sadd.s32 %s444, 1
    %s446 = scalar_select %p443, %s444, %s445
    %p449 = pneg %p443
    %p450 = scmp.eq.s32.totalorder %s25, 1
    %p451 = por %p449, %p450
    %p452 = scmp.ne.s32.totalorder %s444, %s447
    %p453 = scmp.eq.s32.totalorder %s25, 0
    %p454 = por %p452, %p453
    %p455 = scmp.ne.s32.totalorder %s444, %s447
    %p456 = scmp.eq.s32.totalorder %s30, 1
    %p457 = por %p455, %p456
    %p458 = scmp.ne.s32.totalorder %s447, %s448
    %p459 = scmp.eq.s32.totalorder %s30, 0
    %p460 = por %p458, %p459
    %p461 = scmp.ne.s32.totalorder %s447, %s448
    %p462 = scmp.eq.s32.totalorder %s31, 1
    %p463 = por %p461, %p462
    %p465 = scmp.ne.s32.totalorder %s448, %s464
    %p466 = scmp.eq.s32.totalorder %s31, 0
    %p467 = por %p465, %p466
    %p468 = scmp.le.s32.totalorder 1, %s25
    %p469 = scmp.lt.s32.totalorder %s25, 3
    %p470 = pnand %p468, %p469
    %p471 = pneg %p470
    // Predicated region
    $region9: #{_lambda_.15} parent=5 // pred_check
      _
    $region10: #{_lambda_.15} parent=5 // pred_check_branch
      %473 = sbr.rel (%p470) target = $region12
    $region11: #{_lambda_.15} parent=5 // pred_region
      %s474 = ssub.s32 %s25, 1
      // Predicated region
      $region13: #{_lambda_.15} parent=11 // pred_check
        %p475 = pneg %p98
      $region14: #{_lambda_.15} parent=11 // pred_check_branch
        %477 = sbr.rel (%p475) target = $region16
      $region15: #{_lambda_.15} parent=11 // pred_region
        _
      $region16: #{_lambda_.15} parent=11 // pred_fallthru
        _
      // Predicated region
      $region17: #{_lambda_.15} parent=11 // pred_check
        %p478 = pneg %p119
      $region18: #{_lambda_.15} parent=11 // pred_check_branch
        %480 = sbr.rel (%p478) target = $region20
      $region19: #{_lambda_.15} parent=11 // pred_region
        _
      $region20: #{_lambda_.15} parent=11 // pred_fallthru
        _
      // Predicated region
      $region21: #{_lambda_.15} parent=11 // pred_check
        %p481 = pneg %p140
      $region22: #{_lambda_.15} parent=11 // pred_check_branch
        %483 = sbr.rel (%p481) target = $region24
      $region23: #{_lambda_.15} parent=11 // pred_region
        _
      $region24: #{_lambda_.15} parent=11 // pred_fallthru
        _
      // Predicated region
      $region25: #{_lambda_.15} parent=11 // pred_check
        %p484 = pneg %p161
      $region26: #{_lambda_.15} parent=11 // pred_check_branch
        %486 = sbr.rel (%p484) target = $region28
      $region27: #{_lambda_.15} parent=11 // pred_region
        _
      $region28: #{_lambda_.15} parent=11 // pred_fallthru
        _
      // Predicated region
      $region29: #{_lambda_.15} parent=11 // pred_check
        %p487 = pneg %p182
      $region30: #{_lambda_.15} parent=11 // pred_check_branch
        %489 = sbr.rel (%p487) target = $region32
      $region31: #{_lambda_.15} parent=11 // pred_region
        _
      $region32: #{_lambda_.15} parent=11 // pred_fallthru
        _
      // Predicated region
      $region33: #{_lambda_.15} parent=11 // pred_check
        %p490 = pneg %p203
      $region34: #{_lambda_.15} parent=11 // pred_check_branch
        %492 = sbr.rel (%p490) target = $region36
      $region35: #{_lambda_.15} parent=11 // pred_region
        _
      $region36: #{_lambda_.15} parent=11 // pred_fallthru
        _
      // Predicated region
      $region37: #{_lambda_.15} parent=11 // pred_check
        %p493 = pneg %p224
      $region38: #{_lambda_.15} parent=11 // pred_check_branch
        %495 = sbr.rel (%p493) target = $region40
      $region39: #{_lambda_.15} parent=11 // pred_region
        _
      $region40: #{_lambda_.15} parent=11 // pred_fallthru
        _
      // Predicated region
      $region41: #{_lambda_.15} parent=11 // pred_check
        %p496 = pneg %p245
      $region42: #{_lambda_.15} parent=11 // pred_check_branch
        %498 = sbr.rel (%p496) target = $region44
      $region43: #{_lambda_.15} parent=11 // pred_region
        _
      $region44: #{_lambda_.15} parent=11 // pred_fallthru
        _
      // Predicated region
      $region45: #{_lambda_.15} parent=11 // pred_check
        %p499 = pneg %p266
      $region46: #{_lambda_.15} parent=11 // pred_check_branch
        %501 = sbr.rel (%p499) target = $region48
      $region47: #{_lambda_.15} parent=11 // pred_region
        _
      $region48: #{_lambda_.15} parent=11 // pred_fallthru
        _
      // Predicated region
      $region49: #{_lambda_.15} parent=11 // pred_check
        %p502 = pneg %p287
      $region50: #{_lambda_.15} parent=11 // pred_check_branch
        %504 = sbr.rel (%p502) target = $region52
      $region51: #{_lambda_.15} parent=11 // pred_region
        _
      $region52: #{_lambda_.15} parent=11 // pred_fallthru
        _
      // Predicated region
      $region53: #{_lambda_.15} parent=11 // pred_check
        %p505 = pneg %p308
      $region54: #{_lambda_.15} parent=11 // pred_check_branch
        %507 = sbr.rel (%p505) target = $region56
      $region55: #{_lambda_.15} parent=11 // pred_region
        _
      $region56: #{_lambda_.15} parent=11 // pred_fallthru
        _
      // Predicated region
      $region57: #{_lambda_.15} parent=11 // pred_check
        %p508 = pneg %p329
      $region58: #{_lambda_.15} parent=11 // pred_check_branch
        %510 = sbr.rel (%p508) target = $region60
      $region59: #{_lambda_.15} parent=11 // pred_region
        _
      $region60: #{_lambda_.15} parent=11 // pred_fallthru
        _
      // Predicated region
      $region61: #{_lambda_.15} parent=11 // pred_check
        %p511 = pneg %p350
      $region62: #{_lambda_.15} parent=11 // pred_check_branch
        %513 = sbr.rel (%p511) target = $region64
      $region63: #{_lambda_.15} parent=11 // pred_region
        _
      $region64: #{_lambda_.15} parent=11 // pred_fallthru
        _
      // Predicated region
      $region65: #{_lambda_.15} parent=11 // pred_check
        %p514 = pneg %p371
      $region66: #{_lambda_.15} parent=11 // pred_check_branch
        %516 = sbr.rel (%p514) target = $region68
      $region67: #{_lambda_.15} parent=11 // pred_region
        _
      $region68: #{_lambda_.15} parent=11 // pred_fallthru
        _
      // Predicated region
      $region69: #{_lambda_.15} parent=11 // pred_check
        %p517 = pneg %p392
      $region70: #{_lambda_.15} parent=11 // pred_check_branch
        %519 = sbr.rel (%p517) target = $region72
      $region71: #{_lambda_.15} parent=11 // pred_region
        _
      $region72: #{_lambda_.15} parent=11 // pred_fallthru
        _
      // Predicated region
      $region73: #{_lambda_.15} parent=11 // pred_check
        %p520 = pneg %p413
      $region74: #{_lambda_.15} parent=11 // pred_check_branch
        %522 = sbr.rel (%p520) target = $region76
      $region75: #{_lambda_.15} parent=11 // pred_region
        _
      $region76: #{_lambda_.15} parent=11 // pred_fallthru
        _
      // Predicated region
      $region77: #{_lambda_.15} parent=11 // pred_check
        %p523 = pneg %p434
      $region78: #{_lambda_.15} parent=11 // pred_check_branch
        %525 = sbr.rel (%p523) target = $region80
      $region79: #{_lambda_.15} parent=11 // pred_region
        _
      $region80: #{_lambda_.15} parent=11 // pred_fallthru
        _
    $region12: #{_lambda_.15} parent=5 // pred_fallthru
      _
    %p526 = scmp.lt.s32.totalorder %s25, 2
    // Predicated region
    $region81: #{_lambda_.15} parent=5 // pred_check
      %p527 = pneg %p526
    $region82: #{_lambda_.15} parent=5 // pred_check_branch
      %529 = sbr.rel (%p527) target = $region84
    $region83: #{_lambda_.15} parent=5 // pred_region
      // Predicated region
      $region85: #{_lambda_.15} parent=83 // pred_check
        %p530 = pneg %p45
      $region86: #{_lambda_.15} parent=83 // pred_check_branch
        %532 = sbr.rel (%p530) target = $region88
      $region87: #{_lambda_.15} parent=83 // pred_region
        %p533 = scmp.lt.s32.totalorder %s25, 1
        %s534 = scalar_select %p533, %s25, 1
        %s535 = smul.addr %s534, 8
        %s536 = smul.addr %s535, 4
        %s537 = scalar_lea.vmem %s0, %s536
      $region88: #{_lambda_.15} parent=83 // pred_fallthru
        _
      // Predicated region
      $region89: #{_lambda_.15} parent=83 // pred_check
        %p538 = pneg %p71
      $region90: #{_lambda_.15} parent=83 // pred_check_branch
        %540 = sbr.rel (%p538) target = $region92
      $region91: #{_lambda_.15} parent=83 // pred_region
        %p541 = scmp.lt.s32.totalorder %s25, 1
        %s542 = scalar_select %p541, %s25, 1
        %s543 = smul.addr %s542, 2
        %s544 = smul.addr %s543, 8
        %s545 = scalar_lea.vmem %s1, %s544
      $region92: #{_lambda_.15} parent=83 // pred_fallthru
        _
    $region84: #{_lambda_.15} parent=5 // pred_fallthru
      _
    %p546 = scmp.le.s32.totalorder 1, %s25
    %p547 = scmp.lt.s32.totalorder %s25, 3
    %p548 = pnand %p546, %p547
    %p549 = pneg %p548
    // Predicated region
    $region93: #{_lambda_.15} parent=5 // pred_check
      _
    $region94: #{_lambda_.15} parent=5 // pred_check_branch
      %551 = sbr.rel (%p548) target = $region96
    $region95: #{_lambda_.15} parent=5 // pred_region
      %s552 = ssub.s32 %s25, 1
      %p553 = scmp.lt.s32.totalorder %s30, 1
      %s554 = scalar_select %p553, %s30, 1
      %s555 = smul.addr %s554, 8
      %s556 = smul.addr %s555, 4
      %s557 = scalar_lea.vmem %s0, %s556
      %p558 = pneg %p51
      %p559 = pneg %p48
      %p560 = scmp.lt.s32.totalorder %s30, 1
      %s561 = scalar_select %p560, %s30, 1
      %s562 = smul.addr %s561, 2
      %s563 = smul.addr %s562, 8
      %s564 = scalar_lea.vmem %s1, %s563
      %p565 = pneg %p77
      %p566 = pneg %p74
      %p567 = pneg %p98
      %p568 = pneg %p95
      %p569 = pneg %p119
      %p570 = pneg %p116
      %p571 = pneg %p140
      %p572 = pneg %p137
      %p573 = pneg %p161
      %p574 = pneg %p158
      %p575 = pneg %p182
      %p576 = pneg %p179
      %p577 = pneg %p203
      %p578 = pneg %p200
      %p579 = pneg %p224
      %p580 = pneg %p221
      %p581 = pneg %p245
      %p582 = pneg %p242
      %p583 = pneg %p266
      %p584 = pneg %p263
      %p585 = pneg %p287
      %p586 = pneg %p284
      %p587 = pneg %p308
      %p588 = pneg %p305
      %p589 = pneg %p329
      %p590 = pneg %p326
      %p591 = pneg %p350
      %p592 = pneg %p347
      %p593 = pneg %p371
      %p594 = pneg %p368
      %p595 = pneg %p392
      %p596 = pneg %p389
      %p597 = pneg %p413
      %p598 = pneg %p410
      %p599 = pneg %p434
      %p600 = pneg %p431
      %p601 = pneg %p460
      %p602 = pneg %p457
      %p603 = scmp.lt.s32.totalorder %s30, 1
      %s604 = scalar_select %p603, %s30, 1
      %s605 = smul.addr %s604, 2
      %s606 = smul.addr %s605, 8
      %s607 = scalar_lea.vmem %s19, %s606
      %p608 = scmp.lt.s32.totalorder %s30, 1
      %s609 = scalar_select %p608, %s30, 1
      %s610 = smul.addr %s609, 8
      %s611 = smul.addr %s610, 4
      %s612 = scalar_lea.vmem %s0, %s611
      %p613 = scmp.lt.s32.totalorder %s30, 1
      %s614 = scalar_select %p613, %s30, 1
      %s615 = smul.addr %s614, 2
      %s616 = smul.addr %s615, 8
      %s617 = scalar_lea.vmem %s1, %s616
      %p618 = scmp.lt.s32.totalorder %s30, 1
      %s619 = scalar_select %p618, %s30, 1
      %s620 = smul.addr %s619, 2
      %s621 = smul.addr %s620, 8
      %s622 = scalar_lea.vmem %s19, %s621
      %v624 = vld [vmem:[%s617] sm:$0xff]
      %v625 = vld [vmem:[%s617 + $0x8] sm:$0xff]
      %v626 = vlaneseq
      %v627 = vand.u32 %v626, 127
      %v628 = vld [vmem:[%s612] sm:$0xff]
      %v629 = vld [vmem:[%s612 + $0x8] sm:$0xff]
      %v630 = vld [vmem:[%s612 + $0x10] sm:$0xff]
      %v631 = vld [vmem:[%s612 + $0x18] sm:$0xff]
      %v632 = vld [vmem:[%s2] sm:$0xff]
      %v633 = vld [vmem:[%s2 + $0x8] sm:$0xff]
      %v634 = vld [vmem:[%s2 + $0x10] sm:$0xff]
      %v635 = vld [vmem:[%s2 + $0x18] sm:$0xff]
      %v636 = vld [vmem:[%s2 + $0x20] sm:$0xff]
      %v637 = vld [vmem:[%s2 + $0x28] sm:$0xff]
      %v638 = vld [vmem:[%s2 + $0x30] sm:$0xff]
      %v639 = vld [vmem:[%s2 + $0x38] sm:$0xff]
      %v640 = vld [vmem:[%s2 + $0x40] sm:$0xff]
      %v641 = vld [vmem:[%s2 + $0x48] sm:$0xff]
      %v642 = vld [vmem:[%s2 + $0x50] sm:$0xff]
      %v643 = vld [vmem:[%s2 + $0x58] sm:$0xff]
      %v644 = vld [vmem:[%s2 + $0x60] sm:$0xff]
      %v645 = vld [vmem:[%s2 + $0x68] sm:$0xff]
      %v646 = vld [vmem:[%s2 + $0x70] sm:$0xff]
      %v647 = vld [vmem:[%s2 + $0x78] sm:$0xff]
      %v648 = vld [vmem:[%s2 + $0x80] sm:$0xff]
      %v649 = vld [vmem:[%s2 + $0x88] sm:$0xff]
      %v650 = vld [vmem:[%s2 + $0x90] sm:$0xff]
      %v651 = vld [vmem:[%s2 + $0x98] sm:$0xff]
      %v652 = vld [vmem:[%s2 + $0xa0] sm:$0xff]
      %v653 = vld [vmem:[%s2 + $0xa8] sm:$0xff]
      %v654 = vld [vmem:[%s2 + $0xb0] sm:$0xff]
      %v655 = vld [vmem:[%s2 + $0xb8] sm:$0xff]
      %v656 = vld [vmem:[%s2 + $0xc0] sm:$0xff]
      %v657 = vld [vmem:[%s2 + $0xc8] sm:$0xff]
      %v658 = vld [vmem:[%s2 + $0xd0] sm:$0xff]
      %v659 = vld [vmem:[%s2 + $0xd8] sm:$0xff]
      %v660 = vld [vmem:[%s2 + $0xe0] sm:$0xff]
      %v661 = vld [vmem:[%s2 + $0xe8] sm:$0xff]
      %v662 = vld [vmem:[%s2 + $0xf0] sm:$0xff]
      %v663 = vld [vmem:[%s2 + $0xf8] sm:$0xff]
      %v664 = vld [vmem:[%s2 + $0x100] sm:$0xff]
      %v665 = vld [vmem:[%s2 + $0x108] sm:$0xff]
      %v666 = vld [vmem:[%s2 + $0x110] sm:$0xff]
      %v667 = vld [vmem:[%s2 + $0x118] sm:$0xff]
      %v668 = vld [vmem:[%s2 + $0x120] sm:$0xff]
      %v669 = vld [vmem:[%s2 + $0x128] sm:$0xff]
      %v670 = vld [vmem:[%s2 + $0x130] sm:$0xff]
      %v671 = vld [vmem:[%s2 + $0x138] sm:$0xff]
      %v672 = vld [vmem:[%s2 + $0x140] sm:$0xff]
      %v673 = vld [vmem:[%s2 + $0x148] sm:$0xff]
      %v674 = vld [vmem:[%s2 + $0x150] sm:$0xff]
      %v675 = vld [vmem:[%s2 + $0x158] sm:$0xff]
      %v676 = vld [vmem:[%s2 + $0x160] sm:$0xff]
      %v677 = vld [vmem:[%s2 + $0x168] sm:$0xff]
      %v678 = vld [vmem:[%s2 + $0x170] sm:$0xff]
      %v679 = vld [vmem:[%s2 + $0x178] sm:$0xff]
      %v680 = vld [vmem:[%s2 + $0x180] sm:$0xff]
      %v681 = vld [vmem:[%s2 + $0x188] sm:$0xff]
      %v682 = vld [vmem:[%s2 + $0x190] sm:$0xff]
      %v683 = vld [vmem:[%s2 + $0x198] sm:$0xff]
      %v684 = vld [vmem:[%s2 + $0x1a0] sm:$0xff]
      %v685 = vld [vmem:[%s2 + $0x1a8] sm:$0xff]
      %v686 = vld [vmem:[%s2 + $0x1b0] sm:$0xff]
      %v687 = vld [vmem:[%s2 + $0x1b8] sm:$0xff]
      %v688 = vld [vmem:[%s2 + $0x1c0] sm:$0xff]
      %v689 = vld [vmem:[%s2 + $0x1c8] sm:$0xff]
      %v690 = vld [vmem:[%s2 + $0x1d0] sm:$0xff]
      %v691 = vld [vmem:[%s2 + $0x1d8] sm:$0xff]
      %v692 = vld [vmem:[%s2 + $0x1e0] sm:$0xff]
      %v693 = vld [vmem:[%s2 + $0x1e8] sm:$0xff]
      %v694 = vld [vmem:[%s2 + $0x1f0] sm:$0xff]
      %v695 = vld [vmem:[%s2 + $0x1f8] sm:$0xff]
      %v700 = vunpack.c.l.b16 %v628
      %v701 = vunpack.c.h.b16 %v628
      %v702 = vunpack.c.l.b16 %v629
      %v703 = vunpack.c.h.b16 %v629
      %v704 = vunpack.c.l.b16 %v630
      %v705 = vunpack.c.h.b16 %v630
      %v706 = vunpack.c.l.b16 %v631
      %v707 = vunpack.c.h.b16 %v631
      %v708 = vpack.c.b16 %v704, %v700
      %v709 = vpack.c.b16 %v705, %v701
      %v710 = vpack.c.b16 %v706, %v702
      %v711 = vpack.c.b16 %v707, %v703
      %v780 = vunpack.c.l.b16 %v632
      %v781 = vunpack.c.h.b16 %v632
      %v782 = vunpack.c.l.b16 %v633
      %v783 = vunpack.c.h.b16 %v633
      %v784 = vunpack.c.l.b16 %v634
      %v785 = vunpack.c.h.b16 %v634
      %v786 = vunpack.c.l.b16 %v635
      %v787 = vunpack.c.h.b16 %v635
      %v788 = vunpack.c.l.b16 %v636
      %v789 = vunpack.c.h.b16 %v636
      %v790 = vunpack.c.l.b16 %v637
      %v791 = vunpack.c.h.b16 %v637
      %v792 = vunpack.c.l.b16 %v638
      %v793 = vunpack.c.h.b16 %v638
      %v794 = vunpack.c.l.b16 %v639
      %v795 = vunpack.c.h.b16 %v639
      %v796 = vunpack.c.l.b16 %v640
      %v797 = vunpack.c.h.b16 %v640
      %v798 = vunpack.c.l.b16 %v641
      %v799 = vunpack.c.h.b16 %v641
      %v800 = vunpack.c.l.b16 %v642
      %v801 = vunpack.c.h.b16 %v642
      %v802 = vunpack.c.l.b16 %v643
      %v803 = vunpack.c.h.b16 %v643
      %v804 = vunpack.c.l.b16 %v644
      %v805 = vunpack.c.h.b16 %v644
      %v806 = vunpack.c.l.b16 %v645
      %v807 = vunpack.c.h.b16 %v645
      %v808 = vunpack.c.l.b16 %v646
      %v809 = vunpack.c.h.b16 %v646
      %v810 = vunpack.c.l.b16 %v647
      %v811 = vunpack.c.h.b16 %v647
      %v812 = vunpack.c.l.b16 %v648
      %v813 = vunpack.c.h.b16 %v648
      %v814 = vunpack.c.l.b16 %v649
      %v815 = vunpack.c.h.b16 %v649
      %v816 = vunpack.c.l.b16 %v650
      %v817 = vunpack.c.h.b16 %v650
      %v818 = vunpack.c.l.b16 %v651
      %v819 = vunpack.c.h.b16 %v651
      %v820 = vunpack.c.l.b16 %v652
      %v821 = vunpack.c.h.b16 %v652
      %v822 = vunpack.c.l.b16 %v653
      %v823 = vunpack.c.h.b16 %v653
      %v824 = vunpack.c.l.b16 %v654
      %v825 = vunpack.c.h.b16 %v654
      %v826 = vunpack.c.l.b16 %v655
      %v827 = vunpack.c.h.b16 %v655
      %v828 = vunpack.c.l.b16 %v656
      %v829 = vunpack.c.h.b16 %v656
      %v830 = vunpack.c.l.b16 %v657
      %v831 = vunpack.c.h.b16 %v657
      %v832 = vunpack.c.l.b16 %v658
      %v833 = vunpack.c.h.b16 %v658
      %v834 = vunpack.c.l.b16 %v659
      %v835 = vunpack.c.h.b16 %v659
      %v836 = vunpack.c.l.b16 %v660
      %v837 = vunpack.c.h.b16 %v660
      %v838 = vunpack.c.l.b16 %v661
      %v839 = vunpack.c.h.b16 %v661
      %v840 = vunpack.c.l.b16 %v662
      %v841 = vunpack.c.h.b16 %v662
      %v842 = vunpack.c.l.b16 %v663
      %v843 = vunpack.c.h.b16 %v663
      %v844 = vunpack.c.l.b16 %v664
      %v845 = vunpack.c.h.b16 %v664
      %v846 = vunpack.c.l.b16 %v665
      %v847 = vunpack.c.h.b16 %v665
      %v848 = vunpack.c.l.b16 %v666
      %v849 = vunpack.c.h.b16 %v666
      %v850 = vunpack.c.l.b16 %v667
      %v851 = vunpack.c.h.b16 %v667
      %v852 = vunpack.c.l.b16 %v668
      %v853 = vunpack.c.h.b16 %v668
      %v854 = vunpack.c.l.b16 %v669
      %v855 = vunpack.c.h.b16 %v669
      %v856 = vunpack.c.l.b16 %v670
      %v857 = vunpack.c.h.b16 %v670
      %v858 = vunpack.c.l.b16 %v671
      %v859 = vunpack.c.h.b16 %v671
      %v860 = vunpack.c.l.b16 %v672
      %v861 = vunpack.c.h.b16 %v672
      %v862 = vunpack.c.l.b16 %v673
      %v863 = vunpack.c.h.b16 %v673
      %v864 = vunpack.c.l.b16 %v674
      %v865 = vunpack.c.h.b16 %v674
      %v866 = vunpack.c.l.b16 %v675
      %v867 = vunpack.c.h.b16 %v675
      %v868 = vunpack.c.l.b16 %v676
      %v869 = vunpack.c.h.b16 %v676
      %v870 = vunpack.c.l.b16 %v677
      %v871 = vunpack.c.h.b16 %v677
      %v872 = vunpack.c.l.b16 %v678
      %v873 = vunpack.c.h.b16 %v678
      %v874 = vunpack.c.l.b16 %v679
      %v875 = vunpack.c.h.b16 %v679
      %v876 = vunpack.c.l.b16 %v680
      %v877 = vunpack.c.h.b16 %v680
      %v878 = vunpack.c.l.b16 %v681
      %v879 = vunpack.c.h.b16 %v681
      %v880 = vunpack.c.l.b16 %v682
      %v881 = vunpack.c.h.b16 %v682
      %v882 = vunpack.c.l.b16 %v683
      %v883 = vunpack.c.h.b16 %v683
      %v884 = vunpack.c.l.b16 %v684
      %v885 = vunpack.c.h.b16 %v684
      %v886 = vunpack.c.l.b16 %v685
      %v887 = vunpack.c.h.b16 %v685
      %v888 = vunpack.c.l.b16 %v686
      %v889 = vunpack.c.h.b16 %v686
      %v890 = vunpack.c.l.b16 %v687
      %v891 = vunpack.c.h.b16 %v687
      %v892 = vunpack.c.l.b16 %v688
      %v893 = vunpack.c.h.b16 %v688
      %v894 = vunpack.c.l.b16 %v689
      %v895 = vunpack.c.h.b16 %v689
      %v896 = vunpack.c.l.b16 %v690
      %v897 = vunpack.c.h.b16 %v690
      %v898 = vunpack.c.l.b16 %v691
      %v899 = vunpack.c.h.b16 %v691
      %v900 = vunpack.c.l.b16 %v692
      %v901 = vunpack.c.h.b16 %v692
      %v902 = vunpack.c.l.b16 %v693
      %v903 = vunpack.c.h.b16 %v693
      %v904 = vunpack.c.l.b16 %v694
      %v905 = vunpack.c.h.b16 %v694
      %v906 = vunpack.c.l.b16 %v695
      %v907 = vunpack.c.h.b16 %v695
      %v908 = vpack.c.b16 %v782, %v780
      %v909 = vpack.c.b16 %v783, %v781
      %v910 = vpack.c.b16 %v786, %v784
      %v911 = vpack.c.b16 %v787, %v785
      %v912 = vpack.c.b16 %v790, %v788
      %v913 = vpack.c.b16 %v791, %v789
      %v914 = vpack.c.b16 %v794, %v792
      %v915 = vpack.c.b16 %v795, %v793
      %v916 = vpack.c.b16 %v798, %v796
      %v917 = vpack.c.b16 %v799, %v797
      %v918 = vpack.c.b16 %v802, %v800
      %v919 = vpack.c.b16 %v803, %v801
      %v920 = vpack.c.b16 %v806, %v804
      %v921 = vpack.c.b16 %v807, %v805
      %v922 = vpack.c.b16 %v810, %v808
      %v923 = vpack.c.b16 %v811, %v809
      %v924 = vpack.c.b16 %v814, %v812
      %v925 = vpack.c.b16 %v815, %v813
      %v926 = vpack.c.b16 %v818, %v816
      %v927 = vpack.c.b16 %v819, %v817
      %v928 = vpack.c.b16 %v822, %v820
      %v929 = vpack.c.b16 %v823, %v821
      %v930 = vpack.c.b16 %v826, %v824
      %v931 = vpack.c.b16 %v827, %v825
      %v932 = vpack.c.b16 %v830, %v828
      %v933 = vpack.c.b16 %v831, %v829
      %v934 = vpack.c.b16 %v834, %v832
      %v935 = vpack.c.b16 %v835, %v833
      %v936 = vpack.c.b16 %v838, %v836
      %v937 = vpack.c.b16 %v839, %v837
      %v938 = vpack.c.b16 %v842, %v840
      %v939 = vpack.c.b16 %v843, %v841
      %v940 = vpack.c.b16 %v846, %v844
      %v941 = vpack.c.b16 %v847, %v845
      %v942 = vpack.c.b16 %v850, %v848
      %v943 = vpack.c.b16 %v851, %v849
      %v944 = vpack.c.b16 %v854, %v852
      %v945 = vpack.c.b16 %v855, %v853
      %v946 = vpack.c.b16 %v858, %v856
      %v947 = vpack.c.b16 %v859, %v857
      %v948 = vpack.c.b16 %v862, %v860
      %v949 = vpack.c.b16 %v863, %v861
      %v950 = vpack.c.b16 %v866, %v864
      %v951 = vpack.c.b16 %v867, %v865
      %v952 = vpack.c.b16 %v870, %v868
      %v953 = vpack.c.b16 %v871, %v869
      %v954 = vpack.c.b16 %v874, %v872
      %v955 = vpack.c.b16 %v875, %v873
      %v956 = vpack.c.b16 %v878, %v876
      %v957 = vpack.c.b16 %v879, %v877
      %v958 = vpack.c.b16 %v882, %v880
      %v959 = vpack.c.b16 %v883, %v881
      %v960 = vpack.c.b16 %v886, %v884
      %v961 = vpack.c.b16 %v887, %v885
      %v962 = vpack.c.b16 %v890, %v888
      %v963 = vpack.c.b16 %v891, %v889
      %v964 = vpack.c.b16 %v894, %v892
      %v965 = vpack.c.b16 %v895, %v893
      %v966 = vpack.c.b16 %v898, %v896
      %v967 = vpack.c.b16 %v899, %v897
      %v968 = vpack.c.b16 %v902, %v900
      %v969 = vpack.c.b16 %v903, %v901
      %v970 = vpack.c.b16 %v906, %v904
      %v971 = vpack.c.b16 %v907, %v905
      %1036 = vmatprep.subr.bf16.mxu0 %v909
      %1037 = vmatpush1.bf16.msra.mxu0 %v908
      %1038 = vmatprep.subr.bf16.mxu0 %v911
      %1039 = vmatpush1.bf16.msra.mxu0 %v910
      %1040 = vmatprep.subr.bf16.mxu0 %v913
      %1041 = vmatpush1.bf16.msra.mxu0 %v912
      %1042 = vmatprep.subr.bf16.mxu0 %v915
      %1043 = vmatpush1.bf16.msra.mxu0 %v914
      %1044 = vmatprep.subr.bf16.mxu0 %v917
      %1045 = vmatpush1.bf16.msra.mxu0 %v916
      %1046 = vmatprep.subr.bf16.mxu0 %v919
      %1047 = vmatpush1.bf16.msra.mxu0 %v918
      %1048 = vmatprep.subr.bf16.mxu0 %v921
      %1049 = vmatpush1.bf16.msra.mxu0 %v920
      %1050 = vmatprep.subr.bf16.mxu0 %v923
      %1051 = vmatpush1.bf16.msra.mxu0 %v922
      %1052 = vmatprep.subr.bf16.mxu0 %v925
      %1053 = vmatpush1.bf16.msra.mxu0 %v924
      %1054 = vmatprep.subr.bf16.mxu0 %v927
      %1055 = vmatpush1.bf16.msra.mxu0 %v926
      %1056 = vmatprep.subr.bf16.mxu0 %v929
      %1057 = vmatpush1.bf16.msra.mxu0 %v928
      %1058 = vmatprep.subr.bf16.mxu0 %v931
      %1059 = vmatpush1.bf16.msra.mxu0 %v930
      %1060 = vmatprep.subr.bf16.mxu0 %v933
      %1061 = vmatpush1.bf16.msra.mxu0 %v932
      %1062 = vmatprep.subr.bf16.mxu0 %v935
      %1063 = vmatpush1.bf16.msra.mxu0 %v934
      %1064 = vmatprep.subr.bf16.mxu0 %v937
      %1065 = vmatpush1.bf16.msra.mxu0 %v936
      %1066 = vmatprep.subr.bf16.mxu0 %v939
      %1067 = vmatpush1.bf16.msra.mxu0 %v938
      %1068 = vmatprep.mubr.bf16.mxu0 %v709
      %1069 = vmatmul.mubr.bf16.gmra.mrb[0].mxu0 %v708
      %v1070 = vpop.f32.mrb[0].mxu0
      %v1071 = vadd.f32 0.0, %v1070
      %v1072 = vpop.f32.mrb[0].mxu0
      %v1073 = vadd.f32 0.0, %v1072
      %v1074 = vpop.f32.mrb[0].mxu0
      %v1075 = vadd.f32 0.0, %v1074
      %v1076 = vpop.f32.mrb[0].mxu0
      %v1077 = vadd.f32 0.0, %v1076
      %1078 = vdwg.mxu0
      %1079 = vmatprep.subr.bf16.mxu0 %v941
      %1080 = vmatpush1.bf16.msra.mxu0 %v940
      %1081 = vmatprep.subr.bf16.mxu0 %v943
      %1082 = vmatpush1.bf16.msra.mxu0 %v942
      %1083 = vmatprep.subr.bf16.mxu0 %v945
      %1084 = vmatpush1.bf16.msra.mxu0 %v944
      %1085 = vmatprep.subr.bf16.mxu0 %v947
      %1086 = vmatpush1.bf16.msra.mxu0 %v946
      %1087 = vmatprep.subr.bf16.mxu0 %v949
      %1088 = vmatpush1.bf16.msra.mxu0 %v948
      %1089 = vmatprep.subr.bf16.mxu0 %v951
      %1090 = vmatpush1.bf16.msra.mxu0 %v950
      %1091 = vmatprep.subr.bf16.mxu0 %v953
      %1092 = vmatpush1.bf16.msra.mxu0 %v952
      %1093 = vmatprep.subr.bf16.mxu0 %v955
      %1094 = vmatpush1.bf16.msra.mxu0 %v954
      %1095 = vmatprep.subr.bf16.mxu0 %v957
      %1096 = vmatpush1.bf16.msra.mxu0 %v956
      %1097 = vmatprep.subr.bf16.mxu0 %v959
      %1098 = vmatpush1.bf16.msra.mxu0 %v958
      %1099 = vmatprep.subr.bf16.mxu0 %v961
      %1100 = vmatpush1.bf16.msra.mxu0 %v960
      %1101 = vmatprep.subr.bf16.mxu0 %v963
      %1102 = vmatpush1.bf16.msra.mxu0 %v962
      %1103 = vmatprep.subr.bf16.mxu0 %v965
      %1104 = vmatpush1.bf16.msra.mxu0 %v964
      %1105 = vmatprep.subr.bf16.mxu0 %v967
      %1106 = vmatpush1.bf16.msra.mxu0 %v966
      %1107 = vmatprep.subr.bf16.mxu0 %v969
      %1108 = vmatpush1.bf16.msra.mxu0 %v968
      %1109 = vmatprep.subr.bf16.mxu0 %v971
      %1110 = vmatpush1.bf16.msra.mxu0 %v970
      %1111 = vmatprep.mubr.bf16.mxu0 %v711
      %1112 = vmatmul.mubr.bf16.gmra.mrb[0].mxu0 %v710
      %v1113 = vpop.f32.mrb[0].mxu0
      %v1114 = vadd.f32 %v1071, %v1113
      %v1115 = vpop.f32.mrb[0].mxu0
      %v1116 = vadd.f32 %v1073, %v1115
      %v1117 = vpop.f32.mrb[0].mxu0
      %v1118 = vadd.f32 %v1075, %v1117
      %v1119 = vpop.f32.mrb[0].mxu0
      %v1120 = vadd.f32 %v1077, %v1119
      %1121 = vdwg.mxu0
      %v1122 = vld [vmem:[%s3] sm:$0xff]
      %v1123 = vld [vmem:[%s3 + $0x8] sm:$0xff]
      %v1124 = vld [vmem:[%s3 + $0x10] sm:$0xff]
      %v1125 = vld [vmem:[%s3 + $0x18] sm:$0xff]
      %v1126 = vld [vmem:[%s3 + $0x20] sm:$0xff]
      %v1127 = vld [vmem:[%s3 + $0x28] sm:$0xff]
      %v1128 = vld [vmem:[%s3 + $0x30] sm:$0xff]
      %v1129 = vld [vmem:[%s3 + $0x38] sm:$0xff]
      %v1130 = vld [vmem:[%s3 + $0x40] sm:$0xff]
      %v1131 = vld [vmem:[%s3 + $0x48] sm:$0xff]
      %v1132 = vld [vmem:[%s3 + $0x50] sm:$0xff]
      %v1133 = vld [vmem:[%s3 + $0x58] sm:$0xff]
      %v1134 = vld [vmem:[%s3 + $0x60] sm:$0xff]
      %v1135 = vld [vmem:[%s3 + $0x68] sm:$0xff]
      %v1136 = vld [vmem:[%s3 + $0x70] sm:$0xff]
      %v1137 = vld [vmem:[%s3 + $0x78] sm:$0xff]
      %v1138 = vld [vmem:[%s3 + $0x80] sm:$0xff]
      %v1139 = vld [vmem:[%s3 + $0x88] sm:$0xff]
      %v1140 = vld [vmem:[%s3 + $0x90] sm:$0xff]
      %v1141 = vld [vmem:[%s3 + $0x98] sm:$0xff]
      %v1142 = vld [vmem:[%s3 + $0xa0] sm:$0xff]
      %v1143 = vld [vmem:[%s3 + $0xa8] sm:$0xff]
      %v1144 = vld [vmem:[%s3 + $0xb0] sm:$0xff]
      %v1145 = vld [vmem:[%s3 + $0xb8] sm:$0xff]
      %v1146 = vld [vmem:[%s3 + $0xc0] sm:$0xff]
      %v1147 = vld [vmem:[%s3 + $0xc8] sm:$0xff]
      %v1148 = vld [vmem:[%s3 + $0xd0] sm:$0xff]
      %v1149 = vld [vmem:[%s3 + $0xd8] sm:$0xff]
      %v1150 = vld [vmem:[%s3 + $0xe0] sm:$0xff]
      %v1151 = vld [vmem:[%s3 + $0xe8] sm:$0xff]
      %v1152 = vld [vmem:[%s3 + $0xf0] sm:$0xff]
      %v1153 = vld [vmem:[%s3 + $0xf8] sm:$0xff]
      %v1154 = vld [vmem:[%s3 + $0x100] sm:$0xff]
      %v1155 = vld [vmem:[%s3 + $0x108] sm:$0xff]
      %v1156 = vld [vmem:[%s3 + $0x110] sm:$0xff]
      %v1157 = vld [vmem:[%s3 + $0x118] sm:$0xff]
      %v1158 = vld [vmem:[%s3 + $0x120] sm:$0xff]
      %v1159 = vld [vmem:[%s3 + $0x128] sm:$0xff]
      %v1160 = vld [vmem:[%s3 + $0x130] sm:$0xff]
      %v1161 = vld [vmem:[%s3 + $0x138] sm:$0xff]
      %v1162 = vld [vmem:[%s3 + $0x140] sm:$0xff]
      %v1163 = vld [vmem:[%s3 + $0x148] sm:$0xff]
      %v1164 = vld [vmem:[%s3 + $0x150] sm:$0xff]
      %v1165 = vld [vmem:[%s3 + $0x158] sm:$0xff]
      %v1166 = vld [vmem:[%s3 + $0x160] sm:$0xff]
      %v1167 = vld [vmem:[%s3 + $0x168] sm:$0xff]
      %v1168 = vld [vmem:[%s3 + $0x170] sm:$0xff]
      %v1169 = vld [vmem:[%s3 + $0x178] sm:$0xff]
      %v1170 = vld [vmem:[%s3 + $0x180] sm:$0xff]
      %v1171 = vld [vmem:[%s3 + $0x188] sm:$0xff]
      %v1172 = vld [vmem:[%s3 + $0x190] sm:$0xff]
      %v1173 = vld [vmem:[%s3 + $0x198] sm:$0xff]
      %v1174 = vld [vmem:[%s3 + $0x1a0] sm:$0xff]
      %v1175 = vld [vmem:[%s3 + $0x1a8] sm:$0xff]
      %v1176 = vld [vmem:[%s3 + $0x1b0] sm:$0xff]
      %v1177 = vld [vmem:[%s3 + $0x1b8] sm:$0xff]
      %v1178 = vld [vmem:[%s3 + $0x1c0] sm:$0xff]
      %v1179 = vld [vmem:[%s3 + $0x1c8] sm:$0xff]
      %v1180 = vld [vmem:[%s3 + $0x1d0] sm:$0xff]
      %v1181 = vld [vmem:[%s3 + $0x1d8] sm:$0xff]
      %v1182 = vld [vmem:[%s3 + $0x1e0] sm:$0xff]
      %v1183 = vld [vmem:[%s3 + $0x1e8] sm:$0xff]
      %v1184 = vld [vmem:[%s3 + $0x1f0] sm:$0xff]
      %v1185 = vld [vmem:[%s3 + $0x1f8] sm:$0xff]
      %v1186 = vld [vmem:[%s4] sm:$0x3]
      %v1188 = vlaneseq
      %v1189 = vshrl.u32 %v1188, 7
      %v1190 = vsub.s32 0, %v1189
      %v1191 = vrot.slane %v1186, %v1190
      %v1192 = vlaneseq
      %v1193 = vshrl.u32 %v1192, 7
      %v1194 = vsub.s32 1, %v1193
      %v1195 = vrot.slane %v1186, %v1194
      %v1262 = vunpack.c.l.b16 %v1122
      %v1263 = vunpack.c.h.b16 %v1122
      %v1264 = vunpack.c.l.b16 %v1123
      %v1265 = vunpack.c.h.b16 %v1123
      %v1266 = vunpack.c.l.b16 %v1124
      %v1267 = vunpack.c.h.b16 %v1124
      %v1268 = vunpack.c.l.b16 %v1125
      %v1269 = vunpack.c.h.b16 %v1125
      %v1270 = vunpack.c.l.b16 %v1126
      %v1271 = vunpack.c.h.b16 %v1126
      %v1272 = vunpack.c.l.b16 %v1127
      %v1273 = vunpack.c.h.b16 %v1127
      %v1274 = vunpack.c.l.b16 %v1128
      %v1275 = vunpack.c.h.b16 %v1128
      %v1276 = vunpack.c.l.b16 %v1129
      %v1277 = vunpack.c.h.b16 %v1129
      %v1278 = vunpack.c.l.b16 %v1130
      %v1279 = vunpack.c.h.b16 %v1130
      %v1280 = vunpack.c.l.b16 %v1131
      %v1281 = vunpack.c.h.b16 %v1131
      %v1282 = vunpack.c.l.b16 %v1132
      %v1283 = vunpack.c.h.b16 %v1132
      %v1284 = vunpack.c.l.b16 %v1133
      %v1285 = vunpack.c.h.b16 %v1133
      %v1286 = vunpack.c.l.b16 %v1134
      %v1287 = vunpack.c.h.b16 %v1134
      %v1288 = vunpack.c.l.b16 %v1135
      %v1289 = vunpack.c.h.b16 %v1135
      %v1290 = vunpack.c.l.b16 %v1136
      %v1291 = vunpack.c.h.b16 %v1136
      %v1292 = vunpack.c.l.b16 %v1137
      %v1293 = vunpack.c.h.b16 %v1137
      %v1294 = vunpack.c.l.b16 %v1138
      %v1295 = vunpack.c.h.b16 %v1138
      %v1296 = vunpack.c.l.b16 %v1139
      %v1297 = vunpack.c.h.b16 %v1139
      %v1298 = vunpack.c.l.b16 %v1140
      %v1299 = vunpack.c.h.b16 %v1140
      %v1300 = vunpack.c.l.b16 %v1141
      %v1301 = vunpack.c.h.b16 %v1141
      %v1302 = vunpack.c.l.b16 %v1142
      %v1303 = vunpack.c.h.b16 %v1142
      %v1304 = vunpack.c.l.b16 %v1143
      %v1305 = vunpack.c.h.b16 %v1143
      %v1306 = vunpack.c.l.b16 %v1144
      %v1307 = vunpack.c.h.b16 %v1144
      %v1308 = vunpack.c.l.b16 %v1145
      %v1309 = vunpack.c.h.b16 %v1145
      %v1310 = vunpack.c.l.b16 %v1146
      %v1311 = vunpack.c.h.b16 %v1146
      %v1312 = vunpack.c.l.b16 %v1147
      %v1313 = vunpack.c.h.b16 %v1147
      %v1314 = vunpack.c.l.b16 %v1148
      %v1315 = vunpack.c.h.b16 %v1148
      %v1316 = vunpack.c.l.b16 %v1149
      %v1317 = vunpack.c.h.b16 %v1149
      %v1318 = vunpack.c.l.b16 %v1150
      %v1319 = vunpack.c.h.b16 %v1150
      %v1320 = vunpack.c.l.b16 %v1151
      %v1321 = vunpack.c.h.b16 %v1151
      %v1322 = vunpack.c.l.b16 %v1152
      %v1323 = vunpack.c.h.b16 %v1152
      %v1324 = vunpack.c.l.b16 %v1153
      %v1325 = vunpack.c.h.b16 %v1153
      %v1326 = vunpack.c.l.b16 %v1154
      %v1327 = vunpack.c.h.b16 %v1154
      %v1328 = vunpack.c.l.b16 %v1155
      %v1329 = vunpack.c.h.b16 %v1155
      %v1330 = vunpack.c.l.b16 %v1156
      %v1331 = vunpack.c.h.b16 %v1156
      %v1332 = vunpack.c.l.b16 %v1157
      %v1333 = vunpack.c.h.b16 %v1157
      %v1334 = vunpack.c.l.b16 %v1158
      %v1335 = vunpack.c.h.b16 %v1158
      %v1336 = vunpack.c.l.b16 %v1159
      %v1337 = vunpack.c.h.b16 %v1159
      %v1338 = vunpack.c.l.b16 %v1160
      %v1339 = vunpack.c.h.b16 %v1160
      %v1340 = vunpack.c.l.b16 %v1161
      %v1341 = vunpack.c.h.b16 %v1161
      %v1342 = vunpack.c.l.b16 %v1162
      %v1343 = vunpack.c.h.b16 %v1162
      %v1344 = vunpack.c.l.b16 %v1163
      %v1345 = vunpack.c.h.b16 %v1163
      %v1346 = vunpack.c.l.b16 %v1164
      %v1347 = vunpack.c.h.b16 %v1164
      %v1348 = vunpack.c.l.b16 %v1165
      %v1349 = vunpack.c.h.b16 %v1165
      %v1350 = vunpack.c.l.b16 %v1166
      %v1351 = vunpack.c.h.b16 %v1166
      %v1352 = vunpack.c.l.b16 %v1167
      %v1353 = vunpack.c.h.b16 %v1167
      %v1354 = vunpack.c.l.b16 %v1168
      %v1355 = vunpack.c.h.b16 %v1168
      %v1356 = vunpack.c.l.b16 %v1169
      %v1357 = vunpack.c.h.b16 %v1169
      %v1358 = vunpack.c.l.b16 %v1170
      %v1359 = vunpack.c.h.b16 %v1170
      %v1360 = vunpack.c.l.b16 %v1171
      %v1361 = vunpack.c.h.b16 %v1171
      %v1362 = vunpack.c.l.b16 %v1172
      %v1363 = vunpack.c.h.b16 %v1172
      %v1364 = vunpack.c.l.b16 %v1173
      %v1365 = vunpack.c.h.b16 %v1173
      %v1366 = vunpack.c.l.b16 %v1174
      %v1367 = vunpack.c.h.b16 %v1174
      %v1368 = vunpack.c.l.b16 %v1175
      %v1369 = vunpack.c.h.b16 %v1175
      %v1370 = vunpack.c.l.b16 %v1176
      %v1371 = vunpack.c.h.b16 %v1176
      %v1372 = vunpack.c.l.b16 %v1177
      %v1373 = vunpack.c.h.b16 %v1177
      %v1374 = vunpack.c.l.b16 %v1178
      %v1375 = vunpack.c.h.b16 %v1178
      %v1376 = vunpack.c.l.b16 %v1179
      %v1377 = vunpack.c.h.b16 %v1179
      %v1378 = vunpack.c.l.b16 %v1180
      %v1379 = vunpack.c.h.b16 %v1180
      %v1380 = vunpack.c.l.b16 %v1181
      %v1381 = vunpack.c.h.b16 %v1181
      %v1382 = vunpack.c.l.b16 %v1182
      %v1383 = vunpack.c.h.b16 %v1182
      %v1384 = vunpack.c.l.b16 %v1183
      %v1385 = vunpack.c.h.b16 %v1183
      %v1386 = vunpack.c.l.b16 %v1184
      %v1387 = vunpack.c.h.b16 %v1184
      %v1388 = vunpack.c.l.b16 %v1185
      %v1389 = vunpack.c.h.b16 %v1185
      %v1390 = vpack.c.b16 %v1264, %v1262
      %v1391 = vpack.c.b16 %v1265, %v1263
      %v1392 = vpack.c.b16 %v1268, %v1266
      %v1393 = vpack.c.b16 %v1269, %v1267
      %v1394 = vpack.c.b16 %v1272, %v1270
      %v1395 = vpack.c.b16 %v1273, %v1271
      %v1396 = vpack.c.b16 %v1276, %v1274
      %v1397 = vpack.c.b16 %v1277, %v1275
      %v1398 = vpack.c.b16 %v1280, %v1278
      %v1399 = vpack.c.b16 %v1281, %v1279
      %v1400 = vpack.c.b16 %v1284, %v1282
      %v1401 = vpack.c.b16 %v1285, %v1283
      %v1402 = vpack.c.b16 %v1288, %v1286
      %v1403 = vpack.c.b16 %v1289, %v1287
      %v1404 = vpack.c.b16 %v1292, %v1290
      %v1405 = vpack.c.b16 %v1293, %v1291
      %v1406 = vpack.c.b16 %v1296, %v1294
      %v1407 = vpack.c.b16 %v1297, %v1295
      %v1408 = vpack.c.b16 %v1300, %v1298
      %v1409 = vpack.c.b16 %v1301, %v1299
      %v1410 = vpack.c.b16 %v1304, %v1302
      %v1411 = vpack.c.b16 %v1305, %v1303
      %v1412 = vpack.c.b16 %v1308, %v1306
      %v1413 = vpack.c.b16 %v1309, %v1307
      %v1414 = vpack.c.b16 %v1312, %v1310
      %v1415 = vpack.c.b16 %v1313, %v1311
      %v1416 = vpack.c.b16 %v1316, %v1314
      %v1417 = vpack.c.b16 %v1317, %v1315
      %v1418 = vpack.c.b16 %v1320, %v1318
      %v1419 = vpack.c.b16 %v1321, %v1319
      %v1420 = vpack.c.b16 %v1324, %v1322
      %v1421 = vpack.c.b16 %v1325, %v1323
      %v1422 = vpack.c.b16 %v1328, %v1326
      %v1423 = vpack.c.b16 %v1329, %v1327
      %v1424 = vpack.c.b16 %v1332, %v1330
      %v1425 = vpack.c.b16 %v1333, %v1331
      %v1426 = vpack.c.b16 %v1336, %v1334
      %v1427 = vpack.c.b16 %v1337, %v1335
      %v1428 = vpack.c.b16 %v1340, %v1338
      %v1429 = vpack.c.b16 %v1341, %v1339
      %v1430 = vpack.c.b16 %v1344, %v1342
      %v1431 = vpack.c.b16 %v1345, %v1343
      %v1432 = vpack.c.b16 %v1348, %v1346
      %v1433 = vpack.c.b16 %v1349, %v1347
      %v1434 = vpack.c.b16 %v1352, %v1350
      %v1435 = vpack.c.b16 %v1353, %v1351
      %v1436 = vpack.c.b16 %v1356, %v1354
      %v1437 = vpack.c.b16 %v1357, %v1355
      %v1438 = vpack.c.b16 %v1360, %v1358
      %v1439 = vpack.c.b16 %v1361, %v1359
      %v1440 = vpack.c.b16 %v1364, %v1362
      %v1441 = vpack.c.b16 %v1365, %v1363
      %v1442 = vpack.c.b16 %v1368, %v1366
      %v1443 = vpack.c.b16 %v1369, %v1367
      %v1444 = vpack.c.b16 %v1372, %v1370
      %v1445 = vpack.c.b16 %v1373, %v1371
      %v1446 = vpack.c.b16 %v1376, %v1374
      %v1447 = vpack.c.b16 %v1377, %v1375
      %v1448 = vpack.c.b16 %v1380, %v1378
      %v1449 = vpack.c.b16 %v1381, %v1379
      %v1450 = vpack.c.b16 %v1384, %v1382
      %v1451 = vpack.c.b16 %v1385, %v1383
      %v1452 = vpack.c.b16 %v1388, %v1386
      %v1453 = vpack.c.b16 %v1389, %v1387
      %1518 = vmatprep.subr.bf16.mxu0 %v1391
      %1519 = vmatpush1.bf16.msra.mxu0 %v1390
      %1520 = vmatprep.subr.bf16.mxu0 %v1393
      %1521 = vmatpush1.bf16.msra.mxu0 %v1392
      %1522 = vmatprep.subr.bf16.mxu0 %v1395
      %1523 = vmatpush1.bf16.msra.mxu0 %v1394
      %1524 = vmatprep.subr.bf16.mxu0 %v1397
      %1525 = vmatpush1.bf16.msra.mxu0 %v1396
      %1526 = vmatprep.subr.bf16.mxu0 %v1399
      %1527 = vmatpush1.bf16.msra.mxu0 %v1398
      %1528 = vmatprep.subr.bf16.mxu0 %v1401
      %1529 = vmatpush1.bf16.msra.mxu0 %v1400
      %1530 = vmatprep.subr.bf16.mxu0 %v1403
      %1531 = vmatpush1.bf16.msra.mxu0 %v1402
      %1532 = vmatprep.subr.bf16.mxu0 %v1405
      %1533 = vmatpush1.bf16.msra.mxu0 %v1404
      %1534 = vmatprep.subr.bf16.mxu0 %v1407
      %1535 = vmatpush1.bf16.msra.mxu0 %v1406
      %1536 = vmatprep.subr.bf16.mxu0 %v1409
      %1537 = vmatpush1.bf16.msra.mxu0 %v1408
      %1538 = vmatprep.subr.bf16.mxu0 %v1411
      %1539 = vmatpush1.bf16.msra.mxu0 %v1410
      %1540 = vmatprep.subr.bf16.mxu0 %v1413
      %1541 = vmatpush1.bf16.msra.mxu0 %v1412
      %1542 = vmatprep.subr.bf16.mxu0 %v1415
      %1543 = vmatpush1.bf16.msra.mxu0 %v1414
      %1544 = vmatprep.subr.bf16.mxu0 %v1417
      %1545 = vmatpush1.bf16.msra.mxu0 %v1416
      %1546 = vmatprep.subr.bf16.mxu0 %v1419
      %1547 = vmatpush1.bf16.msra.mxu0 %v1418
      %1548 = vmatprep.subr.bf16.mxu0 %v1421
      %1549 = vmatpush1.bf16.msra.mxu0 %v1420
      %1550 = vmatprep.mubr.bf16.mxu0 %v709
      %1551 = vmatmul.mubr.bf16.gmra.mrb[0].mxu0 %v708
      %v1552 = vpop.f32.mrb[0].mxu0
      %v1553 = vadd.f32 %v1191, %v1552
      %v1554 = vpop.f32.mrb[0].mxu0
      %v1555 = vadd.f32 %v1195, %v1554
      %v1556 = vpop.f32.mrb[0].mxu0
      %v1557 = vadd.f32 %v1191, %v1556
      %v1558 = vpop.f32.mrb[0].mxu0
      %v1559 = vadd.f32 %v1195, %v1558
      %1560 = vdwg.mxu0
      %1561 = vmatprep.subr.bf16.mxu0 %v1423
      %1562 = vmatpush1.bf16.msra.mxu0 %v1422
      %1563 = vmatprep.subr.bf16.mxu0 %v1425
      %1564 = vmatpush1.bf16.msra.mxu0 %v1424
      %1565 = vmatprep.subr.bf16.mxu0 %v1427
      %1566 = vmatpush1.bf16.msra.mxu0 %v1426
      %1567 = vmatprep.subr.bf16.mxu0 %v1429
      %1568 = vmatpush1.bf16.msra.mxu0 %v1428
      %1569 = vmatprep.subr.bf16.mxu0 %v1431
      %1570 = vmatpush1.bf16.msra.mxu0 %v1430
      %1571 = vmatprep.subr.bf16.mxu0 %v1433
      %1572 = vmatpush1.bf16.msra.mxu0 %v1432
      %1573 = vmatprep.subr.bf16.mxu0 %v1435
      %1574 = vmatpush1.bf16.msra.mxu0 %v1434
      %1575 = vmatprep.subr.bf16.mxu0 %v1437
      %1576 = vmatpush1.bf16.msra.mxu0 %v1436
      %1577 = vmatprep.subr.bf16.mxu0 %v1439
      %1578 = vmatpush1.bf16.msra.mxu0 %v1438
      %1579 = vmatprep.subr.bf16.mxu0 %v1441
      %1580 = vmatpush1.bf16.msra.mxu0 %v1440
      %1581 = vmatprep.subr.bf16.mxu0 %v1443
      %1582 = vmatpush1.bf16.msra.mxu0 %v1442
      %1583 = vmatprep.subr.bf16.mxu0 %v1445
      %1584 = vmatpush1.bf16.msra.mxu0 %v1444
      %1585 = vmatprep.subr.bf16.mxu0 %v1447
      %1586 = vmatpush1.bf16.msra.mxu0 %v1446
      %1587 = vmatprep.subr.bf16.mxu0 %v1449
      %1588 = vmatpush1.bf16.msra.mxu0 %v1448
      %1589 = vmatprep.subr.bf16.mxu0 %v1451
      %1590 = vmatpush1.bf16.msra.mxu0 %v1450
      %1591 = vmatprep.subr.bf16.mxu0 %v1453
      %1592 = vmatpush1.bf16.msra.mxu0 %v1452
      %1593 = vmatprep.mubr.bf16.mxu0 %v711
      %1594 = vmatmul.mubr.bf16.gmra.mrb[0].mxu0 %v710
      %v1595 = vpop.f32.mrb[0].mxu0
      %v1596 = vadd.f32 %v1553, %v1595
      %v1597 = vpop.f32.mrb[0].mxu0
      %v1598 = vadd.f32 %v1555, %v1597
      %v1599 = vpop.f32.mrb[0].mxu0
      %v1600 = vadd.f32 %v1557, %v1599
      %v1601 = vpop.f32.mrb[0].mxu0
      %v1602 = vadd.f32 %v1559, %v1601
      %1603 = vdwg.mxu0
      %v1604 = vpack.c.bf16 %v1118, %v1114
      %v1605 = vpack.c.bf16 %v1120, %v1116
      %1606 = vset.pattern.permute.xlu0 0
      %1607 = vperm.xlu0 %1606, %v624
      %v1608 = vpop.permute.xlu0 %1607
      %1609 = vset.pattern.permute.xlu0 0
      %1610 = vperm.xlu0 %1609, %v625
      %v1611 = vpop.permute.xlu0 %1610
      %vm1612 = vcmp.eq.s32.totalorder %v1608, %v627
      %vm1613 = vcmp.eq.s32.totalorder %v1611, %v627
      %v1614 = vsel %vm1612, 1, 0
      %v1615 = vsel %vm1613, 1, 0
      %v1616 = vcvt.s32.f32 %v1614
      %v1617 = vcvt.s32.f32 %v1615
      %v1618 = vpack.c.bf16 %v1617, %v1616
      %vm1619 = vcmask 130048
      %v1621 = vsel %vm1619, %v1618, 0
      %1623 = vmatprep.subr.bf16.mxu0 %v1605
      %1624 = vmatpush1.bf16.msra.mxu0 %v1604
      %1625 = vmatprep.subr.bf16.mxu0 0
      %1626 = vmatpush1.bf16.msra.mxu0 0
      %1627 = vmatprep.subr.bf16.mxu0 0
      %1628 = vmatpush1.bf16.msra.mxu0 0
      %1629 = vmatprep.subr.bf16.mxu0 0
      %1630 = vmatpush1.bf16.msra.mxu0 0
      %1631 = vmatprep.subr.bf16.mxu0 0
      %1632 = vmatpush1.bf16.msra.mxu0 0
      %1633 = vmatprep.subr.bf16.mxu0 0
      %1634 = vmatpush1.bf16.msra.mxu0 0
      %1635 = vmatprep.subr.bf16.mxu0 0
      %1636 = vmatpush1.bf16.msra.mxu0 0
      %1637 = vmatprep.subr.bf16.mxu0 0
      %1638 = vmatpush1.bf16.msra.mxu0 0
      %1639 = vmatprep.subr.bf16.mxu0 0
      %1640 = vmatpush1.bf16.msra.mxu0 0
      %1641 = vmatprep.subr.bf16.mxu0 0
      %1642 = vmatpush1.bf16.msra.mxu0 0
      %1643 = vmatprep.subr.bf16.mxu0 0
      %1644 = vmatpush1.bf16.msra.mxu0 0
      %1645 = vmatprep.subr.bf16.mxu0 0
      %1646 = vmatpush1.bf16.msra.mxu0 0
      %1647 = vmatprep.subr.bf16.mxu0 0
      %1648 = vmatpush1.bf16.msra.mxu0 0
      %1649 = vmatprep.subr.bf16.mxu0 0
      %1650 = vmatpush1.bf16.msra.mxu0 0
      %1651 = vmatprep.subr.bf16.mxu0 0
      %1652 = vmatpush1.bf16.msra.mxu0 0
      %1653 = vmatprep.subr.bf16.mxu0 0
      %1654 = vmatpush1.bf16.msra.mxu0 0
      %1655 = vmatprep.mubr.bf16.mxu0 0
      %1656 = vmatmul.mubr.bf16.gmra.mrb[0].mxu0 %v1621
      %v1657 = vpop.f32.mrb[0].mxu0
      %v1658 = vadd.f32 0.0, %v1657
      %v1659 = vpop.f32.mrb[0].mxu0
      %v1660 = vadd.f32 0.0, %v1659
      %v1661 = vpop.f32.mrb[0].mxu0
      %v1662 = vadd.f32 0.0, %v1661
      %v1663 = vpop.f32.mrb[0].mxu0
      %v1664 = vadd.f32 0.0, %v1663
      %1665 = vdwg.mxu0
      %1666 = vset.pattern.permute.xlu0 1
      %1667 = vperm.xlu0 %1666, %v624
      %v1668 = vpop.permute.xlu0 %1667
      %1669 = vset.pattern.permute.xlu0 1
      %1670 = vperm.xlu0 %1669, %v625
      %v1671 = vpop.permute.xlu0 %1670
      %vm1672 = vcmp.eq.s32.totalorder %v1668, %v627
      %vm1673 = vcmp.eq.s32.totalorder %v1671, %v627
      %v1674 = vsel %vm1672, 1, 0
      %v1675 = vsel %vm1673, 1, 0
      %v1676 = vcvt.s32.f32 %v1674
      %v1677 = vcvt.s32.f32 %v1675
      %v1678 = vpack.c.bf16 %v1677, %v1676
      %v1680 = vsel %vm1619, %v1678, 0
      %1682 = vmatprep.subr.bf16.mxu0 %v1605
      %1683 = vmatpush1.bf16.msra.mxu0 %v1604
      %1684 = vmatprep.subr.bf16.mxu0 0
      %1685 = vmatpush1.bf16.msra.mxu0 0
      %1686 = vmatprep.subr.bf16.mxu0 0
      %1687 = vmatpush1.bf16.msra.mxu0 0
      %1688 = vmatprep.subr.bf16.mxu0 0
      %1689 = vmatpush1.bf16.msra.mxu0 0
      %1690 = vmatprep.subr.bf16.mxu0 0
      %1691 = vmatpush1.bf16.msra.mxu0 0
      %1692 = vmatprep.subr.bf16.mxu0 0
      %1693 = vmatpush1.bf16.msra.mxu0 0
      %1694 = vmatprep.subr.bf16.mxu0 0
      %1695 = vmatpush1.bf16.msra.mxu0 0
      %1696 = vmatprep.subr.bf16.mxu0 0
      %1697 = vmatpush1.bf16.msra.mxu0 0
      %1698 = vmatprep.subr.bf16.mxu0 0
      %1699 = vmatpush1.bf16.msra.mxu0 0
      %1700 = vmatprep.subr.bf16.mxu0 0
      %1701 = vmatpush1.bf16.msra.mxu0 0
      %1702 = vmatprep.subr.bf16.mxu0 0
      %1703 = vmatpush1.bf16.msra.mxu0 0
      %1704 = vmatprep.subr.bf16.mxu0 0
      %1705 = vmatpush1.bf16.msra.mxu0 0
      %1706 = vmatprep.subr.bf16.mxu0 0
      %1707 = vmatpush1.bf16.msra.mxu0 0
      %1708 = vmatprep.subr.bf16.mxu0 0
      %1709 = vmatpush1.bf16.msra.mxu0 0
      %1710 = vmatprep.subr.bf16.mxu0 0
      %1711 = vmatpush1.bf16.msra.mxu0 0
      %1712 = vmatprep.subr.bf16.mxu0 0
      %1713 = vmatpush1.bf16.msra.mxu0 0
      %1714 = vmatprep.mubr.bf16.mxu0 0
      %1715 = vmatmul.mubr.bf16.gmra.mrb[0].mxu0 %v1680
      %v1716 = vpop.f32.mrb[0].mxu0
      %v1717 = vadd.f32 0.0, %v1716
      %v1718 = vpop.f32.mrb[0].mxu0
      %v1719 = vadd.f32 0.0, %v1718
      %v1720 = vpop.f32.mrb[0].mxu0
      %v1721 = vadd.f32 0.0, %v1720
      %v1722 = vpop.f32.mrb[0].mxu0
      %v1723 = vadd.f32 0.0, %v1722
      %1724 = vdwg.mxu0
      %v1725 = vmax.f32 %v1658, %v1717
      %v1726 = vmax.f32 %v1660, %v1719
      %v1727 = vmax.f32 %v1662, %v1721
      %v1728 = vmax.f32 %v1664, %v1723
      %1729 = vset.pattern.permute.xlu0 2
      %1730 = vperm.xlu0 %1729, %v624
      %v1731 = vpop.permute.xlu0 %1730
      %1732 = vset.pattern.permute.xlu0 2
      %1733 = vperm.xlu0 %1732, %v625
      %v1734 = vpop.permute.xlu0 %1733
      %vm1735 = vcmp.eq.s32.totalorder %v1731, %v627
      %vm1736 = vcmp.eq.s32.totalorder %v1734, %v627
      %v1737 = vsel %vm1735, 1, 0
      %v1738 = vsel %vm1736, 1, 0
      %v1739 = vcvt.s32.f32 %v1737
      %v1740 = vcvt.s32.f32 %v1738
      %v1741 = vpack.c.bf16 %v1740, %v1739
      %v1743 = vsel %vm1619, %v1741, 0
      %1745 = vmatprep.subr.bf16.mxu0 %v1605
      %1746 = vmatpush1.bf16.msra.mxu0 %v1604
      %1747 = vmatprep.subr.bf16.mxu0 0
      %1748 = vmatpush1.bf16.msra.mxu0 0
      %1749 = vmatprep.subr.bf16.mxu0 0
      %1750 = vmatpush1.bf16.msra.mxu0 0
      %1751 = vmatprep.subr.bf16.mxu0 0
      %1752 = vmatpush1.bf16.msra.mxu0 0
      %1753 = vmatprep.subr.bf16.mxu0 0
      %1754 = vmatpush1.bf16.msra.mxu0 0
      %1755 = vmatprep.subr.bf16.mxu0 0
      %1756 = vmatpush1.bf16.msra.mxu0 0
      %1757 = vmatprep.subr.bf16.mxu0 0
      %1758 = vmatpush1.bf16.msra.mxu0 0
      %1759 = vmatprep.subr.bf16.mxu0 0
      %1760 = vmatpush1.bf16.msra.mxu0 0
      %1761 = vmatprep.subr.bf16.mxu0 0
      %1762 = vmatpush1.bf16.msra.mxu0 0
      %1763 = vmatprep.subr.bf16.mxu0 0
      %1764 = vmatpush1.bf16.msra.mxu0 0
      %1765 = vmatprep.subr.bf16.mxu0 0
      %1766 = vmatpush1.bf16.msra.mxu0 0
      %1767 = vmatprep.subr.bf16.mxu0 0
      %1768 = vmatpush1.bf16.msra.mxu0 0
      %1769 = vmatprep.subr.bf16.mxu0 0
      %1770 = vmatpush1.bf16.msra.mxu0 0
      %1771 = vmatprep.subr.bf16.mxu0 0
      %1772 = vmatpush1.bf16.msra.mxu0 0
      %1773 = vmatprep.subr.bf16.mxu0 0
      %1774 = vmatpush1.bf16.msra.mxu0 0
      %1775 = vmatprep.subr.bf16.mxu0 0
      %1776 = vmatpush1.bf16.msra.mxu0 0
      %1777 = vmatprep.mubr.bf16.mxu0 0
      %1778 = vmatmul.mubr.bf16.gmra.mrb[0].mxu0 %v1743
      %v1779 = vpop.f32.mrb[0].mxu0
      %v1780 = vadd.f32 0.0, %v1779
      %v1781 = vpop.f32.mrb[0].mxu0
      %v1782 = vadd.f32 0.0, %v1781
      %v1783 = vpop.f32.mrb[0].mxu0
      %v1784 = vadd.f32 0.0, %v1783
      %v1785 = vpop.f32.mrb[0].mxu0
      %v1786 = vadd.f32 0.0, %v1785
      %1787 = vdwg.mxu0
      %v1788 = vmax.f32 %v1725, %v1780
      %v1789 = vmax.f32 %v1726, %v1782
      %v1790 = vmax.f32 %v1727, %v1784
      %v1791 = vmax.f32 %v1728, %v1786
      %1792 = vset.pattern.permute.xlu0 3
      %1793 = vperm.xlu0 %1792, %v624
      %v1794 = vpop.permute.xlu0 %1793
      %1795 = vset.pattern.permute.xlu0 3
      %1796 = vperm.xlu0 %1795, %v625
      %v1797 = vpop.permute.xlu0 %1796
      %vm1798 = vcmp.eq.s32.totalorder %v1794, %v627
      %vm1799 = vcmp.eq.s32.totalorder %v1797, %v627
      %v1800 = vsel %vm1798, 1, 0
      %v1801 = vsel %vm1799, 1, 0
      %v1802 = vcvt.s32.f32 %v1800
      %v1803 = vcvt.s32.f32 %v1801
      %v1804 = vpack.c.bf16 %v1803, %v1802
      %v1806 = vsel %vm1619, %v1804, 0
      %1808 = vmatprep.subr.bf16.mxu0 %v1605
      %1809 = vmatpush1.bf16.msra.mxu0 %v1604
      %1810 = vmatprep.subr.bf16.mxu0 0
      %1811 = vmatpush1.bf16.msra.mxu0 0
      %1812 = vmatprep.subr.bf16.mxu0 0
      %1813 = vmatpush1.bf16.msra.mxu0 0
      %1814 = vmatprep.subr.bf16.mxu0 0
      %1815 = vmatpush1.bf16.msra.mxu0 0
      %1816 = vmatprep.subr.bf16.mxu0 0
      %1817 = vmatpush1.bf16.msra.mxu0 0
      %1818 = vmatprep.subr.bf16.mxu0 0
      %1819 = vmatpush1.bf16.msra.mxu0 0
      %1820 = vmatprep.subr.bf16.mxu0 0
      %1821 = vmatpush1.bf16.msra.mxu0 0
      %1822 = vmatprep.subr.bf16.mxu0 0
      %1823 = vmatpush1.bf16.msra.mxu0 0
      %1824 = vmatprep.subr.bf16.mxu0 0
      %1825 = vmatpush1.bf16.msra.mxu0 0
      %1826 = vmatprep.subr.bf16.mxu0 0
      %1827 = vmatpush1.bf16.msra.mxu0 0
      %1828 = vmatprep.subr.bf16.mxu0 0
      %1829 = vmatpush1.bf16.msra.mxu0 0
      %1830 = vmatprep.subr.bf16.mxu0 0
      %1831 = vmatpush1.bf16.msra.mxu0 0
      %1832 = vmatprep.subr.bf16.mxu0 0
      %1833 = vmatpush1.bf16.msra.mxu0 0
      %1834 = vmatprep.subr.bf16.mxu0 0
      %1835 = vmatpush1.bf16.msra.mxu0 0
      %1836 = vmatprep.subr.bf16.mxu0 0
      %1837 = vmatpush1.bf16.msra.mxu0 0
      %1838 = vmatprep.subr.bf16.mxu0 0
      %1839 = vmatpush1.bf16.msra.mxu0 0
      %1840 = vmatprep.mubr.bf16.mxu0 0
      %1841 = vmatmul.mubr.bf16.gmra.mrb[0].mxu0 %v1806
      %v1842 = vpop.f32.mrb[0].mxu0
      %v1843 = vadd.f32 0.0, %v1842
      %v1844 = vpop.f32.mrb[0].mxu0
      %v1845 = vadd.f32 0.0, %v1844
      %v1846 = vpop.f32.mrb[0].mxu0
      %v1847 = vadd.f32 0.0, %v1846
      %v1848 = vpop.f32.mrb[0].mxu0
      %v1849 = vadd.f32 0.0, %v1848
      %1850 = vdwg.mxu0
      %v1851 = vmax.f32 %v1788, %v1843
      %v1852 = vmax.f32 %v1789, %v1845
      %v1853 = vmax.f32 %v1790, %v1847
      %v1854 = vmax.f32 %v1791, %v1849
      %v1855 = vadd.f32 %v1851, %v1596
      %v1856 = vadd.f32 %v1852, %v1598
      %v1857 = vadd.f32 %v1853, %v1600
      %v1858 = vadd.f32 %v1854, %v1602
      %vm1859 = vcmp.gt.f32.partialorder %v1855, 0.0
      %vm1860 = vcmp.gt.f32.partialorder %v1856, 0.0
      %vm1861 = vcmp.gt.f32.partialorder %v1857, 0.0
      %vm1862 = vcmp.gt.f32.partialorder %v1858, 0.0
      %v1863 = vmul.f32 %v1855, 0.2
      %v1864 = vmul.f32 %v1856, 0.2
      %v1865 = vmul.f32 %v1857, 0.2
      %v1866 = vmul.f32 %v1858, 0.2
      %v1867 = vsel %vm1859, %v1855, %v1863
      %v1868 = vsel %vm1860, %v1856, %v1864
      %v1869 = vsel %vm1861, %v1857, %v1865
      %v1870 = vsel %vm1862, %v1858, %v1866
      %v1871 = vpack.c.bf16 %v1869, %v1867
      %v1872 = vpack.c.bf16 %v1870, %v1868
      %v1873 = vld [vmem:[%s5] sm:$0xf]
      %v1874 = vld [vmem:[%s5 + $0x4] sm:$0xf]
      %v1875 = vld [vmem:[%s5 + $0x8] sm:$0xf]
      %v1876 = vld [vmem:[%s5 + $0xc] sm:$0xf]
      %v1877 = vld [vmem:[%s5 + $0x10] sm:$0xf]
      %v1878 = vld [vmem:[%s5 + $0x14] sm:$0xf]
      %v1879 = vld [vmem:[%s5 + $0x18] sm:$0xf]
      %v1880 = vld [vmem:[%s5 + $0x1c] sm:$0xf]
      %v1881 = vld [vmem:[%s5 + $0x20] sm:$0xf]
      %v1882 = vld [vmem:[%s5 + $0x24] sm:$0xf]
      %v1883 = vld [vmem:[%s5 + $0x28] sm:$0xf]
      %v1884 = vld [vmem:[%s5 + $0x2c] sm:$0xf]
      %v1885 = vld [vmem:[%s5 + $0x30] sm:$0xf]
      %v1886 = vld [vmem:[%s5 + $0x34] sm:$0xf]
      %v1887 = vld [vmem:[%s5 + $0x38] sm:$0xf]
      %v1888 = vld [vmem:[%s5 + $0x3c] sm:$0xf]
      %v1889 = vld [vmem:[%s5 + $0x40] sm:$0xf]
      %v1890 = vld [vmem:[%s5 + $0x44] sm:$0xf]
      %v1891 = vld [vmem:[%s5 + $0x48] sm:$0xf]
      %v1892 = vld [vmem:[%s5 + $0x4c] sm:$0xf]
      %v1893 = vld [vmem:[%s5 + $0x50] sm:$0xf]
      %v1894 = vld [vmem:[%s5 + $0x54] sm:$0xf]
      %v1895 = vld [vmem:[%s5 + $0x58] sm:$0xf]
      %v1896 = vld [vmem:[%s5 + $0x5c] sm:$0xf]
      %v1897 = vld [vmem:[%s5 + $0x60] sm:$0xf]
      %v1898 = vld [vmem:[%s5 + $0x64] sm:$0xf]
      %v1899 = vld [vmem:[%s5 + $0x68] sm:$0xf]
      %v1900 = vld [vmem:[%s5 + $0x6c] sm:$0xf]
      %v1901 = vld [vmem:[%s5 + $0x70] sm:$0xf]
      %v1902 = vld [vmem:[%s5 + $0x74] sm:$0xf]
      %v1903 = vld [vmem:[%s5 + $0x78] sm:$0xf]
      %v1904 = vld [vmem:[%s5 + $0x7c] sm:$0xf]
      %v1937 = vunpack.c.l.b16 %v1873
      %v1938 = vunpack.c.l.b16 %v1874
      %v1939 = vunpack.c.l.b16 %v1875
      %v1940 = vunpack.c.l.b16 %v1876
      %v1941 = vunpack.c.l.b16 %v1877
      %v1942 = vunpack.c.l.b16 %v1878
      %v1943 = vunpack.c.l.b16 %v1879
      %v1944 = vunpack.c.l.b16 %v1880
      %v1945 = vunpack.c.l.b16 %v1881
      %v1946 = vunpack.c.l.b16 %v1882
      %v1947 = vunpack.c.l.b16 %v1883
      %v1948 = vunpack.c.l.b16 %v1884
      %v1949 = vunpack.c.l.b16 %v1885
      %v1950 = vunpack.c.l.b16 %v1886
      %v1951 = vunpack.c.l.b16 %v1887
      %v1952 = vunpack.c.l.b16 %v1888
      %v1953 = vunpack.c.l.b16 %v1889
      %v1954 = vunpack.c.l.b16 %v1890
      %v1955 = vunpack.c.l.b16 %v1891
      %v1956 = vunpack.c.l.b16 %v1892
      %v1957 = vunpack.c.l.b16 %v1893
      %v1958 = vunpack.c.l.b16 %v1894
      %v1959 = vunpack.c.l.b16 %v1895
      %v1960 = vunpack.c.l.b16 %v1896
      %v1961 = vunpack.c.l.b16 %v1897
      %v1962 = vunpack.c.l.b16 %v1898
      %v1963 = vunpack.c.l.b16 %v1899
      %v1964 = vunpack.c.l.b16 %v1900
      %v1965 = vunpack.c.l.b16 %v1901
      %v1966 = vunpack.c.l.b16 %v1902
      %v1967 = vunpack.c.l.b16 %v1903
      %v1968 = vunpack.c.l.b16 %v1904
      %v1969 = vpack.c.b16 %v1938, %v1937
      %v1970 = vpack.c.b16 %v1940, %v1939
      %v1971 = vpack.c.b16 %v1942, %v1941
      %v1972 = vpack.c.b16 %v1944, %v1943
      %v1973 = vpack.c.b16 %v1946, %v1945
      %v1974 = vpack.c.b16 %v1948, %v1947
      %v1975 = vpack.c.b16 %v1950, %v1949
      %v1976 = vpack.c.b16 %v1952, %v1951
      %v1977 = vpack.c.b16 %v1954, %v1953
      %v1978 = vpack.c.b16 %v1956, %v1955
      %v1979 = vpack.c.b16 %v1958, %v1957
      %v1980 = vpack.c.b16 %v1960, %v1959
      %v1981 = vpack.c.b16 %v1962, %v1961
      %v1982 = vpack.c.b16 %v1964, %v1963
      %v1983 = vpack.c.b16 %v1966, %v1965
      %v1984 = vpack.c.b16 %v1968, %v1967
      %2001 = vmatprep.subr.bf16.mxu0 0
      %2002 = vmatpush1.bf16.msra.mxu0 %v1969
      %2003 = vmatprep.subr.bf16.mxu0 0
      %2004 = vmatpush1.bf16.msra.mxu0 %v1970
      %2005 = vmatprep.subr.bf16.mxu0 0
      %2006 = vmatpush1.bf16.msra.mxu0 %v1971
      %2007 = vmatprep.subr.bf16.mxu0 0
      %2008 = vmatpush1.bf16.msra.mxu0 %v1972
      %2009 = vmatprep.subr.bf16.mxu0 0
      %2010 = vmatpush1.bf16.msra.mxu0 %v1973
      %2011 = vmatprep.subr.bf16.mxu0 0
      %2012 = vmatpush1.bf16.msra.mxu0 %v1974
      %2013 = vmatprep.subr.bf16.mxu0 0
      %2014 = vmatpush1.bf16.msra.mxu0 %v1975
      %2015 = vmatprep.subr.bf16.mxu0 0
      %2016 = vmatpush1.bf16.msra.mxu0 %v1976
      %2017 = vmatprep.subr.bf16.mxu0 0
      %2018 = vmatpush1.bf16.msra.mxu0 %v1977
      %2019 = vmatprep.subr.bf16.mxu0 0
      %2020 = vmatpush1.bf16.msra.mxu0 %v1978
      %2021 = vmatprep.subr.bf16.mxu0 0
      %2022 = vmatpush1.bf16.msra.mxu0 %v1979
      %2023 = vmatprep.subr.bf16.mxu0 0
      %2024 = vmatpush1.bf16.msra.mxu0 %v1980
      %2025 = vmatprep.subr.bf16.mxu0 0
      %2026 = vmatpush1.bf16.msra.mxu0 %v1981
      %2027 = vmatprep.subr.bf16.mxu0 0
      %2028 = vmatpush1.bf16.msra.mxu0 %v1982
      %2029 = vmatprep.subr.bf16.mxu0 0
      %2030 = vmatpush1.bf16.msra.mxu0 %v1983
      %2031 = vmatprep.subr.bf16.mxu0 0
      %2032 = vmatpush1.bf16.msra.mxu0 %v1984
      %2033 = vmatprep.mubr.bf16.mxu0 %v1872
      %2034 = vmatmul.mubr.bf16.gmra.mrb[0].mxu0 %v1871
      %v2035 = vpop.f32.mrb[0].mxu0
      %v2036 = vadd.f32 0.0, %v2035
      %v2037 = vpop.f32.mrb[0].mxu0
      %v2038 = vpop.f32.mrb[0].mxu0
      %v2039 = vadd.f32 0.0, %v2038
      %v2040 = vpop.f32.mrb[0].mxu0
      %2041 = vdwg.mxu0
      %v2042 = vld [vmem:[%s6] sm:$0xf]
      %v2043 = vld [vmem:[%s6 + $0x4] sm:$0xf]
      %v2044 = vld [vmem:[%s6 + $0x8] sm:$0xf]
      %v2045 = vld [vmem:[%s6 + $0xc] sm:$0xf]
      %v2046 = vld [vmem:[%s6 + $0x10] sm:$0xf]
      %v2047 = vld [vmem:[%s6 + $0x14] sm:$0xf]
      %v2048 = vld [vmem:[%s6 + $0x18] sm:$0xf]
      %v2049 = vld [vmem:[%s6 + $0x1c] sm:$0xf]
      %v2050 = vld [vmem:[%s6 + $0x20] sm:$0xf]
      %v2051 = vld [vmem:[%s6 + $0x24] sm:$0xf]
      %v2052 = vld [vmem:[%s6 + $0x28] sm:$0xf]
      %v2053 = vld [vmem:[%s6 + $0x2c] sm:$0xf]
      %v2054 = vld [vmem:[%s6 + $0x30] sm:$0xf]
      %v2055 = vld [vmem:[%s6 + $0x34] sm:$0xf]
      %v2056 = vld [vmem:[%s6 + $0x38] sm:$0xf]
      %v2057 = vld [vmem:[%s6 + $0x3c] sm:$0xf]
      %v2058 = vld [vmem:[%s6 + $0x40] sm:$0xf]
      %v2059 = vld [vmem:[%s6 + $0x44] sm:$0xf]
      %v2060 = vld [vmem:[%s6 + $0x48] sm:$0xf]
      %v2061 = vld [vmem:[%s6 + $0x4c] sm:$0xf]
      %v2062 = vld [vmem:[%s6 + $0x50] sm:$0xf]
      %v2063 = vld [vmem:[%s6 + $0x54] sm:$0xf]
      %v2064 = vld [vmem:[%s6 + $0x58] sm:$0xf]
      %v2065 = vld [vmem:[%s6 + $0x5c] sm:$0xf]
      %v2066 = vld [vmem:[%s6 + $0x60] sm:$0xf]
      %v2067 = vld [vmem:[%s6 + $0x64] sm:$0xf]
      %v2068 = vld [vmem:[%s6 + $0x68] sm:$0xf]
      %v2069 = vld [vmem:[%s6 + $0x6c] sm:$0xf]
      %v2070 = vld [vmem:[%s6 + $0x70] sm:$0xf]
      %v2071 = vld [vmem:[%s6 + $0x74] sm:$0xf]
      %v2072 = vld [vmem:[%s6 + $0x78] sm:$0xf]
      %v2073 = vld [vmem:[%s6 + $0x7c] sm:$0xf]
      %v2074 = vld [vmem:[%s7] sm:$0x1]
      %v2076 = vlaneseq
      %v2077 = vshrl.u32 %v2076, 7
      %v2078 = vsub.s32 0, %v2077
      %v2079 = vrot.slane %v2074, %v2078
      %v2113 = vunpack.c.l.b16 %v2042
      %v2114 = vunpack.c.l.b16 %v2043
      %v2115 = vunpack.c.l.b16 %v2044
      %v2116 = vunpack.c.l.b16 %v2045
      %v2117 = vunpack.c.l.b16 %v2046
      %v2118 = vunpack.c.l.b16 %v2047
      %v2119 = vunpack.c.l.b16 %v2048
      %v2120 = vunpack.c.l.b16 %v2049
      %v2121 = vunpack.c.l.b16 %v2050
      %v2122 = vunpack.c.l.b16 %v2051
      %v2123 = vunpack.c.l.b16 %v2052
      %v2124 = vunpack.c.l.b16 %v2053
      %v2125 = vunpack.c.l.b16 %v2054
      %v2126 = vunpack.c.l.b16 %v2055
      %v2127 = vunpack.c.l.b16 %v2056
      %v2128 = vunpack.c.l.b16 %v2057
      %v2129 = vunpack.c.l.b16 %v2058
      %v2130 = vunpack.c.l.b16 %v2059
      %v2131 = vunpack.c.l.b16 %v2060
      %v2132 = vunpack.c.l.b16 %v2061
      %v2133 = vunpack.c.l.b16 %v2062
      %v2134 = vunpack.c.l.b16 %v2063
      %v2135 = vunpack.c.l.b16 %v2064
      %v2136 = vunpack.c.l.b16 %v2065
      %v2137 = vunpack.c.l.b16 %v2066
      %v2138 = vunpack.c.l.b16 %v2067
      %v2139 = vunpack.c.l.b16 %v2068
      %v2140 = vunpack.c.l.b16 %v2069
      %v2141 = vunpack.c.l.b16 %v2070
      %v2142 = vunpack.c.l.b16 %v2071
      %v2143 = vunpack.c.l.b16 %v2072
      %v2144 = vunpack.c.l.b16 %v2073
      %v2145 = vpack.c.b16 %v2114, %v2113
      %v2146 = vpack.c.b16 %v2116, %v2115
      %v2147 = vpack.c.b16 %v2118, %v2117
      %v2148 = vpack.c.b16 %v2120, %v2119
      %v2149 = vpack.c.b16 %v2122, %v2121
      %v2150 = vpack.c.b16 %v2124, %v2123
      %v2151 = vpack.c.b16 %v2126, %v2125
      %v2152 = vpack.c.b16 %v2128, %v2127
      %v2153 = vpack.c.b16 %v2130, %v2129
      %v2154 = vpack.c.b16 %v2132, %v2131
      %v2155 = vpack.c.b16 %v2134, %v2133
      %v2156 = vpack.c.b16 %v2136, %v2135
      %v2157 = vpack.c.b16 %v2138, %v2137
      %v2158 = vpack.c.b16 %v2140, %v2139
      %v2159 = vpack.c.b16 %v2142, %v2141
      %v2160 = vpack.c.b16 %v2144, %v2143
      %2177 = vmatprep.subr.bf16.mxu0 0
      %2178 = vmatpush1.bf16.msra.mxu0 %v2145
      %2179 = vmatprep.subr.bf16.mxu0 0
      %2180 = vmatpush1.bf16.msra.mxu0 %v2146
      %2181 = vmatprep.subr.bf16.mxu0 0
      %2182 = vmatpush1.bf16.msra.mxu0 %v2147
      %2183 = vmatprep.subr.bf16.mxu0 0
      %2184 = vmatpush1.bf16.msra.mxu0 %v2148
      %2185 = vmatprep.subr.bf16.mxu0 0
      %2186 = vmatpush1.bf16.msra.mxu0 %v2149
      %2187 = vmatprep.subr.bf16.mxu0 0
      %2188 = vmatpush1.bf16.msra.mxu0 %v2150
      %2189 = vmatprep.subr.bf16.mxu0 0
      %2190 = vmatpush1.bf16.msra.mxu0 %v2151
      %2191 = vmatprep.subr.bf16.mxu0 0
      %2192 = vmatpush1.bf16.msra.mxu0 %v2152
      %2193 = vmatprep.subr.bf16.mxu0 0
      %2194 = vmatpush1.bf16.msra.mxu0 %v2153
      %2195 = vmatprep.subr.bf16.mxu0 0
      %2196 = vmatpush1.bf16.msra.mxu0 %v2154
      %2197 = vmatprep.subr.bf16.mxu0 0
      %2198 = vmatpush1.bf16.msra.mxu0 %v2155
      %2199 = vmatprep.subr.bf16.mxu0 0
      %2200 = vmatpush1.bf16.msra.mxu0 %v2156
      %2201 = vmatprep.subr.bf16.mxu0 0
      %2202 = vmatpush1.bf16.msra.mxu0 %v2157
      %2203 = vmatprep.subr.bf16.mxu0 0
      %2204 = vmatpush1.bf16.msra.mxu0 %v2158
      %2205 = vmatprep.subr.bf16.mxu0 0
      %2206 = vmatpush1.bf16.msra.mxu0 %v2159
      %2207 = vmatprep.subr.bf16.mxu0 0
      %2208 = vmatpush1.bf16.msra.mxu0 %v2160
      %2209 = vmatprep.mubr.bf16.mxu0 %v1872
      %2210 = vmatmul.mubr.bf16.gmra.mrb[0].mxu0 %v1871
      %v2211 = vpop.f32.mrb[0].mxu0
      %v2212 = vadd.f32 %v2079, %v2211
      %v2213 = vpop.f32.mrb[0].mxu0
      %v2214 = vpop.f32.mrb[0].mxu0
      %v2215 = vadd.f32 %v2079, %v2214
      %v2216 = vpop.f32.mrb[0].mxu0
      %2217 = vdwg.mxu0
      %v2218 = vpack.c.bf16 %v2039, %v2036
      %2219 = vmatprep.subr.bf16.mxu0 0
      %2220 = vmatpush1.bf16.msra.mxu0 %v2218
      %2221 = vmatprep.subr.bf16.mxu0 0
      %2222 = vmatpush1.bf16.msra.mxu0 0
      %2223 = vmatprep.subr.bf16.mxu0 0
      %2224 = vmatpush1.bf16.msra.mxu0 0
      %2225 = vmatprep.subr.bf16.mxu0 0
      %2226 = vmatpush1.bf16.msra.mxu0 0
      %2227 = vmatprep.subr.bf16.mxu0 0
      %2228 = vmatpush1.bf16.msra.mxu0 0
      %2229 = vmatprep.subr.bf16.mxu0 0
      %2230 = vmatpush1.bf16.msra.mxu0 0
      %2231 = vmatprep.subr.bf16.mxu0 0
      %2232 = vmatpush1.bf16.msra.mxu0 0
      %2233 = vmatprep.subr.bf16.mxu0 0
      %2234 = vmatpush1.bf16.msra.mxu0 0
      %2235 = vmatprep.subr.bf16.mxu0 0
      %2236 = vmatpush1.bf16.msra.mxu0 0
      %2237 = vmatprep.subr.bf16.mxu0 0
      %2238 = vmatpush1.bf16.msra.mxu0 0
      %2239 = vmatprep.subr.bf16.mxu0 0
      %2240 = vmatpush1.bf16.msra.mxu0 0
      %2241 = vmatprep.subr.bf16.mxu0 0
      %2242 = vmatpush1.bf16.msra.mxu0 0
      %2243 = vmatprep.subr.bf16.mxu0 0
      %2244 = vmatpush1.bf16.msra.mxu0 0
      %2245 = vmatprep.subr.bf16.mxu0 0
      %2246 = vmatpush1.bf16.msra.mxu0 0
      %2247 = vmatprep.subr.bf16.mxu0 0
      %2248 = vmatpush1.bf16.msra.mxu0 0
      %2249 = vmatprep.subr.bf16.mxu0 0
      %2250 = vmatpush1.bf16.msra.mxu0 0
      %2251 = vmatprep.mubr.bf16.mxu0 0
      %2252 = vmatmul.mubr.bf16.gmra.mrb[0].mxu0 %v1621
      %v2253 = vpop.f32.mrb[0].mxu0
      %v2254 = vadd.f32 0.0, %v2253
      %v2255 = vpop.f32.mrb[0].mxu0
      %v2256 = vpop.f32.mrb[0].mxu0
      %v2257 = vadd.f32 0.0, %v2256
      %v2258 = vpop.f32.mrb[0].mxu0
      %2259 = vdwg.mxu0
      %2260 = vmatprep.subr.bf16.mxu0 0
      %2261 = vmatpush1.bf16.msra.mxu0 %v2218
      %2262 = vmatprep.subr.bf16.mxu0 0
      %2263 = vmatpush1.bf16.msra.mxu0 0
      %2264 = vmatprep.subr.bf16.mxu0 0
      %2265 = vmatpush1.bf16.msra.mxu0 0
      %2266 = vmatprep.subr.bf16.mxu0 0
      %2267 = vmatpush1.bf16.msra.mxu0 0
      %2268 = vmatprep.subr.bf16.mxu0 0
      %2269 = vmatpush1.bf16.msra.mxu0 0
      %2270 = vmatprep.subr.bf16.mxu0 0
      %2271 = vmatpush1.bf16.msra.mxu0 0
      %2272 = vmatprep.subr.bf16.mxu0 0
      %2273 = vmatpush1.bf16.msra.mxu0 0
      %2274 = vmatprep.subr.bf16.mxu0 0
      %2275 = vmatpush1.bf16.msra.mxu0 0
      %2276 = vmatprep.subr.bf16.mxu0 0
      %2277 = vmatpush1.bf16.msra.mxu0 0
      %2278 = vmatprep.subr.bf16.mxu0 0
      %2279 = vmatpush1.bf16.msra.mxu0 0
      %2280 = vmatprep.subr.bf16.mxu0 0
      %2281 = vmatpush1.bf16.msra.mxu0 0
      %2282 = vmatprep.subr.bf16.mxu0 0
      %2283 = vmatpush1.bf16.msra.mxu0 0
      %2284 = vmatprep.subr.bf16.mxu0 0
      %2285 = vmatpush1.bf16.msra.mxu0 0
      %2286 = vmatprep.subr.bf16.mxu0 0
      %2287 = vmatpush1.bf16.msra.mxu0 0
      %2288 = vmatprep.subr.bf16.mxu0 0
      %2289 = vmatpush1.bf16.msra.mxu0 0
      %2290 = vmatprep.subr.bf16.mxu0 0
      %2291 = vmatpush1.bf16.msra.mxu0 0
      %2292 = vmatprep.mubr.bf16.mxu0 0
      %2293 = vmatmul.mubr.bf16.gmra.mrb[0].mxu0 %v1680
      %v2294 = vpop.f32.mrb[0].mxu0
      %v2295 = vadd.f32 0.0, %v2294
      %v2296 = vpop.f32.mrb[0].mxu0
      %v2297 = vpop.f32.mrb[0].mxu0
      %v2298 = vadd.f32 0.0, %v2297
      %v2299 = vpop.f32.mrb[0].mxu0
      %2300 = vdwg.mxu0
      %v2301 = vmax.f32 %v2254, %v2295
      %v2302 = vmax.f32 %v2257, %v2298
      %2303 = vmatprep.subr.bf16.mxu0 0
      %2304 = vmatpush1.bf16.msra.mxu0 %v2218
      %2305 = vmatprep.subr.bf16.mxu0 0
      %2306 = vmatpush1.bf16.msra.mxu0 0
      %2307 = vmatprep.subr.bf16.mxu0 0
      %2308 = vmatpush1.bf16.msra.mxu0 0
      %2309 = vmatprep.subr.bf16.mxu0 0
      %2310 = vmatpush1.bf16.msra.mxu0 0
      %2311 = vmatprep.subr.bf16.mxu0 0
      %2312 = vmatpush1.bf16.msra.mxu0 0
      %2313 = vmatprep.subr.bf16.mxu0 0
      %2314 = vmatpush1.bf16.msra.mxu0 0
      %2315 = vmatprep.subr.bf16.mxu0 0
      %2316 = vmatpush1.bf16.msra.mxu0 0
      %2317 = vmatprep.subr.bf16.mxu0 0
      %2318 = vmatpush1.bf16.msra.mxu0 0
      %2319 = vmatprep.subr.bf16.mxu0 0
      %2320 = vmatpush1.bf16.msra.mxu0 0
      %2321 = vmatprep.subr.bf16.mxu0 0
      %2322 = vmatpush1.bf16.msra.mxu0 0
      %2323 = vmatprep.subr.bf16.mxu0 0
      %2324 = vmatpush1.bf16.msra.mxu0 0
      %2325 = vmatprep.subr.bf16.mxu0 0
      %2326 = vmatpush1.bf16.msra.mxu0 0
      %2327 = vmatprep.subr.bf16.mxu0 0
      %2328 = vmatpush1.bf16.msra.mxu0 0
      %2329 = vmatprep.subr.bf16.mxu0 0
      %2330 = vmatpush1.bf16.msra.mxu0 0
      %2331 = vmatprep.subr.bf16.mxu0 0
      %2332 = vmatpush1.bf16.msra.mxu0 0
      %2333 = vmatprep.subr.bf16.mxu0 0
      %2334 = vmatpush1.bf16.msra.mxu0 0
      %2335 = vmatprep.mubr.bf16.mxu0 0
      %2336 = vmatmul.mubr.bf16.gmra.mrb[0].mxu0 %v1743
      %v2337 = vpop.f32.mrb[0].mxu0
      %v2338 = vadd.f32 0.0, %v2337
      %v2339 = vpop.f32.mrb[0].mxu0
      %v2340 = vpop.f32.mrb[0].mxu0
      %v2341 = vadd.f32 0.0, %v2340
      %v2342 = vpop.f32.mrb[0].mxu0
      %2343 = vdwg.mxu0
      %v2344 = vmax.f32 %v2301, %v2338
      %v2345 = vmax.f32 %v2302, %v2341
      %2346 = vmatprep.subr.bf16.mxu0 0
      %2347 = vmatpush1.bf16.msra.mxu0 %v2218
      %2348 = vmatprep.subr.bf16.mxu0 0
      %2349 = vmatpush1.bf16.msra.mxu0 0
      %2350 = vmatprep.subr.bf16.mxu0 0
      %2351 = vmatpush1.bf16.msra.mxu0 0
      %2352 = vmatprep.subr.bf16.mxu0 0
      %2353 = vmatpush1.bf16.msra.mxu0 0
      %2354 = vmatprep.subr.bf16.mxu0 0
      %2355 = vmatpush1.bf16.msra.mxu0 0
      %2356 = vmatprep.subr.bf16.mxu0 0
      %2357 = vmatpush1.bf16.msra.mxu0 0
      %2358 = vmatprep.subr.bf16.mxu0 0
      %2359 = vmatpush1.bf16.msra.mxu0 0
      %2360 = vmatprep.subr.bf16.mxu0 0
      %2361 = vmatpush1.bf16.msra.mxu0 0
      %2362 = vmatprep.subr.bf16.mxu0 0
      %2363 = vmatpush1.bf16.msra.mxu0 0
      %2364 = vmatprep.subr.bf16.mxu0 0
      %2365 = vmatpush1.bf16.msra.mxu0 0
      %2366 = vmatprep.subr.bf16.mxu0 0
      %2367 = vmatpush1.bf16.msra.mxu0 0
      %2368 = vmatprep.subr.bf16.mxu0 0
      %2369 = vmatpush1.bf16.msra.mxu0 0
      %2370 = vmatprep.subr.bf16.mxu0 0
      %2371 = vmatpush1.bf16.msra.mxu0 0
      %2372 = vmatprep.subr.bf16.mxu0 0
      %2373 = vmatpush1.bf16.msra.mxu0 0
      %2374 = vmatprep.subr.bf16.mxu0 0
      %2375 = vmatpush1.bf16.msra.mxu0 0
      %2376 = vmatprep.subr.bf16.mxu0 0
      %2377 = vmatpush1.bf16.msra.mxu0 0
      %2378 = vmatprep.mubr.bf16.mxu0 0
      %2379 = vmatmul.mubr.bf16.gmra.mrb[0].mxu0 %v1806
      %v2380 = vpop.f32.mrb[0].mxu0
      %v2381 = vadd.f32 0.0, %v2380
      %v2382 = vpop.f32.mrb[0].mxu0
      %v2383 = vpop.f32.mrb[0].mxu0
      %v2384 = vadd.f32 0.0, %v2383
      %v2385 = vpop.f32.mrb[0].mxu0
      %2386 = vdwg.mxu0
      %v2387 = vmax.f32 %v2344, %v2381
      %v2388 = vmax.f32 %v2345, %v2384
      %v2389 = vadd.f32 %v2387, %v2212
      %v2390 = vadd.f32 %v2388, %v2215
      %vm2391 = vcmp.gt.f32.partialorder %v2389, 0.0
      %vm2392 = vcmp.gt.f32.partialorder %v2390, 0.0
      %v2393 = vmul.f32 %v2389, 0.2
      %v2394 = vmul.f32 %v2390, 0.2
      %v2395 = vsel %vm2391, %v2389, %v2393
      %v2396 = vsel %vm2392, %v2390, %v2394
      %v2397 = vpack.c.bf16 %v2396, %v2395
      %v2398 = vld [vmem:[%s8] sm:$0xf]
      %v2399 = vld [vmem:[%s8 + $0x4] sm:$0xf]
      %v2400 = vld [vmem:[%s8 + $0x8] sm:$0xf]
      %v2401 = vld [vmem:[%s8 + $0xc] sm:$0xf]
      %v2402 = vld [vmem:[%s8 + $0x10] sm:$0xf]
      %v2403 = vld [vmem:[%s8 + $0x14] sm:$0xf]
      %v2404 = vld [vmem:[%s8 + $0x18] sm:$0xf]
      %v2405 = vld [vmem:[%s8 + $0x1c] sm:$0xf]
      %v2406 = vld [vmem:[%s8 + $0x20] sm:$0xf]
      %v2407 = vld [vmem:[%s8 + $0x24] sm:$0xf]
      %v2408 = vld [vmem:[%s8 + $0x28] sm:$0xf]
      %v2409 = vld [vmem:[%s8 + $0x2c] sm:$0xf]
      %v2410 = vld [vmem:[%s8 + $0x30] sm:$0xf]
      %v2411 = vld [vmem:[%s8 + $0x34] sm:$0xf]
      %v2412 = vld [vmem:[%s8 + $0x38] sm:$0xf]
      %v2413 = vld [vmem:[%s8 + $0x3c] sm:$0xf]
      %v2430 = vunpack.c.l.b16 %v2398
      %v2431 = vunpack.c.l.b16 %v2399
      %v2432 = vunpack.c.l.b16 %v2400
      %v2433 = vunpack.c.l.b16 %v2401
      %v2434 = vunpack.c.l.b16 %v2402
      %v2435 = vunpack.c.l.b16 %v2403
      %v2436 = vunpack.c.l.b16 %v2404
      %v2437 = vunpack.c.l.b16 %v2405
      %v2438 = vunpack.c.l.b16 %v2406
      %v2439 = vunpack.c.l.b16 %v2407
      %v2440 = vunpack.c.l.b16 %v2408
      %v2441 = vunpack.c.l.b16 %v2409
      %v2442 = vunpack.c.l.b16 %v2410
      %v2443 = vunpack.c.l.b16 %v2411
      %v2444 = vunpack.c.l.b16 %v2412
      %v2445 = vunpack.c.l.b16 %v2413
      %v2446 = vpack.c.b16 %v2431, %v2430
      %v2447 = vpack.c.b16 %v2433, %v2432
      %v2448 = vpack.c.b16 %v2435, %v2434
      %v2449 = vpack.c.b16 %v2437, %v2436
      %v2450 = vpack.c.b16 %v2439, %v2438
      %v2451 = vpack.c.b16 %v2441, %v2440
      %v2452 = vpack.c.b16 %v2443, %v2442
      %v2453 = vpack.c.b16 %v2445, %v2444
      %2462 = vmatprep.subr.bf16.mxu0 0
      %2463 = vmatpush1.bf16.msra.mxu0 %v2446
      %2464 = vmatprep.subr.bf16.mxu0 0
      %2465 = vmatpush1.bf16.msra.mxu0 %v2447
      %2466 = vmatprep.subr.bf16.mxu0 0
      %2467 = vmatpush1.bf16.msra.mxu0 %v2448
      %2468 = vmatprep.subr.bf16.mxu0 0
      %2469 = vmatpush1.bf16.msra.mxu0 %v2449
      %2470 = vmatprep.subr.bf16.mxu0 0
      %2471 = vmatpush1.bf16.msra.mxu0 %v2450
      %2472 = vmatprep.subr.bf16.mxu0 0
      %2473 = vmatpush1.bf16.msra.mxu0 %v2451
      %2474 = vmatprep.subr.bf16.mxu0 0
      %2475 = vmatpush1.bf16.msra.mxu0 %v2452
      %2476 = vmatprep.subr.bf16.mxu0 0
      %2477 = vmatpush1.bf16.msra.mxu0 %v2453
      %2478 = vmatprep.subr.bf16.mxu0 0
      %2479 = vmatpush1.bf16.msra.mxu0 0
      %2480 = vmatprep.subr.bf16.mxu0 0
      %2481 = vmatpush1.bf16.msra.mxu0 0
      %2482 = vmatprep.subr.bf16.mxu0 0
      %2483 = vmatpush1.bf16.msra.mxu0 0
      %2484 = vmatprep.subr.bf16.mxu0 0
      %2485 = vmatpush1.bf16.msra.mxu0 0
      %2486 = vmatprep.subr.bf16.mxu0 0
      %2487 = vmatpush1.bf16.msra.mxu0 0
      %2488 = vmatprep.subr.bf16.mxu0 0
      %2489 = vmatpush1.bf16.msra.mxu0 0
      %2490 = vmatprep.subr.bf16.mxu0 0
      %2491 = vmatpush1.bf16.msra.mxu0 0
      %2492 = vmatprep.subr.bf16.mxu0 0
      %2493 = vmatpush1.bf16.msra.mxu0 0
      %2494 = vmatprep.mubr.bf16.mxu0 0
      %2495 = vmatmul.mubr.bf16.gmra.mrb[0].mxu0 %v2397
      %v2496 = vpop.f32.mrb[0].mxu0
      %v2497 = vadd.f32 0.0, %v2496
      %v2498 = vpop.f32.mrb[0].mxu0
      %v2499 = vpop.f32.mrb[0].mxu0
      %v2500 = vadd.f32 0.0, %v2499
      %v2501 = vpop.f32.mrb[0].mxu0
      %2502 = vdwg.mxu0
      %v2503 = vld [vmem:[%s9] sm:$0xf]
      %v2504 = vld [vmem:[%s9 + $0x4] sm:$0xf]
      %v2505 = vld [vmem:[%s9 + $0x8] sm:$0xf]
      %v2506 = vld [vmem:[%s9 + $0xc] sm:$0xf]
      %v2507 = vld [vmem:[%s9 + $0x10] sm:$0xf]
      %v2508 = vld [vmem:[%s9 + $0x14] sm:$0xf]
      %v2509 = vld [vmem:[%s9 + $0x18] sm:$0xf]
      %v2510 = vld [vmem:[%s9 + $0x1c] sm:$0xf]
      %v2511 = vld [vmem:[%s9 + $0x20] sm:$0xf]
      %v2512 = vld [vmem:[%s9 + $0x24] sm:$0xf]
      %v2513 = vld [vmem:[%s9 + $0x28] sm:$0xf]
      %v2514 = vld [vmem:[%s9 + $0x2c] sm:$0xf]
      %v2515 = vld [vmem:[%s9 + $0x30] sm:$0xf]
      %v2516 = vld [vmem:[%s9 + $0x34] sm:$0xf]
      %v2517 = vld [vmem:[%s9 + $0x38] sm:$0xf]
      %v2518 = vld [vmem:[%s9 + $0x3c] sm:$0xf]
      %v2519 = vld [vmem:[%s10] sm:$0x1]
      %v2521 = vlaneseq
      %v2522 = vshrl.u32 %v2521, 7
      %v2523 = vsub.s32 0, %v2522
      %v2524 = vrot.slane %v2519, %v2523
      %v2542 = vunpack.c.l.b16 %v2503
      %v2543 = vunpack.c.l.b16 %v2504
      %v2544 = vunpack.c.l.b16 %v2505
      %v2545 = vunpack.c.l.b16 %v2506
      %v2546 = vunpack.c.l.b16 %v2507
      %v2547 = vunpack.c.l.b16 %v2508
      %v2548 = vunpack.c.l.b16 %v2509
      %v2549 = vunpack.c.l.b16 %v2510
      %v2550 = vunpack.c.l.b16 %v2511
      %v2551 = vunpack.c.l.b16 %v2512
      %v2552 = vunpack.c.l.b16 %v2513
      %v2553 = vunpack.c.l.b16 %v2514
      %v2554 = vunpack.c.l.b16 %v2515
      %v2555 = vunpack.c.l.b16 %v2516
      %v2556 = vunpack.c.l.b16 %v2517
      %v2557 = vunpack.c.l.b16 %v2518
      %v2558 = vpack.c.b16 %v2543, %v2542
      %v2559 = vpack.c.b16 %v2545, %v2544
      %v2560 = vpack.c.b16 %v2547, %v2546
      %v2561 = vpack.c.b16 %v2549, %v2548
      %v2562 = vpack.c.b16 %v2551, %v2550
      %v2563 = vpack.c.b16 %v2553, %v2552
      %v2564 = vpack.c.b16 %v2555, %v2554
      %v2565 = vpack.c.b16 %v2557, %v2556
      %2574 = vmatprep.subr.bf16.mxu0 0
      %2575 = vmatpush1.bf16.msra.mxu0 %v2558
      %2576 = vmatprep.subr.bf16.mxu0 0
      %2577 = vmatpush1.bf16.msra.mxu0 %v2559
      %2578 = vmatprep.subr.bf16.mxu0 0
      %2579 = vmatpush1.bf16.msra.mxu0 %v2560
      %2580 = vmatprep.subr.bf16.mxu0 0
      %2581 = vmatpush1.bf16.msra.mxu0 %v2561
      %2582 = vmatprep.subr.bf16.mxu0 0
      %2583 = vmatpush1.bf16.msra.mxu0 %v2562
      %2584 = vmatprep.subr.bf16.mxu0 0
      %2585 = vmatpush1.bf16.msra.mxu0 %v2563
      %2586 = vmatprep.subr.bf16.mxu0 0
      %2587 = vmatpush1.bf16.msra.mxu0 %v2564
      %2588 = vmatprep.subr.bf16.mxu0 0
      %2589 = vmatpush1.bf16.msra.mxu0 %v2565
      %2590 = vmatprep.subr.bf16.mxu0 0
      %2591 = vmatpush1.bf16.msra.mxu0 0
      %2592 = vmatprep.subr.bf16.mxu0 0
      %2593 = vmatpush1.bf16.msra.mxu0 0
      %2594 = vmatprep.subr.bf16.mxu0 0
      %2595 = vmatpush1.bf16.msra.mxu0 0
      %2596 = vmatprep.subr.bf16.mxu0 0
      %2597 = vmatpush1.bf16.msra.mxu0 0
      %2598 = vmatprep.subr.bf16.mxu0 0
      %2599 = vmatpush1.bf16.msra.mxu0 0
      %2600 = vmatprep.subr.bf16.mxu0 0
      %2601 = vmatpush1.bf16.msra.mxu0 0
      %2602 = vmatprep.subr.bf16.mxu0 0
      %2603 = vmatpush1.bf16.msra.mxu0 0
      %2604 = vmatprep.subr.bf16.mxu0 0
      %2605 = vmatpush1.bf16.msra.mxu0 0
      %2606 = vmatprep.mubr.bf16.mxu0 0
      %2607 = vmatmul.mubr.bf16.gmra.mrb[0].mxu0 %v2397
      %v2608 = vpop.f32.mrb[0].mxu0
      %v2609 = vadd.f32 %v2524, %v2608
      %v2610 = vpop.f32.mrb[0].mxu0
      %v2611 = vpop.f32.mrb[0].mxu0
      %v2612 = vadd.f32 %v2524, %v2611
      %v2613 = vpop.f32.mrb[0].mxu0
      %2614 = vdwg.mxu0
      %v2615 = vpack.c.bf16 %v2500, %v2497
      %2616 = vmatprep.subr.bf16.mxu0 0
      %2617 = vmatpush1.bf16.msra.mxu0 %v2615
      %2618 = vmatprep.subr.bf16.mxu0 0
      %2619 = vmatpush1.bf16.msra.mxu0 0
      %2620 = vmatprep.subr.bf16.mxu0 0
      %2621 = vmatpush1.bf16.msra.mxu0 0
      %2622 = vmatprep.subr.bf16.mxu0 0
      %2623 = vmatpush1.bf16.msra.mxu0 0
      %2624 = vmatprep.subr.bf16.mxu0 0
      %2625 = vmatpush1.bf16.msra.mxu0 0
      %2626 = vmatprep.subr.bf16.mxu0 0
      %2627 = vmatpush1.bf16.msra.mxu0 0
      %2628 = vmatprep.subr.bf16.mxu0 0
      %2629 = vmatpush1.bf16.msra.mxu0 0
      %2630 = vmatprep.subr.bf16.mxu0 0
      %2631 = vmatpush1.bf16.msra.mxu0 0
      %2632 = vmatprep.subr.bf16.mxu0 0
      %2633 = vmatpush1.bf16.msra.mxu0 0
      %2634 = vmatprep.subr.bf16.mxu0 0
      %2635 = vmatpush1.bf16.msra.mxu0 0
      %2636 = vmatprep.subr.bf16.mxu0 0
      %2637 = vmatpush1.bf16.msra.mxu0 0
      %2638 = vmatprep.subr.bf16.mxu0 0
      %2639 = vmatpush1.bf16.msra.mxu0 0
      %2640 = vmatprep.subr.bf16.mxu0 0
      %2641 = vmatpush1.bf16.msra.mxu0 0
      %2642 = vmatprep.subr.bf16.mxu0 0
      %2643 = vmatpush1.bf16.msra.mxu0 0
      %2644 = vmatprep.subr.bf16.mxu0 0
      %2645 = vmatpush1.bf16.msra.mxu0 0
      %2646 = vmatprep.subr.bf16.mxu0 0
      %2647 = vmatpush1.bf16.msra.mxu0 0
      %2648 = vmatprep.mubr.bf16.mxu0 0
      %2649 = vmatmul.mubr.bf16.gmra.mrb[0].mxu0 %v1621
      %v2650 = vpop.f32.mrb[0].mxu0
      %v2651 = vadd.f32 0.0, %v2650
      %v2652 = vpop.f32.mrb[0].mxu0
      %v2653 = vpop.f32.mrb[0].mxu0
      %v2654 = vadd.f32 0.0, %v2653
      %v2655 = vpop.f32.mrb[0].mxu0
      %2656 = vdwg.mxu0
      %2657 = vmatprep.subr.bf16.mxu0 0
      %2658 = vmatpush1.bf16.msra.mxu0 %v2615
      %2659 = vmatprep.subr.bf16.mxu0 0
      %2660 = vmatpush1.bf16.msra.mxu0 0
      %2661 = vmatprep.subr.bf16.mxu0 0
      %2662 = vmatpush1.bf16.msra.mxu0 0
      %2663 = vmatprep.subr.bf16.mxu0 0
      %2664 = vmatpush1.bf16.msra.mxu0 0
      %2665 = vmatprep.subr.bf16.mxu0 0
      %2666 = vmatpush1.bf16.msra.mxu0 0
      %2667 = vmatprep.subr.bf16.mxu0 0
      %2668 = vmatpush1.bf16.msra.mxu0 0
      %2669 = vmatprep.subr.bf16.mxu0 0
      %2670 = vmatpush1.bf16.msra.mxu0 0
      %2671 = vmatprep.subr.bf16.mxu0 0
      %2672 = vmatpush1.bf16.msra.mxu0 0
      %2673 = vmatprep.subr.bf16.mxu0 0
      %2674 = vmatpush1.bf16.msra.mxu0 0
      %2675 = vmatprep.subr.bf16.mxu0 0
      %2676 = vmatpush1.bf16.msra.mxu0 0
      %2677 = vmatprep.subr.bf16.mxu0 0
      %2678 = vmatpush1.bf16.msra.mxu0 0
      %2679 = vmatprep.subr.bf16.mxu0 0
      %2680 = vmatpush1.bf16.msra.mxu0 0
      %2681 = vmatprep.subr.bf16.mxu0 0
      %2682 = vmatpush1.bf16.msra.mxu0 0
      %2683 = vmatprep.subr.bf16.mxu0 0
      %2684 = vmatpush1.bf16.msra.mxu0 0
      %2685 = vmatprep.subr.bf16.mxu0 0
      %2686 = vmatpush1.bf16.msra.mxu0 0
      %2687 = vmatprep.subr.bf16.mxu0 0
      %2688 = vmatpush1.bf16.msra.mxu0 0
      %2689 = vmatprep.mubr.bf16.mxu0 0
      %2690 = vmatmul.mubr.bf16.gmra.mrb[0].mxu0 %v1680
      %v2691 = vpop.f32.mrb[0].mxu0
      %v2692 = vadd.f32 0.0, %v2691
      %v2693 = vpop.f32.mrb[0].mxu0
      %v2694 = vpop.f32.mrb[0].mxu0
      %v2695 = vadd.f32 0.0, %v2694
      %v2696 = vpop.f32.mrb[0].mxu0
      %2697 = vdwg.mxu0
      %v2698 = vmax.f32 %v2651, %v2692
      %v2699 = vmax.f32 %v2654, %v2695
      %2700 = vmatprep.subr.bf16.mxu0 0
      %2701 = vmatpush1.bf16.msra.mxu0 %v2615
      %2702 = vmatprep.subr.bf16.mxu0 0
      %2703 = vmatpush1.bf16.msra.mxu0 0
      %2704 = vmatprep.subr.bf16.mxu0 0
      %2705 = vmatpush1.bf16.msra.mxu0 0
      %2706 = vmatprep.subr.bf16.mxu0 0
      %2707 = vmatpush1.bf16.msra.mxu0 0
      %2708 = vmatprep.subr.bf16.mxu0 0
      %2709 = vmatpush1.bf16.msra.mxu0 0
      %2710 = vmatprep.subr.bf16.mxu0 0
      %2711 = vmatpush1.bf16.msra.mxu0 0
      %2712 = vmatprep.subr.bf16.mxu0 0
      %2713 = vmatpush1.bf16.msra.mxu0 0
      %2714 = vmatprep.subr.bf16.mxu0 0
      %2715 = vmatpush1.bf16.msra.mxu0 0
      %2716 = vmatprep.subr.bf16.mxu0 0
      %2717 = vmatpush1.bf16.msra.mxu0 0
      %2718 = vmatprep.subr.bf16.mxu0 0
      %2719 = vmatpush1.bf16.msra.mxu0 0
      %2720 = vmatprep.subr.bf16.mxu0 0
      %2721 = vmatpush1.bf16.msra.mxu0 0
      %2722 = vmatprep.subr.bf16.mxu0 0
      %2723 = vmatpush1.bf16.msra.mxu0 0
      %2724 = vmatprep.subr.bf16.mxu0 0
      %2725 = vmatpush1.bf16.msra.mxu0 0
      %2726 = vmatprep.subr.bf16.mxu0 0
      %2727 = vmatpush1.bf16.msra.mxu0 0
      %2728 = vmatprep.subr.bf16.mxu0 0
      %2729 = vmatpush1.bf16.msra.mxu0 0
      %2730 = vmatprep.subr.bf16.mxu0 0
      %2731 = vmatpush1.bf16.msra.mxu0 0
      %2732 = vmatprep.mubr.bf16.mxu0 0
      %2733 = vmatmul.mubr.bf16.gmra.mrb[0].mxu0 %v1743
      %v2734 = vpop.f32.mrb[0].mxu0
      %v2735 = vadd.f32 0.0, %v2734
      %v2736 = vpop.f32.mrb[0].mxu0
      %v2737 = vpop.f32.mrb[0].mxu0
      %v2738 = vadd.f32 0.0, %v2737
      %v2739 = vpop.f32.mrb[0].mxu0
      %2740 = vdwg.mxu0
      %v2741 = vmax.f32 %v2698, %v2735
      %v2742 = vmax.f32 %v2699, %v2738
      %2743 = vmatprep.subr.bf16.mxu0 0
      %2744 = vmatpush1.bf16.msra.mxu0 %v2615
      %2745 = vmatprep.subr.bf16.mxu0 0
      %2746 = vmatpush1.bf16.msra.mxu0 0
      %2747 = vmatprep.subr.bf16.mxu0 0
      %2748 = vmatpush1.bf16.msra.mxu0 0
      %2749 = vmatprep.subr.bf16.mxu0 0
      %2750 = vmatpush1.bf16.msra.mxu0 0
      %2751 = vmatprep.subr.bf16.mxu0 0
      %2752 = vmatpush1.bf16.msra.mxu0 0
      %2753 = vmatprep.subr.bf16.mxu0 0
      %2754 = vmatpush1.bf16.msra.mxu0 0
      %2755 = vmatprep.subr.bf16.mxu0 0
      %2756 = vmatpush1.bf16.msra.mxu0 0
      %2757 = vmatprep.subr.bf16.mxu0 0
      %2758 = vmatpush1.bf16.msra.mxu0 0
      %2759 = vmatprep.subr.bf16.mxu0 0
      %2760 = vmatpush1.bf16.msra.mxu0 0
      %2761 = vmatprep.subr.bf16.mxu0 0
      %2762 = vmatpush1.bf16.msra.mxu0 0
      %2763 = vmatprep.subr.bf16.mxu0 0
      %2764 = vmatpush1.bf16.msra.mxu0 0
      %2765 = vmatprep.subr.bf16.mxu0 0
      %2766 = vmatpush1.bf16.msra.mxu0 0
      %2767 = vmatprep.subr.bf16.mxu0 0
      %2768 = vmatpush1.bf16.msra.mxu0 0
      %2769 = vmatprep.subr.bf16.mxu0 0
      %2770 = vmatpush1.bf16.msra.mxu0 0
      %2771 = vmatprep.subr.bf16.mxu0 0
      %2772 = vmatpush1.bf16.msra.mxu0 0
      %2773 = vmatprep.subr.bf16.mxu0 0
      %2774 = vmatpush1.bf16.msra.mxu0 0
      %2775 = vmatprep.mubr.bf16.mxu0 0
      %2776 = vmatmul.mubr.bf16.gmra.mrb[0].mxu0 %v1806
      %v2777 = vpop.f32.mrb[0].mxu0
      %v2778 = vadd.f32 0.0, %v2777
      %v2779 = vpop.f32.mrb[0].mxu0
      %v2780 = vpop.f32.mrb[0].mxu0
      %v2781 = vadd.f32 0.0, %v2780
      %v2782 = vpop.f32.mrb[0].mxu0
      %2783 = vdwg.mxu0
      %v2784 = vmax.f32 %v2741, %v2778
      %v2785 = vmax.f32 %v2742, %v2781
      %v2786 = vadd.f32 %v2784, %v2609
      %v2787 = vadd.f32 %v2785, %v2612
      %vm2788 = vcmp.gt.f32.partialorder %v2786, 0.0
      %vm2789 = vcmp.gt.f32.partialorder %v2787, 0.0
      %v2790 = vmul.f32 %v2786, 0.2
      %v2791 = vmul.f32 %v2787, 0.2
      %v2792 = vsel %vm2788, %v2786, %v2790
      %v2793 = vsel %vm2789, %v2787, %v2791
      %v2794 = vpack.c.bf16 %v2793, %v2792
      %v2795 = vld [vmem:[%s11] sm:$0xff]
      %v2796 = vld [vmem:[%s11 + $0x8] sm:$0xff]
      %v2797 = vld [vmem:[%s11 + $0x10] sm:$0xff]
      %v2798 = vld [vmem:[%s11 + $0x18] sm:$0xff]
      %v2799 = vld [vmem:[%s11 + $0x20] sm:$0xff]
      %v2800 = vld [vmem:[%s11 + $0x28] sm:$0xff]
      %v2801 = vld [vmem:[%s11 + $0x30] sm:$0xff]
      %v2802 = vld [vmem:[%s11 + $0x38] sm:$0xff]
      %v2803 = vld [vmem:[%s11 + $0x40] sm:$0xff]
      %v2804 = vld [vmem:[%s11 + $0x48] sm:$0xff]
      %v2805 = vld [vmem:[%s11 + $0x50] sm:$0xff]
      %v2806 = vld [vmem:[%s11 + $0x58] sm:$0xff]
      %v2807 = vld [vmem:[%s11 + $0x60] sm:$0xff]
      %v2808 = vld [vmem:[%s11 + $0x68] sm:$0xff]
      %v2809 = vld [vmem:[%s11 + $0x70] sm:$0xff]
      %v2810 = vld [vmem:[%s11 + $0x78] sm:$0xff]
      %v2811 = vld [vmem:[%s11 + $0x80] sm:$0xff]
      %v2812 = vld [vmem:[%s11 + $0x88] sm:$0xff]
      %v2813 = vld [vmem:[%s11 + $0x90] sm:$0xff]
      %v2814 = vld [vmem:[%s11 + $0x98] sm:$0xff]
      %v2815 = vld [vmem:[%s11 + $0xa0] sm:$0xff]
      %v2816 = vld [vmem:[%s11 + $0xa8] sm:$0xff]
      %v2817 = vld [vmem:[%s11 + $0xb0] sm:$0xff]
      %v2818 = vld [vmem:[%s11 + $0xb8] sm:$0xff]
      %v2819 = vld [vmem:[%s11 + $0xc0] sm:$0xff]
      %v2820 = vld [vmem:[%s11 + $0xc8] sm:$0xff]
      %v2821 = vld [vmem:[%s11 + $0xd0] sm:$0xff]
      %v2822 = vld [vmem:[%s11 + $0xd8] sm:$0xff]
      %v2823 = vld [vmem:[%s11 + $0xe0] sm:$0xff]
      %v2824 = vld [vmem:[%s11 + $0xe8] sm:$0xff]
      %v2825 = vld [vmem:[%s11 + $0xf0] sm:$0xff]
      %v2826 = vld [vmem:[%s11 + $0xf8] sm:$0xff]
      %v2827 = vld [vmem:[%s11 + $0x100] sm:$0xff]
      %v2828 = vld [vmem:[%s11 + $0x108] sm:$0xff]
      %v2829 = vld [vmem:[%s11 + $0x110] sm:$0xff]
      %v2830 = vld [vmem:[%s11 + $0x118] sm:$0xff]
      %v2831 = vld [vmem:[%s11 + $0x120] sm:$0xff]
      %v2832 = vld [vmem:[%s11 + $0x128] sm:$0xff]
      %v2833 = vld [vmem:[%s11 + $0x130] sm:$0xff]
      %v2834 = vld [vmem:[%s11 + $0x138] sm:$0xff]
      %v2835 = vld [vmem:[%s11 + $0x140] sm:$0xff]
      %v2836 = vld [vmem:[%s11 + $0x148] sm:$0xff]
      %v2837 = vld [vmem:[%s11 + $0x150] sm:$0xff]
      %v2838 = vld [vmem:[%s11 + $0x158] sm:$0xff]
      %v2839 = vld [vmem:[%s11 + $0x160] sm:$0xff]
      %v2840 = vld [vmem:[%s11 + $0x168] sm:$0xff]
      %v2841 = vld [vmem:[%s11 + $0x170] sm:$0xff]
      %v2842 = vld [vmem:[%s11 + $0x178] sm:$0xff]
      %v2843 = vld [vmem:[%s11 + $0x180] sm:$0xff]
      %v2844 = vld [vmem:[%s11 + $0x188] sm:$0xff]
      %v2845 = vld [vmem:[%s11 + $0x190] sm:$0xff]
      %v2846 = vld [vmem:[%s11 + $0x198] sm:$0xff]
      %v2847 = vld [vmem:[%s11 + $0x1a0] sm:$0xff]
      %v2848 = vld [vmem:[%s11 + $0x1a8] sm:$0xff]
      %v2849 = vld [vmem:[%s11 + $0x1b0] sm:$0xff]
      %v2850 = vld [vmem:[%s11 + $0x1b8] sm:$0xff]
      %v2851 = vld [vmem:[%s11 + $0x1c0] sm:$0xff]
      %v2852 = vld [vmem:[%s11 + $0x1c8] sm:$0xff]
      %v2853 = vld [vmem:[%s11 + $0x1d0] sm:$0xff]
      %v2854 = vld [vmem:[%s11 + $0x1d8] sm:$0xff]
      %v2855 = vld [vmem:[%s11 + $0x1e0] sm:$0xff]
      %v2856 = vld [vmem:[%s11 + $0x1e8] sm:$0xff]
      %v2857 = vld [vmem:[%s11 + $0x1f0] sm:$0xff]
      %v2858 = vld [vmem:[%s11 + $0x1f8] sm:$0xff]
      %v2859 = vld [vmem:[%s12] sm:$0xff]
      %v2860 = vld [vmem:[%s12 + $0x8] sm:$0xff]
      %v2861 = vld [vmem:[%s12 + $0x10] sm:$0xff]
      %v2862 = vld [vmem:[%s12 + $0x18] sm:$0xff]
      %v2863 = vld [vmem:[%s12 + $0x20] sm:$0xff]
      %v2864 = vld [vmem:[%s12 + $0x28] sm:$0xff]
      %v2865 = vld [vmem:[%s12 + $0x30] sm:$0xff]
      %v2866 = vld [vmem:[%s12 + $0x38] sm:$0xff]
      %v2867 = vld [vmem:[%s12 + $0x40] sm:$0xff]
      %v2868 = vld [vmem:[%s12 + $0x48] sm:$0xff]
      %v2869 = vld [vmem:[%s12 + $0x50] sm:$0xff]
      %v2870 = vld [vmem:[%s12 + $0x58] sm:$0xff]
      %v2871 = vld [vmem:[%s12 + $0x60] sm:$0xff]
      %v2872 = vld [vmem:[%s12 + $0x68] sm:$0xff]
      %v2873 = vld [vmem:[%s12 + $0x70] sm:$0xff]
      %v2874 = vld [vmem:[%s12 + $0x78] sm:$0xff]
      %v2875 = vld [vmem:[%s12 + $0x80] sm:$0xff]
      %v2876 = vld [vmem:[%s12 + $0x88] sm:$0xff]
      %v2877 = vld [vmem:[%s12 + $0x90] sm:$0xff]
      %v2878 = vld [vmem:[%s12 + $0x98] sm:$0xff]
      %v2879 = vld [vmem:[%s12 + $0xa0] sm:$0xff]
      %v2880 = vld [vmem:[%s12 + $0xa8] sm:$0xff]
      %v2881 = vld [vmem:[%s12 + $0xb0] sm:$0xff]
      %v2882 = vld [vmem:[%s12 + $0xb8] sm:$0xff]
      %v2883 = vld [vmem:[%s12 + $0xc0] sm:$0xff]
      %v2884 = vld [vmem:[%s12 + $0xc8] sm:$0xff]
      %v2885 = vld [vmem:[%s12 + $0xd0] sm:$0xff]
      %v2886 = vld [vmem:[%s12 + $0xd8] sm:$0xff]
      %v2887 = vld [vmem:[%s12 + $0xe0] sm:$0xff]
      %v2888 = vld [vmem:[%s12 + $0xe8] sm:$0xff]
      %v2889 = vld [vmem:[%s12 + $0xf0] sm:$0xff]
      %v2890 = vld [vmem:[%s12 + $0xf8] sm:$0xff]
      %v2923 = vunpack.c.l.b16 %v2859
      %v2924 = vunpack.c.h.b16 %v2859
      %v2925 = vunpack.c.l.b16 %v2860
      %v2926 = vunpack.c.h.b16 %v2860
      %v2927 = vunpack.c.l.b16 %v2861
      %v2928 = vunpack.c.h.b16 %v2861
      %v2929 = vunpack.c.l.b16 %v2862
      %v2930 = vunpack.c.h.b16 %v2862
      %v2931 = vunpack.c.l.b16 %v2863
      %v2932 = vunpack.c.h.b16 %v2863
      %v2933 = vunpack.c.l.b16 %v2864
      %v2934 = vunpack.c.h.b16 %v2864
      %v2935 = vunpack.c.l.b16 %v2865
      %v2936 = vunpack.c.h.b16 %v2865
      %v2937 = vunpack.c.l.b16 %v2866
      %v2938 = vunpack.c.h.b16 %v2866
      %v2939 = vunpack.c.l.b16 %v2867
      %v2940 = vunpack.c.h.b16 %v2867
      %v2941 = vunpack.c.l.b16 %v2868
      %v2942 = vunpack.c.h.b16 %v2868
      %v2943 = vunpack.c.l.b16 %v2869
      %v2944 = vunpack.c.h.b16 %v2869
      %v2945 = vunpack.c.l.b16 %v2870
      %v2946 = vunpack.c.h.b16 %v2870
      %v2947 = vunpack.c.l.b16 %v2871
      %v2948 = vunpack.c.h.b16 %v2871
      %v2949 = vunpack.c.l.b16 %v2872
      %v2950 = vunpack.c.h.b16 %v2872
      %v2951 = vunpack.c.l.b16 %v2873
      %v2952 = vunpack.c.h.b16 %v2873
      %v2953 = vunpack.c.l.b16 %v2874
      %v2954 = vunpack.c.h.b16 %v2874
      %v2955 = vunpack.c.l.b16 %v2875
      %v2956 = vunpack.c.h.b16 %v2875
      %v2957 = vunpack.c.l.b16 %v2876
      %v2958 = vunpack.c.h.b16 %v2876
      %v2959 = vunpack.c.l.b16 %v2877
      %v2960 = vunpack.c.h.b16 %v2877
      %v2961 = vunpack.c.l.b16 %v2878
      %v2962 = vunpack.c.h.b16 %v2878
      %v2963 = vunpack.c.l.b16 %v2879
      %v2964 = vunpack.c.h.b16 %v2879
      %v2965 = vunpack.c.l.b16 %v2880
      %v2966 = vunpack.c.h.b16 %v2880
      %v2967 = vunpack.c.l.b16 %v2881
      %v2968 = vunpack.c.h.b16 %v2881
      %v2969 = vunpack.c.l.b16 %v2882
      %v2970 = vunpack.c.h.b16 %v2882
      %v2971 = vunpack.c.l.b16 %v2883
      %v2972 = vunpack.c.h.b16 %v2883
      %v2973 = vunpack.c.l.b16 %v2884
      %v2974 = vunpack.c.h.b16 %v2884
      %v2975 = vunpack.c.l.b16 %v2885
      %v2976 = vunpack.c.h.b16 %v2885
      %v2977 = vunpack.c.l.b16 %v2886
      %v2978 = vunpack.c.h.b16 %v2886
      %v2979 = vunpack.c.l.b16 %v2887
      %v2980 = vunpack.c.h.b16 %v2887
      %v2981 = vunpack.c.l.b16 %v2888
      %v2982 = vunpack.c.h.b16 %v2888
      %v2983 = vunpack.c.l.b16 %v2889
      %v2984 = vunpack.c.h.b16 %v2889
      %v2985 = vunpack.c.l.b16 %v2890
      %v2986 = vunpack.c.h.b16 %v2890
      %v2987 = vpack.c.b16 %v2927, %v2923
      %v2988 = vpack.c.b16 %v2928, %v2924
      %v2989 = vpack.c.b16 %v2929, %v2925
      %v2990 = vpack.c.b16 %v2930, %v2926
      %v2991 = vpack.c.b16 %v2935, %v2931
      %v2992 = vpack.c.b16 %v2936, %v2932
      %v2993 = vpack.c.b16 %v2937, %v2933
      %v2994 = vpack.c.b16 %v2938, %v2934
      %v2995 = vpack.c.b16 %v2943, %v2939
      %v2996 = vpack.c.b16 %v2944, %v2940
      %v2997 = vpack.c.b16 %v2945, %v2941
      %v2998 = vpack.c.b16 %v2946, %v2942
      %v2999 = vpack.c.b16 %v2951, %v2947
      %v3000 = vpack.c.b16 %v2952, %v2948
      %v3001 = vpack.c.b16 %v2953, %v2949
      %v3002 = vpack.c.b16 %v2954, %v2950
      %v3003 = vpack.c.b16 %v2959, %v2955
      %v3004 = vpack.c.b16 %v2960, %v2956
      %v3005 = vpack.c.b16 %v2961, %v2957
      %v3006 = vpack.c.b16 %v2962, %v2958
      %v3007 = vpack.c.b16 %v2967, %v2963
      %v3008 = vpack.c.b16 %v2968, %v2964
      %v3009 = vpack.c.b16 %v2969, %v2965
      %v3010 = vpack.c.b16 %v2970, %v2966
      %v3011 = vpack.c.b16 %v2975, %v2971
      %v3012 = vpack.c.b16 %v2976, %v2972
      %v3013 = vpack.c.b16 %v2977, %v2973
      %v3014 = vpack.c.b16 %v2978, %v2974
      %v3015 = vpack.c.b16 %v2983, %v2979
      %v3016 = vpack.c.b16 %v2984, %v2980
      %v3017 = vpack.c.b16 %v2985, %v2981
      %v3018 = vpack.c.b16 %v2986, %v2982
      %3051 = vmatprep.subr.bf16.mxu0 %v2988
      %3052 = vmatpush1.bf16.msra.mxu0 %v2987
      %3053 = vmatprep.subr.bf16.mxu0 %v2992
      %3054 = vmatpush1.bf16.msra.mxu0 %v2991
      %3055 = vmatprep.subr.bf16.mxu0 %v2996
      %3056 = vmatpush1.bf16.msra.mxu0 %v2995
      %3057 = vmatprep.subr.bf16.mxu0 %v3000
      %3058 = vmatpush1.bf16.msra.mxu0 %v2999
      %3059 = vmatprep.subr.bf16.mxu0 %v3004
      %3060 = vmatpush1.bf16.msra.mxu0 %v3003
      %3061 = vmatprep.subr.bf16.mxu0 %v3008
      %3062 = vmatpush1.bf16.msra.mxu0 %v3007
      %3063 = vmatprep.subr.bf16.mxu0 %v3012
      %3064 = vmatpush1.bf16.msra.mxu0 %v3011
      %3065 = vmatprep.subr.bf16.mxu0 %v3016
      %3066 = vmatpush1.bf16.msra.mxu0 %v3015
      %3067 = vmatprep.subr.bf16.mxu0 0
      %3068 = vmatpush1.bf16.msra.mxu0 0
      %3069 = vmatprep.subr.bf16.mxu0 0
      %3070 = vmatpush1.bf16.msra.mxu0 0
      %3071 = vmatprep.subr.bf16.mxu0 0
      %3072 = vmatpush1.bf16.msra.mxu0 0
      %3073 = vmatprep.subr.bf16.mxu0 0
      %3074 = vmatpush1.bf16.msra.mxu0 0
      %3075 = vmatprep.subr.bf16.mxu0 0
      %3076 = vmatpush1.bf16.msra.mxu0 0
      %3077 = vmatprep.subr.bf16.mxu0 0
      %3078 = vmatpush1.bf16.msra.mxu0 0
      %3079 = vmatprep.subr.bf16.mxu0 0
      %3080 = vmatpush1.bf16.msra.mxu0 0
      %3081 = vmatprep.subr.bf16.mxu0 0
      %3082 = vmatpush1.bf16.msra.mxu0 0
      %3083 = vmatprep.mubr.bf16.mxu0 0
      %3084 = vmatmul.mubr.bf16.gmra.mrb[0].mxu0 %v2397
      %v3085 = vpop.f32.mrb[0].mxu0
      %v3086 = vadd.f32 0.0, %v3085
      %v3087 = vpop.f32.mrb[0].mxu0
      %v3088 = vadd.f32 0.0, %v3087
      %v3089 = vpop.f32.mrb[0].mxu0
      %v3090 = vadd.f32 0.0, %v3089
      %v3091 = vpop.f32.mrb[0].mxu0
      %v3092 = vadd.f32 0.0, %v3091
      %3093 = vdwg.mxu0
      %3094 = vmatprep.subr.bf16.mxu0 %v2990
      %3095 = vmatpush1.bf16.msra.mxu0 %v2989
      %3096 = vmatprep.subr.bf16.mxu0 %v2994
      %3097 = vmatpush1.bf16.msra.mxu0 %v2993
      %3098 = vmatprep.subr.bf16.mxu0 %v2998
      %3099 = vmatpush1.bf16.msra.mxu0 %v2997
      %3100 = vmatprep.subr.bf16.mxu0 %v3002
      %3101 = vmatpush1.bf16.msra.mxu0 %v3001
      %3102 = vmatprep.subr.bf16.mxu0 %v3006
      %3103 = vmatpush1.bf16.msra.mxu0 %v3005
      %3104 = vmatprep.subr.bf16.mxu0 %v3010
      %3105 = vmatpush1.bf16.msra.mxu0 %v3009
      %3106 = vmatprep.subr.bf16.mxu0 %v3014
      %3107 = vmatpush1.bf16.msra.mxu0 %v3013
      %3108 = vmatprep.subr.bf16.mxu0 %v3018
      %3109 = vmatpush1.bf16.msra.mxu0 %v3017
      %3110 = vmatprep.subr.bf16.mxu0 0
      %3111 = vmatpush1.bf16.msra.mxu0 0
      %3112 = vmatprep.subr.bf16.mxu0 0
      %3113 = vmatpush1.bf16.msra.mxu0 0
      %3114 = vmatprep.subr.bf16.mxu0 0
      %3115 = vmatpush1.bf16.msra.mxu0 0
      %3116 = vmatprep.subr.bf16.mxu0 0
      %3117 = vmatpush1.bf16.msra.mxu0 0
      %3118 = vmatprep.subr.bf16.mxu0 0
      %3119 = vmatpush1.bf16.msra.mxu0 0
      %3120 = vmatprep.subr.bf16.mxu0 0
      %3121 = vmatpush1.bf16.msra.mxu0 0
      %3122 = vmatprep.subr.bf16.mxu0 0
      %3123 = vmatpush1.bf16.msra.mxu0 0
      %3124 = vmatprep.subr.bf16.mxu0 0
      %3125 = vmatpush1.bf16.msra.mxu0 0
      %3126 = vmatprep.mubr.bf16.mxu0 0
      %3127 = vmatmul.mubr.bf16.gmra.mrb[0].mxu0 %v2397
      %v3128 = vpop.f32.mrb[0].mxu0
      %v3129 = vadd.f32 0.0, %v3128
      %v3130 = vpop.f32.mrb[0].mxu0
      %v3131 = vadd.f32 0.0, %v3130
      %v3132 = vpop.f32.mrb[0].mxu0
      %v3133 = vadd.f32 0.0, %v3132
      %v3134 = vpop.f32.mrb[0].mxu0
      %v3135 = vadd.f32 0.0, %v3134
      %3136 = vdwg.mxu0
      %v3201 = vunpack.c.l.b16 %v2795
      %v3202 = vunpack.c.h.b16 %v2795
      %v3203 = vunpack.c.l.b16 %v2796
      %v3204 = vunpack.c.h.b16 %v2796
      %v3205 = vunpack.c.l.b16 %v2797
      %v3206 = vunpack.c.h.b16 %v2797
      %v3207 = vunpack.c.l.b16 %v2798
      %v3208 = vunpack.c.h.b16 %v2798
      %v3209 = vunpack.c.l.b16 %v2799
      %v3210 = vunpack.c.h.b16 %v2799
      %v3211 = vunpack.c.l.b16 %v2800
      %v3212 = vunpack.c.h.b16 %v2800
      %v3213 = vunpack.c.l.b16 %v2801
      %v3214 = vunpack.c.h.b16 %v2801
      %v3215 = vunpack.c.l.b16 %v2802
      %v3216 = vunpack.c.h.b16 %v2802
      %v3217 = vunpack.c.l.b16 %v2803
      %v3218 = vunpack.c.h.b16 %v2803
      %v3219 = vunpack.c.l.b16 %v2804
      %v3220 = vunpack.c.h.b16 %v2804
      %v3221 = vunpack.c.l.b16 %v2805
      %v3222 = vunpack.c.h.b16 %v2805
      %v3223 = vunpack.c.l.b16 %v2806
      %v3224 = vunpack.c.h.b16 %v2806
      %v3225 = vunpack.c.l.b16 %v2807
      %v3226 = vunpack.c.h.b16 %v2807
      %v3227 = vunpack.c.l.b16 %v2808
      %v3228 = vunpack.c.h.b16 %v2808
      %v3229 = vunpack.c.l.b16 %v2809
      %v3230 = vunpack.c.h.b16 %v2809
      %v3231 = vunpack.c.l.b16 %v2810
      %v3232 = vunpack.c.h.b16 %v2810
      %v3233 = vunpack.c.l.b16 %v2811
      %v3234 = vunpack.c.h.b16 %v2811
      %v3235 = vunpack.c.l.b16 %v2812
      %v3236 = vunpack.c.h.b16 %v2812
      %v3237 = vunpack.c.l.b16 %v2813
      %v3238 = vunpack.c.h.b16 %v2813
      %v3239 = vunpack.c.l.b16 %v2814
      %v3240 = vunpack.c.h.b16 %v2814
      %v3241 = vunpack.c.l.b16 %v2815
      %v3242 = vunpack.c.h.b16 %v2815
      %v3243 = vunpack.c.l.b16 %v2816
      %v3244 = vunpack.c.h.b16 %v2816
      %v3245 = vunpack.c.l.b16 %v2817
      %v3246 = vunpack.c.h.b16 %v2817
      %v3247 = vunpack.c.l.b16 %v2818
      %v3248 = vunpack.c.h.b16 %v2818
      %v3249 = vunpack.c.l.b16 %v2819
      %v3250 = vunpack.c.h.b16 %v2819
      %v3251 = vunpack.c.l.b16 %v2820
      %v3252 = vunpack.c.h.b16 %v2820
      %v3253 = vunpack.c.l.b16 %v2821
      %v3254 = vunpack.c.h.b16 %v2821
      %v3255 = vunpack.c.l.b16 %v2822
      %v3256 = vunpack.c.h.b16 %v2822
      %v3257 = vunpack.c.l.b16 %v2823
      %v3258 = vunpack.c.h.b16 %v2823
      %v3259 = vunpack.c.l.b16 %v2824
      %v3260 = vunpack.c.h.b16 %v2824
      %v3261 = vunpack.c.l.b16 %v2825
      %v3262 = vunpack.c.h.b16 %v2825
      %v3263 = vunpack.c.l.b16 %v2826
      %v3264 = vunpack.c.h.b16 %v2826
      %v3265 = vunpack.c.l.b16 %v2827
      %v3266 = vunpack.c.h.b16 %v2827
      %v3267 = vunpack.c.l.b16 %v2828
      %v3268 = vunpack.c.h.b16 %v2828
      %v3269 = vunpack.c.l.b16 %v2829
      %v3270 = vunpack.c.h.b16 %v2829
      %v3271 = vunpack.c.l.b16 %v2830
      %v3272 = vunpack.c.h.b16 %v2830
      %v3273 = vunpack.c.l.b16 %v2831
      %v3274 = vunpack.c.h.b16 %v2831
      %v3275 = vunpack.c.l.b16 %v2832
      %v3276 = vunpack.c.h.b16 %v2832
      %v3277 = vunpack.c.l.b16 %v2833
      %v3278 = vunpack.c.h.b16 %v2833
      %v3279 = vunpack.c.l.b16 %v2834
      %v3280 = vunpack.c.h.b16 %v2834
      %v3281 = vunpack.c.l.b16 %v2835
      %v3282 = vunpack.c.h.b16 %v2835
      %v3283 = vunpack.c.l.b16 %v2836
      %v3284 = vunpack.c.h.b16 %v2836
      %v3285 = vunpack.c.l.b16 %v2837
      %v3286 = vunpack.c.h.b16 %v2837
      %v3287 = vunpack.c.l.b16 %v2838
      %v3288 = vunpack.c.h.b16 %v2838
      %v3289 = vunpack.c.l.b16 %v2839
      %v3290 = vunpack.c.h.b16 %v2839
      %v3291 = vunpack.c.l.b16 %v2840
      %v3292 = vunpack.c.h.b16 %v2840
      %v3293 = vunpack.c.l.b16 %v2841
      %v3294 = vunpack.c.h.b16 %v2841
      %v3295 = vunpack.c.l.b16 %v2842
      %v3296 = vunpack.c.h.b16 %v2842
      %v3297 = vunpack.c.l.b16 %v2843
      %v3298 = vunpack.c.h.b16 %v2843
      %v3299 = vunpack.c.l.b16 %v2844
      %v3300 = vunpack.c.h.b16 %v2844
      %v3301 = vunpack.c.l.b16 %v2845
      %v3302 = vunpack.c.h.b16 %v2845
      %v3303 = vunpack.c.l.b16 %v2846
      %v3304 = vunpack.c.h.b16 %v2846
      %v3305 = vunpack.c.l.b16 %v2847
      %v3306 = vunpack.c.h.b16 %v2847
      %v3307 = vunpack.c.l.b16 %v2848
      %v3308 = vunpack.c.h.b16 %v2848
      %v3309 = vunpack.c.l.b16 %v2849
      %v3310 = vunpack.c.h.b16 %v2849
      %v3311 = vunpack.c.l.b16 %v2850
      %v3312 = vunpack.c.h.b16 %v2850
      %v3313 = vunpack.c.l.b16 %v2851
      %v3314 = vunpack.c.h.b16 %v2851
      %v3315 = vunpack.c.l.b16 %v2852
      %v3316 = vunpack.c.h.b16 %v2852
      %v3317 = vunpack.c.l.b16 %v2853
      %v3318 = vunpack.c.h.b16 %v2853
      %v3319 = vunpack.c.l.b16 %v2854
      %v3320 = vunpack.c.h.b16 %v2854
      %v3321 = vunpack.c.l.b16 %v2855
      %v3322 = vunpack.c.h.b16 %v2855
      %v3323 = vunpack.c.l.b16 %v2856
      %v3324 = vunpack.c.h.b16 %v2856
      %v3325 = vunpack.c.l.b16 %v2857
      %v3326 = vunpack.c.h.b16 %v2857
      %v3327 = vunpack.c.l.b16 %v2858
      %v3328 = vunpack.c.h.b16 %v2858
      %v3329 = vpack.c.b16 %v3205, %v3201
      %v3330 = vpack.c.b16 %v3206, %v3202
      %v3331 = vpack.c.b16 %v3207, %v3203
      %v3332 = vpack.c.b16 %v3208, %v3204
      %v3333 = vpack.c.b16 %v3213, %v3209
      %v3334 = vpack.c.b16 %v3214, %v3210
      %v3335 = vpack.c.b16 %v3215, %v3211
      %v3336 = vpack.c.b16 %v3216, %v3212
      %v3337 = vpack.c.b16 %v3221, %v3217
      %v3338 = vpack.c.b16 %v3222, %v3218
      %v3339 = vpack.c.b16 %v3223, %v3219
      %v3340 = vpack.c.b16 %v3224, %v3220
      %v3341 = vpack.c.b16 %v3229, %v3225
      %v3342 = vpack.c.b16 %v3230, %v3226
      %v3343 = vpack.c.b16 %v3231, %v3227
      %v3344 = vpack.c.b16 %v3232, %v3228
      %v3345 = vpack.c.b16 %v3237, %v3233
      %v3346 = vpack.c.b16 %v3238, %v3234
      %v3347 = vpack.c.b16 %v3239, %v3235
      %v3348 = vpack.c.b16 %v3240, %v3236
      %v3349 = vpack.c.b16 %v3245, %v3241
      %v3350 = vpack.c.b16 %v3246, %v3242
      %v3351 = vpack.c.b16 %v3247, %v3243
      %v3352 = vpack.c.b16 %v3248, %v3244
      %v3353 = vpack.c.b16 %v3253, %v3249
      %v3354 = vpack.c.b16 %v3254, %v3250
      %v3355 = vpack.c.b16 %v3255, %v3251
      %v3356 = vpack.c.b16 %v3256, %v3252
      %v3357 = vpack.c.b16 %v3261, %v3257
      %v3358 = vpack.c.b16 %v3262, %v3258
      %v3359 = vpack.c.b16 %v3263, %v3259
      %v3360 = vpack.c.b16 %v3264, %v3260
      %v3361 = vpack.c.b16 %v3269, %v3265
      %v3362 = vpack.c.b16 %v3270, %v3266
      %v3363 = vpack.c.b16 %v3271, %v3267
      %v3364 = vpack.c.b16 %v3272, %v3268
      %v3365 = vpack.c.b16 %v3277, %v3273
      %v3366 = vpack.c.b16 %v3278, %v3274
      %v3367 = vpack.c.b16 %v3279, %v3275
      %v3368 = vpack.c.b16 %v3280, %v3276
      %v3369 = vpack.c.b16 %v3285, %v3281
      %v3370 = vpack.c.b16 %v3286, %v3282
      %v3371 = vpack.c.b16 %v3287, %v3283
      %v3372 = vpack.c.b16 %v3288, %v3284
      %v3373 = vpack.c.b16 %v3293, %v3289
      %v3374 = vpack.c.b16 %v3294, %v3290
      %v3375 = vpack.c.b16 %v3295, %v3291
      %v3376 = vpack.c.b16 %v3296, %v3292
      %v3377 = vpack.c.b16 %v3301, %v3297
      %v3378 = vpack.c.b16 %v3302, %v3298
      %v3379 = vpack.c.b16 %v3303, %v3299
      %v3380 = vpack.c.b16 %v3304, %v3300
      %v3381 = vpack.c.b16 %v3309, %v3305
      %v3382 = vpack.c.b16 %v3310, %v3306
      %v3383 = vpack.c.b16 %v3311, %v3307
      %v3384 = vpack.c.b16 %v3312, %v3308
      %v3385 = vpack.c.b16 %v3317, %v3313
      %v3386 = vpack.c.b16 %v3318, %v3314
      %v3387 = vpack.c.b16 %v3319, %v3315
      %v3388 = vpack.c.b16 %v3320, %v3316
      %v3389 = vpack.c.b16 %v3325, %v3321
      %v3390 = vpack.c.b16 %v3326, %v3322
      %v3391 = vpack.c.b16 %v3327, %v3323
      %v3392 = vpack.c.b16 %v3328, %v3324
      %3457 = vmatprep.subr.bf16.mxu0 %v3330
      %3458 = vmatpush1.bf16.msra.mxu0 %v3329
      %3459 = vmatprep.subr.bf16.mxu0 %v3334
      %3460 = vmatpush1.bf16.msra.mxu0 %v3333
      %3461 = vmatprep.subr.bf16.mxu0 %v3338
      %3462 = vmatpush1.bf16.msra.mxu0 %v3337
      %3463 = vmatprep.subr.bf16.mxu0 %v3342
      %3464 = vmatpush1.bf16.msra.mxu0 %v3341
      %3465 = vmatprep.subr.bf16.mxu0 %v3346
      %3466 = vmatpush1.bf16.msra.mxu0 %v3345
      %3467 = vmatprep.subr.bf16.mxu0 %v3350
      %3468 = vmatpush1.bf16.msra.mxu0 %v3349
      %3469 = vmatprep.subr.bf16.mxu0 %v3354
      %3470 = vmatpush1.bf16.msra.mxu0 %v3353
      %3471 = vmatprep.subr.bf16.mxu0 %v3358
      %3472 = vmatpush1.bf16.msra.mxu0 %v3357
      %3473 = vmatprep.subr.bf16.mxu0 %v3362
      %3474 = vmatpush1.bf16.msra.mxu0 %v3361
      %3475 = vmatprep.subr.bf16.mxu0 %v3366
      %3476 = vmatpush1.bf16.msra.mxu0 %v3365
      %3477 = vmatprep.subr.bf16.mxu0 %v3370
      %3478 = vmatpush1.bf16.msra.mxu0 %v3369
      %3479 = vmatprep.subr.bf16.mxu0 %v3374
      %3480 = vmatpush1.bf16.msra.mxu0 %v3373
      %3481 = vmatprep.subr.bf16.mxu0 %v3378
      %3482 = vmatpush1.bf16.msra.mxu0 %v3377
      %3483 = vmatprep.subr.bf16.mxu0 %v3382
      %3484 = vmatpush1.bf16.msra.mxu0 %v3381
      %3485 = vmatprep.subr.bf16.mxu0 %v3386
      %3486 = vmatpush1.bf16.msra.mxu0 %v3385
      %3487 = vmatprep.subr.bf16.mxu0 %v3390
      %3488 = vmatpush1.bf16.msra.mxu0 %v3389
      %3489 = vmatprep.mubr.bf16.mxu0 %v1872
      %3490 = vmatmul.mubr.bf16.gmra.mrb[0].mxu0 %v1871
      %v3491 = vpop.f32.mrb[0].mxu0
      %v3492 = vadd.f32 %v3086, %v3491
      %v3493 = vpop.f32.mrb[0].mxu0
      %v3494 = vadd.f32 %v3088, %v3493
      %v3495 = vpop.f32.mrb[0].mxu0
      %v3496 = vadd.f32 %v3090, %v3495
      %v3497 = vpop.f32.mrb[0].mxu0
      %v3498 = vadd.f32 %v3092, %v3497
      %3499 = vdwg.mxu0
      %3500 = vmatprep.subr.bf16.mxu0 %v3332
      %3501 = vmatpush1.bf16.msra.mxu0 %v3331
      %3502 = vmatprep.subr.bf16.mxu0 %v3336
      %3503 = vmatpush1.bf16.msra.mxu0 %v3335
      %3504 = vmatprep.subr.bf16.mxu0 %v3340
      %3505 = vmatpush1.bf16.msra.mxu0 %v3339
      %3506 = vmatprep.subr.bf16.mxu0 %v3344
      %3507 = vmatpush1.bf16.msra.mxu0 %v3343
      %3508 = vmatprep.subr.bf16.mxu0 %v3348
      %3509 = vmatpush1.bf16.msra.mxu0 %v3347
      %3510 = vmatprep.subr.bf16.mxu0 %v3352
      %3511 = vmatpush1.bf16.msra.mxu0 %v3351
      %3512 = vmatprep.subr.bf16.mxu0 %v3356
      %3513 = vmatpush1.bf16.msra.mxu0 %v3355
      %3514 = vmatprep.subr.bf16.mxu0 %v3360
      %3515 = vmatpush1.bf16.msra.mxu0 %v3359
      %3516 = vmatprep.subr.bf16.mxu0 %v3364
      %3517 = vmatpush1.bf16.msra.mxu0 %v3363
      %3518 = vmatprep.subr.bf16.mxu0 %v3368
      %3519 = vmatpush1.bf16.msra.mxu0 %v3367
      %3520 = vmatprep.subr.bf16.mxu0 %v3372
      %3521 = vmatpush1.bf16.msra.mxu0 %v3371
      %3522 = vmatprep.subr.bf16.mxu0 %v3376
      %3523 = vmatpush1.bf16.msra.mxu0 %v3375
      %3524 = vmatprep.subr.bf16.mxu0 %v3380
      %3525 = vmatpush1.bf16.msra.mxu0 %v3379
      %3526 = vmatprep.subr.bf16.mxu0 %v3384
      %3527 = vmatpush1.bf16.msra.mxu0 %v3383
      %3528 = vmatprep.subr.bf16.mxu0 %v3388
      %3529 = vmatpush1.bf16.msra.mxu0 %v3387
      %3530 = vmatprep.subr.bf16.mxu0 %v3392
      %3531 = vmatpush1.bf16.msra.mxu0 %v3391
      %3532 = vmatprep.mubr.bf16.mxu0 %v1872
      %3533 = vmatmul.mubr.bf16.gmra.mrb[0].mxu0 %v1871
      %v3534 = vpop.f32.mrb[0].mxu0
      %v3535 = vadd.f32 %v3129, %v3534
      %v3536 = vpop.f32.mrb[0].mxu0
      %v3537 = vadd.f32 %v3131, %v3536
      %v3538 = vpop.f32.mrb[0].mxu0
      %v3539 = vadd.f32 %v3133, %v3538
      %v3540 = vpop.f32.mrb[0].mxu0
      %v3541 = vadd.f32 %v3135, %v3540
      %3542 = vdwg.mxu0
      %v3543 = vld [vmem:[%s13] sm:$0xff]
      %v3544 = vld [vmem:[%s13 + $0x8] sm:$0xff]
      %v3545 = vld [vmem:[%s13 + $0x10] sm:$0xff]
      %v3546 = vld [vmem:[%s13 + $0x18] sm:$0xff]
      %v3547 = vld [vmem:[%s13 + $0x20] sm:$0xff]
      %v3548 = vld [vmem:[%s13 + $0x28] sm:$0xff]
      %v3549 = vld [vmem:[%s13 + $0x30] sm:$0xff]
      %v3550 = vld [vmem:[%s13 + $0x38] sm:$0xff]
      %v3551 = vld [vmem:[%s13 + $0x40] sm:$0xff]
      %v3552 = vld [vmem:[%s13 + $0x48] sm:$0xff]
      %v3553 = vld [vmem:[%s13 + $0x50] sm:$0xff]
      %v3554 = vld [vmem:[%s13 + $0x58] sm:$0xff]
      %v3555 = vld [vmem:[%s13 + $0x60] sm:$0xff]
      %v3556 = vld [vmem:[%s13 + $0x68] sm:$0xff]
      %v3557 = vld [vmem:[%s13 + $0x70] sm:$0xff]
      %v3558 = vld [vmem:[%s13 + $0x78] sm:$0xff]
      %v3575 = vunpack.c.l.b16 %v3543
      %v3576 = vunpack.c.h.b16 %v3543
      %v3577 = vunpack.c.l.b16 %v3544
      %v3578 = vunpack.c.h.b16 %v3544
      %v3579 = vunpack.c.l.b16 %v3545
      %v3580 = vunpack.c.h.b16 %v3545
      %v3581 = vunpack.c.l.b16 %v3546
      %v3582 = vunpack.c.h.b16 %v3546
      %v3583 = vunpack.c.l.b16 %v3547
      %v3584 = vunpack.c.h.b16 %v3547
      %v3585 = vunpack.c.l.b16 %v3548
      %v3586 = vunpack.c.h.b16 %v3548
      %v3587 = vunpack.c.l.b16 %v3549
      %v3588 = vunpack.c.h.b16 %v3549
      %v3589 = vunpack.c.l.b16 %v3550
      %v3590 = vunpack.c.h.b16 %v3550
      %v3591 = vunpack.c.l.b16 %v3551
      %v3592 = vunpack.c.h.b16 %v3551
      %v3593 = vunpack.c.l.b16 %v3552
      %v3594 = vunpack.c.h.b16 %v3552
      %v3595 = vunpack.c.l.b16 %v3553
      %v3596 = vunpack.c.h.b16 %v3553
      %v3597 = vunpack.c.l.b16 %v3554
      %v3598 = vunpack.c.h.b16 %v3554
      %v3599 = vunpack.c.l.b16 %v3555
      %v3600 = vunpack.c.h.b16 %v3555
      %v3601 = vunpack.c.l.b16 %v3556
      %v3602 = vunpack.c.h.b16 %v3556
      %v3603 = vunpack.c.l.b16 %v3557
      %v3604 = vunpack.c.h.b16 %v3557
      %v3605 = vunpack.c.l.b16 %v3558
      %v3606 = vunpack.c.h.b16 %v3558
      %v3607 = vpack.c.b16 %v3579, %v3575
      %v3608 = vpack.c.b16 %v3580, %v3576
      %v3609 = vpack.c.b16 %v3581, %v3577
      %v3610 = vpack.c.b16 %v3582, %v3578
      %v3611 = vpack.c.b16 %v3587, %v3583
      %v3612 = vpack.c.b16 %v3588, %v3584
      %v3613 = vpack.c.b16 %v3589, %v3585
      %v3614 = vpack.c.b16 %v3590, %v3586
      %v3615 = vpack.c.b16 %v3595, %v3591
      %v3616 = vpack.c.b16 %v3596, %v3592
      %v3617 = vpack.c.b16 %v3597, %v3593
      %v3618 = vpack.c.b16 %v3598, %v3594
      %v3619 = vpack.c.b16 %v3603, %v3599
      %v3620 = vpack.c.b16 %v3604, %v3600
      %v3621 = vpack.c.b16 %v3605, %v3601
      %v3622 = vpack.c.b16 %v3606, %v3602
      %vm3639 = vcmask 523264
      %v3641 = vsel %vm3639, %v2794, 0
      %3643 = vmatprep.subr.bf16.mxu0 %v3608
      %3644 = vmatpush1.bf16.msra.mxu0 %v3607
      %3645 = vmatprep.subr.bf16.mxu0 %v3612
      %3646 = vmatpush1.bf16.msra.mxu0 %v3611
      %3647 = vmatprep.subr.bf16.mxu0 %v3616
      %3648 = vmatpush1.bf16.msra.mxu0 %v3615
      %3649 = vmatprep.subr.bf16.mxu0 %v3620
      %3650 = vmatpush1.bf16.msra.mxu0 %v3619
      %3651 = vmatprep.subr.bf16.mxu0 0
      %3652 = vmatpush1.bf16.msra.mxu0 0
      %3653 = vmatprep.subr.bf16.mxu0 0
      %3654 = vmatpush1.bf16.msra.mxu0 0
      %3655 = vmatprep.subr.bf16.mxu0 0
      %3656 = vmatpush1.bf16.msra.mxu0 0
      %3657 = vmatprep.subr.bf16.mxu0 0
      %3658 = vmatpush1.bf16.msra.mxu0 0
      %3659 = vmatprep.subr.bf16.mxu0 0
      %3660 = vmatpush1.bf16.msra.mxu0 0
      %3661 = vmatprep.subr.bf16.mxu0 0
      %3662 = vmatpush1.bf16.msra.mxu0 0
      %3663 = vmatprep.subr.bf16.mxu0 0
      %3664 = vmatpush1.bf16.msra.mxu0 0
      %3665 = vmatprep.subr.bf16.mxu0 0
      %3666 = vmatpush1.bf16.msra.mxu0 0
      %3667 = vmatprep.subr.bf16.mxu0 0
      %3668 = vmatpush1.bf16.msra.mxu0 0
      %3669 = vmatprep.subr.bf16.mxu0 0
      %3670 = vmatpush1.bf16.msra.mxu0 0
      %3671 = vmatprep.subr.bf16.mxu0 0
      %3672 = vmatpush1.bf16.msra.mxu0 0
      %3673 = vmatprep.subr.bf16.mxu0 0
      %3674 = vmatpush1.bf16.msra.mxu0 0
      %3675 = vmatprep.mubr.bf16.mxu0 0
      %3676 = vmatmul.mubr.bf16.gmra.mrb[0].mxu0 %v3641
      %v3677 = vpop.f32.mrb[0].mxu0
      %v3678 = vadd.f32 0.0, %v3677
      %v3679 = vpop.f32.mrb[0].mxu0
      %v3680 = vadd.f32 0.0, %v3679
      %v3681 = vpop.f32.mrb[0].mxu0
      %v3682 = vadd.f32 0.0, %v3681
      %v3683 = vpop.f32.mrb[0].mxu0
      %v3684 = vadd.f32 0.0, %v3683
      %3685 = vdwg.mxu0
      %3686 = vmatprep.subr.bf16.mxu0 %v3610
      %3687 = vmatpush1.bf16.msra.mxu0 %v3609
      %3688 = vmatprep.subr.bf16.mxu0 %v3614
      %3689 = vmatpush1.bf16.msra.mxu0 %v3613
      %3690 = vmatprep.subr.bf16.mxu0 %v3618
      %3691 = vmatpush1.bf16.msra.mxu0 %v3617
      %3692 = vmatprep.subr.bf16.mxu0 %v3622
      %3693 = vmatpush1.bf16.msra.mxu0 %v3621
      %3694 = vmatprep.subr.bf16.mxu0 0
      %3695 = vmatpush1.bf16.msra.mxu0 0
      %3696 = vmatprep.subr.bf16.mxu0 0
      %3697 = vmatpush1.bf16.msra.mxu0 0
      %3698 = vmatprep.subr.bf16.mxu0 0
      %3699 = vmatpush1.bf16.msra.mxu0 0
      %3700 = vmatprep.subr.bf16.mxu0 0
      %3701 = vmatpush1.bf16.msra.mxu0 0
      %3702 = vmatprep.subr.bf16.mxu0 0
      %3703 = vmatpush1.bf16.msra.mxu0 0
      %3704 = vmatprep.subr.bf16.mxu0 0
      %3705 = vmatpush1.bf16.msra.mxu0 0
      %3706 = vmatprep.subr.bf16.mxu0 0
      %3707 = vmatpush1.bf16.msra.mxu0 0
      %3708 = vmatprep.subr.bf16.mxu0 0
      %3709 = vmatpush1.bf16.msra.mxu0 0
      %3710 = vmatprep.subr.bf16.mxu0 0
      %3711 = vmatpush1.bf16.msra.mxu0 0
      %3712 = vmatprep.subr.bf16.mxu0 0
      %3713 = vmatpush1.bf16.msra.mxu0 0
      %3714 = vmatprep.subr.bf16.mxu0 0
      %3715 = vmatpush1.bf16.msra.mxu0 0
      %3716 = vmatprep.subr.bf16.mxu0 0
      %3717 = vmatpush1.bf16.msra.mxu0 0
      %3718 = vmatprep.mubr.bf16.mxu0 0
      %3719 = vmatmul.mubr.bf16.gmra.mrb[0].mxu0 %v3641
      %v3720 = vpop.f32.mrb[0].mxu0
      %v3721 = vadd.f32 0.0, %v3720
      %v3722 = vpop.f32.mrb[0].mxu0
      %v3723 = vadd.f32 0.0, %v3722
      %v3724 = vpop.f32.mrb[0].mxu0
      %v3725 = vadd.f32 0.0, %v3724
      %v3726 = vpop.f32.mrb[0].mxu0
      %v3727 = vadd.f32 0.0, %v3726
      %3728 = vdwg.mxu0
      %v3729 = vadd.f32 %v3492, %v3678
      %v3730 = vadd.f32 %v3494, %v3680
      %v3731 = vadd.f32 %v3535, %v3721
      %v3732 = vadd.f32 %v3537, %v3723
      %v3733 = vadd.f32 %v3496, %v3682
      %v3734 = vadd.f32 %v3498, %v3684
      %v3735 = vadd.f32 %v3539, %v3725
      %v3736 = vadd.f32 %v3541, %v3727
      %v3737 = vld [vmem:[%s14] sm:$0xf]
      %v3739 = vlaneseq
      %v3740 = vshrl.u32 %v3739, 7
      %v3741 = vsub.s32 0, %v3740
      %v3742 = vrot.slane %v3737, %v3741
      %v3743 = vlaneseq
      %v3744 = vshrl.u32 %v3743, 7
      %v3745 = vsub.s32 1, %v3744
      %v3746 = vrot.slane %v3737, %v3745
      %v3747 = vlaneseq
      %v3748 = vshrl.u32 %v3747, 7
      %v3749 = vsub.s32 2, %v3748
      %v3750 = vrot.slane %v3737, %v3749
      %v3751 = vlaneseq
      %v3752 = vshrl.u32 %v3751, 7
      %v3753 = vsub.s32 3, %v3752
      %v3754 = vrot.slane %v3737, %v3753
      %v3759 = vadd.f32 %v3729, %v3742
      %v3760 = vadd.f32 %v3730, %v3746
      %v3761 = vadd.f32 %v3731, %v3750
      %v3762 = vadd.f32 %v3732, %v3754
      %v3763 = vadd.f32 %v3733, %v3742
      %v3764 = vadd.f32 %v3734, %v3746
      %v3765 = vadd.f32 %v3735, %v3750
      %v3766 = vadd.f32 %v3736, %v3754
      %vm3767 = vcmp.gt.f32.partialorder %v3759, 0.0
      %vm3768 = vcmp.gt.f32.partialorder %v3760, 0.0
      %vm3769 = vcmp.gt.f32.partialorder %v3761, 0.0
      %vm3770 = vcmp.gt.f32.partialorder %v3762, 0.0
      %vm3771 = vcmp.gt.f32.partialorder %v3763, 0.0
      %vm3772 = vcmp.gt.f32.partialorder %v3764, 0.0
      %vm3773 = vcmp.gt.f32.partialorder %v3765, 0.0
      %vm3774 = vcmp.gt.f32.partialorder %v3766, 0.0
      %v3775 = vmul.f32 %v3759, 0.2
      %v3776 = vmul.f32 %v3760, 0.2
      %v3777 = vmul.f32 %v3761, 0.2
      %v3778 = vmul.f32 %v3762, 0.2
      %v3779 = vmul.f32 %v3763, 0.2
      %v3780 = vmul.f32 %v3764, 0.2
      %v3781 = vmul.f32 %v3765, 0.2
      %v3782 = vmul.f32 %v3766, 0.2
      %v3783 = vsel %vm3767, %v3759, %v3775
      %v3784 = vsel %vm3768, %v3760, %v3776
      %v3785 = vsel %vm3769, %v3761, %v3777
      %v3786 = vsel %vm3770, %v3762, %v3778
      %v3787 = vsel %vm3771, %v3763, %v3779
      %v3788 = vsel %vm3772, %v3764, %v3780
      %v3789 = vsel %vm3773, %v3765, %v3781
      %v3790 = vsel %vm3774, %v3766, %v3782
      %v3791 = vpack.c.bf16 %v3787, %v3783
      %v3792 = vpack.c.bf16 %v3788, %v3784
      %v3793 = vpack.c.bf16 %v3789, %v3785
      %v3794 = vpack.c.bf16 %v3790, %v3786
      %v3795 = vld [vmem:[%s15] sm:$0xff]
      %v3796 = vld [vmem:[%s15 + $0x8] sm:$0xff]
      %v3797 = vld [vmem:[%s15 + $0x10] sm:$0xff]
      %v3798 = vld [vmem:[%s15 + $0x18] sm:$0xff]
      %v3799 = vld [vmem:[%s15 + $0x20] sm:$0xff]
      %v3800 = vld [vmem:[%s15 + $0x28] sm:$0xff]
      %v3801 = vld [vmem:[%s15 + $0x30] sm:$0xff]
      %v3802 = vld [vmem:[%s15 + $0x38] sm:$0xff]
      %v3803 = vld [vmem:[%s15 + $0x40] sm:$0xff]
      %v3804 = vld [vmem:[%s15 + $0x48] sm:$0xff]
      %v3805 = vld [vmem:[%s15 + $0x50] sm:$0xff]
      %v3806 = vld [vmem:[%s15 + $0x58] sm:$0xff]
      %v3807 = vld [vmem:[%s15 + $0x60] sm:$0xff]
      %v3808 = vld [vmem:[%s15 + $0x68] sm:$0xff]
      %v3809 = vld [vmem:[%s15 + $0x70] sm:$0xff]
      %v3810 = vld [vmem:[%s15 + $0x78] sm:$0xff]
      %v3811 = vld [vmem:[%s15 + $0x80] sm:$0xff]
      %v3812 = vld [vmem:[%s15 + $0x88] sm:$0xff]
      %v3813 = vld [vmem:[%s15 + $0x90] sm:$0xff]
      %v3814 = vld [vmem:[%s15 + $0x98] sm:$0xff]
      %v3815 = vld [vmem:[%s15 + $0xa0] sm:$0xff]
      %v3816 = vld [vmem:[%s15 + $0xa8] sm:$0xff]
      %v3817 = vld [vmem:[%s15 + $0xb0] sm:$0xff]
      %v3818 = vld [vmem:[%s15 + $0xb8] sm:$0xff]
      %v3819 = vld [vmem:[%s15 + $0xc0] sm:$0xff]
      %v3820 = vld [vmem:[%s15 + $0xc8] sm:$0xff]
      %v3821 = vld [vmem:[%s15 + $0xd0] sm:$0xff]
      %v3822 = vld [vmem:[%s15 + $0xd8] sm:$0xff]
      %v3823 = vld [vmem:[%s15 + $0xe0] sm:$0xff]
      %v3824 = vld [vmem:[%s15 + $0xe8] sm:$0xff]
      %v3825 = vld [vmem:[%s15 + $0xf0] sm:$0xff]
      %v3826 = vld [vmem:[%s15 + $0xf8] sm:$0xff]
      %v3827 = vld [vmem:[%s15 + $0x100] sm:$0xff]
      %v3828 = vld [vmem:[%s15 + $0x108] sm:$0xff]
      %v3829 = vld [vmem:[%s15 + $0x110] sm:$0xff]
      %v3830 = vld [vmem:[%s15 + $0x118] sm:$0xff]
      %v3831 = vld [vmem:[%s15 + $0x120] sm:$0xff]
      %v3832 = vld [vmem:[%s15 + $0x128] sm:$0xff]
      %v3833 = vld [vmem:[%s15 + $0x130] sm:$0xff]
      %v3834 = vld [vmem:[%s15 + $0x138] sm:$0xff]
      %v3835 = vld [vmem:[%s15 + $0x140] sm:$0xff]
      %v3836 = vld [vmem:[%s15 + $0x148] sm:$0xff]
      %v3837 = vld [vmem:[%s15 + $0x150] sm:$0xff]
      %v3838 = vld [vmem:[%s15 + $0x158] sm:$0xff]
      %v3839 = vld [vmem:[%s15 + $0x160] sm:$0xff]
      %v3840 = vld [vmem:[%s15 + $0x168] sm:$0xff]
      %v3841 = vld [vmem:[%s15 + $0x170] sm:$0xff]
      %v3842 = vld [vmem:[%s15 + $0x178] sm:$0xff]
      %v3843 = vld [vmem:[%s15 + $0x180] sm:$0xff]
      %v3844 = vld [vmem:[%s15 + $0x188] sm:$0xff]
      %v3845 = vld [vmem:[%s15 + $0x190] sm:$0xff]
      %v3846 = vld [vmem:[%s15 + $0x198] sm:$0xff]
      %v3847 = vld [vmem:[%s15 + $0x1a0] sm:$0xff]
      %v3848 = vld [vmem:[%s15 + $0x1a8] sm:$0xff]
      %v3849 = vld [vmem:[%s15 + $0x1b0] sm:$0xff]
      %v3850 = vld [vmem:[%s15 + $0x1b8] sm:$0xff]
      %v3851 = vld [vmem:[%s15 + $0x1c0] sm:$0xff]
      %v3852 = vld [vmem:[%s15 + $0x1c8] sm:$0xff]
      %v3853 = vld [vmem:[%s15 + $0x1d0] sm:$0xff]
      %v3854 = vld [vmem:[%s15 + $0x1d8] sm:$0xff]
      %v3855 = vld [vmem:[%s15 + $0x1e0] sm:$0xff]
      %v3856 = vld [vmem:[%s15 + $0x1e8] sm:$0xff]
      %v3857 = vld [vmem:[%s15 + $0x1f0] sm:$0xff]
      %v3858 = vld [vmem:[%s15 + $0x1f8] sm:$0xff]
      %v3859 = vld [vmem:[%s16] sm:$0x3]
      %v3861 = vlaneseq
      %v3862 = vshrl.u32 %v3861, 7
      %v3863 = vsub.s32 0, %v3862
      %v3864 = vrot.slane %v3859, %v3863
      %v3865 = vlaneseq
      %v3866 = vshrl.u32 %v3865, 7
      %v3867 = vsub.s32 1, %v3866
      %v3868 = vrot.slane %v3859, %v3867
      %v3935 = vunpack.c.l.b16 %v3795
      %v3936 = vunpack.c.h.b16 %v3795
      %v3937 = vunpack.c.l.b16 %v3796
      %v3938 = vunpack.c.h.b16 %v3796
      %v3939 = vunpack.c.l.b16 %v3797
      %v3940 = vunpack.c.h.b16 %v3797
      %v3941 = vunpack.c.l.b16 %v3798
      %v3942 = vunpack.c.h.b16 %v3798
      %v3943 = vunpack.c.l.b16 %v3799
      %v3944 = vunpack.c.h.b16 %v3799
      %v3945 = vunpack.c.l.b16 %v3800
      %v3946 = vunpack.c.h.b16 %v3800
      %v3947 = vunpack.c.l.b16 %v3801
      %v3948 = vunpack.c.h.b16 %v3801
      %v3949 = vunpack.c.l.b16 %v3802
      %v3950 = vunpack.c.h.b16 %v3802
      %v3951 = vunpack.c.l.b16 %v3803
      %v3952 = vunpack.c.h.b16 %v3803
      %v3953 = vunpack.c.l.b16 %v3804
      %v3954 = vunpack.c.h.b16 %v3804
      %v3955 = vunpack.c.l.b16 %v3805
      %v3956 = vunpack.c.h.b16 %v3805
      %v3957 = vunpack.c.l.b16 %v3806
      %v3958 = vunpack.c.h.b16 %v3806
      %v3959 = vunpack.c.l.b16 %v3807
      %v3960 = vunpack.c.h.b16 %v3807
      %v3961 = vunpack.c.l.b16 %v3808
      %v3962 = vunpack.c.h.b16 %v3808
      %v3963 = vunpack.c.l.b16 %v3809
      %v3964 = vunpack.c.h.b16 %v3809
      %v3965 = vunpack.c.l.b16 %v3810
      %v3966 = vunpack.c.h.b16 %v3810
      %v3967 = vunpack.c.l.b16 %v3811
      %v3968 = vunpack.c.h.b16 %v3811
      %v3969 = vunpack.c.l.b16 %v3812
      %v3970 = vunpack.c.h.b16 %v3812
      %v3971 = vunpack.c.l.b16 %v3813
      %v3972 = vunpack.c.h.b16 %v3813
      %v3973 = vunpack.c.l.b16 %v3814
      %v3974 = vunpack.c.h.b16 %v3814
      %v3975 = vunpack.c.l.b16 %v3815
      %v3976 = vunpack.c.h.b16 %v3815
      %v3977 = vunpack.c.l.b16 %v3816
      %v3978 = vunpack.c.h.b16 %v3816
      %v3979 = vunpack.c.l.b16 %v3817
      %v3980 = vunpack.c.h.b16 %v3817
      %v3981 = vunpack.c.l.b16 %v3818
      %v3982 = vunpack.c.h.b16 %v3818
      %v3983 = vunpack.c.l.b16 %v3819
      %v3984 = vunpack.c.h.b16 %v3819
      %v3985 = vunpack.c.l.b16 %v3820
      %v3986 = vunpack.c.h.b16 %v3820
      %v3987 = vunpack.c.l.b16 %v3821
      %v3988 = vunpack.c.h.b16 %v3821
      %v3989 = vunpack.c.l.b16 %v3822
      %v3990 = vunpack.c.h.b16 %v3822
      %v3991 = vunpack.c.l.b16 %v3823
      %v3992 = vunpack.c.h.b16 %v3823
      %v3993 = vunpack.c.l.b16 %v3824
      %v3994 = vunpack.c.h.b16 %v3824
      %v3995 = vunpack.c.l.b16 %v3825
      %v3996 = vunpack.c.h.b16 %v3825
      %v3997 = vunpack.c.l.b16 %v3826
      %v3998 = vunpack.c.h.b16 %v3826
      %v3999 = vunpack.c.l.b16 %v3827
      %v4000 = vunpack.c.h.b16 %v3827
      %v4001 = vunpack.c.l.b16 %v3828
      %v4002 = vunpack.c.h.b16 %v3828
      %v4003 = vunpack.c.l.b16 %v3829
      %v4004 = vunpack.c.h.b16 %v3829
      %v4005 = vunpack.c.l.b16 %v3830
      %v4006 = vunpack.c.h.b16 %v3830
      %v4007 = vunpack.c.l.b16 %v3831
      %v4008 = vunpack.c.h.b16 %v3831
      %v4009 = vunpack.c.l.b16 %v3832
      %v4010 = vunpack.c.h.b16 %v3832
      %v4011 = vunpack.c.l.b16 %v3833
      %v4012 = vunpack.c.h.b16 %v3833
      %v4013 = vunpack.c.l.b16 %v3834
      %v4014 = vunpack.c.h.b16 %v3834
      %v4015 = vunpack.c.l.b16 %v3835
      %v4016 = vunpack.c.h.b16 %v3835
      %v4017 = vunpack.c.l.b16 %v3836
      %v4018 = vunpack.c.h.b16 %v3836
      %v4019 = vunpack.c.l.b16 %v3837
      %v4020 = vunpack.c.h.b16 %v3837
      %v4021 = vunpack.c.l.b16 %v3838
      %v4022 = vunpack.c.h.b16 %v3838
      %v4023 = vunpack.c.l.b16 %v3839
      %v4024 = vunpack.c.h.b16 %v3839
      %v4025 = vunpack.c.l.b16 %v3840
      %v4026 = vunpack.c.h.b16 %v3840
      %v4027 = vunpack.c.l.b16 %v3841
      %v4028 = vunpack.c.h.b16 %v3841
      %v4029 = vunpack.c.l.b16 %v3842
      %v4030 = vunpack.c.h.b16 %v3842
      %v4031 = vunpack.c.l.b16 %v3843
      %v4032 = vunpack.c.h.b16 %v3843
      %v4033 = vunpack.c.l.b16 %v3844
      %v4034 = vunpack.c.h.b16 %v3844
      %v4035 = vunpack.c.l.b16 %v3845
      %v4036 = vunpack.c.h.b16 %v3845
      %v4037 = vunpack.c.l.b16 %v3846
      %v4038 = vunpack.c.h.b16 %v3846
      %v4039 = vunpack.c.l.b16 %v3847
      %v4040 = vunpack.c.h.b16 %v3847
      %v4041 = vunpack.c.l.b16 %v3848
      %v4042 = vunpack.c.h.b16 %v3848
      %v4043 = vunpack.c.l.b16 %v3849
      %v4044 = vunpack.c.h.b16 %v3849
      %v4045 = vunpack.c.l.b16 %v3850
      %v4046 = vunpack.c.h.b16 %v3850
      %v4047 = vunpack.c.l.b16 %v3851
      %v4048 = vunpack.c.h.b16 %v3851
      %v4049 = vunpack.c.l.b16 %v3852
      %v4050 = vunpack.c.h.b16 %v3852
      %v4051 = vunpack.c.l.b16 %v3853
      %v4052 = vunpack.c.h.b16 %v3853
      %v4053 = vunpack.c.l.b16 %v3854
      %v4054 = vunpack.c.h.b16 %v3854
      %v4055 = vunpack.c.l.b16 %v3855
      %v4056 = vunpack.c.h.b16 %v3855
      %v4057 = vunpack.c.l.b16 %v3856
      %v4058 = vunpack.c.h.b16 %v3856
      %v4059 = vunpack.c.l.b16 %v3857
      %v4060 = vunpack.c.h.b16 %v3857
      %v4061 = vunpack.c.l.b16 %v3858
      %v4062 = vunpack.c.h.b16 %v3858
      %v4063 = vpack.c.b16 %v3937, %v3935
      %v4064 = vpack.c.b16 %v3938, %v3936
      %v4065 = vpack.c.b16 %v3941, %v3939
      %v4066 = vpack.c.b16 %v3942, %v3940
      %v4067 = vpack.c.b16 %v3945, %v3943
      %v4068 = vpack.c.b16 %v3946, %v3944
      %v4069 = vpack.c.b16 %v3949, %v3947
      %v4070 = vpack.c.b16 %v3950, %v3948
      %v4071 = vpack.c.b16 %v3953, %v3951
      %v4072 = vpack.c.b16 %v3954, %v3952
      %v4073 = vpack.c.b16 %v3957, %v3955
      %v4074 = vpack.c.b16 %v3958, %v3956
      %v4075 = vpack.c.b16 %v3961, %v3959
      %v4076 = vpack.c.b16 %v3962, %v3960
      %v4077 = vpack.c.b16 %v3965, %v3963
      %v4078 = vpack.c.b16 %v3966, %v3964
      %v4079 = vpack.c.b16 %v3969, %v3967
      %v4080 = vpack.c.b16 %v3970, %v3968
      %v4081 = vpack.c.b16 %v3973, %v3971
      %v4082 = vpack.c.b16 %v3974, %v3972
      %v4083 = vpack.c.b16 %v3977, %v3975
      %v4084 = vpack.c.b16 %v3978, %v3976
      %v4085 = vpack.c.b16 %v3981, %v3979
      %v4086 = vpack.c.b16 %v3982, %v3980
      %v4087 = vpack.c.b16 %v3985, %v3983
      %v4088 = vpack.c.b16 %v3986, %v3984
      %v4089 = vpack.c.b16 %v3989, %v3987
      %v4090 = vpack.c.b16 %v3990, %v3988
      %v4091 = vpack.c.b16 %v3993, %v3991
      %v4092 = vpack.c.b16 %v3994, %v3992
      %v4093 = vpack.c.b16 %v3997, %v3995
      %v4094 = vpack.c.b16 %v3998, %v3996
      %v4095 = vpack.c.b16 %v4001, %v3999
      %v4096 = vpack.c.b16 %v4002, %v4000
      %v4097 = vpack.c.b16 %v4005, %v4003
      %v4098 = vpack.c.b16 %v4006, %v4004
      %v4099 = vpack.c.b16 %v4009, %v4007
      %v4100 = vpack.c.b16 %v4010, %v4008
      %v4101 = vpack.c.b16 %v4013, %v4011
      %v4102 = vpack.c.b16 %v4014, %v4012
      %v4103 = vpack.c.b16 %v4017, %v4015
      %v4104 = vpack.c.b16 %v4018, %v4016
      %v4105 = vpack.c.b16 %v4021, %v4019
      %v4106 = vpack.c.b16 %v4022, %v4020
      %v4107 = vpack.c.b16 %v4025, %v4023
      %v4108 = vpack.c.b16 %v4026, %v4024
      %v4109 = vpack.c.b16 %v4029, %v4027
      %v4110 = vpack.c.b16 %v4030, %v4028
      %v4111 = vpack.c.b16 %v4033, %v4031
      %v4112 = vpack.c.b16 %v4034, %v4032
      %v4113 = vpack.c.b16 %v4037, %v4035
      %v4114 = vpack.c.b16 %v4038, %v4036
      %v4115 = vpack.c.b16 %v4041, %v4039
      %v4116 = vpack.c.b16 %v4042, %v4040
      %v4117 = vpack.c.b16 %v4045, %v4043
      %v4118 = vpack.c.b16 %v4046, %v4044
      %v4119 = vpack.c.b16 %v4049, %v4047
      %v4120 = vpack.c.b16 %v4050, %v4048
      %v4121 = vpack.c.b16 %v4053, %v4051
      %v4122 = vpack.c.b16 %v4054, %v4052
      %v4123 = vpack.c.b16 %v4057, %v4055
      %v4124 = vpack.c.b16 %v4058, %v4056
      %v4125 = vpack.c.b16 %v4061, %v4059
      %v4126 = vpack.c.b16 %v4062, %v4060
      %4191 = vmatprep.subr.bf16.mxu0 %v4064
      %4192 = vmatpush1.bf16.msra.mxu0 %v4063
      %4193 = vmatprep.subr.bf16.mxu0 %v4066
      %4194 = vmatpush1.bf16.msra.mxu0 %v4065
      %4195 = vmatprep.subr.bf16.mxu0 %v4068
      %4196 = vmatpush1.bf16.msra.mxu0 %v4067
      %4197 = vmatprep.subr.bf16.mxu0 %v4070
      %4198 = vmatpush1.bf16.msra.mxu0 %v4069
      %4199 = vmatprep.subr.bf16.mxu0 %v4072
      %4200 = vmatpush1.bf16.msra.mxu0 %v4071
      %4201 = vmatprep.subr.bf16.mxu0 %v4074
      %4202 = vmatpush1.bf16.msra.mxu0 %v4073
      %4203 = vmatprep.subr.bf16.mxu0 %v4076
      %4204 = vmatpush1.bf16.msra.mxu0 %v4075
      %4205 = vmatprep.subr.bf16.mxu0 %v4078
      %4206 = vmatpush1.bf16.msra.mxu0 %v4077
      %4207 = vmatprep.subr.bf16.mxu0 %v4080
      %4208 = vmatpush1.bf16.msra.mxu0 %v4079
      %4209 = vmatprep.subr.bf16.mxu0 %v4082
      %4210 = vmatpush1.bf16.msra.mxu0 %v4081
      %4211 = vmatprep.subr.bf16.mxu0 %v4084
      %4212 = vmatpush1.bf16.msra.mxu0 %v4083
      %4213 = vmatprep.subr.bf16.mxu0 %v4086
      %4214 = vmatpush1.bf16.msra.mxu0 %v4085
      %4215 = vmatprep.subr.bf16.mxu0 %v4088
      %4216 = vmatpush1.bf16.msra.mxu0 %v4087
      %4217 = vmatprep.subr.bf16.mxu0 %v4090
      %4218 = vmatpush1.bf16.msra.mxu0 %v4089
      %4219 = vmatprep.subr.bf16.mxu0 %v4092
      %4220 = vmatpush1.bf16.msra.mxu0 %v4091
      %4221 = vmatprep.subr.bf16.mxu0 %v4094
      %4222 = vmatpush1.bf16.msra.mxu0 %v4093
      %4223 = vmatprep.mubr.bf16.mxu0 %v3792
      %4224 = vmatmul.mubr.bf16.gmra.mrb[0].mxu0 %v3791
      %v4225 = vpop.f32.mrb[0].mxu0
      %v4226 = vadd.f32 %v3864, %v4225
      %v4227 = vpop.f32.mrb[0].mxu0
      %v4228 = vadd.f32 %v3868, %v4227
      %v4229 = vpop.f32.mrb[0].mxu0
      %v4230 = vadd.f32 %v3864, %v4229
      %v4231 = vpop.f32.mrb[0].mxu0
      %v4232 = vadd.f32 %v3868, %v4231
      %4233 = vdwg.mxu0
      %4234 = vmatprep.subr.bf16.mxu0 %v4096
      %4235 = vmatpush1.bf16.msra.mxu0 %v4095
      %4236 = vmatprep.subr.bf16.mxu0 %v4098
      %4237 = vmatpush1.bf16.msra.mxu0 %v4097
      %4238 = vmatprep.subr.bf16.mxu0 %v4100
      %4239 = vmatpush1.bf16.msra.mxu0 %v4099
      %4240 = vmatprep.subr.bf16.mxu0 %v4102
      %4241 = vmatpush1.bf16.msra.mxu0 %v4101
      %4242 = vmatprep.subr.bf16.mxu0 %v4104
      %4243 = vmatpush1.bf16.msra.mxu0 %v4103
      %4244 = vmatprep.subr.bf16.mxu0 %v4106
      %4245 = vmatpush1.bf16.msra.mxu0 %v4105
      %4246 = vmatprep.subr.bf16.mxu0 %v4108
      %4247 = vmatpush1.bf16.msra.mxu0 %v4107
      %4248 = vmatprep.subr.bf16.mxu0 %v4110
      %4249 = vmatpush1.bf16.msra.mxu0 %v4109
      %4250 = vmatprep.subr.bf16.mxu0 %v4112
      %4251 = vmatpush1.bf16.msra.mxu0 %v4111
      %4252 = vmatprep.subr.bf16.mxu0 %v4114
      %4253 = vmatpush1.bf16.msra.mxu0 %v4113
      %4254 = vmatprep.subr.bf16.mxu0 %v4116
      %4255 = vmatpush1.bf16.msra.mxu0 %v4115
      %4256 = vmatprep.subr.bf16.mxu0 %v4118
      %4257 = vmatpush1.bf16.msra.mxu0 %v4117
      %4258 = vmatprep.subr.bf16.mxu0 %v4120
      %4259 = vmatpush1.bf16.msra.mxu0 %v4119
      %4260 = vmatprep.subr.bf16.mxu0 %v4122
      %4261 = vmatpush1.bf16.msra.mxu0 %v4121
      %4262 = vmatprep.subr.bf16.mxu0 %v4124
      %4263 = vmatpush1.bf16.msra.mxu0 %v4123
      %4264 = vmatprep.subr.bf16.mxu0 %v4126
      %4265 = vmatpush1.bf16.msra.mxu0 %v4125
      %4266 = vmatprep.mubr.bf16.mxu0 %v3794
      %4267 = vmatmul.mubr.bf16.gmra.mrb[0].mxu0 %v3793
      %v4268 = vpop.f32.mrb[0].mxu0
      %v4269 = vadd.f32 %v4226, %v4268
      %v4270 = vpop.f32.mrb[0].mxu0
      %v4271 = vadd.f32 %v4228, %v4270
      %v4272 = vpop.f32.mrb[0].mxu0
      %v4273 = vadd.f32 %v4230, %v4272
      %v4274 = vpop.f32.mrb[0].mxu0
      %v4275 = vadd.f32 %v4232, %v4274
      %4276 = vdwg.mxu0
      %vm4277 = vcmp.gt.f32.partialorder %v4269, 0.0
      %vm4278 = vcmp.gt.f32.partialorder %v4271, 0.0
      %vm4279 = vcmp.gt.f32.partialorder %v4273, 0.0
      %vm4280 = vcmp.gt.f32.partialorder %v4275, 0.0
      %v4281 = vmul.f32 %v4269, 0.2
      %v4282 = vmul.f32 %v4271, 0.2
      %v4283 = vmul.f32 %v4273, 0.2
      %v4284 = vmul.f32 %v4275, 0.2
      %v4285 = vsel %vm4277, %v4269, %v4281
      %v4286 = vsel %vm4278, %v4271, %v4282
      %v4287 = vsel %vm4279, %v4273, %v4283
      %v4288 = vsel %vm4280, %v4275, %v4284
      %v4289 = vpack.c.bf16 %v4287, %v4285
      %v4290 = vpack.c.bf16 %v4288, %v4286
      %v4291 = vld [vmem:[%s17] sm:$0xf]
      %v4292 = vld [vmem:[%s17 + $0x4] sm:$0xf]
      %v4293 = vld [vmem:[%s17 + $0x8] sm:$0xf]
      %v4294 = vld [vmem:[%s17 + $0xc] sm:$0xf]
      %v4295 = vld [vmem:[%s17 + $0x10] sm:$0xf]
      %v4296 = vld [vmem:[%s17 + $0x14] sm:$0xf]
      %v4297 = vld [vmem:[%s17 + $0x18] sm:$0xf]
      %v4298 = vld [vmem:[%s17 + $0x1c] sm:$0xf]
      %v4299 = vld [vmem:[%s17 + $0x20] sm:$0xf]
      %v4300 = vld [vmem:[%s17 + $0x24] sm:$0xf]
      %v4301 = vld [vmem:[%s17 + $0x28] sm:$0xf]
      %v4302 = vld [vmem:[%s17 + $0x2c] sm:$0xf]
      %v4303 = vld [vmem:[%s17 + $0x30] sm:$0xf]
      %v4304 = vld [vmem:[%s17 + $0x34] sm:$0xf]
      %v4305 = vld [vmem:[%s17 + $0x38] sm:$0xf]
      %v4306 = vld [vmem:[%s17 + $0x3c] sm:$0xf]
      %v4307 = vld [vmem:[%s17 + $0x40] sm:$0xf]
      %v4308 = vld [vmem:[%s17 + $0x44] sm:$0xf]
      %v4309 = vld [vmem:[%s17 + $0x48] sm:$0xf]
      %v4310 = vld [vmem:[%s17 + $0x4c] sm:$0xf]
      %v4311 = vld [vmem:[%s17 + $0x50] sm:$0xf]
      %v4312 = vld [vmem:[%s17 + $0x54] sm:$0xf]
      %v4313 = vld [vmem:[%s17 + $0x58] sm:$0xf]
      %v4314 = vld [vmem:[%s17 + $0x5c] sm:$0xf]
      %v4315 = vld [vmem:[%s17 + $0x60] sm:$0xf]
      %v4316 = vld [vmem:[%s17 + $0x64] sm:$0xf]
      %v4317 = vld [vmem:[%s17 + $0x68] sm:$0xf]
      %v4318 = vld [vmem:[%s17 + $0x6c] sm:$0xf]
      %v4319 = vld [vmem:[%s17 + $0x70] sm:$0xf]
      %v4320 = vld [vmem:[%s17 + $0x74] sm:$0xf]
      %v4321 = vld [vmem:[%s17 + $0x78] sm:$0xf]
      %v4322 = vld [vmem:[%s17 + $0x7c] sm:$0xf]
      %v4323 = vld [vmem:[%s18] sm:$0x1]
      %v4325 = vlaneseq
      %v4326 = vshrl.u32 %v4325, 7
      %v4327 = vsub.s32 0, %v4326
      %v4328 = vrot.slane %v4323, %v4327
      %v4362 = vunpack.c.l.b16 %v4291
      %v4363 = vunpack.c.l.b16 %v4292
      %v4364 = vunpack.c.l.b16 %v4293
      %v4365 = vunpack.c.l.b16 %v4294
      %v4366 = vunpack.c.l.b16 %v4295
      %v4367 = vunpack.c.l.b16 %v4296
      %v4368 = vunpack.c.l.b16 %v4297
      %v4369 = vunpack.c.l.b16 %v4298
      %v4370 = vunpack.c.l.b16 %v4299
      %v4371 = vunpack.c.l.b16 %v4300
      %v4372 = vunpack.c.l.b16 %v4301
      %v4373 = vunpack.c.l.b16 %v4302
      %v4374 = vunpack.c.l.b16 %v4303
      %v4375 = vunpack.c.l.b16 %v4304
      %v4376 = vunpack.c.l.b16 %v4305
      %v4377 = vunpack.c.l.b16 %v4306
      %v4378 = vunpack.c.l.b16 %v4307
      %v4379 = vunpack.c.l.b16 %v4308
      %v4380 = vunpack.c.l.b16 %v4309
      %v4381 = vunpack.c.l.b16 %v4310
      %v4382 = vunpack.c.l.b16 %v4311
      %v4383 = vunpack.c.l.b16 %v4312
      %v4384 = vunpack.c.l.b16 %v4313
      %v4385 = vunpack.c.l.b16 %v4314
      %v4386 = vunpack.c.l.b16 %v4315
      %v4387 = vunpack.c.l.b16 %v4316
      %v4388 = vunpack.c.l.b16 %v4317
      %v4389 = vunpack.c.l.b16 %v4318
      %v4390 = vunpack.c.l.b16 %v4319
      %v4391 = vunpack.c.l.b16 %v4320
      %v4392 = vunpack.c.l.b16 %v4321
      %v4393 = vunpack.c.l.b16 %v4322
      %v4394 = vpack.c.b16 %v4363, %v4362
      %v4395 = vpack.c.b16 %v4365, %v4364
      %v4396 = vpack.c.b16 %v4367, %v4366
      %v4397 = vpack.c.b16 %v4369, %v4368
      %v4398 = vpack.c.b16 %v4371, %v4370
      %v4399 = vpack.c.b16 %v4373, %v4372
      %v4400 = vpack.c.b16 %v4375, %v4374
      %v4401 = vpack.c.b16 %v4377, %v4376
      %v4402 = vpack.c.b16 %v4379, %v4378
      %v4403 = vpack.c.b16 %v4381, %v4380
      %v4404 = vpack.c.b16 %v4383, %v4382
      %v4405 = vpack.c.b16 %v4385, %v4384
      %v4406 = vpack.c.b16 %v4387, %v4386
      %v4407 = vpack.c.b16 %v4389, %v4388
      %v4408 = vpack.c.b16 %v4391, %v4390
      %v4409 = vpack.c.b16 %v4393, %v4392
      %4426 = vmatprep.subr.bf16.mxu0 0
      %4427 = vmatpush1.bf16.msra.mxu0 %v4394
      %4428 = vmatprep.subr.bf16.mxu0 0
      %4429 = vmatpush1.bf16.msra.mxu0 %v4395
      %4430 = vmatprep.subr.bf16.mxu0 0
      %4431 = vmatpush1.bf16.msra.mxu0 %v4396
      %4432 = vmatprep.subr.bf16.mxu0 0
      %4433 = vmatpush1.bf16.msra.mxu0 %v4397
      %4434 = vmatprep.subr.bf16.mxu0 0
      %4435 = vmatpush1.bf16.msra.mxu0 %v4398
      %4436 = vmatprep.subr.bf16.mxu0 0
      %4437 = vmatpush1.bf16.msra.mxu0 %v4399
      %4438 = vmatprep.subr.bf16.mxu0 0
      %4439 = vmatpush1.bf16.msra.mxu0 %v4400
      %4440 = vmatprep.subr.bf16.mxu0 0
      %4441 = vmatpush1.bf16.msra.mxu0 %v4401
      %4442 = vmatprep.subr.bf16.mxu0 0
      %4443 = vmatpush1.bf16.msra.mxu0 %v4402
      %4444 = vmatprep.subr.bf16.mxu0 0
      %4445 = vmatpush1.bf16.msra.mxu0 %v4403
      %4446 = vmatprep.subr.bf16.mxu0 0
      %4447 = vmatpush1.bf16.msra.mxu0 %v4404
      %4448 = vmatprep.subr.bf16.mxu0 0
      %4449 = vmatpush1.bf16.msra.mxu0 %v4405
      %4450 = vmatprep.subr.bf16.mxu0 0
      %4451 = vmatpush1.bf16.msra.mxu0 %v4406
      %4452 = vmatprep.subr.bf16.mxu0 0
      %4453 = vmatpush1.bf16.msra.mxu0 %v4407
      %4454 = vmatprep.subr.bf16.mxu0 0
      %4455 = vmatpush1.bf16.msra.mxu0 %v4408
      %4456 = vmatprep.subr.bf16.mxu0 0
      %4457 = vmatpush1.bf16.msra.mxu0 %v4409
      %4458 = vmatprep.mubr.bf16.mxu0 %v4290
      %4459 = vmatmul.mubr.bf16.gmra.mrb[0].mxu0 %v4289
      %v4460 = vpop.f32.mrb[0].mxu0
      %v4461 = vadd.f32 %v4328, %v4460
      %v4462 = vpop.f32.mrb[0].mxu0
      %v4463 = vpop.f32.mrb[0].mxu0
      %v4464 = vadd.f32 %v4328, %v4463
      %v4465 = vpop.f32.mrb[0].mxu0
      %4466 = vdwg.mxu0
      %4467 = vst [vmem:[%s622] sm:$0xff] %v4461
      %4468 = vst [vmem:[%s622 + $0x8] sm:$0xff] %v4464
      %p4469 = scmp.lt.s32.totalorder %s30, 1
      %s4470 = scalar_select %p4469, %s30, 1
      %s4471 = smul.addr %s4470, 2
      %s4472 = smul.addr %s4471, 8
      %s4473 = scalar_lea.vmem %s19, %s4472
      // Predicated region
      $region97: #{_lambda_.15} parent=95 // pred_check
        %p4474 = pneg %p457
      $region98: #{_lambda_.15} parent=95 // pred_check_branch
        %4476 = sbr.rel (%p4474) target = $region100
      $region99: #{_lambda_.15} parent=95 // pred_region
        _
      $region100: #{_lambda_.15} parent=95 // pred_fallthru
        _
    $region96: #{_lambda_.15} parent=5 // pred_fallthru
      _
    %p4477 = scmp.le.s32.totalorder 2, %s25
    // Predicated region
    $region101: #{_lambda_.15} parent=5 // pred_check
      %p4478 = pneg %p4477
    $region102: #{_lambda_.15} parent=5 // pred_check_branch
      %4480 = sbr.rel (%p4478) target = $region104
    $region103: #{_lambda_.15} parent=5 // pred_region
      %s4481 = ssub.s32 %s25, 2
      // Predicated region
      $region105: #{_lambda_.15} parent=103 // pred_check
        %p4482 = pneg %p463
      $region106: #{_lambda_.15} parent=103 // pred_check_branch
        %4484 = sbr.rel (%p4482) target = $region108
      $region107: #{_lambda_.15} parent=103 // pred_region
        %p4485 = scmp.lt.s32.totalorder %s31, 1
        %s4486 = scalar_select %p4485, %s31, 1
        %s4487 = smul.addr %s4486, 2
        %s4488 = smul.addr %s4487, 8
        %s4489 = scalar_lea.vmem %s19, %s4488
      $region108: #{_lambda_.15} parent=103 // pred_fallthru
        _
    $region104: #{_lambda_.15} parent=5 // pred_fallthru
      _
  $region6: #{_lambda_.15} parent=0 // loop_footer
    %s29 = sadd.s32 1, %s25
  $region7: #{_lambda_.15} parent=0 // loop_footer_branch
    %24 = sbr.rel target = $region3
  $region8: #{_lambda_.15} parent=0 // loop_exit
    _

</llo_original>
